<compile_context>
chip_gen: v6e
topology: v6e:2x2x1
jax: 0.10.0
libtpu: 0.0.40
codegen_flags: <defaults>
</compile_context>

<pallas_src>
import functools
import math

import jax
import jax.numpy as jnp
from jax import lax
from jax.experimental import pallas as pl
from jax.experimental.pallas import tpu as pltpu


# ----------------------------------------------------------------------------
# exact GELU (erf via Abramowitz & Stegun 7.1.26, |erf err| < 1.5e-7)
# The 0.5 of the GELU cdf is folded into the polynomial; one select for sign;
# exact reciprocal (no approx recip feeding the polynomial).
# ----------------------------------------------------------------------------
_A1, _A2, _A3, _A4, _A5 = (0.5 * 0.254829592, 0.5 * -0.284496736, 0.5 * 1.421413741,
                           0.5 * -1.453152027, 0.5 * 1.061405429)
_P = 0.3275911
_INV_SQRT2 = 0.7071067811865476


def _gelu(x):
    a = jnp.abs(x) * _INV_SQRT2
    t = 1.0 / (1.0 + _P * a)                                 # exact divide
    half_tail = ((((_A5 * t + _A4) * t + _A3) * t + _A2) * t + _A1) * t * jnp.exp(-a * a)
    cdf = jnp.where(x >= 0.0, 1.0 - half_tail, half_tail)    # = 0.5*(1+erf(x/sqrt2))
    return x * cdf


# ----------------------------------------------------------------------------
# fused MixFeedForward kernel: one grid step = `images_per_step` whole images
# ----------------------------------------------------------------------------
def _mix_ffn_kernel(x_ref, w1_ref, b1_ref, wdw_ref, bdw_ref,
                    wpw_ref, bpw_ref, w2_ref, b2_ref,
                    o_ref, hp_ref, *, H, W, images_per_step, compute_dtype):
    f32 = jnp.float32
    HW = H * W
    hid = w1_ref.shape[1]
    stride = HW + W                 # per-image row stride in the padded scratch

    # ---- Conv2d(dim, hid, 1) + GELU over the whole row chunk (big-M GEMM) ---
    x = x_ref[...]                                            # (Mblk, Cin) f32
    h1 = jnp.dot(x.astype(compute_dtype), w1_ref[...],
                 preferred_element_type=f32) + b1_ref[...]
    h1 = _gelu(h1)                                            # (Mblk, hid) f32

    # ---- depthwise Conv2d(hid, hid, 3, pad=1, groups=hid) + GELU ------------
    # Scratch layout: [W zero rows][img0][W zero rows][img1][W zero rows]...
    # Vertical taps land in the zero separators; horizontal wrap is masked.
    # NOTE: pads are (re)written every grid step on purpose -- do NOT guard
    # them with program_id under dimension_semantics=("parallel",).
    zrow = jnp.zeros((W, hid), f32)
    hp_ref[0:W, :] = zrow                                     # top pad
    for i in range(images_per_step):
        base = W + i * stride
        hp_ref[base:base + HW, :] = h1[i * HW:(i + 1) * HW, :]
        hp_ref[base + HW:base + HW + W, :] = zrow             # separator / bottom pad

    wdw = wdw_ref[...]                                        # (9, hid), row = ky*3+kx
    w_rows = [wdw[t:t + 1, :] for t in range(9)]              # hoisted broadcasts
    bdw = bdw_ref[...]                                        # (1, hid)

    # edge masks built in-kernel (no lane-sparse HBM inputs)
    col = lax.broadcasted_iota(jnp.int32, (HW, 1), 0) % W
    at_left = col == 0
    at_right = col == W - 1

    h2_chunks = []
    for i in range(images_per_step):
        base = W + i * stride
        # 3 vertical slices; sublane-aligned whenever W % 8 == 0
        v_m = hp_ref[base - W:base - W + HW, :]               # dy = -1
        v_0 = hp_ref[base:base + HW, :]                       # dy =  0
        v_p = hp_ref[base + W:base + W + HW, :]               # dy = +1
        # combine the 3 vertical taps per kernel column, then shift/mask once per column
        c_l = v_m * w_rows[0] + v_0 * w_rows[3] + v_p * w_rows[6]   # kx = 0 (x-1)
        c_c = v_m * w_rows[1] + v_0 * w_rows[4] + v_p * w_rows[7]   # kx = 1
        c_r = v_m * w_rows[2] + v_0 * w_rows[5] + v_p * w_rows[8]   # kx = 2 (x+1)
        acc = c_c + bdw                                        # bias folded into init
        # roll on the XLU: out[flat] needs c_l[flat-1] (roll +1) and c_r[flat+1]
        # (roll -1, written as HW-1 to keep the shift non-negative).
        acc = acc + jnp.where(at_left, 0.0, pltpu.roll(c_l, shift=1, axis=0))
        acc = acc + jnp.where(at_right, 0.0, pltpu.roll(c_r, shift=HW - 1, axis=0))
        h2_chunks.append(_gelu(acc))
    h2 = h2_chunks[0] if images_per_step == 1 else jnp.concatenate(h2_chunks, axis=0)

    # ---- Conv2d(hid, hid, 1) + GELU (DsConv2d pointwise) --------------------
    h3 = jnp.dot(h2.astype(compute_dtype), wpw_ref[...],
                 preferred_element_type=f32) + bpw_ref[...]
    h3 = _gelu(h3)

    # ---- Conv2d(hid, dim, 1) -------------------------------------------------
    y = jnp.dot(h3.astype(compute_dtype), w2_ref[...],
                preferred_element_type=f32) + b2_ref[...]
    # TODO(synk): dim < 128 keeps this final store lane-masked (vst.msk); only
    # repack to a lane-dense slab if the store ever shows up as a measured cost.
    o_ref[...] = y.astype(o_ref.dtype)


def _images_per_step(B, HW, *, target_rows=256, max_rows=512):
    """Images folded into one grid step.

    Aim for >= target_rows GEMM rows per step (MXU row utilization, step-overhead
    amortization), keep >= 2 grid steps when B >= 2 (v7x megacore), and bound the
    live (rows, hid) f32 intermediates (vreg pressure / v7x 64 MiB VMEM)."""
    best = 1
    for d in range(1, B + 1):
        if B % d != 0:
            continue
        if B >= 2 and B // d < 2:          # keep both v7x TensorCores busy
            continue
        if d > 1 and d * HW > max_rows:    # bound live intermediates
            continue
        best = d
        if d * HW >= target_rows:
            break
    return best


def mix_feed_forward(x, params, *, compute_dtype=jnp.bfloat16,
                     vmem_limit_bytes=32 * 1024 * 1024):
    """MixFeedForward forward. x: (B, dim, H, W) NCHW float32 -> NCHW float32."""
    B, C, H, W = x.shape
    hid = params["w1"].shape[1]
    HW = H * W

    bblk = _images_per_step(B, HW)
    n_steps = B // bblk
    mblk = bblk * HW

    # one-time boundary layout change: NCHW -> (B*H*W, C) channels-last rows
    x_rows = x.astype(jnp.float32).transpose(0, 2, 3, 1).reshape(B * HW, C)

    kernel = functools.partial(_mix_ffn_kernel, H=H, W=W,
                               images_per_step=bblk, compute_dtype=compute_dtype)
    bcast = lambda i: (0, 0)

    # TODO(synk): for large H*W (e.g. 64x64) add a row-tiled grid with a W-pixel
    # halo so live intermediates and the scratch stay within v7x's 64 MiB VMEM.
    # TODO(synk): when B == 1, split the row axis into 2 "parallel" chunks so
    # both v7x TensorCores are used (single-TC v5e/v6e are unaffected).
    out = pl.pallas_call(
        kernel,
        out_shape=jax.ShapeDtypeStruct((B * HW, C), jnp.float32),
        grid=(n_steps,),
        in_specs=[
            pl.BlockSpec((mblk, C), lambda i: (i, 0)),       # x rows
            pl.BlockSpec((C, hid), bcast),                   # w1
            pl.BlockSpec((1, hid), bcast),                   # b1
            pl.BlockSpec((9, hid), bcast),                   # wdw (ky*3+kx major)
            pl.BlockSpec((1, hid), bcast),                   # bdw
            pl.BlockSpec((hid, hid), bcast),                 # wpw
            pl.BlockSpec((1, hid), bcast),                   # bpw
            pl.BlockSpec((hid, C), bcast),                   # w2
            pl.BlockSpec((1, C), bcast),                     # b2
        ],
        out_specs=pl.BlockSpec((mblk, C), lambda i: (i, 0)),
        scratch_shapes=[pltpu.VMEM((W + bblk * (HW + W), hid), jnp.float32)],
        compiler_params=pltpu.CompilerParams(
            dimension_semantics=("parallel",),               # batch chunks -> 2 TCs on v7x
            vmem_limit_bytes=vmem_limit_bytes,
        ),
    )(x_rows, params["w1"], params["b1"], params["wdw"], params["bdw"],
      params["wpw"], params["bpw"], params["w2"], params["b2"])
    return out.reshape(B, H, W, C).transpose(0, 3, 1, 2)


# ----------------------------------------------------------------------------
# parameters (PyTorch layouts) + one-time kernel-layout preprocessing
# ----------------------------------------------------------------------------
def make_torch_params(key, dim, expansion_factor):
    hid = dim * expansion_factor
    ks = iter(jax.random.split(key, 8))

    def w(shape, fan_in):
        return jax.random.normal(next(ks), shape, jnp.float32) / math.sqrt(fan_in)

    return {
        "ff1_w": w((hid, dim, 1, 1), dim), "ff1_b": w((hid,), hid),
        "dw_w": w((hid, 1, 3, 3), 9),      "dw_b": w((hid,), hid),
        "pw_w": w((hid, hid, 1, 1), hid),  "pw_b": w((hid,), hid),
        "ff2_w": w((dim, hid, 1, 1), hid), "ff2_b": w((dim,), dim),
    }


def prep_params(tp, compute_dtype=jnp.bfloat16):
    """Hoist every reshape / transpose / cast out of the per-step kernel path."""
    hid, dim = tp["ff1_w"].shape[0], tp["ff1_w"].shape[1]
    f32 = jnp.float32
    return {
        "w1":  tp["ff1_w"].reshape(hid, dim).T.astype(compute_dtype),   # (dim, hid)
        "b1":  tp["ff1_b"].reshape(1, hid).astype(f32),
        "wdw": tp["dw_w"].reshape(hid, 9).T.astype(f32),                # (9, hid)
        "bdw": tp["dw_b"].reshape(1, hid).astype(f32),
        "wpw": tp["pw_w"].reshape(hid, hid).T.astype(compute_dtype),    # (hid, hid)
        "bpw": tp["pw_b"].reshape(1, hid).astype(f32),
        "w2":  tp["ff2_w"].reshape(dim, hid).T.astype(compute_dtype),   # (hid, dim)
        "b2":  tp["ff2_b"].reshape(1, dim).astype(f32),
    }


# ----------------------------------------------------------------------------
# pure-JAX f32 reference (matches the PyTorch module)
# ----------------------------------------------------------------------------
def mix_feed_forward_reference(x, tp):
    gelu = lambda v: 0.5 * v * (1.0 + jax.scipy.special.erf(v * 0.7071067811865476))

    def conv1x1(x, w, b):
        y = jnp.einsum("bchw,oc->bohw", x, w.reshape(w.shape[0], w.shape[1]))
        return y + b[None, :, None, None]

    def dwconv3x3(x, w, b):
        B, C, H, W = x.shape
        xp = jnp.pad(x, ((0, 0), (0, 0), (1, 1), (1, 1)))
        acc = jnp.zeros_like(x)
        for ky in range(3):
            for kx in range(3):
                acc = acc + xp[:, :, ky:ky + H, kx:kx + W] * w[:, 0, ky, kx][None, :, None, None]
        return acc + b[None, :, None, None]

    h = gelu(conv1x1(x, tp["ff1_w"], tp["ff1_b"]))
    h = gelu(dwconv3x3(h, tp["dw_w"], tp["dw_b"]))
    h = gelu(conv1x1(h, tp["pw_w"], tp["pw_b"]))
    return conv1x1(h, tp["ff2_w"], tp["ff2_b"])


if __name__ == "__main__":
    key = jax.random.PRNGKey(0)
    pkey, xkey = jax.random.split(key)

    # Small shapes consistent with a SpikeFormer MiT stage: dim=32,
    # expansion_factor=8 (hidden=256 -> lane-dense GEMMs), 16x16 spatial so one
    # grid step already feeds the MXU with M=256 rows (W=16 keeps the dw slices
    # sublane-aligned).
    B, dim, H, W = 2, 32, 16, 16
    expansion_factor = 8

    tp = make_torch_params(pkey, dim, expansion_factor)
    params = prep_params(tp)
    x = jax.random.normal(xkey, (B, dim, H, W), jnp.float32)

    out = jax.jit(mix_feed_forward)(x, params)
    jax.block_until_ready(out)
    assert out.shape == (B, dim, H, W), out.shape

    ref = mix_feed_forward_reference(x, tp)
    err = float(jnp.max(jnp.abs(out - ref)))
    # bf16 GEMM operands dominate the error vs. the f32 reference (the erf
    # polynomial contributes < 2e-7); pass compute_dtype=jnp.float32 to
    # prep_params / mix_feed_forward for tight parity.
    assert err < 1e-1, err
    print("KERNEL_OK")
</pallas_src>

<mosaic_0001>
module attributes {stable_mosaic.version = 11 : i64} {
  func.func @_mix_ffn_kernel(%arg0: i32, %arg1: memref<256x32xf32, #tpu.memory_space<vmem>>, %arg2: memref<32x256xbf16, #tpu.memory_space<vmem>>, %arg3: memref<1x256xf32, #tpu.memory_space<vmem>>, %arg4: memref<9x256xf32, #tpu.memory_space<vmem>>, %arg5: memref<1x256xf32, #tpu.memory_space<vmem>>, %arg6: memref<256x256xbf16, #tpu.memory_space<vmem>>, %arg7: memref<1x256xf32, #tpu.memory_space<vmem>>, %arg8: memref<256x32xbf16, #tpu.memory_space<vmem>>, %arg9: memref<1x32xf32, #tpu.memory_space<vmem>>, %arg10: memref<256x32xf32, #tpu.memory_space<vmem>>, %arg11: memref<288x256xf32, #tpu.memory_space<vmem>>) attributes {dimension_semantics = [#tpu.dimension_semantics<parallel>], iteration_bounds = array<i64: 2>, scalar_prefetch = 0 : i64, scratch_operands = 1 : i64, tpu.core_type = #tpu.core_type<tc>, window_params = [{transform_indices = @transform_0, window_bounds = array<i64: 256, 32>}, {pipeline_mode = #tpu.pipeline_mode<synchronous>, transform_indices = @transform_1, window_bounds = array<i64: 32, 256>}, {pipeline_mode = #tpu.pipeline_mode<synchronous>, transform_indices = @transform_2, window_bounds = array<i64: 1, 256>}, {pipeline_mode = #tpu.pipeline_mode<synchronous>, transform_indices = @transform_3, window_bounds = array<i64: 9, 256>}, {pipeline_mode = #tpu.pipeline_mode<synchronous>, transform_indices = @transform_4, window_bounds = array<i64: 1, 256>}, {pipeline_mode = #tpu.pipeline_mode<synchronous>, transform_indices = @transform_5, window_bounds = array<i64: 256, 256>}, {pipeline_mode = #tpu.pipeline_mode<synchronous>, transform_indices = @transform_6, window_bounds = array<i64: 1, 256>}, {pipeline_mode = #tpu.pipeline_mode<synchronous>, transform_indices = @transform_7, window_bounds = array<i64: 256, 32>}, {pipeline_mode = #tpu.pipeline_mode<synchronous>, transform_indices = @transform_8, window_bounds = array<i64: 1, 32>}, {transform_indices = @transform_9, window_bounds = array<i64: 256, 32>}]} {
    %c0 = arith.constant 0 : index
    %c0_0 = arith.constant 0 : index
    %0 = vector.load %arg1[%c0, %c0_0] : memref<256x32xf32, #tpu.memory_space<vmem>>, vector<256x32xf32>
    %1 = arith.truncf %0 : vector<256x32xf32> to vector<256x32xbf16>
    %c0_1 = arith.constant 0 : index
    %c0_2 = arith.constant 0 : index
    %2 = vector.load %arg2[%c0_1, %c0_2] : memref<32x256xbf16, #tpu.memory_space<vmem>>, vector<32x256xbf16>
    %cst = arith.constant dense<0.000000e+00> : vector<256x256xf32>
    %3 = tpu.matmul %1, %2, %cst {dimension_numbers = #tpu.dot_dimension_numbers<[1], [0], [0], [1], [0, 0, 1, 1], [], []>} : vector<256x32xbf16>, vector<32x256xbf16>, vector<256x256xf32> -> vector<256x256xf32>
    %c0_3 = arith.constant 0 : index
    %c0_4 = arith.constant 0 : index
    %4 = vector.load %arg3[%c0_3, %c0_4] : memref<1x256xf32, #tpu.memory_space<vmem>>, vector<1x256xf32>
    %5 = vector.broadcast %4 : vector<1x256xf32> to vector<256x256xf32>
    %6 = arith.addf %3, %5 : vector<256x256xf32>
    %7 = math.absf %6 : vector<256x256xf32>
    %cst_5 = arith.constant 0.707106769 : f32
    %8 = vector.broadcast %cst_5 : f32 to vector<256x256xf32>
    %9 = arith.mulf %7, %8 : vector<256x256xf32>
    %cst_6 = arith.constant 0.327591091 : f32
    %10 = vector.broadcast %cst_6 : f32 to vector<256x256xf32>
    %11 = arith.mulf %10, %9 : vector<256x256xf32>
    %cst_7 = arith.constant 1.000000e+00 : f32
    %12 = vector.broadcast %cst_7 : f32 to vector<256x256xf32>
    %13 = arith.addf %12, %11 : vector<256x256xf32>
    %cst_8 = arith.constant 1.000000e+00 : f32
    %14 = vector.broadcast %cst_8 : f32 to vector<256x256xf32>
    %15 = arith.divf %14, %13 : vector<256x256xf32>
    %cst_9 = arith.constant 0.53070271 : f32
    %16 = vector.broadcast %cst_9 : f32 to vector<256x256xf32>
    %17 = arith.mulf %16, %15 : vector<256x256xf32>
    %cst_10 = arith.constant -0.72657603 : f32
    %18 = vector.broadcast %cst_10 : f32 to vector<256x256xf32>
    %19 = arith.addf %17, %18 : vector<256x256xf32>
    %20 = arith.mulf %19, %15 : vector<256x256xf32>
    %cst_11 = arith.constant 0.710706889 : f32
    %21 = vector.broadcast %cst_11 : f32 to vector<256x256xf32>
    %22 = arith.addf %20, %21 : vector<256x256xf32>
    %23 = arith.mulf %22, %15 : vector<256x256xf32>
    %cst_12 = arith.constant -0.142248362 : f32
    %24 = vector.broadcast %cst_12 : f32 to vector<256x256xf32>
    %25 = arith.addf %23, %24 : vector<256x256xf32>
    %26 = arith.mulf %25, %15 : vector<256x256xf32>
    %cst_13 = arith.constant 0.127414793 : f32
    %27 = vector.broadcast %cst_13 : f32 to vector<256x256xf32>
    %28 = arith.addf %26, %27 : vector<256x256xf32>
    %29 = arith.mulf %28, %15 : vector<256x256xf32>
    %cst_14 = arith.constant 0.000000e+00 : f32
    %30 = vector.broadcast %cst_14 : f32 to vector<256x256xf32>
    %31 = arith.subf %30, %9 : vector<256x256xf32>
    %32 = arith.mulf %31, %9 : vector<256x256xf32>
    %33 = math.exp %32 : vector<256x256xf32>
    %34 = arith.mulf %29, %33 : vector<256x256xf32>
    %cst_15 = arith.constant 0.000000e+00 : f32
    %35 = vector.broadcast %cst_15 : f32 to vector<256x256xf32>
    %36 = arith.cmpf oge, %6, %35 : vector<256x256xf32>
    %cst_16 = arith.constant 1.000000e+00 : f32
    %37 = vector.broadcast %cst_16 : f32 to vector<256x256xf32>
    %38 = arith.subf %37, %34 : vector<256x256xf32>
    %39 = arith.select %36, %38, %34 : vector<256x256xi1>, vector<256x256xf32>
    %40 = arith.mulf %6, %39 : vector<256x256xf32>
    %cst_17 = arith.constant 0.000000e+00 : f32
    %41 = vector.broadcast %cst_17 : f32 to vector<16x256xf32>
    %c0_18 = arith.constant 0 : index
    %c0_19 = arith.constant 0 : index
    %42 = vector.load %arg11[%c0_18, %c0_19] : memref<288x256xf32, #tpu.memory_space<vmem>>, vector<16x256xf32>
    tpu.vector_store %arg11[%c0_18, %c0_19], %41 {strides = array<i32>} : memref<288x256xf32, #tpu.memory_space<vmem>>, vector<16x256xf32>,
    %c16 = arith.constant 16 : index
    %c0_20 = arith.constant 0 : index
    %43 = vector.load %arg11[%c16, %c0_20] : memref<288x256xf32, #tpu.memory_space<vmem>>, vector<256x256xf32>
    tpu.vector_store %arg11[%c16, %c0_20], %40 {strides = array<i32>} : memref<288x256xf32, #tpu.memory_space<vmem>>, vector<256x256xf32>,
    %c272 = arith.constant 272 : index
    %c0_21 = arith.constant 0 : index
    %44 = vector.load %arg11[%c272, %c0_21] : memref<288x256xf32, #tpu.memory_space<vmem>>, vector<16x256xf32>
    tpu.vector_store %arg11[%c272, %c0_21], %41 {strides = array<i32>} : memref<288x256xf32, #tpu.memory_space<vmem>>, vector<16x256xf32>,
    %c0_22 = arith.constant 0 : index
    %c0_23 = arith.constant 0 : index
    %45 = vector.load %arg4[%c0_22, %c0_23] : memref<9x256xf32, #tpu.memory_space<vmem>>, vector<9x256xf32>
    %46 = vector.extract_strided_slice %45 {offsets = [0, 0], sizes = [1, 256], strides = [1, 1]} : vector<9x256xf32> to vector<1x256xf32>
    %47 = vector.extract_strided_slice %45 {offsets = [1, 0], sizes = [1, 256], strides = [1, 1]} : vector<9x256xf32> to vector<1x256xf32>
    %48 = vector.extract_strided_slice %45 {offsets = [2, 0], sizes = [1, 256], strides = [1, 1]} : vector<9x256xf32> to vector<1x256xf32>
    %49 = vector.extract_strided_slice %45 {offsets = [3, 0], sizes = [1, 256], strides = [1, 1]} : vector<9x256xf32> to vector<1x256xf32>
    %50 = vector.extract_strided_slice %45 {offsets = [4, 0], sizes = [1, 256], strides = [1, 1]} : vector<9x256xf32> to vector<1x256xf32>
    %51 = vector.extract_strided_slice %45 {offsets = [5, 0], sizes = [1, 256], strides = [1, 1]} : vector<9x256xf32> to vector<1x256xf32>
    %52 = vector.extract_strided_slice %45 {offsets = [6, 0], sizes = [1, 256], strides = [1, 1]} : vector<9x256xf32> to vector<1x256xf32>
    %53 = vector.extract_strided_slice %45 {offsets = [7, 0], sizes = [1, 256], strides = [1, 1]} : vector<9x256xf32> to vector<1x256xf32>
    %54 = vector.extract_strided_slice %45 {offsets = [8, 0], sizes = [1, 256], strides = [1, 1]} : vector<9x256xf32> to vector<1x256xf32>
    %c0_24 = arith.constant 0 : index
    %c0_25 = arith.constant 0 : index
    %55 = vector.load %arg5[%c0_24, %c0_25] : memref<1x256xf32, #tpu.memory_space<vmem>>, vector<1x256xf32>
    %56 = tpu.iota {dimensions = array<i32: 0>} : vector<256x1xi32>
    %c16_i32 = arith.constant 16 : i32
    %c0_i32 = arith.constant 0 : i32
    %57 = arith.cmpi eq, %c16_i32, %c0_i32 : i32
    %c1_i32 = arith.constant 1 : i32
    %58 = arith.select %57, %c1_i32, %c16_i32 : i32
    %59 = vector.broadcast %58 : i32 to vector<256x1xi32>
    %60 = arith.remsi %56, %59 : vector<256x1xi32>
    %c0_i32_26 = arith.constant 0 : i32
    %61 = vector.broadcast %c0_i32_26 : i32 to vector<256x1xi32>
    %62 = arith.cmpi ne, %60, %61 : vector<256x1xi32>
    %c0_i32_27 = arith.constant 0 : i32
    %63 = vector.broadcast %c0_i32_27 : i32 to vector<256x1xi32>
    %64 = arith.cmpi slt, %60, %63 : vector<256x1xi32>
    %c0_i32_28 = arith.constant 0 : i32
    %65 = arith.cmpi slt, %58, %c0_i32_28 : i32
    %66 = vector.broadcast %65 : i1 to vector<256x1xi1>
    %67 = vector.broadcast %66 : vector<256x1xi1> to vector<256x1xi1>
    %68 = arith.xori %64, %67 : vector<256x1xi1>
    %69 = arith.andi %68, %62 : vector<256x1xi1>
    %70 = vector.broadcast %58 : i32 to vector<256x1xi32>
    %71 = arith.addi %60, %70 : vector<256x1xi32>
    %72 = arith.select %69, %71, %60 : vector<256x1xi1>, vector<256x1xi32>
    %c0_i32_29 = arith.constant 0 : i32
    %73 = vector.broadcast %c0_i32_29 : i32 to vector<256x1xi32>
    %74 = arith.cmpi eq, %72, %73 : vector<256x1xi32>
    %c15_i32 = arith.constant 15 : i32
    %75 = vector.broadcast %c15_i32 : i32 to vector<256x1xi32>
    %76 = arith.cmpi eq, %72, %75 : vector<256x1xi32>
    %c0_30 = arith.constant 0 : index
    %c0_31 = arith.constant 0 : index
    %77 = vector.load %arg11[%c0_30, %c0_31] : memref<288x256xf32, #tpu.memory_space<vmem>>, vector<256x256xf32>
    %c16_32 = arith.constant 16 : index
    %c0_33 = arith.constant 0 : index
    %78 = vector.load %arg11[%c16_32, %c0_33] : memref<288x256xf32, #tpu.memory_space<vmem>>, vector<256x256xf32>
    %c32 = arith.constant 32 : index
    %c0_34 = arith.constant 0 : index
    %79 = vector.load %arg11[%c32, %c0_34] : memref<288x256xf32, #tpu.memory_space<vmem>>, vector<256x256xf32>
    %80 = vector.broadcast %46 : vector<1x256xf32> to vector<256x256xf32>
    %81 = arith.mulf %77, %80 : vector<256x256xf32>
    %82 = vector.broadcast %49 : vector<1x256xf32> to vector<256x256xf32>
    %83 = arith.mulf %78, %82 : vector<256x256xf32>
    %84 = arith.addf %81, %83 : vector<256x256xf32>
    %85 = vector.broadcast %52 : vector<1x256xf32> to vector<256x256xf32>
    %86 = arith.mulf %79, %85 : vector<256x256xf32>
    %87 = arith.addf %84, %86 : vector<256x256xf32>
    %88 = vector.broadcast %47 : vector<1x256xf32> to vector<256x256xf32>
    %89 = arith.mulf %77, %88 : vector<256x256xf32>
    %90 = vector.broadcast %50 : vector<1x256xf32> to vector<256x256xf32>
    %91 = arith.mulf %78, %90 : vector<256x256xf32>
    %92 = arith.addf %89, %91 : vector<256x256xf32>
    %93 = vector.broadcast %53 : vector<1x256xf32> to vector<256x256xf32>
    %94 = arith.mulf %79, %93 : vector<256x256xf32>
    %95 = arith.addf %92, %94 : vector<256x256xf32>
    %96 = vector.broadcast %48 : vector<1x256xf32> to vector<256x256xf32>
    %97 = arith.mulf %77, %96 : vector<256x256xf32>
    %98 = vector.broadcast %51 : vector<1x256xf32> to vector<256x256xf32>
    %99 = arith.mulf %78, %98 : vector<256x256xf32>
    %100 = arith.addf %97, %99 : vector<256x256xf32>
    %101 = vector.broadcast %54 : vector<1x256xf32> to vector<256x256xf32>
    %102 = arith.mulf %79, %101 : vector<256x256xf32>
    %103 = arith.addf %100, %102 : vector<256x256xf32>
    %104 = vector.broadcast %55 : vector<1x256xf32> to vector<256x256xf32>
    %105 = arith.addf %95, %104 : vector<256x256xf32>
    %c1_i32_35 = arith.constant 1 : i32
    %106 = tpu.dynamic_rotate %87 by %c1_i32_35 dim 0 : vector<256x256xf32>, i32 -> vector<256x256xf32>
    %cst_36 = arith.constant 0.000000e+00 : f32
    %107 = vector.shape_cast %74 : vector<256x1xi1> to vector<256x1xi1>
    %108 = vector.broadcast %107 : vector<256x1xi1> to vector<256x256xi1>
    %109 = vector.broadcast %cst_36 : f32 to vector<256x256xf32>
    %110 = arith.select %108, %109, %106 : vector<256x256xi1>, vector<256x256xf32>
    %111 = arith.addf %105, %110 : vector<256x256xf32>
    %c255_i32 = arith.constant 255 : i32
    %112 = tpu.dynamic_rotate %103 by %c255_i32 dim 0 : vector<256x256xf32>, i32 -> vector<256x256xf32>
    %cst_37 = arith.constant 0.000000e+00 : f32
    %113 = vector.shape_cast %76 : vector<256x1xi1> to vector<256x1xi1>
    %114 = vector.broadcast %113 : vector<256x1xi1> to vector<256x256xi1>
    %115 = vector.broadcast %cst_37 : f32 to vector<256x256xf32>
    %116 = arith.select %114, %115, %112 : vector<256x256xi1>, vector<256x256xf32>
    %117 = arith.addf %111, %116 : vector<256x256xf32>
    %118 = math.absf %117 : vector<256x256xf32>
    %cst_38 = arith.constant 0.707106769 : f32
    %119 = vector.broadcast %cst_38 : f32 to vector<256x256xf32>
    %120 = arith.mulf %118, %119 : vector<256x256xf32>
    %cst_39 = arith.constant 0.327591091 : f32
    %121 = vector.broadcast %cst_39 : f32 to vector<256x256xf32>
    %122 = arith.mulf %121, %120 : vector<256x256xf32>
    %cst_40 = arith.constant 1.000000e+00 : f32
    %123 = vector.broadcast %cst_40 : f32 to vector<256x256xf32>
    %124 = arith.addf %123, %122 : vector<256x256xf32>
    %cst_41 = arith.constant 1.000000e+00 : f32
    %125 = vector.broadcast %cst_41 : f32 to vector<256x256xf32>
    %126 = arith.divf %125, %124 : vector<256x256xf32>
    %cst_42 = arith.constant 0.53070271 : f32
    %127 = vector.broadcast %cst_42 : f32 to vector<256x256xf32>
    %128 = arith.mulf %127, %126 : vector<256x256xf32>
    %cst_43 = arith.constant -0.72657603 : f32
    %129 = vector.broadcast %cst_43 : f32 to vector<256x256xf32>
    %130 = arith.addf %128, %129 : vector<256x256xf32>
    %131 = arith.mulf %130, %126 : vector<256x256xf32>
    %cst_44 = arith.constant 0.710706889 : f32
    %132 = vector.broadcast %cst_44 : f32 to vector<256x256xf32>
    %133 = arith.addf %131, %132 : vector<256x256xf32>
    %134 = arith.mulf %133, %126 : vector<256x256xf32>
    %cst_45 = arith.constant -0.142248362 : f32
    %135 = vector.broadcast %cst_45 : f32 to vector<256x256xf32>
    %136 = arith.addf %134, %135 : vector<256x256xf32>
    %137 = arith.mulf %136, %126 : vector<256x256xf32>
    %cst_46 = arith.constant 0.127414793 : f32
    %138 = vector.broadcast %cst_46 : f32 to vector<256x256xf32>
    %139 = arith.addf %137, %138 : vector<256x256xf32>
    %140 = arith.mulf %139, %126 : vector<256x256xf32>
    %cst_47 = arith.constant 0.000000e+00 : f32
    %141 = vector.broadcast %cst_47 : f32 to vector<256x256xf32>
    %142 = arith.subf %141, %120 : vector<256x256xf32>
    %143 = arith.mulf %142, %120 : vector<256x256xf32>
    %144 = math.exp %143 : vector<256x256xf32>
    %145 = arith.mulf %140, %144 : vector<256x256xf32>
    %cst_48 = arith.constant 0.000000e+00 : f32
    %146 = vector.broadcast %cst_48 : f32 to vector<256x256xf32>
    %147 = arith.cmpf oge, %117, %146 : vector<256x256xf32>
    %cst_49 = arith.constant 1.000000e+00 : f32
    %148 = vector.broadcast %cst_49 : f32 to vector<256x256xf32>
    %149 = arith.subf %148, %145 : vector<256x256xf32>
    %150 = arith.select %147, %149, %145 : vector<256x256xi1>, vector<256x256xf32>
    %151 = arith.mulf %117, %150 : vector<256x256xf32>
    %152 = arith.truncf %151 : vector<256x256xf32> to vector<256x256xbf16>
    %c0_50 = arith.constant 0 : index
    %c0_51 = arith.constant 0 : index
    %153 = vector.load %arg6[%c0_50, %c0_51] : memref<256x256xbf16, #tpu.memory_space<vmem>>, vector<256x256xbf16>
    %cst_52 = arith.constant dense<0.000000e+00> : vector<256x256xf32>
    %154 = tpu.matmul %152, %153, %cst_52 {dimension_numbers = #tpu.dot_dimension_numbers<[1], [0], [0], [1], [0, 0, 1, 1], [], []>} : vector<256x256xbf16>, vector<256x256xbf16>, vector<256x256xf32> -> vector<256x256xf32>
    %c0_53 = arith.constant 0 : index
    %c0_54 = arith.constant 0 : index
    %155 = vector.load %arg7[%c0_53, %c0_54] : memref<1x256xf32, #tpu.memory_space<vmem>>, vector<1x256xf32>
    %156 = vector.broadcast %155 : vector<1x256xf32> to vector<256x256xf32>
    %157 = arith.addf %154, %156 : vector<256x256xf32>
    %158 = math.absf %157 : vector<256x256xf32>
    %cst_55 = arith.constant 0.707106769 : f32
    %159 = vector.broadcast %cst_55 : f32 to vector<256x256xf32>
    %160 = arith.mulf %158, %159 : vector<256x256xf32>
    %cst_56 = arith.constant 0.327591091 : f32
    %161 = vector.broadcast %cst_56 : f32 to vector<256x256xf32>
    %162 = arith.mulf %161, %160 : vector<256x256xf32>
    %cst_57 = arith.constant 1.000000e+00 : f32
    %163 = vector.broadcast %cst_57 : f32 to vector<256x256xf32>
    %164 = arith.addf %163, %162 : vector<256x256xf32>
    %cst_58 = arith.constant 1.000000e+00 : f32
    %165 = vector.broadcast %cst_58 : f32 to vector<256x256xf32>
    %166 = arith.divf %165, %164 : vector<256x256xf32>
    %cst_59 = arith.constant 0.53070271 : f32
    %167 = vector.broadcast %cst_59 : f32 to vector<256x256xf32>
    %168 = arith.mulf %167, %166 : vector<256x256xf32>
    %cst_60 = arith.constant -0.72657603 : f32
    %169 = vector.broadcast %cst_60 : f32 to vector<256x256xf32>
    %170 = arith.addf %168, %169 : vector<256x256xf32>
    %171 = arith.mulf %170, %166 : vector<256x256xf32>
    %cst_61 = arith.constant 0.710706889 : f32
    %172 = vector.broadcast %cst_61 : f32 to vector<256x256xf32>
    %173 = arith.addf %171, %172 : vector<256x256xf32>
    %174 = arith.mulf %173, %166 : vector<256x256xf32>
    %cst_62 = arith.constant -0.142248362 : f32
    %175 = vector.broadcast %cst_62 : f32 to vector<256x256xf32>
    %176 = arith.addf %174, %175 : vector<256x256xf32>
    %177 = arith.mulf %176, %166 : vector<256x256xf32>
    %cst_63 = arith.constant 0.127414793 : f32
    %178 = vector.broadcast %cst_63 : f32 to vector<256x256xf32>
    %179 = arith.addf %177, %178 : vector<256x256xf32>
    %180 = arith.mulf %179, %166 : vector<256x256xf32>
    %cst_64 = arith.constant 0.000000e+00 : f32
    %181 = vector.broadcast %cst_64 : f32 to vector<256x256xf32>
    %182 = arith.subf %181, %160 : vector<256x256xf32>
    %183 = arith.mulf %182, %160 : vector<256x256xf32>
    %184 = math.exp %183 : vector<256x256xf32>
    %185 = arith.mulf %180, %184 : vector<256x256xf32>
    %cst_65 = arith.constant 0.000000e+00 : f32
    %186 = vector.broadcast %cst_65 : f32 to vector<256x256xf32>
    %187 = arith.cmpf oge, %157, %186 : vector<256x256xf32>
    %cst_66 = arith.constant 1.000000e+00 : f32
    %188 = vector.broadcast %cst_66 : f32 to vector<256x256xf32>
    %189 = arith.subf %188, %185 : vector<256x256xf32>
    %190 = arith.select %187, %189, %185 : vector<256x256xi1>, vector<256x256xf32>
    %191 = arith.mulf %157, %190 : vector<256x256xf32>
    %192 = arith.truncf %191 : vector<256x256xf32> to vector<256x256xbf16>
    %c0_67 = arith.constant 0 : index
    %c0_68 = arith.constant 0 : index
    %193 = vector.load %arg8[%c0_67, %c0_68] : memref<256x32xbf16, #tpu.memory_space<vmem>>, vector<256x32xbf16>
    %cst_69 = arith.constant dense<0.000000e+00> : vector<256x32xf32>
    %194 = tpu.matmul %192, %193, %cst_69 {dimension_numbers = #tpu.dot_dimension_numbers<[1], [0], [0], [1], [0, 0, 1, 1], [], []>} : vector<256x256xbf16>, vector<256x32xbf16>, vector<256x32xf32> -> vector<256x32xf32>
    %c0_70 = arith.constant 0 : index
    %c0_71 = arith.constant 0 : index
    %195 = vector.load %arg9[%c0_70, %c0_71] : memref<1x32xf32, #tpu.memory_space<vmem>>, vector<1x32xf32>
    %196 = vector.broadcast %195 : vector<1x32xf32> to vector<256x32xf32>
    %197 = arith.addf %194, %196 : vector<256x32xf32>
    %c0_72 = arith.constant 0 : index
    %c0_73 = arith.constant 0 : index
    %198 = vector.load %arg10[%c0_72, %c0_73] : memref<256x32xf32, #tpu.memory_space<vmem>>, vector<256x32xf32>
    tpu.vector_store %arg10[%c0_72, %c0_73], %197 {strides = array<i32>} : memref<256x32xf32, #tpu.memory_space<vmem>>, vector<256x32xf32>,
    return
  }
  func.func @transform_0(%arg0: i32) -> (i32, i32) {
    %c0_i32 = arith.constant 0 : i32
    %c0_i32_0 = arith.constant 0 : i32
    return %arg0, %c0_i32 : i32, i32
  }
  func.func @transform_1(%arg0: i32) -> (i32, i32) {
    %c0_i32 = arith.constant 0 : i32
    %c0_i32_0 = arith.constant 0 : i32
    %c0_i32_1 = arith.constant 0 : i32
    return %c0_i32, %c0_i32_0 : i32, i32
  }
  func.func @transform_2(%arg0: i32) -> (i32, i32) {
    %c0_i32 = arith.constant 0 : i32
    %c0_i32_0 = arith.constant 0 : i32
    %c0_i32_1 = arith.constant 0 : i32
    return %c0_i32, %c0_i32_0 : i32, i32
  }
  func.func @transform_3(%arg0: i32) -> (i32, i32) {
    %c0_i32 = arith.constant 0 : i32
    %c0_i32_0 = arith.constant 0 : i32
    %c0_i32_1 = arith.constant 0 : i32
    return %c0_i32, %c0_i32_0 : i32, i32
  }
  func.func @transform_4(%arg0: i32) -> (i32, i32) {
    %c0_i32 = arith.constant 0 : i32
    %c0_i32_0 = arith.constant 0 : i32
    %c0_i32_1 = arith.constant 0 : i32
    return %c0_i32, %c0_i32_0 : i32, i32
  }
  func.func @transform_5(%arg0: i32) -> (i32, i32) {
    %c0_i32 = arith.constant 0 : i32
    %c0_i32_0 = arith.constant 0 : i32
    %c0_i32_1 = arith.constant 0 : i32
    return %c0_i32, %c0_i32_0 : i32, i32
  }
  func.func @transform_6(%arg0: i32) -> (i32, i32) {
    %c0_i32 = arith.constant 0 : i32
    %c0_i32_0 = arith.constant 0 : i32
    %c0_i32_1 = arith.constant 0 : i32
    return %c0_i32, %c0_i32_0 : i32, i32
  }
  func.func @transform_7(%arg0: i32) -> (i32, i32) {
    %c0_i32 = arith.constant 0 : i32
    %c0_i32_0 = arith.constant 0 : i32
    %c0_i32_1 = arith.constant 0 : i32
    return %c0_i32, %c0_i32_0 : i32, i32
  }
  func.func @transform_8(%arg0: i32) -> (i32, i32) {
    %c0_i32 = arith.constant 0 : i32
    %c0_i32_0 = arith.constant 0 : i32
    %c0_i32_1 = arith.constant 0 : i32
    return %c0_i32, %c0_i32_0 : i32, i32
  }
  func.func @transform_9(%arg0: i32) -> (i32, i32) {
    %c0_i32 = arith.constant 0 : i32
    %c0_i32_0 = arith.constant 0 : i32
    return %arg0, %c0_i32 : i32, i32
  }
}

</mosaic_0001>

<llo_original>
// kernel: mix_feed_forward.1
$region0: #{mix_feed_forward.1}
  #allocation0 [shape = 'u32[]', space=smem, size = 0x4, offset = 0x4, fixed_abs, tag = 'smem constant byte address 0x4 - core index']
  #allocation1 [shape = 'u32[144,128]{1,0:T(1,128)}', space=vmem, size = 0x12000, scoped, tag = 'internal scratch']
  #allocation2 [shape = 'f32[288,256]{1,0:T(8,128)}', space=vmem, size = 0x48000, scoped, tag = 'scratch operand']
  %s0 = inlined_call_operand.hbm [shape: f32[512,32], index: 0, kind: input, shape index: {}]
  %s1 = inlined_call_operand.vmem [shape: bf16[32,256], index: 1, kind: input, shape index: {}]
  %s2 = inlined_call_operand.vmem [shape: f32[1,256], index: 2, kind: input, shape index: {}]
  %s3 = inlined_call_operand.vmem [shape: f32[9,256], index: 3, kind: input, shape index: {}]
  %s4 = inlined_call_operand.vmem [shape: f32[1,256], index: 4, kind: input, shape index: {}]
  %s5 = inlined_call_operand.hbm [shape: bf16[256,256], index: 5, kind: input, shape index: {}]
  %s6 = inlined_call_operand.vmem [shape: f32[1,256], index: 6, kind: input, shape index: {}]
  %s7 = inlined_call_operand.vmem [shape: bf16[256,32], index: 7, kind: input, shape index: {}]
  %s8 = inlined_call_operand.vmem [shape: f32[1,32], index: 8, kind: input, shape index: {}]
  %s9 = inlined_call_operand.hbm [shape: f32[512,32], index: 9, kind: output, shape index: {}]
  %s10 = sld [smem:[#allocation0]]
  $region77: #{mix_feed_forward.1} parent=0
    _
  %s12 = ssub.s32 1, %s10
  %s13 = scalar_select 0, %s12, %s10
  $region1: #{mix_feed_forward.1} parent=0
    #allocation3 [shape = 'u8[262144]{0}', space=vmem, size = 0x40000, scoped, tag = 'input window, operand 0']
    #allocation4 [shape = 's32[2]{0}', space=sflag, size = 0x8, scoped, tag = 'scoped memory for mix_feed_forward.1']
    #allocation5 [shape = 's32[2]{0}', space=sflag, size = 0x8, scoped, tag = 'scoped memory for mix_feed_forward.1']
    #allocation6 [shape = 'u8[131072]{0}', space=vmem, size = 0x20000, scoped, tag = 'input window, operand 5, single buffered']
    #allocation7 [shape = 's32[1]{0}', space=sflag, size = 0x4, scoped, tag = 'scoped memory for mix_feed_forward.1']
    #allocation8 [shape = 'u8[262144]{0}', space=vmem, size = 0x40000, scoped, tag = 'output window, operand 0']
    %14 = vsyncpa [#allocation4], 0
    %s15 = scalar_lea.sflag [#allocation4], 1
    %16 = vsyncpa %s15, 0
    %17 = vsyncpa [#allocation7], 0
    %18 = vsyncpa [#allocation5], 0
    %s19 = scalar_lea.sflag [#allocation5], 1
    %20 = vsyncpa %s19, 0
    loop: start=0, step=1, limit=4
    $region2: #{mix_feed_forward.1} parent=1 // loop_pre_header
      _
    $region3: #{mix_feed_forward.1} parent=1 // loop_header
      %s22 = sphi 0, %s26
      %p23 = scmp.ge.s32.totalorder %s22, 4
      %s32 = sphi 0, %s34
      %s35 = sphi 0, %s32
      %s36 = sphi 0, %s35
      %s52 = sphi 0, %s36
      %s56 = sphi 0, %s56
      %s58 = sphi 0, %s56
      %s59 = sphi 0, %s58
      %s73 = sphi 0, %s59
      %s77 = sphi 0, %s77
      %s79 = sphi 0, %s77
      %s80 = sphi 0, %s79
      %s94 = sphi 0, %s80
      %s98 = sphi 0, %s98
      %s100 = sphi 0, %s98
      %s101 = sphi 0, %s100
      %s115 = sphi 0, %s101
      %s119 = sphi 0, %s119
      %s121 = sphi 0, %s119
      %s122 = sphi 0, %s121
      %s136 = sphi 0, %s122
      %s140 = sphi 0, %s140
      %s142 = sphi 0, %s140
      %s143 = sphi 0, %s142
      %s157 = sphi 0, %s143
      %s161 = sphi 0, %s161
      %s163 = sphi 0, %s161
      %s164 = sphi 0, %s163
      %s178 = sphi 0, %s164
      %s182 = sphi 0, %s182
      %s184 = sphi 0, %s182
      %s185 = sphi 0, %s184
      %s199 = sphi 0, %s185
      %s203 = sphi 0, %s203
      %s205 = sphi 0, %s203
      %s206 = sphi 0, %s205
      %s220 = sphi 0, %s206
      %s226 = sphi 0, %s228
      %s229 = sphi 0, %s226
      %s230 = sphi 0, %s229
      %s246 = sphi 0, %s230
    $region4: #{mix_feed_forward.1} parent=1 // loop_header_branch
      %25 = sbr.rel (%p23) target = $region8
    $region5: #{mix_feed_forward.1} parent=1 // loop_body
      %s27 = ssub.s32 %s22, 1
      %s28 = ssub.s32 %s22, 2
      %s29 = sadd.s32 %s22, 1
      %s30 = ssub.s32 %s22, %s29
      %p31 = scmp.eq.s32.totalorder %s30, 0
      %s33 = sadd.s32 %s32, 1
      %s34 = scalar_select %p31, %s32, %s33
      %p37 = pneg %p31
      %p38 = scmp.eq.s32.totalorder %s22, 1
      %p39 = por %p37, %p38
      %p40 = scmp.ne.s32.totalorder %s32, %s35
      %p41 = scmp.eq.s32.totalorder %s22, 0
      %p42 = por %p40, %p41
      %p43 = scmp.ne.s32.totalorder %s32, %s35
      %p44 = scmp.eq.s32.totalorder %s27, 1
      %p45 = por %p43, %p44
      %p46 = scmp.ne.s32.totalorder %s35, %s36
      %p47 = scmp.eq.s32.totalorder %s27, 0
      %p48 = por %p46, %p47
      %p49 = scmp.ne.s32.totalorder %s35, %s36
      %p50 = scmp.eq.s32.totalorder %s28, 1
      %p51 = por %p49, %p50
      %p53 = scmp.ne.s32.totalorder %s36, %s52
      %p54 = scmp.eq.s32.totalorder %s28, 0
      %p55 = por %p53, %p54
      %s57 = sadd.s32 %s56, 1
      %p60 = scmp.eq.s32.totalorder %s22, 1
      %p61 = scmp.ne.s32.totalorder %s56, %s58
      %p62 = scmp.eq.s32.totalorder %s22, 0
      %p63 = por %p61, %p62
      %p64 = scmp.ne.s32.totalorder %s56, %s58
      %p65 = scmp.eq.s32.totalorder %s27, 1
      %p66 = por %p64, %p65
      %p67 = scmp.ne.s32.totalorder %s58, %s59
      %p68 = scmp.eq.s32.totalorder %s27, 0
      %p69 = por %p67, %p68
      %p70 = scmp.ne.s32.totalorder %s58, %s59
      %p71 = scmp.eq.s32.totalorder %s28, 1
      %p72 = por %p70, %p71
      %p74 = scmp.ne.s32.totalorder %s59, %s73
      %p75 = scmp.eq.s32.totalorder %s28, 0
      %p76 = por %p74, %p75
      %s78 = sadd.s32 %s77, 1
      %p81 = scmp.eq.s32.totalorder %s22, 1
      %p82 = scmp.ne.s32.totalorder %s77, %s79
      %p83 = scmp.eq.s32.totalorder %s22, 0
      %p84 = por %p82, %p83
      %p85 = scmp.ne.s32.totalorder %s77, %s79
      %p86 = scmp.eq.s32.totalorder %s27, 1
      %p87 = por %p85, %p86
      %p88 = scmp.ne.s32.totalorder %s79, %s80
      %p89 = scmp.eq.s32.totalorder %s27, 0
      %p90 = por %p88, %p89
      %p91 = scmp.ne.s32.totalorder %s79, %s80
      %p92 = scmp.eq.s32.totalorder %s28, 1
      %p93 = por %p91, %p92
      %p95 = scmp.ne.s32.totalorder %s80, %s94
      %p96 = scmp.eq.s32.totalorder %s28, 0
      %p97 = por %p95, %p96
      %s99 = sadd.s32 %s98, 1
      %p102 = scmp.eq.s32.totalorder %s22, 1
      %p103 = scmp.ne.s32.totalorder %s98, %s100
      %p104 = scmp.eq.s32.totalorder %s22, 0
      %p105 = por %p103, %p104
      %p106 = scmp.ne.s32.totalorder %s98, %s100
      %p107 = scmp.eq.s32.totalorder %s27, 1
      %p108 = por %p106, %p107
      %p109 = scmp.ne.s32.totalorder %s100, %s101
      %p110 = scmp.eq.s32.totalorder %s27, 0
      %p111 = por %p109, %p110
      %p112 = scmp.ne.s32.totalorder %s100, %s101
      %p113 = scmp.eq.s32.totalorder %s28, 1
      %p114 = por %p112, %p113
      %p116 = scmp.ne.s32.totalorder %s101, %s115
      %p117 = scmp.eq.s32.totalorder %s28, 0
      %p118 = por %p116, %p117
      %s120 = sadd.s32 %s119, 1
      %p123 = scmp.eq.s32.totalorder %s22, 1
      %p124 = scmp.ne.s32.totalorder %s119, %s121
      %p125 = scmp.eq.s32.totalorder %s22, 0
      %p126 = por %p124, %p125
      %p127 = scmp.ne.s32.totalorder %s119, %s121
      %p128 = scmp.eq.s32.totalorder %s27, 1
      %p129 = por %p127, %p128
      %p130 = scmp.ne.s32.totalorder %s121, %s122
      %p131 = scmp.eq.s32.totalorder %s27, 0
      %p132 = por %p130, %p131
      %p133 = scmp.ne.s32.totalorder %s121, %s122
      %p134 = scmp.eq.s32.totalorder %s28, 1
      %p135 = por %p133, %p134
      %p137 = scmp.ne.s32.totalorder %s122, %s136
      %p138 = scmp.eq.s32.totalorder %s28, 0
      %p139 = por %p137, %p138
      %s141 = sadd.s32 %s140, 1
      %p144 = scmp.eq.s32.totalorder %s22, 1
      %p145 = scmp.ne.s32.totalorder %s140, %s142
      %p146 = scmp.eq.s32.totalorder %s22, 0
      %p147 = por %p145, %p146
      %p148 = scmp.ne.s32.totalorder %s140, %s142
      %p149 = scmp.eq.s32.totalorder %s27, 1
      %p150 = por %p148, %p149
      %p151 = scmp.ne.s32.totalorder %s142, %s143
      %p152 = scmp.eq.s32.totalorder %s27, 0
      %p153 = por %p151, %p152
      %p154 = scmp.ne.s32.totalorder %s142, %s143
      %p155 = scmp.eq.s32.totalorder %s28, 1
      %p156 = por %p154, %p155
      %p158 = scmp.ne.s32.totalorder %s143, %s157
      %p159 = scmp.eq.s32.totalorder %s28, 0
      %p160 = por %p158, %p159
      %s162 = sadd.s32 %s161, 1
      %p165 = scmp.eq.s32.totalorder %s22, 1
      %p166 = scmp.ne.s32.totalorder %s161, %s163
      %p167 = scmp.eq.s32.totalorder %s22, 0
      %p168 = por %p166, %p167
      %p169 = scmp.ne.s32.totalorder %s161, %s163
      %p170 = scmp.eq.s32.totalorder %s27, 1
      %p171 = por %p169, %p170
      %p172 = scmp.ne.s32.totalorder %s163, %s164
      %p173 = scmp.eq.s32.totalorder %s27, 0
      %p174 = por %p172, %p173
      %p175 = scmp.ne.s32.totalorder %s163, %s164
      %p176 = scmp.eq.s32.totalorder %s28, 1
      %p177 = por %p175, %p176
      %p179 = scmp.ne.s32.totalorder %s164, %s178
      %p180 = scmp.eq.s32.totalorder %s28, 0
      %p181 = por %p179, %p180
      %s183 = sadd.s32 %s182, 1
      %p186 = scmp.eq.s32.totalorder %s22, 1
      %p187 = scmp.ne.s32.totalorder %s182, %s184
      %p188 = scmp.eq.s32.totalorder %s22, 0
      %p189 = por %p187, %p188
      %p190 = scmp.ne.s32.totalorder %s182, %s184
      %p191 = scmp.eq.s32.totalorder %s27, 1
      %p192 = por %p190, %p191
      %p193 = scmp.ne.s32.totalorder %s184, %s185
      %p194 = scmp.eq.s32.totalorder %s27, 0
      %p195 = por %p193, %p194
      %p196 = scmp.ne.s32.totalorder %s184, %s185
      %p197 = scmp.eq.s32.totalorder %s28, 1
      %p198 = por %p196, %p197
      %p200 = scmp.ne.s32.totalorder %s185, %s199
      %p201 = scmp.eq.s32.totalorder %s28, 0
      %p202 = por %p200, %p201
      %s204 = sadd.s32 %s203, 1
      %p207 = scmp.eq.s32.totalorder %s22, 1
      %p208 = scmp.ne.s32.totalorder %s203, %s205
      %p209 = scmp.eq.s32.totalorder %s22, 0
      %p210 = por %p208, %p209
      %p211 = scmp.ne.s32.totalorder %s203, %s205
      %p212 = scmp.eq.s32.totalorder %s27, 1
      %p213 = por %p211, %p212
      %p214 = scmp.ne.s32.totalorder %s205, %s206
      %p215 = scmp.eq.s32.totalorder %s27, 0
      %p216 = por %p214, %p215
      %p217 = scmp.ne.s32.totalorder %s205, %s206
      %p218 = scmp.eq.s32.totalorder %s28, 1
      %p219 = por %p217, %p218
      %p221 = scmp.ne.s32.totalorder %s206, %s220
      %p222 = scmp.eq.s32.totalorder %s28, 0
      %p223 = por %p221, %p222
      %s224 = ssub.s32 %s22, %s29
      %p225 = scmp.eq.s32.totalorder %s224, 0
      %s227 = sadd.s32 %s226, 1
      %s228 = scalar_select %p225, %s226, %s227
      %p231 = pneg %p225
      %p232 = scmp.eq.s32.totalorder %s22, 1
      %p233 = por %p231, %p232
      %p234 = scmp.ne.s32.totalorder %s226, %s229
      %p235 = scmp.eq.s32.totalorder %s22, 0
      %p236 = por %p234, %p235
      %p237 = scmp.ne.s32.totalorder %s226, %s229
      %p238 = scmp.eq.s32.totalorder %s27, 1
      %p239 = por %p237, %p238
      %p240 = scmp.ne.s32.totalorder %s229, %s230
      %p241 = scmp.eq.s32.totalorder %s27, 0
      %p242 = por %p240, %p241
      %p243 = scmp.ne.s32.totalorder %s229, %s230
      %p244 = scmp.eq.s32.totalorder %s28, 1
      %p245 = por %p243, %p244
      %p247 = scmp.ne.s32.totalorder %s230, %s246
      %p248 = scmp.eq.s32.totalorder %s28, 0
      %p249 = por %p247, %p248
      %p250 = scmp.le.s32.totalorder 1, %s22
      %p251 = scmp.lt.s32.totalorder %s22, 3
      %p252 = pnand %p250, %p251
      %p253 = pneg %p252
      // Predicated region
      $region9: #{mix_feed_forward.1} parent=5 // pred_check
        _
      $region10: #{mix_feed_forward.1} parent=5 // pred_check_branch
        %255 = sbr.rel (%p252) target = $region12
      $region11: #{mix_feed_forward.1} parent=5 // pred_region
        %s256 = ssub.s32 %s22, 1
        // Predicated region
        $region13: #{mix_feed_forward.1} parent=11 // pred_check
          %p257 = pneg %p69
        $region14: #{mix_feed_forward.1} parent=11 // pred_check_branch
          %259 = sbr.rel (%p257) target = $region16
        $region15: #{mix_feed_forward.1} parent=11 // pred_region
          _
        $region16: #{mix_feed_forward.1} parent=11 // pred_fallthru
          _
        // Predicated region
        $region17: #{mix_feed_forward.1} parent=11 // pred_check
          %p260 = pneg %p90
        $region18: #{mix_feed_forward.1} parent=11 // pred_check_branch
          %262 = sbr.rel (%p260) target = $region20
        $region19: #{mix_feed_forward.1} parent=11 // pred_region
          _
        $region20: #{mix_feed_forward.1} parent=11 // pred_fallthru
          _
        // Predicated region
        $region21: #{mix_feed_forward.1} parent=11 // pred_check
          %p263 = pneg %p111
        $region22: #{mix_feed_forward.1} parent=11 // pred_check_branch
          %265 = sbr.rel (%p263) target = $region24
        $region23: #{mix_feed_forward.1} parent=11 // pred_region
          _
        $region24: #{mix_feed_forward.1} parent=11 // pred_fallthru
          _
        // Predicated region
        $region25: #{mix_feed_forward.1} parent=11 // pred_check
          %p266 = pneg %p132
        $region26: #{mix_feed_forward.1} parent=11 // pred_check_branch
          %268 = sbr.rel (%p266) target = $region28
        $region27: #{mix_feed_forward.1} parent=11 // pred_region
          _
        $region28: #{mix_feed_forward.1} parent=11 // pred_fallthru
          _
        // Predicated region
        $region29: #{mix_feed_forward.1} parent=11 // pred_check
          %p269 = pneg %p153
        $region30: #{mix_feed_forward.1} parent=11 // pred_check_branch
          %271 = sbr.rel (%p269) target = $region32
        $region31: #{mix_feed_forward.1} parent=11 // pred_region
          %s273 = ssub.s32 4096, 4096
          %274 = vsyncadd [#allocation7], %s273
          %s275 = sshll.u32 [#allocation6], 4
          %s276 = int_to_ptr.vmem [resolvable:$true] %s275
          %281 = dma.hbm_to_vmem [thread:$0]  %s5, 4096, %s276, [#allocation7], 128, 128, 8
        $region32: #{mix_feed_forward.1} parent=11 // pred_fallthru
          _
        // Predicated region
        $region33: #{mix_feed_forward.1} parent=11 // pred_check
          %p282 = pneg %p174
        $region34: #{mix_feed_forward.1} parent=11 // pred_check_branch
          %284 = sbr.rel (%p282) target = $region36
        $region35: #{mix_feed_forward.1} parent=11 // pred_region
          _
        $region36: #{mix_feed_forward.1} parent=11 // pred_fallthru
          _
        // Predicated region
        $region37: #{mix_feed_forward.1} parent=11 // pred_check
          %p285 = pneg %p195
        $region38: #{mix_feed_forward.1} parent=11 // pred_check_branch
          %287 = sbr.rel (%p285) target = $region40
        $region39: #{mix_feed_forward.1} parent=11 // pred_region
          _
        $region40: #{mix_feed_forward.1} parent=11 // pred_fallthru
          _
        // Predicated region
        $region41: #{mix_feed_forward.1} parent=11 // pred_check
          %p288 = pneg %p216
        $region42: #{mix_feed_forward.1} parent=11 // pred_check_branch
          %290 = sbr.rel (%p288) target = $region44
        $region43: #{mix_feed_forward.1} parent=11 // pred_region
          _
        $region44: #{mix_feed_forward.1} parent=11 // pred_fallthru
          _
      $region12: #{mix_feed_forward.1} parent=5 // pred_fallthru
        _
      %p291 = scmp.lt.s32.totalorder %s22, 2
      // Predicated region
      $region45: #{mix_feed_forward.1} parent=5 // pred_check
        %p292 = pneg %p291
      $region46: #{mix_feed_forward.1} parent=5 // pred_check_branch
        %294 = sbr.rel (%p292) target = $region48
      $region47: #{mix_feed_forward.1} parent=5 // pred_region
        // Predicated region
        $region49: #{mix_feed_forward.1} parent=47 // pred_check
          %p295 = pneg %p42
        $region50: #{mix_feed_forward.1} parent=47 // pred_check_branch
          %297 = sbr.rel (%p295) target = $region52
        $region51: #{mix_feed_forward.1} parent=47 // pred_region
          %s298 = sand.u32 %s32, 1
          %s299 = scalar_lea.sflag [#allocation4], %s298
          %s300 = sand.u32 %s32, 1
          %s301 = smul.addr %s300, 256
          %s302 = scalar_lea.vmem [#allocation3], %s301
          %s303 = smul.u32 32, %s22
          %s305 = ssub.s32 4096, 4096
          %306 = vsyncadd %s299, %s305
          %s307 = smul.addr %s303, 128
          %s308 = scalar_lea.hbm %s0, %s307
          %s309 = sshll.u32 %s302, 4
          %s310 = int_to_ptr.vmem [resolvable:$true] %s309
          %315 = dma.hbm_to_vmem [thread:$0]  %s308, 4096, %s310, %s299, 128, 128, 8
        $region52: #{mix_feed_forward.1} parent=47 // pred_fallthru
          _
      $region48: #{mix_feed_forward.1} parent=5 // pred_fallthru
        _
      %p316 = scmp.le.s32.totalorder 1, %s22
      %p317 = scmp.lt.s32.totalorder %s22, 3
      %p318 = pnand %p316, %p317
      %p319 = pneg %p318
      // Predicated region
      $region53: #{mix_feed_forward.1} parent=5 // pred_check
        _
      $region54: #{mix_feed_forward.1} parent=5 // pred_check_branch
        %321 = sbr.rel (%p318) target = $region56
      $region55: #{mix_feed_forward.1} parent=5 // pred_region
        %s322 = ssub.s32 %s22, 1
        %s323 = sand.u32 %s35, 1
        %s324 = scalar_lea.sflag [#allocation4], %s323
        %s325 = sand.u32 %s35, 1
        %s326 = smul.addr %s325, 256
        %s327 = scalar_lea.vmem [#allocation3], %s326
        // Predicated region
        $region57: #{mix_feed_forward.1} parent=55 // pred_check
          %p328 = pneg %p48
        $region58: #{mix_feed_forward.1} parent=55 // pred_check_branch
          %330 = sbr.rel (%p328) target = $region60
        $region59: #{mix_feed_forward.1} parent=55 // pred_region
          %331 = dma.done %s324, 4096
        $region60: #{mix_feed_forward.1} parent=55 // pred_fallthru
          _
        // Predicated region
        $region61: #{mix_feed_forward.1} parent=55 // pred_check
          %p332 = pneg %p153
        $region62: #{mix_feed_forward.1} parent=55 // pred_check_branch
          %334 = sbr.rel (%p332) target = $region64
        $region63: #{mix_feed_forward.1} parent=55 // pred_region
          %335 = dma.done [#allocation7], 4096
        $region64: #{mix_feed_forward.1} parent=55 // pred_fallthru
          _
        %s336 = sand.u32 %s35, 1
        %s337 = scalar_lea.sflag [#allocation4], %s336
        %s338 = sand.u32 %s35, 1
        %s339 = smul.addr %s338, 256
        %s340 = scalar_lea.vmem [#allocation3], %s339
        %p341 = pneg %p48
        %p342 = pneg %p45
        %p343 = pneg %p69
        %p344 = pneg %p66
        %p345 = pneg %p90
        %p346 = pneg %p87
        %p347 = pneg %p111
        %p348 = pneg %p108
        %p349 = pneg %p132
        %p350 = pneg %p129
        %p351 = pneg %p153
        %p352 = pneg %p150
        %p353 = pneg %p174
        %p354 = pneg %p171
        %p355 = pneg %p195
        %p356 = pneg %p192
        %p357 = pneg %p216
        %p358 = pneg %p213
        %p359 = pneg %p242
        %p360 = pneg %p239
        %s361 = sand.u32 %s229, 1
        %s362 = scalar_lea.sflag [#allocation5], %s361
        %s363 = sand.u32 %s229, 1
        %s364 = smul.addr %s363, 256
        %s365 = scalar_lea.vmem [#allocation8], %s364
        %s366 = smul.u32 32, %s27
        %s367 = smul.u32 32, %s27
        %v369 = vld [vmem:[%s327] sm:$0xff]
        %v370 = vld [vmem:[%s327 + $0x8] sm:$0xff]
        %v371 = vld [vmem:[%s327 + $0x10] sm:$0xff]
        %v372 = vld [vmem:[%s327 + $0x18] sm:$0xff]
        %v373 = vld [vmem:[%s327 + $0x20] sm:$0xff]
        %v374 = vld [vmem:[%s327 + $0x28] sm:$0xff]
        %v375 = vld [vmem:[%s327 + $0x30] sm:$0xff]
        %v376 = vld [vmem:[%s327 + $0x38] sm:$0xff]
        %v377 = vld [vmem:[%s327 + $0x40] sm:$0xff]
        %v378 = vld [vmem:[%s327 + $0x48] sm:$0xff]
        %v379 = vld [vmem:[%s327 + $0x50] sm:$0xff]
        %v380 = vld [vmem:[%s327 + $0x58] sm:$0xff]
        %v381 = vld [vmem:[%s327 + $0x60] sm:$0xff]
        %v382 = vld [vmem:[%s327 + $0x68] sm:$0xff]
        %v383 = vld [vmem:[%s327 + $0x70] sm:$0xff]
        %v384 = vld [vmem:[%s327 + $0x78] sm:$0xff]
        %v385 = vld [vmem:[%s327 + $0x80] sm:$0xff]
        %v386 = vld [vmem:[%s327 + $0x88] sm:$0xff]
        %v387 = vld [vmem:[%s327 + $0x90] sm:$0xff]
        %v388 = vld [vmem:[%s327 + $0x98] sm:$0xff]
        %v389 = vld [vmem:[%s327 + $0xa0] sm:$0xff]
        %v390 = vld [vmem:[%s327 + $0xa8] sm:$0xff]
        %v391 = vld [vmem:[%s327 + $0xb0] sm:$0xff]
        %v392 = vld [vmem:[%s327 + $0xb8] sm:$0xff]
        %v393 = vld [vmem:[%s327 + $0xc0] sm:$0xff]
        %v394 = vld [vmem:[%s327 + $0xc8] sm:$0xff]
        %v395 = vld [vmem:[%s327 + $0xd0] sm:$0xff]
        %v396 = vld [vmem:[%s327 + $0xd8] sm:$0xff]
        %v397 = vld [vmem:[%s327 + $0xe0] sm:$0xff]
        %v398 = vld [vmem:[%s327 + $0xe8] sm:$0xff]
        %v399 = vld [vmem:[%s327 + $0xf0] sm:$0xff]
        %v400 = vld [vmem:[%s327 + $0xf8] sm:$0xff]
        %v401 = vpack.c.bf16 %v370, %v369
        %v402 = vpack.c.bf16 %v372, %v371
        %v403 = vpack.c.bf16 %v374, %v373
        %v404 = vpack.c.bf16 %v376, %v375
        %v405 = vpack.c.bf16 %v378, %v377
        %v406 = vpack.c.bf16 %v380, %v379
        %v407 = vpack.c.bf16 %v382, %v381
        %v408 = vpack.c.bf16 %v384, %v383
        %v409 = vpack.c.bf16 %v386, %v385
        %v410 = vpack.c.bf16 %v388, %v387
        %v411 = vpack.c.bf16 %v390, %v389
        %v412 = vpack.c.bf16 %v392, %v391
        %v413 = vpack.c.bf16 %v394, %v393
        %v414 = vpack.c.bf16 %v396, %v395
        %v415 = vpack.c.bf16 %v398, %v397
        %v416 = vpack.c.bf16 %v400, %v399
        %v417 = vld [vmem:[%s1] sm:$0xff]
        %v418 = vld [vmem:[%s1 + $0x8] sm:$0xff]
        %v419 = vld [vmem:[%s1 + $0x10] sm:$0xff]
        %v420 = vld [vmem:[%s1 + $0x18] sm:$0xff]
        %v421 = vld [vmem:[%s2] sm:$0x3]
        %v423 = vlaneseq
        %v424 = vshrl.u32 %v423, 7
        %v425 = vsub.s32 0, %v424
        %v426 = vrot.slane %v421, %v425
        %v427 = vlaneseq
        %v428 = vshrl.u32 %v427, 7
        %v429 = vsub.s32 1, %v428
        %v430 = vrot.slane %v421, %v429
        %v437 = vunpack.c.l.b16 %v417
        %v438 = vunpack.c.h.b16 %v417
        %v439 = vunpack.c.l.b16 %v418
        %v440 = vunpack.c.h.b16 %v418
        %v441 = vunpack.c.l.b16 %v419
        %v442 = vunpack.c.h.b16 %v419
        %v443 = vunpack.c.l.b16 %v420
        %v444 = vunpack.c.h.b16 %v420
        %v445 = vpack.c.b16 %v439, %v437
        %v446 = vpack.c.b16 %v440, %v438
        %v447 = vpack.c.b16 %v443, %v441
        %v448 = vpack.c.b16 %v444, %v442
        %vm453 = vcmask 261120
        %v455 = vsel %vm453, %v401, 0
        %v458 = vsel %vm453, %v402, 0
        %v461 = vsel %vm453, %v403, 0
        %v464 = vsel %vm453, %v404, 0
        %v467 = vsel %vm453, %v405, 0
        %v470 = vsel %vm453, %v406, 0
        %v473 = vsel %vm453, %v407, 0
        %v476 = vsel %vm453, %v408, 0
        %v479 = vsel %vm453, %v409, 0
        %v482 = vsel %vm453, %v410, 0
        %v485 = vsel %vm453, %v411, 0
        %v488 = vsel %vm453, %v412, 0
        %v491 = vsel %vm453, %v413, 0
        %v494 = vsel %vm453, %v414, 0
        %v497 = vsel %vm453, %v415, 0
        %v500 = vsel %vm453, %v416, 0
        %502 = vmatprep.subr.bf16.mxu0 0
        %503 = vmatpush1.bf16.msra.mxu0 0
        %504 = vmatprep.subr.bf16.mxu0 0
        %505 = vmatpush1.bf16.msra.mxu0 0
        %506 = vmatprep.subr.bf16.mxu0 0
        %507 = vmatpush1.bf16.msra.mxu0 0
        %508 = vmatprep.subr.bf16.mxu0 0
        %509 = vmatpush1.bf16.msra.mxu0 0
        %510 = vmatprep.subr.bf16.mxu0 0
        %511 = vmatpush1.bf16.msra.mxu0 0
        %512 = vmatprep.subr.bf16.mxu0 0
        %513 = vmatpush1.bf16.msra.mxu0 0
        %514 = vmatprep.subr.bf16.mxu0 %v448
        %515 = vmatpush1.bf16.msra.mxu0 %v447
        %516 = vmatprep.subr.bf16.mxu0 %v446
        %517 = vmatpush1.bf16.msra.mxu0 %v445
        %518 = vmatprep.subr.bf16.mxu0 0
        %519 = vmatpush2.bf16.msra.mxu0 0
        %520 = vmatprep.subr.bf16.mxu0 0
        %521 = vmatpush2.bf16.msra.mxu0 0
        %522 = vmatprep.subr.bf16.mxu0 0
        %523 = vmatpush2.bf16.msra.mxu0 0
        %524 = vmatprep.subr.bf16.mxu0 0
        %525 = vmatpush2.bf16.msra.mxu0 0
        %526 = vmatprep.subr.bf16.mxu0 0
        %527 = vmatpush2.bf16.msra.mxu0 0
        %528 = vmatprep.subr.bf16.mxu0 0
        %529 = vmatpush2.bf16.msra.mxu0 0
        %530 = vmatprep.subr.bf16.mxu0 0
        %531 = vmatpush2.bf16.msra.mxu0 0
        %532 = vmatprep.subr.bf16.mxu0 0
        %533 = vmatpush2.bf16.msra.mxu0 0
        %534 = vmatprep.mubr.bf16.mxu0 0
        %535 = vmatmul.mubr.bf16.gmra.mxu0 %v455
        %v536 = vpop.f32.mrf.mxu0
        %v537 = vadd.f32 %v426, %v536
        %v538 = vpop.f32.mrf.mxu0
        %v539 = vadd.f32 %v430, %v538
        %v540 = vpop.f32.mrf.mxu0
        %v541 = vadd.f32 %v426, %v540
        %v542 = vpop.f32.mrf.mxu0
        %v543 = vadd.f32 %v430, %v542
        %544 = vmatprep.mubr.bf16.mxu0 0
        %545 = vmatmul.mubr.bf16.gmra.mxu0 %v458
        %v546 = vpop.f32.mrf.mxu0
        %v547 = vadd.f32 %v426, %v546
        %v548 = vpop.f32.mrf.mxu0
        %v549 = vadd.f32 %v430, %v548
        %v550 = vpop.f32.mrf.mxu0
        %v551 = vadd.f32 %v426, %v550
        %v552 = vpop.f32.mrf.mxu0
        %v553 = vadd.f32 %v430, %v552
        %554 = vmatprep.mubr.bf16.mxu0 0
        %555 = vmatmul.mubr.bf16.gmra.mxu0 %v461
        %v556 = vpop.f32.mrf.mxu0
        %v557 = vadd.f32 %v426, %v556
        %v558 = vpop.f32.mrf.mxu0
        %v559 = vadd.f32 %v430, %v558
        %v560 = vpop.f32.mrf.mxu0
        %v561 = vadd.f32 %v426, %v560
        %v562 = vpop.f32.mrf.mxu0
        %v563 = vadd.f32 %v430, %v562
        %564 = vmatprep.mubr.bf16.mxu0 0
        %565 = vmatmul.mubr.bf16.gmra.mxu0 %v464
        %v566 = vpop.f32.mrf.mxu0
        %v567 = vadd.f32 %v426, %v566
        %v568 = vpop.f32.mrf.mxu0
        %v569 = vadd.f32 %v430, %v568
        %v570 = vpop.f32.mrf.mxu0
        %v571 = vadd.f32 %v426, %v570
        %v572 = vpop.f32.mrf.mxu0
        %v573 = vadd.f32 %v430, %v572
        %574 = vmatprep.mubr.bf16.mxu0 0
        %575 = vmatmul.mubr.bf16.gmra.mxu0 %v467
        %v576 = vpop.f32.mrf.mxu0
        %v577 = vadd.f32 %v426, %v576
        %v578 = vpop.f32.mrf.mxu0
        %v579 = vadd.f32 %v430, %v578
        %v580 = vpop.f32.mrf.mxu0
        %v581 = vadd.f32 %v426, %v580
        %v582 = vpop.f32.mrf.mxu0
        %v583 = vadd.f32 %v430, %v582
        %584 = vmatprep.mubr.bf16.mxu0 0
        %585 = vmatmul.mubr.bf16.gmra.mxu0 %v470
        %v586 = vpop.f32.mrf.mxu0
        %v587 = vadd.f32 %v426, %v586
        %v588 = vpop.f32.mrf.mxu0
        %v589 = vadd.f32 %v430, %v588
        %v590 = vpop.f32.mrf.mxu0
        %v591 = vadd.f32 %v426, %v590
        %v592 = vpop.f32.mrf.mxu0
        %v593 = vadd.f32 %v430, %v592
        %594 = vmatprep.mubr.bf16.mxu0 0
        %595 = vmatmul.mubr.bf16.gmra.mxu0 %v473
        %v596 = vpop.f32.mrf.mxu0
        %v597 = vadd.f32 %v426, %v596
        %v598 = vpop.f32.mrf.mxu0
        %v599 = vadd.f32 %v430, %v598
        %v600 = vpop.f32.mrf.mxu0
        %v601 = vadd.f32 %v426, %v600
        %v602 = vpop.f32.mrf.mxu0
        %v603 = vadd.f32 %v430, %v602
        %604 = vmatprep.mubr.bf16.mxu0 0
        %605 = vmatmul.mubr.bf16.gmra.mxu0 %v476
        %v606 = vpop.f32.mrf.mxu0
        %v607 = vadd.f32 %v426, %v606
        %v608 = vpop.f32.mrf.mxu0
        %v609 = vadd.f32 %v430, %v608
        %v610 = vpop.f32.mrf.mxu0
        %v611 = vadd.f32 %v426, %v610
        %v612 = vpop.f32.mrf.mxu0
        %v613 = vadd.f32 %v430, %v612
        %614 = vmatprep.mubr.bf16.mxu0 0
        %615 = vmatmul.mubr.bf16.gmra.mxu0 %v479
        %v616 = vpop.f32.mrf.mxu0
        %v617 = vadd.f32 %v426, %v616
        %v618 = vpop.f32.mrf.mxu0
        %v619 = vadd.f32 %v430, %v618
        %v620 = vpop.f32.mrf.mxu0
        %v621 = vadd.f32 %v426, %v620
        %v622 = vpop.f32.mrf.mxu0
        %v623 = vadd.f32 %v430, %v622
        %624 = vmatprep.mubr.bf16.mxu0 0
        %625 = vmatmul.mubr.bf16.gmra.mxu0 %v482
        %v626 = vpop.f32.mrf.mxu0
        %v627 = vadd.f32 %v426, %v626
        %v628 = vpop.f32.mrf.mxu0
        %v629 = vadd.f32 %v430, %v628
        %v630 = vpop.f32.mrf.mxu0
        %v631 = vadd.f32 %v426, %v630
        %v632 = vpop.f32.mrf.mxu0
        %v633 = vadd.f32 %v430, %v632
        %634 = vmatprep.mubr.bf16.mxu0 0
        %635 = vmatmul.mubr.bf16.gmra.mxu0 %v485
        %v636 = vpop.f32.mrf.mxu0
        %v637 = vadd.f32 %v426, %v636
        %v638 = vpop.f32.mrf.mxu0
        %v639 = vadd.f32 %v430, %v638
        %v640 = vpop.f32.mrf.mxu0
        %v641 = vadd.f32 %v426, %v640
        %v642 = vpop.f32.mrf.mxu0
        %v643 = vadd.f32 %v430, %v642
        %644 = vmatprep.mubr.bf16.mxu0 0
        %645 = vmatmul.mubr.bf16.gmra.mxu0 %v488
        %v646 = vpop.f32.mrf.mxu0
        %v647 = vadd.f32 %v426, %v646
        %v648 = vpop.f32.mrf.mxu0
        %v649 = vadd.f32 %v430, %v648
        %v650 = vpop.f32.mrf.mxu0
        %v651 = vadd.f32 %v426, %v650
        %v652 = vpop.f32.mrf.mxu0
        %v653 = vadd.f32 %v430, %v652
        %654 = vmatprep.mubr.bf16.mxu0 0
        %655 = vmatmul.mubr.bf16.gmra.mxu0 %v491
        %v656 = vpop.f32.mrf.mxu0
        %v657 = vadd.f32 %v426, %v656
        %v658 = vpop.f32.mrf.mxu0
        %v659 = vadd.f32 %v430, %v658
        %v660 = vpop.f32.mrf.mxu0
        %v661 = vadd.f32 %v426, %v660
        %v662 = vpop.f32.mrf.mxu0
        %v663 = vadd.f32 %v430, %v662
        %664 = vmatprep.mubr.bf16.mxu0 0
        %665 = vmatmul.mubr.bf16.gmra.mxu0 %v494
        %v666 = vpop.f32.mrf.mxu0
        %v667 = vadd.f32 %v426, %v666
        %v668 = vpop.f32.mrf.mxu0
        %v669 = vadd.f32 %v430, %v668
        %v670 = vpop.f32.mrf.mxu0
        %v671 = vadd.f32 %v426, %v670
        %v672 = vpop.f32.mrf.mxu0
        %v673 = vadd.f32 %v430, %v672
        %674 = vmatprep.mubr.bf16.mxu0 0
        %675 = vmatmul.mubr.bf16.gmra.mxu0 %v497
        %v676 = vpop.f32.mrf.mxu0
        %v677 = vadd.f32 %v426, %v676
        %v678 = vpop.f32.mrf.mxu0
        %v679 = vadd.f32 %v430, %v678
        %v680 = vpop.f32.mrf.mxu0
        %v681 = vadd.f32 %v426, %v680
        %v682 = vpop.f32.mrf.mxu0
        %v683 = vadd.f32 %v430, %v682
        %684 = vmatprep.mubr.bf16.mxu0 0
        %685 = vmatmul.mubr.bf16.gmra.mxu0 %v500
        %v686 = vpop.f32.mrf.mxu0
        %v687 = vadd.f32 %v426, %v686
        %v688 = vpop.f32.mrf.mxu0
        %v689 = vadd.f32 %v430, %v688
        %v690 = vpop.f32.mrf.mxu0
        %v691 = vadd.f32 %v426, %v690
        %v692 = vpop.f32.mrf.mxu0
        %v693 = vadd.f32 %v430, %v692
        %694 = vdwg.mxu0
        %v695 = vand.u32 2147483647, %v537
        %v696 = vand.u32 2147483647, %v539
        %v697 = vand.u32 2147483647, %v541
        %v698 = vand.u32 2147483647, %v543
        %v699 = vand.u32 2147483647, %v547
        %v700 = vand.u32 2147483647, %v549
        %v701 = vand.u32 2147483647, %v551
        %v702 = vand.u32 2147483647, %v553
        %v703 = vand.u32 2147483647, %v557
        %v704 = vand.u32 2147483647, %v559
        %v705 = vand.u32 2147483647, %v561
        %v706 = vand.u32 2147483647, %v563
        %v707 = vand.u32 2147483647, %v567
        %v708 = vand.u32 2147483647, %v569
        %v709 = vand.u32 2147483647, %v571
        %v710 = vand.u32 2147483647, %v573
        %v711 = vand.u32 2147483647, %v577
        %v712 = vand.u32 2147483647, %v579
        %v713 = vand.u32 2147483647, %v581
        %v714 = vand.u32 2147483647, %v583
        %v715 = vand.u32 2147483647, %v587
        %v716 = vand.u32 2147483647, %v589
        %v717 = vand.u32 2147483647, %v591
        %v718 = vand.u32 2147483647, %v593
        %v719 = vand.u32 2147483647, %v597
        %v720 = vand.u32 2147483647, %v599
        %v721 = vand.u32 2147483647, %v601
        %v722 = vand.u32 2147483647, %v603
        %v723 = vand.u32 2147483647, %v607
        %v724 = vand.u32 2147483647, %v609
        %v725 = vand.u32 2147483647, %v611
        %v726 = vand.u32 2147483647, %v613
        %v727 = vand.u32 2147483647, %v617
        %v728 = vand.u32 2147483647, %v619
        %v729 = vand.u32 2147483647, %v621
        %v730 = vand.u32 2147483647, %v623
        %v731 = vand.u32 2147483647, %v627
        %v732 = vand.u32 2147483647, %v629
        %v733 = vand.u32 2147483647, %v631
        %v734 = vand.u32 2147483647, %v633
        %v735 = vand.u32 2147483647, %v637
        %v736 = vand.u32 2147483647, %v639
        %v737 = vand.u32 2147483647, %v641
        %v738 = vand.u32 2147483647, %v643
        %v739 = vand.u32 2147483647, %v647
        %v740 = vand.u32 2147483647, %v649
        %v741 = vand.u32 2147483647, %v651
        %v742 = vand.u32 2147483647, %v653
        %v743 = vand.u32 2147483647, %v657
        %v744 = vand.u32 2147483647, %v659
        %v745 = vand.u32 2147483647, %v661
        %v746 = vand.u32 2147483647, %v663
        %v747 = vand.u32 2147483647, %v667
        %v748 = vand.u32 2147483647, %v669
        %v749 = vand.u32 2147483647, %v671
        %v750 = vand.u32 2147483647, %v673
        %v751 = vand.u32 2147483647, %v677
        %v752 = vand.u32 2147483647, %v679
        %v753 = vand.u32 2147483647, %v681
        %v754 = vand.u32 2147483647, %v683
        %v755 = vand.u32 2147483647, %v687
        %v756 = vand.u32 2147483647, %v689
        %v757 = vand.u32 2147483647, %v691
        %v758 = vand.u32 2147483647, %v693
        %v759 = vmul.f32 %v695, 0.70710677
        %v760 = vmul.f32 %v696, 0.70710677
        %v761 = vmul.f32 %v697, 0.70710677
        %v762 = vmul.f32 %v698, 0.70710677
        %v763 = vmul.f32 %v699, 0.70710677
        %v764 = vmul.f32 %v700, 0.70710677
        %v765 = vmul.f32 %v701, 0.70710677
        %v766 = vmul.f32 %v702, 0.70710677
        %v767 = vmul.f32 %v703, 0.70710677
        %v768 = vmul.f32 %v704, 0.70710677
        %v769 = vmul.f32 %v705, 0.70710677
        %v770 = vmul.f32 %v706, 0.70710677
        %v771 = vmul.f32 %v707, 0.70710677
        %v772 = vmul.f32 %v708, 0.70710677
        %v773 = vmul.f32 %v709, 0.70710677
        %v774 = vmul.f32 %v710, 0.70710677
        %v775 = vmul.f32 %v711, 0.70710677
        %v776 = vmul.f32 %v712, 0.70710677
        %v777 = vmul.f32 %v713, 0.70710677
        %v778 = vmul.f32 %v714, 0.70710677
        %v779 = vmul.f32 %v715, 0.70710677
        %v780 = vmul.f32 %v716, 0.70710677
        %v781 = vmul.f32 %v717, 0.70710677
        %v782 = vmul.f32 %v718, 0.70710677
        %v783 = vmul.f32 %v719, 0.70710677
        %v784 = vmul.f32 %v720, 0.70710677
        %v785 = vmul.f32 %v721, 0.70710677
        %v786 = vmul.f32 %v722, 0.70710677
        %v787 = vmul.f32 %v723, 0.70710677
        %v788 = vmul.f32 %v724, 0.70710677
        %v789 = vmul.f32 %v725, 0.70710677
        %v790 = vmul.f32 %v726, 0.70710677
        %v791 = vmul.f32 %v727, 0.70710677
        %v792 = vmul.f32 %v728, 0.70710677
        %v793 = vmul.f32 %v729, 0.70710677
        %v794 = vmul.f32 %v730, 0.70710677
        %v795 = vmul.f32 %v731, 0.70710677
        %v796 = vmul.f32 %v732, 0.70710677
        %v797 = vmul.f32 %v733, 0.70710677
        %v798 = vmul.f32 %v734, 0.70710677
        %v799 = vmul.f32 %v735, 0.70710677
        %v800 = vmul.f32 %v736, 0.70710677
        %v801 = vmul.f32 %v737, 0.70710677
        %v802 = vmul.f32 %v738, 0.70710677
        %v803 = vmul.f32 %v739, 0.70710677
        %v804 = vmul.f32 %v740, 0.70710677
        %v805 = vmul.f32 %v741, 0.70710677
        %v806 = vmul.f32 %v742, 0.70710677
        %v807 = vmul.f32 %v743, 0.70710677
        %v808 = vmul.f32 %v744, 0.70710677
        %v809 = vmul.f32 %v745, 0.70710677
        %v810 = vmul.f32 %v746, 0.70710677
        %v811 = vmul.f32 %v747, 0.70710677
        %v812 = vmul.f32 %v748, 0.70710677
        %v813 = vmul.f32 %v749, 0.70710677
        %v814 = vmul.f32 %v750, 0.70710677
        %v815 = vmul.f32 %v751, 0.70710677
        %v816 = vmul.f32 %v752, 0.70710677
        %v817 = vmul.f32 %v753, 0.70710677
        %v818 = vmul.f32 %v754, 0.70710677
        %v819 = vmul.f32 %v755, 0.70710677
        %v820 = vmul.f32 %v756, 0.70710677
        %v821 = vmul.f32 %v757, 0.70710677
        %v822 = vmul.f32 %v758, 0.70710677
        %v823 = vmul.f32 %v759, 0.3275911
        %v824 = vmul.f32 %v760, 0.3275911
        %v825 = vmul.f32 %v761, 0.3275911
        %v826 = vmul.f32 %v762, 0.3275911
        %v827 = vmul.f32 %v763, 0.3275911
        %v828 = vmul.f32 %v764, 0.3275911
        %v829 = vmul.f32 %v765, 0.3275911
        %v830 = vmul.f32 %v766, 0.3275911
        %v831 = vmul.f32 %v767, 0.3275911
        %v832 = vmul.f32 %v768, 0.3275911
        %v833 = vmul.f32 %v769, 0.3275911
        %v834 = vmul.f32 %v770, 0.3275911
        %v835 = vmul.f32 %v771, 0.3275911
        %v836 = vmul.f32 %v772, 0.3275911
        %v837 = vmul.f32 %v773, 0.3275911
        %v838 = vmul.f32 %v774, 0.3275911
        %v839 = vmul.f32 %v775, 0.3275911
        %v840 = vmul.f32 %v776, 0.3275911
        %v841 = vmul.f32 %v777, 0.3275911
        %v842 = vmul.f32 %v778, 0.3275911
        %v843 = vmul.f32 %v779, 0.3275911
        %v844 = vmul.f32 %v780, 0.3275911
        %v845 = vmul.f32 %v781, 0.3275911
        %v846 = vmul.f32 %v782, 0.3275911
        %v847 = vmul.f32 %v783, 0.3275911
        %v848 = vmul.f32 %v784, 0.3275911
        %v849 = vmul.f32 %v785, 0.3275911
        %v850 = vmul.f32 %v786, 0.3275911
        %v851 = vmul.f32 %v787, 0.3275911
        %v852 = vmul.f32 %v788, 0.3275911
        %v853 = vmul.f32 %v789, 0.3275911
        %v854 = vmul.f32 %v790, 0.3275911
        %v855 = vmul.f32 %v791, 0.3275911
        %v856 = vmul.f32 %v792, 0.3275911
        %v857 = vmul.f32 %v793, 0.3275911
        %v858 = vmul.f32 %v794, 0.3275911
        %v859 = vmul.f32 %v795, 0.3275911
        %v860 = vmul.f32 %v796, 0.3275911
        %v861 = vmul.f32 %v797, 0.3275911
        %v862 = vmul.f32 %v798, 0.3275911
        %v863 = vmul.f32 %v799, 0.3275911
        %v864 = vmul.f32 %v800, 0.3275911
        %v865 = vmul.f32 %v801, 0.3275911
        %v866 = vmul.f32 %v802, 0.3275911
        %v867 = vmul.f32 %v803, 0.3275911
        %v868 = vmul.f32 %v804, 0.3275911
        %v869 = vmul.f32 %v805, 0.3275911
        %v870 = vmul.f32 %v806, 0.3275911
        %v871 = vmul.f32 %v807, 0.3275911
        %v872 = vmul.f32 %v808, 0.3275911
        %v873 = vmul.f32 %v809, 0.3275911
        %v874 = vmul.f32 %v810, 0.3275911
        %v875 = vmul.f32 %v811, 0.3275911
        %v876 = vmul.f32 %v812, 0.3275911
        %v877 = vmul.f32 %v813, 0.3275911
        %v878 = vmul.f32 %v814, 0.3275911
        %v879 = vmul.f32 %v815, 0.3275911
        %v880 = vmul.f32 %v816, 0.3275911
        %v881 = vmul.f32 %v817, 0.3275911
        %v882 = vmul.f32 %v818, 0.3275911
        %v883 = vmul.f32 %v819, 0.3275911
        %v884 = vmul.f32 %v820, 0.3275911
        %v885 = vmul.f32 %v821, 0.3275911
        %v886 = vmul.f32 %v822, 0.3275911
        %v887 = vadd.f32 %v823, 1.0
        %v888 = vadd.f32 %v824, 1.0
        %v889 = vadd.f32 %v825, 1.0
        %v890 = vadd.f32 %v826, 1.0
        %v891 = vadd.f32 %v827, 1.0
        %v892 = vadd.f32 %v828, 1.0
        %v893 = vadd.f32 %v829, 1.0
        %v894 = vadd.f32 %v830, 1.0
        %v895 = vadd.f32 %v831, 1.0
        %v896 = vadd.f32 %v832, 1.0
        %v897 = vadd.f32 %v833, 1.0
        %v898 = vadd.f32 %v834, 1.0
        %v899 = vadd.f32 %v835, 1.0
        %v900 = vadd.f32 %v836, 1.0
        %v901 = vadd.f32 %v837, 1.0
        %v902 = vadd.f32 %v838, 1.0
        %v903 = vadd.f32 %v839, 1.0
        %v904 = vadd.f32 %v840, 1.0
        %v905 = vadd.f32 %v841, 1.0
        %v906 = vadd.f32 %v842, 1.0
        %v907 = vadd.f32 %v843, 1.0
        %v908 = vadd.f32 %v844, 1.0
        %v909 = vadd.f32 %v845, 1.0
        %v910 = vadd.f32 %v846, 1.0
        %v911 = vadd.f32 %v847, 1.0
        %v912 = vadd.f32 %v848, 1.0
        %v913 = vadd.f32 %v849, 1.0
        %v914 = vadd.f32 %v850, 1.0
        %v915 = vadd.f32 %v851, 1.0
        %v916 = vadd.f32 %v852, 1.0
        %v917 = vadd.f32 %v853, 1.0
        %v918 = vadd.f32 %v854, 1.0
        %v919 = vadd.f32 %v855, 1.0
        %v920 = vadd.f32 %v856, 1.0
        %v921 = vadd.f32 %v857, 1.0
        %v922 = vadd.f32 %v858, 1.0
        %v923 = vadd.f32 %v859, 1.0
        %v924 = vadd.f32 %v860, 1.0
        %v925 = vadd.f32 %v861, 1.0
        %v926 = vadd.f32 %v862, 1.0
        %v927 = vadd.f32 %v863, 1.0
        %v928 = vadd.f32 %v864, 1.0
        %v929 = vadd.f32 %v865, 1.0
        %v930 = vadd.f32 %v866, 1.0
        %v931 = vadd.f32 %v867, 1.0
        %v932 = vadd.f32 %v868, 1.0
        %v933 = vadd.f32 %v869, 1.0
        %v934 = vadd.f32 %v870, 1.0
        %v935 = vadd.f32 %v871, 1.0
        %v936 = vadd.f32 %v872, 1.0
        %v937 = vadd.f32 %v873, 1.0
        %v938 = vadd.f32 %v874, 1.0
        %v939 = vadd.f32 %v875, 1.0
        %v940 = vadd.f32 %v876, 1.0
        %v941 = vadd.f32 %v877, 1.0
        %v942 = vadd.f32 %v878, 1.0
        %v943 = vadd.f32 %v879, 1.0
        %v944 = vadd.f32 %v880, 1.0
        %v945 = vadd.f32 %v881, 1.0
        %v946 = vadd.f32 %v882, 1.0
        %v947 = vadd.f32 %v883, 1.0
        %v948 = vadd.f32 %v884, 1.0
        %v949 = vadd.f32 %v885, 1.0
        %v950 = vadd.f32 %v886, 1.0
        %v951 = vrcp.pop %v887
        %v952 = vmul.f32 1.0, %v951
        %v953 = vrcp.pop %v888
        %v954 = vmul.f32 1.0, %v953
        %v955 = vrcp.pop %v889
        %v956 = vmul.f32 1.0, %v955
        %v957 = vrcp.pop %v890
        %v958 = vmul.f32 1.0, %v957
        %v959 = vrcp.pop %v891
        %v960 = vmul.f32 1.0, %v959
        %v961 = vrcp.pop %v892
        %v962 = vmul.f32 1.0, %v961
        %v963 = vrcp.pop %v893
        %v964 = vmul.f32 1.0, %v963
        %v965 = vrcp.pop %v894
        %v966 = vmul.f32 1.0, %v965
        %v967 = vrcp.pop %v895
        %v968 = vmul.f32 1.0, %v967
        %v969 = vrcp.pop %v896
        %v970 = vmul.f32 1.0, %v969
        %v971 = vrcp.pop %v897
        %v972 = vmul.f32 1.0, %v971
        %v973 = vrcp.pop %v898
        %v974 = vmul.f32 1.0, %v973
        %v975 = vrcp.pop %v899
        %v976 = vmul.f32 1.0, %v975
        %v977 = vrcp.pop %v900
        %v978 = vmul.f32 1.0, %v977
        %v979 = vrcp.pop %v901
        %v980 = vmul.f32 1.0, %v979
        %v981 = vrcp.pop %v902
        %v982 = vmul.f32 1.0, %v981
        %v983 = vrcp.pop %v903
        %v984 = vmul.f32 1.0, %v983
        %v985 = vrcp.pop %v904
        %v986 = vmul.f32 1.0, %v985
        %v987 = vrcp.pop %v905
        %v988 = vmul.f32 1.0, %v987
        %v989 = vrcp.pop %v906
        %v990 = vmul.f32 1.0, %v989
        %v991 = vrcp.pop %v907
        %v992 = vmul.f32 1.0, %v991
        %v993 = vrcp.pop %v908
        %v994 = vmul.f32 1.0, %v993
        %v995 = vrcp.pop %v909
        %v996 = vmul.f32 1.0, %v995
        %v997 = vrcp.pop %v910
        %v998 = vmul.f32 1.0, %v997
        %v999 = vrcp.pop %v911
        %v1000 = vmul.f32 1.0, %v999
        %v1001 = vrcp.pop %v912
        %v1002 = vmul.f32 1.0, %v1001
        %v1003 = vrcp.pop %v913
        %v1004 = vmul.f32 1.0, %v1003
        %v1005 = vrcp.pop %v914
        %v1006 = vmul.f32 1.0, %v1005
        %v1007 = vrcp.pop %v915
        %v1008 = vmul.f32 1.0, %v1007
        %v1009 = vrcp.pop %v916
        %v1010 = vmul.f32 1.0, %v1009
        %v1011 = vrcp.pop %v917
        %v1012 = vmul.f32 1.0, %v1011
        %v1013 = vrcp.pop %v918
        %v1014 = vmul.f32 1.0, %v1013
        %v1015 = vrcp.pop %v919
        %v1016 = vmul.f32 1.0, %v1015
        %v1017 = vrcp.pop %v920
        %v1018 = vmul.f32 1.0, %v1017
        %v1019 = vrcp.pop %v921
        %v1020 = vmul.f32 1.0, %v1019
        %v1021 = vrcp.pop %v922
        %v1022 = vmul.f32 1.0, %v1021
        %v1023 = vrcp.pop %v923
        %v1024 = vmul.f32 1.0, %v1023
        %v1025 = vrcp.pop %v924
        %v1026 = vmul.f32 1.0, %v1025
        %v1027 = vrcp.pop %v925
        %v1028 = vmul.f32 1.0, %v1027
        %v1029 = vrcp.pop %v926
        %v1030 = vmul.f32 1.0, %v1029
        %v1031 = vrcp.pop %v927
        %v1032 = vmul.f32 1.0, %v1031
        %v1033 = vrcp.pop %v928
        %v1034 = vmul.f32 1.0, %v1033
        %v1035 = vrcp.pop %v929
        %v1036 = vmul.f32 1.0, %v1035
        %v1037 = vrcp.pop %v930
        %v1038 = vmul.f32 1.0, %v1037
        %v1039 = vrcp.pop %v931
        %v1040 = vmul.f32 1.0, %v1039
        %v1041 = vrcp.pop %v932
        %v1042 = vmul.f32 1.0, %v1041
        %v1043 = vrcp.pop %v933
        %v1044 = vmul.f32 1.0, %v1043
        %v1045 = vrcp.pop %v934
        %v1046 = vmul.f32 1.0, %v1045
        %v1047 = vrcp.pop %v935
        %v1048 = vmul.f32 1.0, %v1047
        %v1049 = vrcp.pop %v936
        %v1050 = vmul.f32 1.0, %v1049
        %v1051 = vrcp.pop %v937
        %v1052 = vmul.f32 1.0, %v1051
        %v1053 = vrcp.pop %v938
        %v1054 = vmul.f32 1.0, %v1053
        %v1055 = vrcp.pop %v939
        %v1056 = vmul.f32 1.0, %v1055
        %v1057 = vrcp.pop %v940
        %v1058 = vmul.f32 1.0, %v1057
        %v1059 = vrcp.pop %v941
        %v1060 = vmul.f32 1.0, %v1059
        %v1061 = vrcp.pop %v942
        %v1062 = vmul.f32 1.0, %v1061
        %v1063 = vrcp.pop %v943
        %v1064 = vmul.f32 1.0, %v1063
        %v1065 = vrcp.pop %v944
        %v1066 = vmul.f32 1.0, %v1065
        %v1067 = vrcp.pop %v945
        %v1068 = vmul.f32 1.0, %v1067
        %v1069 = vrcp.pop %v946
        %v1070 = vmul.f32 1.0, %v1069
        %v1071 = vrcp.pop %v947
        %v1072 = vmul.f32 1.0, %v1071
        %v1073 = vrcp.pop %v948
        %v1074 = vmul.f32 1.0, %v1073
        %v1075 = vrcp.pop %v949
        %v1076 = vmul.f32 1.0, %v1075
        %v1077 = vrcp.pop %v950
        %v1078 = vmul.f32 1.0, %v1077
        %v1079 = vmul.f32 %v952, 0.5307027
        %v1080 = vmul.f32 %v954, 0.5307027
        %v1081 = vmul.f32 %v956, 0.5307027
        %v1082 = vmul.f32 %v958, 0.5307027
        %v1083 = vmul.f32 %v960, 0.5307027
        %v1084 = vmul.f32 %v962, 0.5307027
        %v1085 = vmul.f32 %v964, 0.5307027
        %v1086 = vmul.f32 %v966, 0.5307027
        %v1087 = vmul.f32 %v968, 0.5307027
        %v1088 = vmul.f32 %v970, 0.5307027
        %v1089 = vmul.f32 %v972, 0.5307027
        %v1090 = vmul.f32 %v974, 0.5307027
        %v1091 = vmul.f32 %v976, 0.5307027
        %v1092 = vmul.f32 %v978, 0.5307027
        %v1093 = vmul.f32 %v980, 0.5307027
        %v1094 = vmul.f32 %v982, 0.5307027
        %v1095 = vmul.f32 %v984, 0.5307027
        %v1096 = vmul.f32 %v986, 0.5307027
        %v1097 = vmul.f32 %v988, 0.5307027
        %v1098 = vmul.f32 %v990, 0.5307027
        %v1099 = vmul.f32 %v992, 0.5307027
        %v1100 = vmul.f32 %v994, 0.5307027
        %v1101 = vmul.f32 %v996, 0.5307027
        %v1102 = vmul.f32 %v998, 0.5307027
        %v1103 = vmul.f32 %v1000, 0.5307027
        %v1104 = vmul.f32 %v1002, 0.5307027
        %v1105 = vmul.f32 %v1004, 0.5307027
        %v1106 = vmul.f32 %v1006, 0.5307027
        %v1107 = vmul.f32 %v1008, 0.5307027
        %v1108 = vmul.f32 %v1010, 0.5307027
        %v1109 = vmul.f32 %v1012, 0.5307027
        %v1110 = vmul.f32 %v1014, 0.5307027
        %v1111 = vmul.f32 %v1016, 0.5307027
        %v1112 = vmul.f32 %v1018, 0.5307027
        %v1113 = vmul.f32 %v1020, 0.5307027
        %v1114 = vmul.f32 %v1022, 0.5307027
        %v1115 = vmul.f32 %v1024, 0.5307027
        %v1116 = vmul.f32 %v1026, 0.5307027
        %v1117 = vmul.f32 %v1028, 0.5307027
        %v1118 = vmul.f32 %v1030, 0.5307027
        %v1119 = vmul.f32 %v1032, 0.5307027
        %v1120 = vmul.f32 %v1034, 0.5307027
        %v1121 = vmul.f32 %v1036, 0.5307027
        %v1122 = vmul.f32 %v1038, 0.5307027
        %v1123 = vmul.f32 %v1040, 0.5307027
        %v1124 = vmul.f32 %v1042, 0.5307027
        %v1125 = vmul.f32 %v1044, 0.5307027
        %v1126 = vmul.f32 %v1046, 0.5307027
        %v1127 = vmul.f32 %v1048, 0.5307027
        %v1128 = vmul.f32 %v1050, 0.5307027
        %v1129 = vmul.f32 %v1052, 0.5307027
        %v1130 = vmul.f32 %v1054, 0.5307027
        %v1131 = vmul.f32 %v1056, 0.5307027
        %v1132 = vmul.f32 %v1058, 0.5307027
        %v1133 = vmul.f32 %v1060, 0.5307027
        %v1134 = vmul.f32 %v1062, 0.5307027
        %v1135 = vmul.f32 %v1064, 0.5307027
        %v1136 = vmul.f32 %v1066, 0.5307027
        %v1137 = vmul.f32 %v1068, 0.5307027
        %v1138 = vmul.f32 %v1070, 0.5307027
        %v1139 = vmul.f32 %v1072, 0.5307027
        %v1140 = vmul.f32 %v1074, 0.5307027
        %v1141 = vmul.f32 %v1076, 0.5307027
        %v1142 = vmul.f32 %v1078, 0.5307027
        %v1143 = vadd.f32 %v1079, -0.72657603
        %v1144 = vadd.f32 %v1080, -0.72657603
        %v1145 = vadd.f32 %v1081, -0.72657603
        %v1146 = vadd.f32 %v1082, -0.72657603
        %v1147 = vadd.f32 %v1083, -0.72657603
        %v1148 = vadd.f32 %v1084, -0.72657603
        %v1149 = vadd.f32 %v1085, -0.72657603
        %v1150 = vadd.f32 %v1086, -0.72657603
        %v1151 = vadd.f32 %v1087, -0.72657603
        %v1152 = vadd.f32 %v1088, -0.72657603
        %v1153 = vadd.f32 %v1089, -0.72657603
        %v1154 = vadd.f32 %v1090, -0.72657603
        %v1155 = vadd.f32 %v1091, -0.72657603
        %v1156 = vadd.f32 %v1092, -0.72657603
        %v1157 = vadd.f32 %v1093, -0.72657603
        %v1158 = vadd.f32 %v1094, -0.72657603
        %v1159 = vadd.f32 %v1095, -0.72657603
        %v1160 = vadd.f32 %v1096, -0.72657603
        %v1161 = vadd.f32 %v1097, -0.72657603
        %v1162 = vadd.f32 %v1098, -0.72657603
        %v1163 = vadd.f32 %v1099, -0.72657603
        %v1164 = vadd.f32 %v1100, -0.72657603
        %v1165 = vadd.f32 %v1101, -0.72657603
        %v1166 = vadd.f32 %v1102, -0.72657603
        %v1167 = vadd.f32 %v1103, -0.72657603
        %v1168 = vadd.f32 %v1104, -0.72657603
        %v1169 = vadd.f32 %v1105, -0.72657603
        %v1170 = vadd.f32 %v1106, -0.72657603
        %v1171 = vadd.f32 %v1107, -0.72657603
        %v1172 = vadd.f32 %v1108, -0.72657603
        %v1173 = vadd.f32 %v1109, -0.72657603
        %v1174 = vadd.f32 %v1110, -0.72657603
        %v1175 = vadd.f32 %v1111, -0.72657603
        %v1176 = vadd.f32 %v1112, -0.72657603
        %v1177 = vadd.f32 %v1113, -0.72657603
        %v1178 = vadd.f32 %v1114, -0.72657603
        %v1179 = vadd.f32 %v1115, -0.72657603
        %v1180 = vadd.f32 %v1116, -0.72657603
        %v1181 = vadd.f32 %v1117, -0.72657603
        %v1182 = vadd.f32 %v1118, -0.72657603
        %v1183 = vadd.f32 %v1119, -0.72657603
        %v1184 = vadd.f32 %v1120, -0.72657603
        %v1185 = vadd.f32 %v1121, -0.72657603
        %v1186 = vadd.f32 %v1122, -0.72657603
        %v1187 = vadd.f32 %v1123, -0.72657603
        %v1188 = vadd.f32 %v1124, -0.72657603
        %v1189 = vadd.f32 %v1125, -0.72657603
        %v1190 = vadd.f32 %v1126, -0.72657603
        %v1191 = vadd.f32 %v1127, -0.72657603
        %v1192 = vadd.f32 %v1128, -0.72657603
        %v1193 = vadd.f32 %v1129, -0.72657603
        %v1194 = vadd.f32 %v1130, -0.72657603
        %v1195 = vadd.f32 %v1131, -0.72657603
        %v1196 = vadd.f32 %v1132, -0.72657603
        %v1197 = vadd.f32 %v1133, -0.72657603
        %v1198 = vadd.f32 %v1134, -0.72657603
        %v1199 = vadd.f32 %v1135, -0.72657603
        %v1200 = vadd.f32 %v1136, -0.72657603
        %v1201 = vadd.f32 %v1137, -0.72657603
        %v1202 = vadd.f32 %v1138, -0.72657603
        %v1203 = vadd.f32 %v1139, -0.72657603
        %v1204 = vadd.f32 %v1140, -0.72657603
        %v1205 = vadd.f32 %v1141, -0.72657603
        %v1206 = vadd.f32 %v1142, -0.72657603
        %v1207 = vmul.f32 %v1143, %v952
        %v1208 = vmul.f32 %v1144, %v954
        %v1209 = vmul.f32 %v1145, %v956
        %v1210 = vmul.f32 %v1146, %v958
        %v1211 = vmul.f32 %v1147, %v960
        %v1212 = vmul.f32 %v1148, %v962
        %v1213 = vmul.f32 %v1149, %v964
        %v1214 = vmul.f32 %v1150, %v966
        %v1215 = vmul.f32 %v1151, %v968
        %v1216 = vmul.f32 %v1152, %v970
        %v1217 = vmul.f32 %v1153, %v972
        %v1218 = vmul.f32 %v1154, %v974
        %v1219 = vmul.f32 %v1155, %v976
        %v1220 = vmul.f32 %v1156, %v978
        %v1221 = vmul.f32 %v1157, %v980
        %v1222 = vmul.f32 %v1158, %v982
        %v1223 = vmul.f32 %v1159, %v984
        %v1224 = vmul.f32 %v1160, %v986
        %v1225 = vmul.f32 %v1161, %v988
        %v1226 = vmul.f32 %v1162, %v990
        %v1227 = vmul.f32 %v1163, %v992
        %v1228 = vmul.f32 %v1164, %v994
        %v1229 = vmul.f32 %v1165, %v996
        %v1230 = vmul.f32 %v1166, %v998
        %v1231 = vmul.f32 %v1167, %v1000
        %v1232 = vmul.f32 %v1168, %v1002
        %v1233 = vmul.f32 %v1169, %v1004
        %v1234 = vmul.f32 %v1170, %v1006
        %v1235 = vmul.f32 %v1171, %v1008
        %v1236 = vmul.f32 %v1172, %v1010
        %v1237 = vmul.f32 %v1173, %v1012
        %v1238 = vmul.f32 %v1174, %v1014
        %v1239 = vmul.f32 %v1175, %v1016
        %v1240 = vmul.f32 %v1176, %v1018
        %v1241 = vmul.f32 %v1177, %v1020
        %v1242 = vmul.f32 %v1178, %v1022
        %v1243 = vmul.f32 %v1179, %v1024
        %v1244 = vmul.f32 %v1180, %v1026
        %v1245 = vmul.f32 %v1181, %v1028
        %v1246 = vmul.f32 %v1182, %v1030
        %v1247 = vmul.f32 %v1183, %v1032
        %v1248 = vmul.f32 %v1184, %v1034
        %v1249 = vmul.f32 %v1185, %v1036
        %v1250 = vmul.f32 %v1186, %v1038
        %v1251 = vmul.f32 %v1187, %v1040
        %v1252 = vmul.f32 %v1188, %v1042
        %v1253 = vmul.f32 %v1189, %v1044
        %v1254 = vmul.f32 %v1190, %v1046
        %v1255 = vmul.f32 %v1191, %v1048
        %v1256 = vmul.f32 %v1192, %v1050
        %v1257 = vmul.f32 %v1193, %v1052
        %v1258 = vmul.f32 %v1194, %v1054
        %v1259 = vmul.f32 %v1195, %v1056
        %v1260 = vmul.f32 %v1196, %v1058
        %v1261 = vmul.f32 %v1197, %v1060
        %v1262 = vmul.f32 %v1198, %v1062
        %v1263 = vmul.f32 %v1199, %v1064
        %v1264 = vmul.f32 %v1200, %v1066
        %v1265 = vmul.f32 %v1201, %v1068
        %v1266 = vmul.f32 %v1202, %v1070
        %v1267 = vmul.f32 %v1203, %v1072
        %v1268 = vmul.f32 %v1204, %v1074
        %v1269 = vmul.f32 %v1205, %v1076
        %v1270 = vmul.f32 %v1206, %v1078
        %v1271 = vadd.f32 %v1207, 0.7107069
        %v1272 = vadd.f32 %v1208, 0.7107069
        %v1273 = vadd.f32 %v1209, 0.7107069
        %v1274 = vadd.f32 %v1210, 0.7107069
        %v1275 = vadd.f32 %v1211, 0.7107069
        %v1276 = vadd.f32 %v1212, 0.7107069
        %v1277 = vadd.f32 %v1213, 0.7107069
        %v1278 = vadd.f32 %v1214, 0.7107069
        %v1279 = vadd.f32 %v1215, 0.7107069
        %v1280 = vadd.f32 %v1216, 0.7107069
        %v1281 = vadd.f32 %v1217, 0.7107069
        %v1282 = vadd.f32 %v1218, 0.7107069
        %v1283 = vadd.f32 %v1219, 0.7107069
        %v1284 = vadd.f32 %v1220, 0.7107069
        %v1285 = vadd.f32 %v1221, 0.7107069
        %v1286 = vadd.f32 %v1222, 0.7107069
        %v1287 = vadd.f32 %v1223, 0.7107069
        %v1288 = vadd.f32 %v1224, 0.7107069
        %v1289 = vadd.f32 %v1225, 0.7107069
        %v1290 = vadd.f32 %v1226, 0.7107069
        %v1291 = vadd.f32 %v1227, 0.7107069
        %v1292 = vadd.f32 %v1228, 0.7107069
        %v1293 = vadd.f32 %v1229, 0.7107069
        %v1294 = vadd.f32 %v1230, 0.7107069
        %v1295 = vadd.f32 %v1231, 0.7107069
        %v1296 = vadd.f32 %v1232, 0.7107069
        %v1297 = vadd.f32 %v1233, 0.7107069
        %v1298 = vadd.f32 %v1234, 0.7107069
        %v1299 = vadd.f32 %v1235, 0.7107069
        %v1300 = vadd.f32 %v1236, 0.7107069
        %v1301 = vadd.f32 %v1237, 0.7107069
        %v1302 = vadd.f32 %v1238, 0.7107069
        %v1303 = vadd.f32 %v1239, 0.7107069
        %v1304 = vadd.f32 %v1240, 0.7107069
        %v1305 = vadd.f32 %v1241, 0.7107069
        %v1306 = vadd.f32 %v1242, 0.7107069
        %v1307 = vadd.f32 %v1243, 0.7107069
        %v1308 = vadd.f32 %v1244, 0.7107069
        %v1309 = vadd.f32 %v1245, 0.7107069
        %v1310 = vadd.f32 %v1246, 0.7107069
        %v1311 = vadd.f32 %v1247, 0.7107069
        %v1312 = vadd.f32 %v1248, 0.7107069
        %v1313 = vadd.f32 %v1249, 0.7107069
        %v1314 = vadd.f32 %v1250, 0.7107069
        %v1315 = vadd.f32 %v1251, 0.7107069
        %v1316 = vadd.f32 %v1252, 0.7107069
        %v1317 = vadd.f32 %v1253, 0.7107069
        %v1318 = vadd.f32 %v1254, 0.7107069
        %v1319 = vadd.f32 %v1255, 0.7107069
        %v1320 = vadd.f32 %v1256, 0.7107069
        %v1321 = vadd.f32 %v1257, 0.7107069
        %v1322 = vadd.f32 %v1258, 0.7107069
        %v1323 = vadd.f32 %v1259, 0.7107069
        %v1324 = vadd.f32 %v1260, 0.7107069
        %v1325 = vadd.f32 %v1261, 0.7107069
        %v1326 = vadd.f32 %v1262, 0.7107069
        %v1327 = vadd.f32 %v1263, 0.7107069
        %v1328 = vadd.f32 %v1264, 0.7107069
        %v1329 = vadd.f32 %v1265, 0.7107069
        %v1330 = vadd.f32 %v1266, 0.7107069
        %v1331 = vadd.f32 %v1267, 0.7107069
        %v1332 = vadd.f32 %v1268, 0.7107069
        %v1333 = vadd.f32 %v1269, 0.7107069
        %v1334 = vadd.f32 %v1270, 0.7107069
        %v1335 = vmul.f32 %v1271, %v952
        %v1336 = vmul.f32 %v1272, %v954
        %v1337 = vmul.f32 %v1273, %v956
        %v1338 = vmul.f32 %v1274, %v958
        %v1339 = vmul.f32 %v1275, %v960
        %v1340 = vmul.f32 %v1276, %v962
        %v1341 = vmul.f32 %v1277, %v964
        %v1342 = vmul.f32 %v1278, %v966
        %v1343 = vmul.f32 %v1279, %v968
        %v1344 = vmul.f32 %v1280, %v970
        %v1345 = vmul.f32 %v1281, %v972
        %v1346 = vmul.f32 %v1282, %v974
        %v1347 = vmul.f32 %v1283, %v976
        %v1348 = vmul.f32 %v1284, %v978
        %v1349 = vmul.f32 %v1285, %v980
        %v1350 = vmul.f32 %v1286, %v982
        %v1351 = vmul.f32 %v1287, %v984
        %v1352 = vmul.f32 %v1288, %v986
        %v1353 = vmul.f32 %v1289, %v988
        %v1354 = vmul.f32 %v1290, %v990
        %v1355 = vmul.f32 %v1291, %v992
        %v1356 = vmul.f32 %v1292, %v994
        %v1357 = vmul.f32 %v1293, %v996
        %v1358 = vmul.f32 %v1294, %v998
        %v1359 = vmul.f32 %v1295, %v1000
        %v1360 = vmul.f32 %v1296, %v1002
        %v1361 = vmul.f32 %v1297, %v1004
        %v1362 = vmul.f32 %v1298, %v1006
        %v1363 = vmul.f32 %v1299, %v1008
        %v1364 = vmul.f32 %v1300, %v1010
        %v1365 = vmul.f32 %v1301, %v1012
        %v1366 = vmul.f32 %v1302, %v1014
        %v1367 = vmul.f32 %v1303, %v1016
        %v1368 = vmul.f32 %v1304, %v1018
        %v1369 = vmul.f32 %v1305, %v1020
        %v1370 = vmul.f32 %v1306, %v1022
        %v1371 = vmul.f32 %v1307, %v1024
        %v1372 = vmul.f32 %v1308, %v1026
        %v1373 = vmul.f32 %v1309, %v1028
        %v1374 = vmul.f32 %v1310, %v1030
        %v1375 = vmul.f32 %v1311, %v1032
        %v1376 = vmul.f32 %v1312, %v1034
        %v1377 = vmul.f32 %v1313, %v1036
        %v1378 = vmul.f32 %v1314, %v1038
        %v1379 = vmul.f32 %v1315, %v1040
        %v1380 = vmul.f32 %v1316, %v1042
        %v1381 = vmul.f32 %v1317, %v1044
        %v1382 = vmul.f32 %v1318, %v1046
        %v1383 = vmul.f32 %v1319, %v1048
        %v1384 = vmul.f32 %v1320, %v1050
        %v1385 = vmul.f32 %v1321, %v1052
        %v1386 = vmul.f32 %v1322, %v1054
        %v1387 = vmul.f32 %v1323, %v1056
        %v1388 = vmul.f32 %v1324, %v1058
        %v1389 = vmul.f32 %v1325, %v1060
        %v1390 = vmul.f32 %v1326, %v1062
        %v1391 = vmul.f32 %v1327, %v1064
        %v1392 = vmul.f32 %v1328, %v1066
        %v1393 = vmul.f32 %v1329, %v1068
        %v1394 = vmul.f32 %v1330, %v1070
        %v1395 = vmul.f32 %v1331, %v1072
        %v1396 = vmul.f32 %v1332, %v1074
        %v1397 = vmul.f32 %v1333, %v1076
        %v1398 = vmul.f32 %v1334, %v1078
        %v1399 = vadd.f32 %v1335, -0.14224836
        %v1400 = vadd.f32 %v1336, -0.14224836
        %v1401 = vadd.f32 %v1337, -0.14224836
        %v1402 = vadd.f32 %v1338, -0.14224836
        %v1403 = vadd.f32 %v1339, -0.14224836
        %v1404 = vadd.f32 %v1340, -0.14224836
        %v1405 = vadd.f32 %v1341, -0.14224836
        %v1406 = vadd.f32 %v1342, -0.14224836
        %v1407 = vadd.f32 %v1343, -0.14224836
        %v1408 = vadd.f32 %v1344, -0.14224836
        %v1409 = vadd.f32 %v1345, -0.14224836
        %v1410 = vadd.f32 %v1346, -0.14224836
        %v1411 = vadd.f32 %v1347, -0.14224836
        %v1412 = vadd.f32 %v1348, -0.14224836
        %v1413 = vadd.f32 %v1349, -0.14224836
        %v1414 = vadd.f32 %v1350, -0.14224836
        %v1415 = vadd.f32 %v1351, -0.14224836
        %v1416 = vadd.f32 %v1352, -0.14224836
        %v1417 = vadd.f32 %v1353, -0.14224836
        %v1418 = vadd.f32 %v1354, -0.14224836
        %v1419 = vadd.f32 %v1355, -0.14224836
        %v1420 = vadd.f32 %v1356, -0.14224836
        %v1421 = vadd.f32 %v1357, -0.14224836
        %v1422 = vadd.f32 %v1358, -0.14224836
        %v1423 = vadd.f32 %v1359, -0.14224836
        %v1424 = vadd.f32 %v1360, -0.14224836
        %v1425 = vadd.f32 %v1361, -0.14224836
        %v1426 = vadd.f32 %v1362, -0.14224836
        %v1427 = vadd.f32 %v1363, -0.14224836
        %v1428 = vadd.f32 %v1364, -0.14224836
        %v1429 = vadd.f32 %v1365, -0.14224836
        %v1430 = vadd.f32 %v1366, -0.14224836
        %v1431 = vadd.f32 %v1367, -0.14224836
        %v1432 = vadd.f32 %v1368, -0.14224836
        %v1433 = vadd.f32 %v1369, -0.14224836
        %v1434 = vadd.f32 %v1370, -0.14224836
        %v1435 = vadd.f32 %v1371, -0.14224836
        %v1436 = vadd.f32 %v1372, -0.14224836
        %v1437 = vadd.f32 %v1373, -0.14224836
        %v1438 = vadd.f32 %v1374, -0.14224836
        %v1439 = vadd.f32 %v1375, -0.14224836
        %v1440 = vadd.f32 %v1376, -0.14224836
        %v1441 = vadd.f32 %v1377, -0.14224836
        %v1442 = vadd.f32 %v1378, -0.14224836
        %v1443 = vadd.f32 %v1379, -0.14224836
        %v1444 = vadd.f32 %v1380, -0.14224836
        %v1445 = vadd.f32 %v1381, -0.14224836
        %v1446 = vadd.f32 %v1382, -0.14224836
        %v1447 = vadd.f32 %v1383, -0.14224836
        %v1448 = vadd.f32 %v1384, -0.14224836
        %v1449 = vadd.f32 %v1385, -0.14224836
        %v1450 = vadd.f32 %v1386, -0.14224836
        %v1451 = vadd.f32 %v1387, -0.14224836
        %v1452 = vadd.f32 %v1388, -0.14224836
        %v1453 = vadd.f32 %v1389, -0.14224836
        %v1454 = vadd.f32 %v1390, -0.14224836
        %v1455 = vadd.f32 %v1391, -0.14224836
        %v1456 = vadd.f32 %v1392, -0.14224836
        %v1457 = vadd.f32 %v1393, -0.14224836
        %v1458 = vadd.f32 %v1394, -0.14224836
        %v1459 = vadd.f32 %v1395, -0.14224836
        %v1460 = vadd.f32 %v1396, -0.14224836
        %v1461 = vadd.f32 %v1397, -0.14224836
        %v1462 = vadd.f32 %v1398, -0.14224836
        %v1463 = vmul.f32 %v1399, %v952
        %v1464 = vmul.f32 %v1400, %v954
        %v1465 = vmul.f32 %v1401, %v956
        %v1466 = vmul.f32 %v1402, %v958
        %v1467 = vmul.f32 %v1403, %v960
        %v1468 = vmul.f32 %v1404, %v962
        %v1469 = vmul.f32 %v1405, %v964
        %v1470 = vmul.f32 %v1406, %v966
        %v1471 = vmul.f32 %v1407, %v968
        %v1472 = vmul.f32 %v1408, %v970
        %v1473 = vmul.f32 %v1409, %v972
        %v1474 = vmul.f32 %v1410, %v974
        %v1475 = vmul.f32 %v1411, %v976
        %v1476 = vmul.f32 %v1412, %v978
        %v1477 = vmul.f32 %v1413, %v980
        %v1478 = vmul.f32 %v1414, %v982
        %v1479 = vmul.f32 %v1415, %v984
        %v1480 = vmul.f32 %v1416, %v986
        %v1481 = vmul.f32 %v1417, %v988
        %v1482 = vmul.f32 %v1418, %v990
        %v1483 = vmul.f32 %v1419, %v992
        %v1484 = vmul.f32 %v1420, %v994
        %v1485 = vmul.f32 %v1421, %v996
        %v1486 = vmul.f32 %v1422, %v998
        %v1487 = vmul.f32 %v1423, %v1000
        %v1488 = vmul.f32 %v1424, %v1002
        %v1489 = vmul.f32 %v1425, %v1004
        %v1490 = vmul.f32 %v1426, %v1006
        %v1491 = vmul.f32 %v1427, %v1008
        %v1492 = vmul.f32 %v1428, %v1010
        %v1493 = vmul.f32 %v1429, %v1012
        %v1494 = vmul.f32 %v1430, %v1014
        %v1495 = vmul.f32 %v1431, %v1016
        %v1496 = vmul.f32 %v1432, %v1018
        %v1497 = vmul.f32 %v1433, %v1020
        %v1498 = vmul.f32 %v1434, %v1022
        %v1499 = vmul.f32 %v1435, %v1024
        %v1500 = vmul.f32 %v1436, %v1026
        %v1501 = vmul.f32 %v1437, %v1028
        %v1502 = vmul.f32 %v1438, %v1030
        %v1503 = vmul.f32 %v1439, %v1032
        %v1504 = vmul.f32 %v1440, %v1034
        %v1505 = vmul.f32 %v1441, %v1036
        %v1506 = vmul.f32 %v1442, %v1038
        %v1507 = vmul.f32 %v1443, %v1040
        %v1508 = vmul.f32 %v1444, %v1042
        %v1509 = vmul.f32 %v1445, %v1044
        %v1510 = vmul.f32 %v1446, %v1046
        %v1511 = vmul.f32 %v1447, %v1048
        %v1512 = vmul.f32 %v1448, %v1050
        %v1513 = vmul.f32 %v1449, %v1052
        %v1514 = vmul.f32 %v1450, %v1054
        %v1515 = vmul.f32 %v1451, %v1056
        %v1516 = vmul.f32 %v1452, %v1058
        %v1517 = vmul.f32 %v1453, %v1060
        %v1518 = vmul.f32 %v1454, %v1062
        %v1519 = vmul.f32 %v1455, %v1064
        %v1520 = vmul.f32 %v1456, %v1066
        %v1521 = vmul.f32 %v1457, %v1068
        %v1522 = vmul.f32 %v1458, %v1070
        %v1523 = vmul.f32 %v1459, %v1072
        %v1524 = vmul.f32 %v1460, %v1074
        %v1525 = vmul.f32 %v1461, %v1076
        %v1526 = vmul.f32 %v1462, %v1078
        %v1527 = vadd.f32 %v1463, 0.1274148
        %v1528 = vadd.f32 %v1464, 0.1274148
        %v1529 = vadd.f32 %v1465, 0.1274148
        %v1530 = vadd.f32 %v1466, 0.1274148
        %v1531 = vadd.f32 %v1467, 0.1274148
        %v1532 = vadd.f32 %v1468, 0.1274148
        %v1533 = vadd.f32 %v1469, 0.1274148
        %v1534 = vadd.f32 %v1470, 0.1274148
        %v1535 = vadd.f32 %v1471, 0.1274148
        %v1536 = vadd.f32 %v1472, 0.1274148
        %v1537 = vadd.f32 %v1473, 0.1274148
        %v1538 = vadd.f32 %v1474, 0.1274148
        %v1539 = vadd.f32 %v1475, 0.1274148
        %v1540 = vadd.f32 %v1476, 0.1274148
        %v1541 = vadd.f32 %v1477, 0.1274148
        %v1542 = vadd.f32 %v1478, 0.1274148
        %v1543 = vadd.f32 %v1479, 0.1274148
        %v1544 = vadd.f32 %v1480, 0.1274148
        %v1545 = vadd.f32 %v1481, 0.1274148
        %v1546 = vadd.f32 %v1482, 0.1274148
        %v1547 = vadd.f32 %v1483, 0.1274148
        %v1548 = vadd.f32 %v1484, 0.1274148
        %v1549 = vadd.f32 %v1485, 0.1274148
        %v1550 = vadd.f32 %v1486, 0.1274148
        %v1551 = vadd.f32 %v1487, 0.1274148
        %v1552 = vadd.f32 %v1488, 0.1274148
        %v1553 = vadd.f32 %v1489, 0.1274148
        %v1554 = vadd.f32 %v1490, 0.1274148
        %v1555 = vadd.f32 %v1491, 0.1274148
        %v1556 = vadd.f32 %v1492, 0.1274148
        %v1557 = vadd.f32 %v1493, 0.1274148
        %v1558 = vadd.f32 %v1494, 0.1274148
        %v1559 = vadd.f32 %v1495, 0.1274148
        %v1560 = vadd.f32 %v1496, 0.1274148
        %v1561 = vadd.f32 %v1497, 0.1274148
        %v1562 = vadd.f32 %v1498, 0.1274148
        %v1563 = vadd.f32 %v1499, 0.1274148
        %v1564 = vadd.f32 %v1500, 0.1274148
        %v1565 = vadd.f32 %v1501, 0.1274148
        %v1566 = vadd.f32 %v1502, 0.1274148
        %v1567 = vadd.f32 %v1503, 0.1274148
        %v1568 = vadd.f32 %v1504, 0.1274148
        %v1569 = vadd.f32 %v1505, 0.1274148
        %v1570 = vadd.f32 %v1506, 0.1274148
        %v1571 = vadd.f32 %v1507, 0.1274148
        %v1572 = vadd.f32 %v1508, 0.1274148
        %v1573 = vadd.f32 %v1509, 0.1274148
        %v1574 = vadd.f32 %v1510, 0.1274148
        %v1575 = vadd.f32 %v1511, 0.1274148
        %v1576 = vadd.f32 %v1512, 0.1274148
        %v1577 = vadd.f32 %v1513, 0.1274148
        %v1578 = vadd.f32 %v1514, 0.1274148
        %v1579 = vadd.f32 %v1515, 0.1274148
        %v1580 = vadd.f32 %v1516, 0.1274148
        %v1581 = vadd.f32 %v1517, 0.1274148
        %v1582 = vadd.f32 %v1518, 0.1274148
        %v1583 = vadd.f32 %v1519, 0.1274148
        %v1584 = vadd.f32 %v1520, 0.1274148
        %v1585 = vadd.f32 %v1521, 0.1274148
        %v1586 = vadd.f32 %v1522, 0.1274148
        %v1587 = vadd.f32 %v1523, 0.1274148
        %v1588 = vadd.f32 %v1524, 0.1274148
        %v1589 = vadd.f32 %v1525, 0.1274148
        %v1590 = vadd.f32 %v1526, 0.1274148
        %v1591 = vmul.f32 %v1527, %v952
        %v1592 = vmul.f32 %v1528, %v954
        %v1593 = vmul.f32 %v1529, %v956
        %v1594 = vmul.f32 %v1530, %v958
        %v1595 = vmul.f32 %v1531, %v960
        %v1596 = vmul.f32 %v1532, %v962
        %v1597 = vmul.f32 %v1533, %v964
        %v1598 = vmul.f32 %v1534, %v966
        %v1599 = vmul.f32 %v1535, %v968
        %v1600 = vmul.f32 %v1536, %v970
        %v1601 = vmul.f32 %v1537, %v972
        %v1602 = vmul.f32 %v1538, %v974
        %v1603 = vmul.f32 %v1539, %v976
        %v1604 = vmul.f32 %v1540, %v978
        %v1605 = vmul.f32 %v1541, %v980
        %v1606 = vmul.f32 %v1542, %v982
        %v1607 = vmul.f32 %v1543, %v984
        %v1608 = vmul.f32 %v1544, %v986
        %v1609 = vmul.f32 %v1545, %v988
        %v1610 = vmul.f32 %v1546, %v990
        %v1611 = vmul.f32 %v1547, %v992
        %v1612 = vmul.f32 %v1548, %v994
        %v1613 = vmul.f32 %v1549, %v996
        %v1614 = vmul.f32 %v1550, %v998
        %v1615 = vmul.f32 %v1551, %v1000
        %v1616 = vmul.f32 %v1552, %v1002
        %v1617 = vmul.f32 %v1553, %v1004
        %v1618 = vmul.f32 %v1554, %v1006
        %v1619 = vmul.f32 %v1555, %v1008
        %v1620 = vmul.f32 %v1556, %v1010
        %v1621 = vmul.f32 %v1557, %v1012
        %v1622 = vmul.f32 %v1558, %v1014
        %v1623 = vmul.f32 %v1559, %v1016
        %v1624 = vmul.f32 %v1560, %v1018
        %v1625 = vmul.f32 %v1561, %v1020
        %v1626 = vmul.f32 %v1562, %v1022
        %v1627 = vmul.f32 %v1563, %v1024
        %v1628 = vmul.f32 %v1564, %v1026
        %v1629 = vmul.f32 %v1565, %v1028
        %v1630 = vmul.f32 %v1566, %v1030
        %v1631 = vmul.f32 %v1567, %v1032
        %v1632 = vmul.f32 %v1568, %v1034
        %v1633 = vmul.f32 %v1569, %v1036
        %v1634 = vmul.f32 %v1570, %v1038
        %v1635 = vmul.f32 %v1571, %v1040
        %v1636 = vmul.f32 %v1572, %v1042
        %v1637 = vmul.f32 %v1573, %v1044
        %v1638 = vmul.f32 %v1574, %v1046
        %v1639 = vmul.f32 %v1575, %v1048
        %v1640 = vmul.f32 %v1576, %v1050
        %v1641 = vmul.f32 %v1577, %v1052
        %v1642 = vmul.f32 %v1578, %v1054
        %v1643 = vmul.f32 %v1579, %v1056
        %v1644 = vmul.f32 %v1580, %v1058
        %v1645 = vmul.f32 %v1581, %v1060
        %v1646 = vmul.f32 %v1582, %v1062
        %v1647 = vmul.f32 %v1583, %v1064
        %v1648 = vmul.f32 %v1584, %v1066
        %v1649 = vmul.f32 %v1585, %v1068
        %v1650 = vmul.f32 %v1586, %v1070
        %v1651 = vmul.f32 %v1587, %v1072
        %v1652 = vmul.f32 %v1588, %v1074
        %v1653 = vmul.f32 %v1589, %v1076
        %v1654 = vmul.f32 %v1590, %v1078
        %v1655 = vsub.f32 0.0, %v759
        %v1656 = vsub.f32 0.0, %v760
        %v1657 = vsub.f32 0.0, %v761
        %v1658 = vsub.f32 0.0, %v762
        %v1659 = vsub.f32 0.0, %v763
        %v1660 = vsub.f32 0.0, %v764
        %v1661 = vsub.f32 0.0, %v765
        %v1662 = vsub.f32 0.0, %v766
        %v1663 = vsub.f32 0.0, %v767
        %v1664 = vsub.f32 0.0, %v768
        %v1665 = vsub.f32 0.0, %v769
        %v1666 = vsub.f32 0.0, %v770
        %v1667 = vsub.f32 0.0, %v771
        %v1668 = vsub.f32 0.0, %v772
        %v1669 = vsub.f32 0.0, %v773
        %v1670 = vsub.f32 0.0, %v774
        %v1671 = vsub.f32 0.0, %v775
        %v1672 = vsub.f32 0.0, %v776
        %v1673 = vsub.f32 0.0, %v777
        %v1674 = vsub.f32 0.0, %v778
        %v1675 = vsub.f32 0.0, %v779
        %v1676 = vsub.f32 0.0, %v780
        %v1677 = vsub.f32 0.0, %v781
        %v1678 = vsub.f32 0.0, %v782
        %v1679 = vsub.f32 0.0, %v783
        %v1680 = vsub.f32 0.0, %v784
        %v1681 = vsub.f32 0.0, %v785
        %v1682 = vsub.f32 0.0, %v786
        %v1683 = vsub.f32 0.0, %v787
        %v1684 = vsub.f32 0.0, %v788
        %v1685 = vsub.f32 0.0, %v789
        %v1686 = vsub.f32 0.0, %v790
        %v1687 = vsub.f32 0.0, %v791
        %v1688 = vsub.f32 0.0, %v792
        %v1689 = vsub.f32 0.0, %v793
        %v1690 = vsub.f32 0.0, %v794
        %v1691 = vsub.f32 0.0, %v795
        %v1692 = vsub.f32 0.0, %v796
        %v1693 = vsub.f32 0.0, %v797
        %v1694 = vsub.f32 0.0, %v798
        %v1695 = vsub.f32 0.0, %v799
        %v1696 = vsub.f32 0.0, %v800
        %v1697 = vsub.f32 0.0, %v801
        %v1698 = vsub.f32 0.0, %v802
        %v1699 = vsub.f32 0.0, %v803
        %v1700 = vsub.f32 0.0, %v804
        %v1701 = vsub.f32 0.0, %v805
        %v1702 = vsub.f32 0.0, %v806
        %v1703 = vsub.f32 0.0, %v807
        %v1704 = vsub.f32 0.0, %v808
        %v1705 = vsub.f32 0.0, %v809
        %v1706 = vsub.f32 0.0, %v810
        %v1707 = vsub.f32 0.0, %v811
        %v1708 = vsub.f32 0.0, %v812
        %v1709 = vsub.f32 0.0, %v813
        %v1710 = vsub.f32 0.0, %v814
        %v1711 = vsub.f32 0.0, %v815
        %v1712 = vsub.f32 0.0, %v816
        %v1713 = vsub.f32 0.0, %v817
        %v1714 = vsub.f32 0.0, %v818
        %v1715 = vsub.f32 0.0, %v819
        %v1716 = vsub.f32 0.0, %v820
        %v1717 = vsub.f32 0.0, %v821
        %v1718 = vsub.f32 0.0, %v822
        %v1719 = vmul.f32 %v1655, %v759
        %v1720 = vmul.f32 %v1656, %v760
        %v1721 = vmul.f32 %v1657, %v761
        %v1722 = vmul.f32 %v1658, %v762
        %v1723 = vmul.f32 %v1659, %v763
        %v1724 = vmul.f32 %v1660, %v764
        %v1725 = vmul.f32 %v1661, %v765
        %v1726 = vmul.f32 %v1662, %v766
        %v1727 = vmul.f32 %v1663, %v767
        %v1728 = vmul.f32 %v1664, %v768
        %v1729 = vmul.f32 %v1665, %v769
        %v1730 = vmul.f32 %v1666, %v770
        %v1731 = vmul.f32 %v1667, %v771
        %v1732 = vmul.f32 %v1668, %v772
        %v1733 = vmul.f32 %v1669, %v773
        %v1734 = vmul.f32 %v1670, %v774
        %v1735 = vmul.f32 %v1671, %v775
        %v1736 = vmul.f32 %v1672, %v776
        %v1737 = vmul.f32 %v1673, %v777
        %v1738 = vmul.f32 %v1674, %v778
        %v1739 = vmul.f32 %v1675, %v779
        %v1740 = vmul.f32 %v1676, %v780
        %v1741 = vmul.f32 %v1677, %v781
        %v1742 = vmul.f32 %v1678, %v782
        %v1743 = vmul.f32 %v1679, %v783
        %v1744 = vmul.f32 %v1680, %v784
        %v1745 = vmul.f32 %v1681, %v785
        %v1746 = vmul.f32 %v1682, %v786
        %v1747 = vmul.f32 %v1683, %v787
        %v1748 = vmul.f32 %v1684, %v788
        %v1749 = vmul.f32 %v1685, %v789
        %v1750 = vmul.f32 %v1686, %v790
        %v1751 = vmul.f32 %v1687, %v791
        %v1752 = vmul.f32 %v1688, %v792
        %v1753 = vmul.f32 %v1689, %v793
        %v1754 = vmul.f32 %v1690, %v794
        %v1755 = vmul.f32 %v1691, %v795
        %v1756 = vmul.f32 %v1692, %v796
        %v1757 = vmul.f32 %v1693, %v797
        %v1758 = vmul.f32 %v1694, %v798
        %v1759 = vmul.f32 %v1695, %v799
        %v1760 = vmul.f32 %v1696, %v800
        %v1761 = vmul.f32 %v1697, %v801
        %v1762 = vmul.f32 %v1698, %v802
        %v1763 = vmul.f32 %v1699, %v803
        %v1764 = vmul.f32 %v1700, %v804
        %v1765 = vmul.f32 %v1701, %v805
        %v1766 = vmul.f32 %v1702, %v806
        %v1767 = vmul.f32 %v1703, %v807
        %v1768 = vmul.f32 %v1704, %v808
        %v1769 = vmul.f32 %v1705, %v809
        %v1770 = vmul.f32 %v1706, %v810
        %v1771 = vmul.f32 %v1707, %v811
        %v1772 = vmul.f32 %v1708, %v812
        %v1773 = vmul.f32 %v1709, %v813
        %v1774 = vmul.f32 %v1710, %v814
        %v1775 = vmul.f32 %v1711, %v815
        %v1776 = vmul.f32 %v1712, %v816
        %v1777 = vmul.f32 %v1713, %v817
        %v1778 = vmul.f32 %v1714, %v818
        %v1779 = vmul.f32 %v1715, %v819
        %v1780 = vmul.f32 %v1716, %v820
        %v1781 = vmul.f32 %v1717, %v821
        %v1782 = vmul.f32 %v1718, %v822
        %v1783 = vmul.f32 %v1719, 1.442695
        %v1784 = vpow.pop %v1783
        %v1785 = vmul.f32 %v1720, 1.442695
        %v1786 = vpow.pop %v1785
        %v1787 = vmul.f32 %v1721, 1.442695
        %v1788 = vpow.pop %v1787
        %v1789 = vmul.f32 %v1722, 1.442695
        %v1790 = vpow.pop %v1789
        %v1791 = vmul.f32 %v1723, 1.442695
        %v1792 = vpow.pop %v1791
        %v1793 = vmul.f32 %v1724, 1.442695
        %v1794 = vpow.pop %v1793
        %v1795 = vmul.f32 %v1725, 1.442695
        %v1796 = vpow.pop %v1795
        %v1797 = vmul.f32 %v1726, 1.442695
        %v1798 = vpow.pop %v1797
        %v1799 = vmul.f32 %v1727, 1.442695
        %v1800 = vpow.pop %v1799
        %v1801 = vmul.f32 %v1728, 1.442695
        %v1802 = vpow.pop %v1801
        %v1803 = vmul.f32 %v1729, 1.442695
        %v1804 = vpow.pop %v1803
        %v1805 = vmul.f32 %v1730, 1.442695
        %v1806 = vpow.pop %v1805
        %v1807 = vmul.f32 %v1731, 1.442695
        %v1808 = vpow.pop %v1807
        %v1809 = vmul.f32 %v1732, 1.442695
        %v1810 = vpow.pop %v1809
        %v1811 = vmul.f32 %v1733, 1.442695
        %v1812 = vpow.pop %v1811
        %v1813 = vmul.f32 %v1734, 1.442695
        %v1814 = vpow.pop %v1813
        %v1815 = vmul.f32 %v1735, 1.442695
        %v1816 = vpow.pop %v1815
        %v1817 = vmul.f32 %v1736, 1.442695
        %v1818 = vpow.pop %v1817
        %v1819 = vmul.f32 %v1737, 1.442695
        %v1820 = vpow.pop %v1819
        %v1821 = vmul.f32 %v1738, 1.442695
        %v1822 = vpow.pop %v1821
        %v1823 = vmul.f32 %v1739, 1.442695
        %v1824 = vpow.pop %v1823
        %v1825 = vmul.f32 %v1740, 1.442695
        %v1826 = vpow.pop %v1825
        %v1827 = vmul.f32 %v1741, 1.442695
        %v1828 = vpow.pop %v1827
        %v1829 = vmul.f32 %v1742, 1.442695
        %v1830 = vpow.pop %v1829
        %v1831 = vmul.f32 %v1743, 1.442695
        %v1832 = vpow.pop %v1831
        %v1833 = vmul.f32 %v1744, 1.442695
        %v1834 = vpow.pop %v1833
        %v1835 = vmul.f32 %v1745, 1.442695
        %v1836 = vpow.pop %v1835
        %v1837 = vmul.f32 %v1746, 1.442695
        %v1838 = vpow.pop %v1837
        %v1839 = vmul.f32 %v1747, 1.442695
        %v1840 = vpow.pop %v1839
        %v1841 = vmul.f32 %v1748, 1.442695
        %v1842 = vpow.pop %v1841
        %v1843 = vmul.f32 %v1749, 1.442695
        %v1844 = vpow.pop %v1843
        %v1845 = vmul.f32 %v1750, 1.442695
        %v1846 = vpow.pop %v1845
        %v1847 = vmul.f32 %v1751, 1.442695
        %v1848 = vpow.pop %v1847
        %v1849 = vmul.f32 %v1752, 1.442695
        %v1850 = vpow.pop %v1849
        %v1851 = vmul.f32 %v1753, 1.442695
        %v1852 = vpow.pop %v1851
        %v1853 = vmul.f32 %v1754, 1.442695
        %v1854 = vpow.pop %v1853
        %v1855 = vmul.f32 %v1755, 1.442695
        %v1856 = vpow.pop %v1855
        %v1857 = vmul.f32 %v1756, 1.442695
        %v1858 = vpow.pop %v1857
        %v1859 = vmul.f32 %v1757, 1.442695
        %v1860 = vpow.pop %v1859
        %v1861 = vmul.f32 %v1758, 1.442695
        %v1862 = vpow.pop %v1861
        %v1863 = vmul.f32 %v1759, 1.442695
        %v1864 = vpow.pop %v1863
        %v1865 = vmul.f32 %v1760, 1.442695
        %v1866 = vpow.pop %v1865
        %v1867 = vmul.f32 %v1761, 1.442695
        %v1868 = vpow.pop %v1867
        %v1869 = vmul.f32 %v1762, 1.442695
        %v1870 = vpow.pop %v1869
        %v1871 = vmul.f32 %v1763, 1.442695
        %v1872 = vpow.pop %v1871
        %v1873 = vmul.f32 %v1764, 1.442695
        %v1874 = vpow.pop %v1873
        %v1875 = vmul.f32 %v1765, 1.442695
        %v1876 = vpow.pop %v1875
        %v1877 = vmul.f32 %v1766, 1.442695
        %v1878 = vpow.pop %v1877
        %v1879 = vmul.f32 %v1767, 1.442695
        %v1880 = vpow.pop %v1879
        %v1881 = vmul.f32 %v1768, 1.442695
        %v1882 = vpow.pop %v1881
        %v1883 = vmul.f32 %v1769, 1.442695
        %v1884 = vpow.pop %v1883
        %v1885 = vmul.f32 %v1770, 1.442695
        %v1886 = vpow.pop %v1885
        %v1887 = vmul.f32 %v1771, 1.442695
        %v1888 = vpow.pop %v1887
        %v1889 = vmul.f32 %v1772, 1.442695
        %v1890 = vpow.pop %v1889
        %v1891 = vmul.f32 %v1773, 1.442695
        %v1892 = vpow.pop %v1891
        %v1893 = vmul.f32 %v1774, 1.442695
        %v1894 = vpow.pop %v1893
        %v1895 = vmul.f32 %v1775, 1.442695
        %v1896 = vpow.pop %v1895
        %v1897 = vmul.f32 %v1776, 1.442695
        %v1898 = vpow.pop %v1897
        %v1899 = vmul.f32 %v1777, 1.442695
        %v1900 = vpow.pop %v1899
        %v1901 = vmul.f32 %v1778, 1.442695
        %v1902 = vpow.pop %v1901
        %v1903 = vmul.f32 %v1779, 1.442695
        %v1904 = vpow.pop %v1903
        %v1905 = vmul.f32 %v1780, 1.442695
        %v1906 = vpow.pop %v1905
        %v1907 = vmul.f32 %v1781, 1.442695
        %v1908 = vpow.pop %v1907
        %v1909 = vmul.f32 %v1782, 1.442695
        %v1910 = vpow.pop %v1909
        %v1911 = vmul.f32 %v1591, %v1784
        %v1912 = vmul.f32 %v1592, %v1786
        %v1913 = vmul.f32 %v1593, %v1788
        %v1914 = vmul.f32 %v1594, %v1790
        %v1915 = vmul.f32 %v1595, %v1792
        %v1916 = vmul.f32 %v1596, %v1794
        %v1917 = vmul.f32 %v1597, %v1796
        %v1918 = vmul.f32 %v1598, %v1798
        %v1919 = vmul.f32 %v1599, %v1800
        %v1920 = vmul.f32 %v1600, %v1802
        %v1921 = vmul.f32 %v1601, %v1804
        %v1922 = vmul.f32 %v1602, %v1806
        %v1923 = vmul.f32 %v1603, %v1808
        %v1924 = vmul.f32 %v1604, %v1810
        %v1925 = vmul.f32 %v1605, %v1812
        %v1926 = vmul.f32 %v1606, %v1814
        %v1927 = vmul.f32 %v1607, %v1816
        %v1928 = vmul.f32 %v1608, %v1818
        %v1929 = vmul.f32 %v1609, %v1820
        %v1930 = vmul.f32 %v1610, %v1822
        %v1931 = vmul.f32 %v1611, %v1824
        %v1932 = vmul.f32 %v1612, %v1826
        %v1933 = vmul.f32 %v1613, %v1828
        %v1934 = vmul.f32 %v1614, %v1830
        %v1935 = vmul.f32 %v1615, %v1832
        %v1936 = vmul.f32 %v1616, %v1834
        %v1937 = vmul.f32 %v1617, %v1836
        %v1938 = vmul.f32 %v1618, %v1838
        %v1939 = vmul.f32 %v1619, %v1840
        %v1940 = vmul.f32 %v1620, %v1842
        %v1941 = vmul.f32 %v1621, %v1844
        %v1942 = vmul.f32 %v1622, %v1846
        %v1943 = vmul.f32 %v1623, %v1848
        %v1944 = vmul.f32 %v1624, %v1850
        %v1945 = vmul.f32 %v1625, %v1852
        %v1946 = vmul.f32 %v1626, %v1854
        %v1947 = vmul.f32 %v1627, %v1856
        %v1948 = vmul.f32 %v1628, %v1858
        %v1949 = vmul.f32 %v1629, %v1860
        %v1950 = vmul.f32 %v1630, %v1862
        %v1951 = vmul.f32 %v1631, %v1864
        %v1952 = vmul.f32 %v1632, %v1866
        %v1953 = vmul.f32 %v1633, %v1868
        %v1954 = vmul.f32 %v1634, %v1870
        %v1955 = vmul.f32 %v1635, %v1872
        %v1956 = vmul.f32 %v1636, %v1874
        %v1957 = vmul.f32 %v1637, %v1876
        %v1958 = vmul.f32 %v1638, %v1878
        %v1959 = vmul.f32 %v1639, %v1880
        %v1960 = vmul.f32 %v1640, %v1882
        %v1961 = vmul.f32 %v1641, %v1884
        %v1962 = vmul.f32 %v1642, %v1886
        %v1963 = vmul.f32 %v1643, %v1888
        %v1964 = vmul.f32 %v1644, %v1890
        %v1965 = vmul.f32 %v1645, %v1892
        %v1966 = vmul.f32 %v1646, %v1894
        %v1967 = vmul.f32 %v1647, %v1896
        %v1968 = vmul.f32 %v1648, %v1898
        %v1969 = vmul.f32 %v1649, %v1900
        %v1970 = vmul.f32 %v1650, %v1902
        %v1971 = vmul.f32 %v1651, %v1904
        %v1972 = vmul.f32 %v1652, %v1906
        %v1973 = vmul.f32 %v1653, %v1908
        %v1974 = vmul.f32 %v1654, %v1910
        %vm1975 = vcmp.ge.f32.partialorder %v537, 0.0
        %vm1976 = vcmp.ge.f32.partialorder %v539, 0.0
        %vm1977 = vcmp.ge.f32.partialorder %v541, 0.0
        %vm1978 = vcmp.ge.f32.partialorder %v543, 0.0
        %vm1979 = vcmp.ge.f32.partialorder %v547, 0.0
        %vm1980 = vcmp.ge.f32.partialorder %v549, 0.0
        %vm1981 = vcmp.ge.f32.partialorder %v551, 0.0
        %vm1982 = vcmp.ge.f32.partialorder %v553, 0.0
        %vm1983 = vcmp.ge.f32.partialorder %v557, 0.0
        %vm1984 = vcmp.ge.f32.partialorder %v559, 0.0
        %vm1985 = vcmp.ge.f32.partialorder %v561, 0.0
        %vm1986 = vcmp.ge.f32.partialorder %v563, 0.0
        %vm1987 = vcmp.ge.f32.partialorder %v567, 0.0
        %vm1988 = vcmp.ge.f32.partialorder %v569, 0.0
        %vm1989 = vcmp.ge.f32.partialorder %v571, 0.0
        %vm1990 = vcmp.ge.f32.partialorder %v573, 0.0
        %vm1991 = vcmp.ge.f32.partialorder %v577, 0.0
        %vm1992 = vcmp.ge.f32.partialorder %v579, 0.0
        %vm1993 = vcmp.ge.f32.partialorder %v581, 0.0
        %vm1994 = vcmp.ge.f32.partialorder %v583, 0.0
        %vm1995 = vcmp.ge.f32.partialorder %v587, 0.0
        %vm1996 = vcmp.ge.f32.partialorder %v589, 0.0
        %vm1997 = vcmp.ge.f32.partialorder %v591, 0.0
        %vm1998 = vcmp.ge.f32.partialorder %v593, 0.0
        %vm1999 = vcmp.ge.f32.partialorder %v597, 0.0
        %vm2000 = vcmp.ge.f32.partialorder %v599, 0.0
        %vm2001 = vcmp.ge.f32.partialorder %v601, 0.0
        %vm2002 = vcmp.ge.f32.partialorder %v603, 0.0
        %vm2003 = vcmp.ge.f32.partialorder %v607, 0.0
        %vm2004 = vcmp.ge.f32.partialorder %v609, 0.0
        %vm2005 = vcmp.ge.f32.partialorder %v611, 0.0
        %vm2006 = vcmp.ge.f32.partialorder %v613, 0.0
        %vm2007 = vcmp.ge.f32.partialorder %v617, 0.0
        %vm2008 = vcmp.ge.f32.partialorder %v619, 0.0
        %vm2009 = vcmp.ge.f32.partialorder %v621, 0.0
        %vm2010 = vcmp.ge.f32.partialorder %v623, 0.0
        %vm2011 = vcmp.ge.f32.partialorder %v627, 0.0
        %vm2012 = vcmp.ge.f32.partialorder %v629, 0.0
        %vm2013 = vcmp.ge.f32.partialorder %v631, 0.0
        %vm2014 = vcmp.ge.f32.partialorder %v633, 0.0
        %vm2015 = vcmp.ge.f32.partialorder %v637, 0.0
        %vm2016 = vcmp.ge.f32.partialorder %v639, 0.0
        %vm2017 = vcmp.ge.f32.partialorder %v641, 0.0
        %vm2018 = vcmp.ge.f32.partialorder %v643, 0.0
        %vm2019 = vcmp.ge.f32.partialorder %v647, 0.0
        %vm2020 = vcmp.ge.f32.partialorder %v649, 0.0
        %vm2021 = vcmp.ge.f32.partialorder %v651, 0.0
        %vm2022 = vcmp.ge.f32.partialorder %v653, 0.0
        %vm2023 = vcmp.ge.f32.partialorder %v657, 0.0
        %vm2024 = vcmp.ge.f32.partialorder %v659, 0.0
        %vm2025 = vcmp.ge.f32.partialorder %v661, 0.0
        %vm2026 = vcmp.ge.f32.partialorder %v663, 0.0
        %vm2027 = vcmp.ge.f32.partialorder %v667, 0.0
        %vm2028 = vcmp.ge.f32.partialorder %v669, 0.0
        %vm2029 = vcmp.ge.f32.partialorder %v671, 0.0
        %vm2030 = vcmp.ge.f32.partialorder %v673, 0.0
        %vm2031 = vcmp.ge.f32.partialorder %v677, 0.0
        %vm2032 = vcmp.ge.f32.partialorder %v679, 0.0
        %vm2033 = vcmp.ge.f32.partialorder %v681, 0.0
        %vm2034 = vcmp.ge.f32.partialorder %v683, 0.0
        %vm2035 = vcmp.ge.f32.partialorder %v687, 0.0
        %vm2036 = vcmp.ge.f32.partialorder %v689, 0.0
        %vm2037 = vcmp.ge.f32.partialorder %v691, 0.0
        %vm2038 = vcmp.ge.f32.partialorder %v693, 0.0
        %v2039 = vsub.f32 1.0, %v1911
        %v2040 = vsub.f32 1.0, %v1912
        %v2041 = vsub.f32 1.0, %v1913
        %v2042 = vsub.f32 1.0, %v1914
        %v2043 = vsub.f32 1.0, %v1915
        %v2044 = vsub.f32 1.0, %v1916
        %v2045 = vsub.f32 1.0, %v1917
        %v2046 = vsub.f32 1.0, %v1918
        %v2047 = vsub.f32 1.0, %v1919
        %v2048 = vsub.f32 1.0, %v1920
        %v2049 = vsub.f32 1.0, %v1921
        %v2050 = vsub.f32 1.0, %v1922
        %v2051 = vsub.f32 1.0, %v1923
        %v2052 = vsub.f32 1.0, %v1924
        %v2053 = vsub.f32 1.0, %v1925
        %v2054 = vsub.f32 1.0, %v1926
        %v2055 = vsub.f32 1.0, %v1927
        %v2056 = vsub.f32 1.0, %v1928
        %v2057 = vsub.f32 1.0, %v1929
        %v2058 = vsub.f32 1.0, %v1930
        %v2059 = vsub.f32 1.0, %v1931
        %v2060 = vsub.f32 1.0, %v1932
        %v2061 = vsub.f32 1.0, %v1933
        %v2062 = vsub.f32 1.0, %v1934
        %v2063 = vsub.f32 1.0, %v1935
        %v2064 = vsub.f32 1.0, %v1936
        %v2065 = vsub.f32 1.0, %v1937
        %v2066 = vsub.f32 1.0, %v1938
        %v2067 = vsub.f32 1.0, %v1939
        %v2068 = vsub.f32 1.0, %v1940
        %v2069 = vsub.f32 1.0, %v1941
        %v2070 = vsub.f32 1.0, %v1942
        %v2071 = vsub.f32 1.0, %v1943
        %v2072 = vsub.f32 1.0, %v1944
        %v2073 = vsub.f32 1.0, %v1945
        %v2074 = vsub.f32 1.0, %v1946
        %v2075 = vsub.f32 1.0, %v1947
        %v2076 = vsub.f32 1.0, %v1948
        %v2077 = vsub.f32 1.0, %v1949
        %v2078 = vsub.f32 1.0, %v1950
        %v2079 = vsub.f32 1.0, %v1951
        %v2080 = vsub.f32 1.0, %v1952
        %v2081 = vsub.f32 1.0, %v1953
        %v2082 = vsub.f32 1.0, %v1954
        %v2083 = vsub.f32 1.0, %v1955
        %v2084 = vsub.f32 1.0, %v1956
        %v2085 = vsub.f32 1.0, %v1957
        %v2086 = vsub.f32 1.0, %v1958
        %v2087 = vsub.f32 1.0, %v1959
        %v2088 = vsub.f32 1.0, %v1960
        %v2089 = vsub.f32 1.0, %v1961
        %v2090 = vsub.f32 1.0, %v1962
        %v2091 = vsub.f32 1.0, %v1963
        %v2092 = vsub.f32 1.0, %v1964
        %v2093 = vsub.f32 1.0, %v1965
        %v2094 = vsub.f32 1.0, %v1966
        %v2095 = vsub.f32 1.0, %v1967
        %v2096 = vsub.f32 1.0, %v1968
        %v2097 = vsub.f32 1.0, %v1969
        %v2098 = vsub.f32 1.0, %v1970
        %v2099 = vsub.f32 1.0, %v1971
        %v2100 = vsub.f32 1.0, %v1972
        %v2101 = vsub.f32 1.0, %v1973
        %v2102 = vsub.f32 1.0, %v1974
        %v2103 = vsel %vm1975, %v2039, %v1911
        %v2104 = vsel %vm1976, %v2040, %v1912
        %v2105 = vsel %vm1977, %v2041, %v1913
        %v2106 = vsel %vm1978, %v2042, %v1914
        %v2107 = vsel %vm1979, %v2043, %v1915
        %v2108 = vsel %vm1980, %v2044, %v1916
        %v2109 = vsel %vm1981, %v2045, %v1917
        %v2110 = vsel %vm1982, %v2046, %v1918
        %v2111 = vsel %vm1983, %v2047, %v1919
        %v2112 = vsel %vm1984, %v2048, %v1920
        %v2113 = vsel %vm1985, %v2049, %v1921
        %v2114 = vsel %vm1986, %v2050, %v1922
        %v2115 = vsel %vm1987, %v2051, %v1923
        %v2116 = vsel %vm1988, %v2052, %v1924
        %v2117 = vsel %vm1989, %v2053, %v1925
        %v2118 = vsel %vm1990, %v2054, %v1926
        %v2119 = vsel %vm1991, %v2055, %v1927
        %v2120 = vsel %vm1992, %v2056, %v1928
        %v2121 = vsel %vm1993, %v2057, %v1929
        %v2122 = vsel %vm1994, %v2058, %v1930
        %v2123 = vsel %vm1995, %v2059, %v1931
        %v2124 = vsel %vm1996, %v2060, %v1932
        %v2125 = vsel %vm1997, %v2061, %v1933
        %v2126 = vsel %vm1998, %v2062, %v1934
        %v2127 = vsel %vm1999, %v2063, %v1935
        %v2128 = vsel %vm2000, %v2064, %v1936
        %v2129 = vsel %vm2001, %v2065, %v1937
        %v2130 = vsel %vm2002, %v2066, %v1938
        %v2131 = vsel %vm2003, %v2067, %v1939
        %v2132 = vsel %vm2004, %v2068, %v1940
        %v2133 = vsel %vm2005, %v2069, %v1941
        %v2134 = vsel %vm2006, %v2070, %v1942
        %v2135 = vsel %vm2007, %v2071, %v1943
        %v2136 = vsel %vm2008, %v2072, %v1944
        %v2137 = vsel %vm2009, %v2073, %v1945
        %v2138 = vsel %vm2010, %v2074, %v1946
        %v2139 = vsel %vm2011, %v2075, %v1947
        %v2140 = vsel %vm2012, %v2076, %v1948
        %v2141 = vsel %vm2013, %v2077, %v1949
        %v2142 = vsel %vm2014, %v2078, %v1950
        %v2143 = vsel %vm2015, %v2079, %v1951
        %v2144 = vsel %vm2016, %v2080, %v1952
        %v2145 = vsel %vm2017, %v2081, %v1953
        %v2146 = vsel %vm2018, %v2082, %v1954
        %v2147 = vsel %vm2019, %v2083, %v1955
        %v2148 = vsel %vm2020, %v2084, %v1956
        %v2149 = vsel %vm2021, %v2085, %v1957
        %v2150 = vsel %vm2022, %v2086, %v1958
        %v2151 = vsel %vm2023, %v2087, %v1959
        %v2152 = vsel %vm2024, %v2088, %v1960
        %v2153 = vsel %vm2025, %v2089, %v1961
        %v2154 = vsel %vm2026, %v2090, %v1962
        %v2155 = vsel %vm2027, %v2091, %v1963
        %v2156 = vsel %vm2028, %v2092, %v1964
        %v2157 = vsel %vm2029, %v2093, %v1965
        %v2158 = vsel %vm2030, %v2094, %v1966
        %v2159 = vsel %vm2031, %v2095, %v1967
        %v2160 = vsel %vm2032, %v2096, %v1968
        %v2161 = vsel %vm2033, %v2097, %v1969
        %v2162 = vsel %vm2034, %v2098, %v1970
        %v2163 = vsel %vm2035, %v2099, %v1971
        %v2164 = vsel %vm2036, %v2100, %v1972
        %v2165 = vsel %vm2037, %v2101, %v1973
        %v2166 = vsel %vm2038, %v2102, %v1974
        %v2167 = vmul.f32 %v537, %v2103
        %v2168 = vmul.f32 %v539, %v2104
        %v2169 = vmul.f32 %v541, %v2105
        %v2170 = vmul.f32 %v543, %v2106
        %v2171 = vmul.f32 %v547, %v2107
        %v2172 = vmul.f32 %v549, %v2108
        %v2173 = vmul.f32 %v551, %v2109
        %v2174 = vmul.f32 %v553, %v2110
        %v2175 = vmul.f32 %v557, %v2111
        %v2176 = vmul.f32 %v559, %v2112
        %v2177 = vmul.f32 %v561, %v2113
        %v2178 = vmul.f32 %v563, %v2114
        %v2179 = vmul.f32 %v567, %v2115
        %v2180 = vmul.f32 %v569, %v2116
        %v2181 = vmul.f32 %v571, %v2117
        %v2182 = vmul.f32 %v573, %v2118
        %v2183 = vmul.f32 %v577, %v2119
        %v2184 = vmul.f32 %v579, %v2120
        %v2185 = vmul.f32 %v581, %v2121
        %v2186 = vmul.f32 %v583, %v2122
        %v2187 = vmul.f32 %v587, %v2123
        %v2188 = vmul.f32 %v589, %v2124
        %v2189 = vmul.f32 %v591, %v2125
        %v2190 = vmul.f32 %v593, %v2126
        %v2191 = vmul.f32 %v597, %v2127
        %v2192 = vmul.f32 %v599, %v2128
        %v2193 = vmul.f32 %v601, %v2129
        %v2194 = vmul.f32 %v603, %v2130
        %v2195 = vmul.f32 %v607, %v2131
        %v2196 = vmul.f32 %v609, %v2132
        %v2197 = vmul.f32 %v611, %v2133
        %v2198 = vmul.f32 %v613, %v2134
        %v2199 = vmul.f32 %v617, %v2135
        %v2200 = vmul.f32 %v619, %v2136
        %v2201 = vmul.f32 %v621, %v2137
        %v2202 = vmul.f32 %v623, %v2138
        %v2203 = vmul.f32 %v627, %v2139
        %v2204 = vmul.f32 %v629, %v2140
        %v2205 = vmul.f32 %v631, %v2141
        %v2206 = vmul.f32 %v633, %v2142
        %v2207 = vmul.f32 %v637, %v2143
        %v2208 = vmul.f32 %v639, %v2144
        %v2209 = vmul.f32 %v641, %v2145
        %v2210 = vmul.f32 %v643, %v2146
        %v2211 = vmul.f32 %v647, %v2147
        %v2212 = vmul.f32 %v649, %v2148
        %v2213 = vmul.f32 %v651, %v2149
        %v2214 = vmul.f32 %v653, %v2150
        %v2215 = vmul.f32 %v657, %v2151
        %v2216 = vmul.f32 %v659, %v2152
        %v2217 = vmul.f32 %v661, %v2153
        %v2218 = vmul.f32 %v663, %v2154
        %v2219 = vmul.f32 %v667, %v2155
        %v2220 = vmul.f32 %v669, %v2156
        %v2221 = vmul.f32 %v671, %v2157
        %v2222 = vmul.f32 %v673, %v2158
        %v2223 = vmul.f32 %v677, %v2159
        %v2224 = vmul.f32 %v679, %v2160
        %v2225 = vmul.f32 %v681, %v2161
        %v2226 = vmul.f32 %v683, %v2162
        %v2227 = vmul.f32 %v687, %v2163
        %v2228 = vmul.f32 %v689, %v2164
        %v2229 = vmul.f32 %v691, %v2165
        %v2230 = vmul.f32 %v693, %v2166
        %2231 = vst [vmem:[#allocation2] sm:$0xff] 0.0
        %2232 = vst [vmem:[#allocation2 + $0x8] sm:$0xff] 0.0
        %2233 = vst [vmem:[#allocation2 + $0x10] sm:$0xff] 0.0
        %2234 = vst [vmem:[#allocation2 + $0x18] sm:$0xff] 0.0
        %2235 = vst [vmem:[#allocation2 + $0x20] sm:$0xff] %v2167
        %2236 = vst [vmem:[#allocation2 + $0x28] sm:$0xff] %v2168
        %2237 = vst [vmem:[#allocation2 + $0x30] sm:$0xff] %v2169
        %2238 = vst [vmem:[#allocation2 + $0x38] sm:$0xff] %v2170
        %2239 = vst [vmem:[#allocation2 + $0x40] sm:$0xff] %v2171
        %2240 = vst [vmem:[#allocation2 + $0x48] sm:$0xff] %v2172
        %2241 = vst [vmem:[#allocation2 + $0x50] sm:$0xff] %v2173
        %2242 = vst [vmem:[#allocation2 + $0x58] sm:$0xff] %v2174
        %2243 = vst [vmem:[#allocation2 + $0x60] sm:$0xff] %v2175
        %2244 = vst [vmem:[#allocation2 + $0x68] sm:$0xff] %v2176
        %2245 = vst [vmem:[#allocation2 + $0x70] sm:$0xff] %v2177
        %2246 = vst [vmem:[#allocation2 + $0x78] sm:$0xff] %v2178
        %2247 = vst [vmem:[#allocation2 + $0x80] sm:$0xff] %v2179
        %2248 = vst [vmem:[#allocation2 + $0x88] sm:$0xff] %v2180
        %2249 = vst [vmem:[#allocation2 + $0x90] sm:$0xff] %v2181
        %2250 = vst [vmem:[#allocation2 + $0x98] sm:$0xff] %v2182
        %2251 = vst [vmem:[#allocation2 + $0xa0] sm:$0xff] %v2183
        %2252 = vst [vmem:[#allocation2 + $0xa8] sm:$0xff] %v2184
        %2253 = vst [vmem:[#allocation2 + $0xb0] sm:$0xff] %v2185
        %2254 = vst [vmem:[#allocation2 + $0xb8] sm:$0xff] %v2186
        %2255 = vst [vmem:[#allocation2 + $0xc0] sm:$0xff] %v2187
        %2256 = vst [vmem:[#allocation2 + $0xc8] sm:$0xff] %v2188
        %2257 = vst [vmem:[#allocation2 + $0xd0] sm:$0xff] %v2189
        %2258 = vst [vmem:[#allocation2 + $0xd8] sm:$0xff] %v2190
        %2259 = vst [vmem:[#allocation2 + $0xe0] sm:$0xff] %v2191
        %2260 = vst [vmem:[#allocation2 + $0xe8] sm:$0xff] %v2192
        %2261 = vst [vmem:[#allocation2 + $0xf0] sm:$0xff] %v2193
        %2262 = vst [vmem:[#allocation2 + $0xf8] sm:$0xff] %v2194
        %2263 = vst [vmem:[#allocation2 + $0x100] sm:$0xff] %v2195
        %2264 = vst [vmem:[#allocation2 + $0x108] sm:$0xff] %v2196
        %2265 = vst [vmem:[#allocation2 + $0x110] sm:$0xff] %v2197
        %2266 = vst [vmem:[#allocation2 + $0x118] sm:$0xff] %v2198
        %2267 = vst [vmem:[#allocation2 + $0x120] sm:$0xff] %v2199
        %2268 = vst [vmem:[#allocation2 + $0x128] sm:$0xff] %v2200
        %2269 = vst [vmem:[#allocation2 + $0x130] sm:$0xff] %v2201
        %2270 = vst [vmem:[#allocation2 + $0x138] sm:$0xff] %v2202
        %2271 = vst [vmem:[#allocation2 + $0x140] sm:$0xff] %v2203
        %2272 = vst [vmem:[#allocation2 + $0x148] sm:$0xff] %v2204
        %2273 = vst [vmem:[#allocation2 + $0x150] sm:$0xff] %v2205
        %2274 = vst [vmem:[#allocation2 + $0x158] sm:$0xff] %v2206
        %2275 = vst [vmem:[#allocation2 + $0x160] sm:$0xff] %v2207
        %2276 = vst [vmem:[#allocation2 + $0x168] sm:$0xff] %v2208
        %2277 = vst [vmem:[#allocation2 + $0x170] sm:$0xff] %v2209
        %2278 = vst [vmem:[#allocation2 + $0x178] sm:$0xff] %v2210
        %2279 = vst [vmem:[#allocation2 + $0x180] sm:$0xff] %v2211
        %2280 = vst [vmem:[#allocation2 + $0x188] sm:$0xff] %v2212
        %2281 = vst [vmem:[#allocation2 + $0x190] sm:$0xff] %v2213
        %2282 = vst [vmem:[#allocation2 + $0x198] sm:$0xff] %v2214
        %2283 = vst [vmem:[#allocation2 + $0x1a0] sm:$0xff] %v2215
        %2284 = vst [vmem:[#allocation2 + $0x1a8] sm:$0xff] %v2216
        %2285 = vst [vmem:[#allocation2 + $0x1b0] sm:$0xff] %v2217
        %2286 = vst [vmem:[#allocation2 + $0x1b8] sm:$0xff] %v2218
        %2287 = vst [vmem:[#allocation2 + $0x1c0] sm:$0xff] %v2219
        %2288 = vst [vmem:[#allocation2 + $0x1c8] sm:$0xff] %v2220
        %2289 = vst [vmem:[#allocation2 + $0x1d0] sm:$0xff] %v2221
        %2290 = vst [vmem:[#allocation2 + $0x1d8] sm:$0xff] %v2222
        %2291 = vst [vmem:[#allocation2 + $0x1e0] sm:$0xff] %v2223
        %2292 = vst [vmem:[#allocation2 + $0x1e8] sm:$0xff] %v2224
        %2293 = vst [vmem:[#allocation2 + $0x1f0] sm:$0xff] %v2225
        %2294 = vst [vmem:[#allocation2 + $0x1f8] sm:$0xff] %v2226
        %2295 = vst [vmem:[#allocation2 + $0x200] sm:$0xff] %v2227
        %2296 = vst [vmem:[#allocation2 + $0x208] sm:$0xff] %v2228
        %2297 = vst [vmem:[#allocation2 + $0x210] sm:$0xff] %v2229
        %2298 = vst [vmem:[#allocation2 + $0x218] sm:$0xff] %v2230
        %2299 = vst [vmem:[#allocation2 + $0x220] sm:$0xff] 0.0
        %2300 = vst [vmem:[#allocation2 + $0x228] sm:$0xff] 0.0
        %2301 = vst [vmem:[#allocation2 + $0x230] sm:$0xff] 0.0
        %2302 = vst [vmem:[#allocation2 + $0x238] sm:$0xff] 0.0
        %v2303 = vld [vmem:[%s3] sm:$0xff]
        %v2304 = vld [vmem:[%s3 + $0x8] sm:$0xff]
        %v2305 = vld [vmem:[%s3 + $0x10] sm:$0x1]
        %v2306 = vld [vmem:[%s3 + $0x18] sm:$0x1]
        %v2307 = vld [vmem:[%s4] sm:$0x3]
        %v2308 = vlaneseq
        %v2309 = vshrl.u32 %v2308, 7
        %v2310 = vadd.s32 %v2309, 8
        %v2311 = vadd.s32 %v2309, 16
        %v2312 = vadd.s32 %v2309, 24
        %v2313 = vadd.s32 %v2309, 32
        %v2314 = vadd.s32 %v2309, 40
        %v2315 = vadd.s32 %v2309, 48
        %v2316 = vadd.s32 %v2309, 56
        %v2317 = vadd.s32 %v2309, 64
        %v2318 = vadd.s32 %v2309, 72
        %v2319 = vadd.s32 %v2309, 80
        %v2320 = vadd.s32 %v2309, 88
        %v2321 = vadd.s32 %v2309, 96
        %v2322 = vadd.s32 %v2309, 104
        %v2323 = vadd.s32 %v2309, 112
        %v2324 = vadd.s32 %v2309, 120
        %v2325 = vadd.s32 %v2309, 128
        %v2326 = vadd.s32 %v2309, 136
        %v2327 = vadd.s32 %v2309, 144
        %v2328 = vadd.s32 %v2309, 152
        %v2329 = vadd.s32 %v2309, 160
        %v2330 = vadd.s32 %v2309, 168
        %v2331 = vadd.s32 %v2309, 176
        %v2332 = vadd.s32 %v2309, 184
        %v2333 = vadd.s32 %v2309, 192
        %v2334 = vadd.s32 %v2309, 200
        %v2335 = vadd.s32 %v2309, 208
        %v2336 = vadd.s32 %v2309, 216
        %v2337 = vadd.s32 %v2309, 224
        %v2338 = vadd.s32 %v2309, 232
        %v2339 = vadd.s32 %v2309, 240
        %v2340 = vadd.s32 %v2309, 248
        %vm2341 = vcmp.lt.s32.totalorder %v2309, 0
        %v2342 = vsub.s32 0, %v2309
        %v2343 = vsel %vm2341, %v2342, %v2309
        %v2344 = vshrl.u32 %v2343, 4
        %v2345 = vand.u32 %v2343, 15
        %v2346 = vsub.s32 0, %v2345
        %v2347 = vsel %vm2341, %v2346, %v2345
        %vm2348 = vcmp.lt.s32.totalorder %v2310, 0
        %v2349 = vsub.s32 0, %v2310
        %v2350 = vsel %vm2348, %v2349, %v2310
        %v2351 = vshrl.u32 %v2350, 4
        %v2352 = vand.u32 %v2350, 15
        %v2353 = vsub.s32 0, %v2352
        %v2354 = vsel %vm2348, %v2353, %v2352
        %vm2355 = vcmp.lt.s32.totalorder %v2311, 0
        %v2356 = vsub.s32 0, %v2311
        %v2357 = vsel %vm2355, %v2356, %v2311
        %v2358 = vshrl.u32 %v2357, 4
        %v2359 = vand.u32 %v2357, 15
        %v2360 = vsub.s32 0, %v2359
        %v2361 = vsel %vm2355, %v2360, %v2359
        %vm2362 = vcmp.lt.s32.totalorder %v2312, 0
        %v2363 = vsub.s32 0, %v2312
        %v2364 = vsel %vm2362, %v2363, %v2312
        %v2365 = vshrl.u32 %v2364, 4
        %v2366 = vand.u32 %v2364, 15
        %v2367 = vsub.s32 0, %v2366
        %v2368 = vsel %vm2362, %v2367, %v2366
        %vm2369 = vcmp.lt.s32.totalorder %v2313, 0
        %v2370 = vsub.s32 0, %v2313
        %v2371 = vsel %vm2369, %v2370, %v2313
        %v2372 = vshrl.u32 %v2371, 4
        %v2373 = vand.u32 %v2371, 15
        %v2374 = vsub.s32 0, %v2373
        %v2375 = vsel %vm2369, %v2374, %v2373
        %vm2376 = vcmp.lt.s32.totalorder %v2314, 0
        %v2377 = vsub.s32 0, %v2314
        %v2378 = vsel %vm2376, %v2377, %v2314
        %v2379 = vshrl.u32 %v2378, 4
        %v2380 = vand.u32 %v2378, 15
        %v2381 = vsub.s32 0, %v2380
        %v2382 = vsel %vm2376, %v2381, %v2380
        %vm2383 = vcmp.lt.s32.totalorder %v2315, 0
        %v2384 = vsub.s32 0, %v2315
        %v2385 = vsel %vm2383, %v2384, %v2315
        %v2386 = vshrl.u32 %v2385, 4
        %v2387 = vand.u32 %v2385, 15
        %v2388 = vsub.s32 0, %v2387
        %v2389 = vsel %vm2383, %v2388, %v2387
        %vm2390 = vcmp.lt.s32.totalorder %v2316, 0
        %v2391 = vsub.s32 0, %v2316
        %v2392 = vsel %vm2390, %v2391, %v2316
        %v2393 = vshrl.u32 %v2392, 4
        %v2394 = vand.u32 %v2392, 15
        %v2395 = vsub.s32 0, %v2394
        %v2396 = vsel %vm2390, %v2395, %v2394
        %vm2397 = vcmp.lt.s32.totalorder %v2317, 0
        %v2398 = vsub.s32 0, %v2317
        %v2399 = vsel %vm2397, %v2398, %v2317
        %v2400 = vshrl.u32 %v2399, 4
        %v2401 = vand.u32 %v2399, 15
        %v2402 = vsub.s32 0, %v2401
        %v2403 = vsel %vm2397, %v2402, %v2401
        %vm2404 = vcmp.lt.s32.totalorder %v2318, 0
        %v2405 = vsub.s32 0, %v2318
        %v2406 = vsel %vm2404, %v2405, %v2318
        %v2407 = vshrl.u32 %v2406, 4
        %v2408 = vand.u32 %v2406, 15
        %v2409 = vsub.s32 0, %v2408
        %v2410 = vsel %vm2404, %v2409, %v2408
        %vm2411 = vcmp.lt.s32.totalorder %v2319, 0
        %v2412 = vsub.s32 0, %v2319
        %v2413 = vsel %vm2411, %v2412, %v2319
        %v2414 = vshrl.u32 %v2413, 4
        %v2415 = vand.u32 %v2413, 15
        %v2416 = vsub.s32 0, %v2415
        %v2417 = vsel %vm2411, %v2416, %v2415
        %vm2418 = vcmp.lt.s32.totalorder %v2320, 0
        %v2419 = vsub.s32 0, %v2320
        %v2420 = vsel %vm2418, %v2419, %v2320
        %v2421 = vshrl.u32 %v2420, 4
        %v2422 = vand.u32 %v2420, 15
        %v2423 = vsub.s32 0, %v2422
        %v2424 = vsel %vm2418, %v2423, %v2422
        %vm2425 = vcmp.lt.s32.totalorder %v2321, 0
        %v2426 = vsub.s32 0, %v2321
        %v2427 = vsel %vm2425, %v2426, %v2321
        %v2428 = vshrl.u32 %v2427, 4
        %v2429 = vand.u32 %v2427, 15
        %v2430 = vsub.s32 0, %v2429
        %v2431 = vsel %vm2425, %v2430, %v2429
        %vm2432 = vcmp.lt.s32.totalorder %v2322, 0
        %v2433 = vsub.s32 0, %v2322
        %v2434 = vsel %vm2432, %v2433, %v2322
        %v2435 = vshrl.u32 %v2434, 4
        %v2436 = vand.u32 %v2434, 15
        %v2437 = vsub.s32 0, %v2436
        %v2438 = vsel %vm2432, %v2437, %v2436
        %vm2439 = vcmp.lt.s32.totalorder %v2323, 0
        %v2440 = vsub.s32 0, %v2323
        %v2441 = vsel %vm2439, %v2440, %v2323
        %v2442 = vshrl.u32 %v2441, 4
        %v2443 = vand.u32 %v2441, 15
        %v2444 = vsub.s32 0, %v2443
        %v2445 = vsel %vm2439, %v2444, %v2443
        %vm2446 = vcmp.lt.s32.totalorder %v2324, 0
        %v2447 = vsub.s32 0, %v2324
        %v2448 = vsel %vm2446, %v2447, %v2324
        %v2449 = vshrl.u32 %v2448, 4
        %v2450 = vand.u32 %v2448, 15
        %v2451 = vsub.s32 0, %v2450
        %v2452 = vsel %vm2446, %v2451, %v2450
        %vm2453 = vcmp.lt.s32.totalorder %v2325, 0
        %v2454 = vsub.s32 0, %v2325
        %v2455 = vsel %vm2453, %v2454, %v2325
        %v2456 = vshrl.u32 %v2455, 4
        %v2457 = vand.u32 %v2455, 15
        %v2458 = vsub.s32 0, %v2457
        %v2459 = vsel %vm2453, %v2458, %v2457
        %vm2460 = vcmp.lt.s32.totalorder %v2326, 0
        %v2461 = vsub.s32 0, %v2326
        %v2462 = vsel %vm2460, %v2461, %v2326
        %v2463 = vshrl.u32 %v2462, 4
        %v2464 = vand.u32 %v2462, 15
        %v2465 = vsub.s32 0, %v2464
        %v2466 = vsel %vm2460, %v2465, %v2464
        %vm2467 = vcmp.lt.s32.totalorder %v2327, 0
        %v2468 = vsub.s32 0, %v2327
        %v2469 = vsel %vm2467, %v2468, %v2327
        %v2470 = vshrl.u32 %v2469, 4
        %v2471 = vand.u32 %v2469, 15
        %v2472 = vsub.s32 0, %v2471
        %v2473 = vsel %vm2467, %v2472, %v2471
        %vm2474 = vcmp.lt.s32.totalorder %v2328, 0
        %v2475 = vsub.s32 0, %v2328
        %v2476 = vsel %vm2474, %v2475, %v2328
        %v2477 = vshrl.u32 %v2476, 4
        %v2478 = vand.u32 %v2476, 15
        %v2479 = vsub.s32 0, %v2478
        %v2480 = vsel %vm2474, %v2479, %v2478
        %vm2481 = vcmp.lt.s32.totalorder %v2329, 0
        %v2482 = vsub.s32 0, %v2329
        %v2483 = vsel %vm2481, %v2482, %v2329
        %v2484 = vshrl.u32 %v2483, 4
        %v2485 = vand.u32 %v2483, 15
        %v2486 = vsub.s32 0, %v2485
        %v2487 = vsel %vm2481, %v2486, %v2485
        %vm2488 = vcmp.lt.s32.totalorder %v2330, 0
        %v2489 = vsub.s32 0, %v2330
        %v2490 = vsel %vm2488, %v2489, %v2330
        %v2491 = vshrl.u32 %v2490, 4
        %v2492 = vand.u32 %v2490, 15
        %v2493 = vsub.s32 0, %v2492
        %v2494 = vsel %vm2488, %v2493, %v2492
        %vm2495 = vcmp.lt.s32.totalorder %v2331, 0
        %v2496 = vsub.s32 0, %v2331
        %v2497 = vsel %vm2495, %v2496, %v2331
        %v2498 = vshrl.u32 %v2497, 4
        %v2499 = vand.u32 %v2497, 15
        %v2500 = vsub.s32 0, %v2499
        %v2501 = vsel %vm2495, %v2500, %v2499
        %vm2502 = vcmp.lt.s32.totalorder %v2332, 0
        %v2503 = vsub.s32 0, %v2332
        %v2504 = vsel %vm2502, %v2503, %v2332
        %v2505 = vshrl.u32 %v2504, 4
        %v2506 = vand.u32 %v2504, 15
        %v2507 = vsub.s32 0, %v2506
        %v2508 = vsel %vm2502, %v2507, %v2506
        %vm2509 = vcmp.lt.s32.totalorder %v2333, 0
        %v2510 = vsub.s32 0, %v2333
        %v2511 = vsel %vm2509, %v2510, %v2333
        %v2512 = vshrl.u32 %v2511, 4
        %v2513 = vand.u32 %v2511, 15
        %v2514 = vsub.s32 0, %v2513
        %v2515 = vsel %vm2509, %v2514, %v2513
        %vm2516 = vcmp.lt.s32.totalorder %v2334, 0
        %v2517 = vsub.s32 0, %v2334
        %v2518 = vsel %vm2516, %v2517, %v2334
        %v2519 = vshrl.u32 %v2518, 4
        %v2520 = vand.u32 %v2518, 15
        %v2521 = vsub.s32 0, %v2520
        %v2522 = vsel %vm2516, %v2521, %v2520
        %vm2523 = vcmp.lt.s32.totalorder %v2335, 0
        %v2524 = vsub.s32 0, %v2335
        %v2525 = vsel %vm2523, %v2524, %v2335
        %v2526 = vshrl.u32 %v2525, 4
        %v2527 = vand.u32 %v2525, 15
        %v2528 = vsub.s32 0, %v2527
        %v2529 = vsel %vm2523, %v2528, %v2527
        %vm2530 = vcmp.lt.s32.totalorder %v2336, 0
        %v2531 = vsub.s32 0, %v2336
        %v2532 = vsel %vm2530, %v2531, %v2336
        %v2533 = vshrl.u32 %v2532, 4
        %v2534 = vand.u32 %v2532, 15
        %v2535 = vsub.s32 0, %v2534
        %v2536 = vsel %vm2530, %v2535, %v2534
        %vm2537 = vcmp.lt.s32.totalorder %v2337, 0
        %v2538 = vsub.s32 0, %v2337
        %v2539 = vsel %vm2537, %v2538, %v2337
        %v2540 = vshrl.u32 %v2539, 4
        %v2541 = vand.u32 %v2539, 15
        %v2542 = vsub.s32 0, %v2541
        %v2543 = vsel %vm2537, %v2542, %v2541
        %vm2544 = vcmp.lt.s32.totalorder %v2338, 0
        %v2545 = vsub.s32 0, %v2338
        %v2546 = vsel %vm2544, %v2545, %v2338
        %v2547 = vshrl.u32 %v2546, 4
        %v2548 = vand.u32 %v2546, 15
        %v2549 = vsub.s32 0, %v2548
        %v2550 = vsel %vm2544, %v2549, %v2548
        %vm2551 = vcmp.lt.s32.totalorder %v2339, 0
        %v2552 = vsub.s32 0, %v2339
        %v2553 = vsel %vm2551, %v2552, %v2339
        %v2554 = vshrl.u32 %v2553, 4
        %v2555 = vand.u32 %v2553, 15
        %v2556 = vsub.s32 0, %v2555
        %v2557 = vsel %vm2551, %v2556, %v2555
        %vm2558 = vcmp.lt.s32.totalorder %v2340, 0
        %v2559 = vsub.s32 0, %v2340
        %v2560 = vsel %vm2558, %v2559, %v2340
        %v2561 = vshrl.u32 %v2560, 4
        %v2562 = vand.u32 %v2560, 15
        %v2563 = vsub.s32 0, %v2562
        %v2564 = vsel %vm2558, %v2563, %v2562
        %vm2565 = vcmp.ne.s32.totalorder %v2347, 0
        %vm2566 = vcmp.ne.s32.totalorder %v2354, 0
        %vm2567 = vcmp.ne.s32.totalorder %v2361, 0
        %vm2568 = vcmp.ne.s32.totalorder %v2368, 0
        %vm2569 = vcmp.ne.s32.totalorder %v2375, 0
        %vm2570 = vcmp.ne.s32.totalorder %v2382, 0
        %vm2571 = vcmp.ne.s32.totalorder %v2389, 0
        %vm2572 = vcmp.ne.s32.totalorder %v2396, 0
        %vm2573 = vcmp.ne.s32.totalorder %v2403, 0
        %vm2574 = vcmp.ne.s32.totalorder %v2410, 0
        %vm2575 = vcmp.ne.s32.totalorder %v2417, 0
        %vm2576 = vcmp.ne.s32.totalorder %v2424, 0
        %vm2577 = vcmp.ne.s32.totalorder %v2431, 0
        %vm2578 = vcmp.ne.s32.totalorder %v2438, 0
        %vm2579 = vcmp.ne.s32.totalorder %v2445, 0
        %vm2580 = vcmp.ne.s32.totalorder %v2452, 0
        %vm2581 = vcmp.ne.s32.totalorder %v2459, 0
        %vm2582 = vcmp.ne.s32.totalorder %v2466, 0
        %vm2583 = vcmp.ne.s32.totalorder %v2473, 0
        %vm2584 = vcmp.ne.s32.totalorder %v2480, 0
        %vm2585 = vcmp.ne.s32.totalorder %v2487, 0
        %vm2586 = vcmp.ne.s32.totalorder %v2494, 0
        %vm2587 = vcmp.ne.s32.totalorder %v2501, 0
        %vm2588 = vcmp.ne.s32.totalorder %v2508, 0
        %vm2589 = vcmp.ne.s32.totalorder %v2515, 0
        %vm2590 = vcmp.ne.s32.totalorder %v2522, 0
        %vm2591 = vcmp.ne.s32.totalorder %v2529, 0
        %vm2592 = vcmp.ne.s32.totalorder %v2536, 0
        %vm2593 = vcmp.ne.s32.totalorder %v2543, 0
        %vm2594 = vcmp.ne.s32.totalorder %v2550, 0
        %vm2595 = vcmp.ne.s32.totalorder %v2557, 0
        %vm2596 = vcmp.ne.s32.totalorder %v2564, 0
        %vm2597 = vcmp.lt.s32.totalorder %v2347, 0
        %vm2598 = vcmp.lt.s32.totalorder %v2354, 0
        %vm2599 = vcmp.lt.s32.totalorder %v2361, 0
        %vm2600 = vcmp.lt.s32.totalorder %v2368, 0
        %vm2601 = vcmp.lt.s32.totalorder %v2375, 0
        %vm2602 = vcmp.lt.s32.totalorder %v2382, 0
        %vm2603 = vcmp.lt.s32.totalorder %v2389, 0
        %vm2604 = vcmp.lt.s32.totalorder %v2396, 0
        %vm2605 = vcmp.lt.s32.totalorder %v2403, 0
        %vm2606 = vcmp.lt.s32.totalorder %v2410, 0
        %vm2607 = vcmp.lt.s32.totalorder %v2417, 0
        %vm2608 = vcmp.lt.s32.totalorder %v2424, 0
        %vm2609 = vcmp.lt.s32.totalorder %v2431, 0
        %vm2610 = vcmp.lt.s32.totalorder %v2438, 0
        %vm2611 = vcmp.lt.s32.totalorder %v2445, 0
        %vm2612 = vcmp.lt.s32.totalorder %v2452, 0
        %vm2613 = vcmp.lt.s32.totalorder %v2459, 0
        %vm2614 = vcmp.lt.s32.totalorder %v2466, 0
        %vm2615 = vcmp.lt.s32.totalorder %v2473, 0
        %vm2616 = vcmp.lt.s32.totalorder %v2480, 0
        %vm2617 = vcmp.lt.s32.totalorder %v2487, 0
        %vm2618 = vcmp.lt.s32.totalorder %v2494, 0
        %vm2619 = vcmp.lt.s32.totalorder %v2501, 0
        %vm2620 = vcmp.lt.s32.totalorder %v2508, 0
        %vm2621 = vcmp.lt.s32.totalorder %v2515, 0
        %vm2622 = vcmp.lt.s32.totalorder %v2522, 0
        %vm2623 = vcmp.lt.s32.totalorder %v2529, 0
        %vm2624 = vcmp.lt.s32.totalorder %v2536, 0
        %vm2625 = vcmp.lt.s32.totalorder %v2543, 0
        %vm2626 = vcmp.lt.s32.totalorder %v2550, 0
        %vm2627 = vcmp.lt.s32.totalorder %v2557, 0
        %vm2628 = vcmp.lt.s32.totalorder %v2564, 0
        %vm2629 = vmand %vm2597, %vm2565
        %vm2630 = vmand %vm2598, %vm2566
        %vm2631 = vmand %vm2599, %vm2567
        %vm2632 = vmand %vm2600, %vm2568
        %vm2633 = vmand %vm2601, %vm2569
        %vm2634 = vmand %vm2602, %vm2570
        %vm2635 = vmand %vm2603, %vm2571
        %vm2636 = vmand %vm2604, %vm2572
        %vm2637 = vmand %vm2605, %vm2573
        %vm2638 = vmand %vm2606, %vm2574
        %vm2639 = vmand %vm2607, %vm2575
        %vm2640 = vmand %vm2608, %vm2576
        %vm2641 = vmand %vm2609, %vm2577
        %vm2642 = vmand %vm2610, %vm2578
        %vm2643 = vmand %vm2611, %vm2579
        %vm2644 = vmand %vm2612, %vm2580
        %vm2645 = vmand %vm2613, %vm2581
        %vm2646 = vmand %vm2614, %vm2582
        %vm2647 = vmand %vm2615, %vm2583
        %vm2648 = vmand %vm2616, %vm2584
        %vm2649 = vmand %vm2617, %vm2585
        %vm2650 = vmand %vm2618, %vm2586
        %vm2651 = vmand %vm2619, %vm2587
        %vm2652 = vmand %vm2620, %vm2588
        %vm2653 = vmand %vm2621, %vm2589
        %vm2654 = vmand %vm2622, %vm2590
        %vm2655 = vmand %vm2623, %vm2591
        %vm2656 = vmand %vm2624, %vm2592
        %vm2657 = vmand %vm2625, %vm2593
        %vm2658 = vmand %vm2626, %vm2594
        %vm2659 = vmand %vm2627, %vm2595
        %vm2660 = vmand %vm2628, %vm2596
        %v2661 = vadd.s32 %v2347, 16
        %v2662 = vadd.s32 %v2354, 16
        %v2663 = vadd.s32 %v2361, 16
        %v2664 = vadd.s32 %v2368, 16
        %v2665 = vadd.s32 %v2375, 16
        %v2666 = vadd.s32 %v2382, 16
        %v2667 = vadd.s32 %v2389, 16
        %v2668 = vadd.s32 %v2396, 16
        %v2669 = vadd.s32 %v2403, 16
        %v2670 = vadd.s32 %v2410, 16
        %v2671 = vadd.s32 %v2417, 16
        %v2672 = vadd.s32 %v2424, 16
        %v2673 = vadd.s32 %v2431, 16
        %v2674 = vadd.s32 %v2438, 16
        %v2675 = vadd.s32 %v2445, 16
        %v2676 = vadd.s32 %v2452, 16
        %v2677 = vadd.s32 %v2459, 16
        %v2678 = vadd.s32 %v2466, 16
        %v2679 = vadd.s32 %v2473, 16
        %v2680 = vadd.s32 %v2480, 16
        %v2681 = vadd.s32 %v2487, 16
        %v2682 = vadd.s32 %v2494, 16
        %v2683 = vadd.s32 %v2501, 16
        %v2684 = vadd.s32 %v2508, 16
        %v2685 = vadd.s32 %v2515, 16
        %v2686 = vadd.s32 %v2522, 16
        %v2687 = vadd.s32 %v2529, 16
        %v2688 = vadd.s32 %v2536, 16
        %v2689 = vadd.s32 %v2543, 16
        %v2690 = vadd.s32 %v2550, 16
        %v2691 = vadd.s32 %v2557, 16
        %v2692 = vadd.s32 %v2564, 16
        %v2693 = vsel %vm2629, %v2661, %v2347
        %v2694 = vsel %vm2630, %v2662, %v2354
        %v2695 = vsel %vm2631, %v2663, %v2361
        %v2696 = vsel %vm2632, %v2664, %v2368
        %v2697 = vsel %vm2633, %v2665, %v2375
        %v2698 = vsel %vm2634, %v2666, %v2382
        %v2699 = vsel %vm2635, %v2667, %v2389
        %v2700 = vsel %vm2636, %v2668, %v2396
        %v2701 = vsel %vm2637, %v2669, %v2403
        %v2702 = vsel %vm2638, %v2670, %v2410
        %v2703 = vsel %vm2639, %v2671, %v2417
        %v2704 = vsel %vm2640, %v2672, %v2424
        %v2705 = vsel %vm2641, %v2673, %v2431
        %v2706 = vsel %vm2642, %v2674, %v2438
        %v2707 = vsel %vm2643, %v2675, %v2445
        %v2708 = vsel %vm2644, %v2676, %v2452
        %v2709 = vsel %vm2645, %v2677, %v2459
        %v2710 = vsel %vm2646, %v2678, %v2466
        %v2711 = vsel %vm2647, %v2679, %v2473
        %v2712 = vsel %vm2648, %v2680, %v2480
        %v2713 = vsel %vm2649, %v2681, %v2487
        %v2714 = vsel %vm2650, %v2682, %v2494
        %v2715 = vsel %vm2651, %v2683, %v2501
        %v2716 = vsel %vm2652, %v2684, %v2508
        %v2717 = vsel %vm2653, %v2685, %v2515
        %v2718 = vsel %vm2654, %v2686, %v2522
        %v2719 = vsel %vm2655, %v2687, %v2529
        %v2720 = vsel %vm2656, %v2688, %v2536
        %v2721 = vsel %vm2657, %v2689, %v2543
        %v2722 = vsel %vm2658, %v2690, %v2550
        %v2723 = vsel %vm2659, %v2691, %v2557
        %v2724 = vsel %vm2660, %v2692, %v2564
        %vm2725 = vcmp.eq.s32.totalorder %v2693, 0
        %vm2726 = vcmp.eq.s32.totalorder %v2694, 0
        %vm2727 = vcmp.eq.s32.totalorder %v2695, 0
        %vm2728 = vcmp.eq.s32.totalorder %v2696, 0
        %vm2729 = vcmp.eq.s32.totalorder %v2697, 0
        %vm2730 = vcmp.eq.s32.totalorder %v2698, 0
        %vm2731 = vcmp.eq.s32.totalorder %v2699, 0
        %vm2732 = vcmp.eq.s32.totalorder %v2700, 0
        %vm2733 = vcmp.eq.s32.totalorder %v2701, 0
        %vm2734 = vcmp.eq.s32.totalorder %v2702, 0
        %vm2735 = vcmp.eq.s32.totalorder %v2703, 0
        %vm2736 = vcmp.eq.s32.totalorder %v2704, 0
        %vm2737 = vcmp.eq.s32.totalorder %v2705, 0
        %vm2738 = vcmp.eq.s32.totalorder %v2706, 0
        %vm2739 = vcmp.eq.s32.totalorder %v2707, 0
        %vm2740 = vcmp.eq.s32.totalorder %v2708, 0
        %vm2741 = vcmp.eq.s32.totalorder %v2709, 0
        %vm2742 = vcmp.eq.s32.totalorder %v2710, 0
        %vm2743 = vcmp.eq.s32.totalorder %v2711, 0
        %vm2744 = vcmp.eq.s32.totalorder %v2712, 0
        %vm2745 = vcmp.eq.s32.totalorder %v2713, 0
        %vm2746 = vcmp.eq.s32.totalorder %v2714, 0
        %vm2747 = vcmp.eq.s32.totalorder %v2715, 0
        %vm2748 = vcmp.eq.s32.totalorder %v2716, 0
        %vm2749 = vcmp.eq.s32.totalorder %v2717, 0
        %vm2750 = vcmp.eq.s32.totalorder %v2718, 0
        %vm2751 = vcmp.eq.s32.totalorder %v2719, 0
        %vm2752 = vcmp.eq.s32.totalorder %v2720, 0
        %vm2753 = vcmp.eq.s32.totalorder %v2721, 0
        %vm2754 = vcmp.eq.s32.totalorder %v2722, 0
        %vm2755 = vcmp.eq.s32.totalorder %v2723, 0
        %vm2756 = vcmp.eq.s32.totalorder %v2724, 0
        %vm2757 = vcmp.eq.s32.totalorder %v2693, 15
        %vm2758 = vcmp.eq.s32.totalorder %v2694, 15
        %vm2759 = vcmp.eq.s32.totalorder %v2695, 15
        %vm2760 = vcmp.eq.s32.totalorder %v2696, 15
        %vm2761 = vcmp.eq.s32.totalorder %v2697, 15
        %vm2762 = vcmp.eq.s32.totalorder %v2698, 15
        %vm2763 = vcmp.eq.s32.totalorder %v2699, 15
        %vm2764 = vcmp.eq.s32.totalorder %v2700, 15
        %vm2765 = vcmp.eq.s32.totalorder %v2701, 15
        %vm2766 = vcmp.eq.s32.totalorder %v2702, 15
        %vm2767 = vcmp.eq.s32.totalorder %v2703, 15
        %vm2768 = vcmp.eq.s32.totalorder %v2704, 15
        %vm2769 = vcmp.eq.s32.totalorder %v2705, 15
        %vm2770 = vcmp.eq.s32.totalorder %v2706, 15
        %vm2771 = vcmp.eq.s32.totalorder %v2707, 15
        %vm2772 = vcmp.eq.s32.totalorder %v2708, 15
        %vm2773 = vcmp.eq.s32.totalorder %v2709, 15
        %vm2774 = vcmp.eq.s32.totalorder %v2710, 15
        %vm2775 = vcmp.eq.s32.totalorder %v2711, 15
        %vm2776 = vcmp.eq.s32.totalorder %v2712, 15
        %vm2777 = vcmp.eq.s32.totalorder %v2713, 15
        %vm2778 = vcmp.eq.s32.totalorder %v2714, 15
        %vm2779 = vcmp.eq.s32.totalorder %v2715, 15
        %vm2780 = vcmp.eq.s32.totalorder %v2716, 15
        %vm2781 = vcmp.eq.s32.totalorder %v2717, 15
        %vm2782 = vcmp.eq.s32.totalorder %v2718, 15
        %vm2783 = vcmp.eq.s32.totalorder %v2719, 15
        %vm2784 = vcmp.eq.s32.totalorder %v2720, 15
        %vm2785 = vcmp.eq.s32.totalorder %v2721, 15
        %vm2786 = vcmp.eq.s32.totalorder %v2722, 15
        %vm2787 = vcmp.eq.s32.totalorder %v2723, 15
        %vm2788 = vcmp.eq.s32.totalorder %v2724, 15
        %v2789 = vld [vmem:[#allocation2] sm:$0xff]
        %v2790 = vld [vmem:[#allocation2 + $0x8] sm:$0xff]
        %v2791 = vld [vmem:[#allocation2 + $0x10] sm:$0xff]
        %v2792 = vld [vmem:[#allocation2 + $0x18] sm:$0xff]
        %v2793 = vld [vmem:[#allocation2 + $0x20] sm:$0xff]
        %v2794 = vld [vmem:[#allocation2 + $0x28] sm:$0xff]
        %v2795 = vld [vmem:[#allocation2 + $0x30] sm:$0xff]
        %v2796 = vld [vmem:[#allocation2 + $0x38] sm:$0xff]
        %v2797 = vld [vmem:[#allocation2 + $0x40] sm:$0xff]
        %v2798 = vld [vmem:[#allocation2 + $0x48] sm:$0xff]
        %v2799 = vld [vmem:[#allocation2 + $0x50] sm:$0xff]
        %v2800 = vld [vmem:[#allocation2 + $0x58] sm:$0xff]
        %v2801 = vld [vmem:[#allocation2 + $0x60] sm:$0xff]
        %v2802 = vld [vmem:[#allocation2 + $0x68] sm:$0xff]
        %v2803 = vld [vmem:[#allocation2 + $0x70] sm:$0xff]
        %v2804 = vld [vmem:[#allocation2 + $0x78] sm:$0xff]
        %v2805 = vld [vmem:[#allocation2 + $0x80] sm:$0xff]
        %v2806 = vld [vmem:[#allocation2 + $0x88] sm:$0xff]
        %v2807 = vld [vmem:[#allocation2 + $0x90] sm:$0xff]
        %v2808 = vld [vmem:[#allocation2 + $0x98] sm:$0xff]
        %v2809 = vld [vmem:[#allocation2 + $0xa0] sm:$0xff]
        %v2810 = vld [vmem:[#allocation2 + $0xa8] sm:$0xff]
        %v2811 = vld [vmem:[#allocation2 + $0xb0] sm:$0xff]
        %v2812 = vld [vmem:[#allocation2 + $0xb8] sm:$0xff]
        %v2813 = vld [vmem:[#allocation2 + $0xc0] sm:$0xff]
        %v2814 = vld [vmem:[#allocation2 + $0xc8] sm:$0xff]
        %v2815 = vld [vmem:[#allocation2 + $0xd0] sm:$0xff]
        %v2816 = vld [vmem:[#allocation2 + $0xd8] sm:$0xff]
        %v2817 = vld [vmem:[#allocation2 + $0xe0] sm:$0xff]
        %v2818 = vld [vmem:[#allocation2 + $0xe8] sm:$0xff]
        %v2819 = vld [vmem:[#allocation2 + $0xf0] sm:$0xff]
        %v2820 = vld [vmem:[#allocation2 + $0xf8] sm:$0xff]
        %v2821 = vld [vmem:[#allocation2 + $0x100] sm:$0xff]
        %v2822 = vld [vmem:[#allocation2 + $0x108] sm:$0xff]
        %v2823 = vld [vmem:[#allocation2 + $0x110] sm:$0xff]
        %v2824 = vld [vmem:[#allocation2 + $0x118] sm:$0xff]
        %v2825 = vld [vmem:[#allocation2 + $0x120] sm:$0xff]
        %v2826 = vld [vmem:[#allocation2 + $0x128] sm:$0xff]
        %v2827 = vld [vmem:[#allocation2 + $0x130] sm:$0xff]
        %v2828 = vld [vmem:[#allocation2 + $0x138] sm:$0xff]
        %v2829 = vld [vmem:[#allocation2 + $0x140] sm:$0xff]
        %v2830 = vld [vmem:[#allocation2 + $0x148] sm:$0xff]
        %v2831 = vld [vmem:[#allocation2 + $0x150] sm:$0xff]
        %v2832 = vld [vmem:[#allocation2 + $0x158] sm:$0xff]
        %v2833 = vld [vmem:[#allocation2 + $0x160] sm:$0xff]
        %v2834 = vld [vmem:[#allocation2 + $0x168] sm:$0xff]
        %v2835 = vld [vmem:[#allocation2 + $0x170] sm:$0xff]
        %v2836 = vld [vmem:[#allocation2 + $0x178] sm:$0xff]
        %v2837 = vld [vmem:[#allocation2 + $0x180] sm:$0xff]
        %v2838 = vld [vmem:[#allocation2 + $0x188] sm:$0xff]
        %v2839 = vld [vmem:[#allocation2 + $0x190] sm:$0xff]
        %v2840 = vld [vmem:[#allocation2 + $0x198] sm:$0xff]
        %v2841 = vld [vmem:[#allocation2 + $0x1a0] sm:$0xff]
        %v2842 = vld [vmem:[#allocation2 + $0x1a8] sm:$0xff]
        %v2843 = vld [vmem:[#allocation2 + $0x1b0] sm:$0xff]
        %v2844 = vld [vmem:[#allocation2 + $0x1b8] sm:$0xff]
        %v2845 = vld [vmem:[#allocation2 + $0x1c0] sm:$0xff]
        %v2846 = vld [vmem:[#allocation2 + $0x1c8] sm:$0xff]
        %v2847 = vld [vmem:[#allocation2 + $0x1d0] sm:$0xff]
        %v2848 = vld [vmem:[#allocation2 + $0x1d8] sm:$0xff]
        %v2849 = vld [vmem:[#allocation2 + $0x1e0] sm:$0xff]
        %v2850 = vld [vmem:[#allocation2 + $0x1e8] sm:$0xff]
        %v2851 = vld [vmem:[#allocation2 + $0x1f0] sm:$0xff]
        %v2852 = vld [vmem:[#allocation2 + $0x1f8] sm:$0xff]
        %v2853 = vld [vmem:[#allocation2 + $0x200] sm:$0xff]
        %v2854 = vld [vmem:[#allocation2 + $0x208] sm:$0xff]
        %v2855 = vld [vmem:[#allocation2 + $0x210] sm:$0xff]
        %v2856 = vld [vmem:[#allocation2 + $0x218] sm:$0xff]
        %v2857 = vld [vmem:[#allocation2 + $0x40] sm:$0xff]
        %v2858 = vld [vmem:[#allocation2 + $0x48] sm:$0xff]
        %v2859 = vld [vmem:[#allocation2 + $0x50] sm:$0xff]
        %v2860 = vld [vmem:[#allocation2 + $0x58] sm:$0xff]
        %v2861 = vld [vmem:[#allocation2 + $0x60] sm:$0xff]
        %v2862 = vld [vmem:[#allocation2 + $0x68] sm:$0xff]
        %v2863 = vld [vmem:[#allocation2 + $0x70] sm:$0xff]
        %v2864 = vld [vmem:[#allocation2 + $0x78] sm:$0xff]
        %v2865 = vld [vmem:[#allocation2 + $0x80] sm:$0xff]
        %v2866 = vld [vmem:[#allocation2 + $0x88] sm:$0xff]
        %v2867 = vld [vmem:[#allocation2 + $0x90] sm:$0xff]
        %v2868 = vld [vmem:[#allocation2 + $0x98] sm:$0xff]
        %v2869 = vld [vmem:[#allocation2 + $0xa0] sm:$0xff]
        %v2870 = vld [vmem:[#allocation2 + $0xa8] sm:$0xff]
        %v2871 = vld [vmem:[#allocation2 + $0xb0] sm:$0xff]
        %v2872 = vld [vmem:[#allocation2 + $0xb8] sm:$0xff]
        %v2873 = vld [vmem:[#allocation2 + $0xc0] sm:$0xff]
        %v2874 = vld [vmem:[#allocation2 + $0xc8] sm:$0xff]
        %v2875 = vld [vmem:[#allocation2 + $0xd0] sm:$0xff]
        %v2876 = vld [vmem:[#allocation2 + $0xd8] sm:$0xff]
        %v2877 = vld [vmem:[#allocation2 + $0xe0] sm:$0xff]
        %v2878 = vld [vmem:[#allocation2 + $0xe8] sm:$0xff]
        %v2879 = vld [vmem:[#allocation2 + $0xf0] sm:$0xff]
        %v2880 = vld [vmem:[#allocation2 + $0xf8] sm:$0xff]
        %v2881 = vld [vmem:[#allocation2 + $0x100] sm:$0xff]
        %v2882 = vld [vmem:[#allocation2 + $0x108] sm:$0xff]
        %v2883 = vld [vmem:[#allocation2 + $0x110] sm:$0xff]
        %v2884 = vld [vmem:[#allocation2 + $0x118] sm:$0xff]
        %v2885 = vld [vmem:[#allocation2 + $0x120] sm:$0xff]
        %v2886 = vld [vmem:[#allocation2 + $0x128] sm:$0xff]
        %v2887 = vld [vmem:[#allocation2 + $0x130] sm:$0xff]
        %v2888 = vld [vmem:[#allocation2 + $0x138] sm:$0xff]
        %v2889 = vld [vmem:[#allocation2 + $0x140] sm:$0xff]
        %v2890 = vld [vmem:[#allocation2 + $0x148] sm:$0xff]
        %v2891 = vld [vmem:[#allocation2 + $0x150] sm:$0xff]
        %v2892 = vld [vmem:[#allocation2 + $0x158] sm:$0xff]
        %v2893 = vld [vmem:[#allocation2 + $0x160] sm:$0xff]
        %v2894 = vld [vmem:[#allocation2 + $0x168] sm:$0xff]
        %v2895 = vld [vmem:[#allocation2 + $0x170] sm:$0xff]
        %v2896 = vld [vmem:[#allocation2 + $0x178] sm:$0xff]
        %v2897 = vld [vmem:[#allocation2 + $0x180] sm:$0xff]
        %v2898 = vld [vmem:[#allocation2 + $0x188] sm:$0xff]
        %v2899 = vld [vmem:[#allocation2 + $0x190] sm:$0xff]
        %v2900 = vld [vmem:[#allocation2 + $0x198] sm:$0xff]
        %v2901 = vld [vmem:[#allocation2 + $0x1a0] sm:$0xff]
        %v2902 = vld [vmem:[#allocation2 + $0x1a8] sm:$0xff]
        %v2903 = vld [vmem:[#allocation2 + $0x1b0] sm:$0xff]
        %v2904 = vld [vmem:[#allocation2 + $0x1b8] sm:$0xff]
        %v2905 = vld [vmem:[#allocation2 + $0x1c0] sm:$0xff]
        %v2906 = vld [vmem:[#allocation2 + $0x1c8] sm:$0xff]
        %v2907 = vld [vmem:[#allocation2 + $0x1d0] sm:$0xff]
        %v2908 = vld [vmem:[#allocation2 + $0x1d8] sm:$0xff]
        %v2909 = vld [vmem:[#allocation2 + $0x1e0] sm:$0xff]
        %v2910 = vld [vmem:[#allocation2 + $0x1e8] sm:$0xff]
        %v2911 = vld [vmem:[#allocation2 + $0x1f0] sm:$0xff]
        %v2912 = vld [vmem:[#allocation2 + $0x1f8] sm:$0xff]
        %v2913 = vld [vmem:[#allocation2 + $0x200] sm:$0xff]
        %v2914 = vld [vmem:[#allocation2 + $0x208] sm:$0xff]
        %v2915 = vld [vmem:[#allocation2 + $0x210] sm:$0xff]
        %v2916 = vld [vmem:[#allocation2 + $0x218] sm:$0xff]
        %v2917 = vld [vmem:[#allocation2 + $0x220] sm:$0xff]
        %v2918 = vld [vmem:[#allocation2 + $0x228] sm:$0xff]
        %v2919 = vld [vmem:[#allocation2 + $0x230] sm:$0xff]
        %v2920 = vld [vmem:[#allocation2 + $0x238] sm:$0xff]
        %v2921 = vlaneseq
        %v2922 = vshrl.u32 %v2921, 7
        %v2923 = vsub.s32 0, %v2922
        %v2924 = vrot.slane %v2303, %v2923
        %v2925 = vlaneseq
        %v2926 = vshrl.u32 %v2925, 7
        %v2927 = vsub.s32 0, %v2926
        %v2928 = vrot.slane %v2304, %v2927
        %v2929 = vmul.f32 %v2789, %v2924
        %v2930 = vmul.f32 %v2790, %v2928
        %v2931 = vmul.f32 %v2791, %v2924
        %v2932 = vmul.f32 %v2792, %v2928
        %v2933 = vmul.f32 %v2793, %v2924
        %v2934 = vmul.f32 %v2794, %v2928
        %v2935 = vmul.f32 %v2795, %v2924
        %v2936 = vmul.f32 %v2796, %v2928
        %v2937 = vmul.f32 %v2797, %v2924
        %v2938 = vmul.f32 %v2798, %v2928
        %v2939 = vmul.f32 %v2799, %v2924
        %v2940 = vmul.f32 %v2800, %v2928
        %v2941 = vmul.f32 %v2801, %v2924
        %v2942 = vmul.f32 %v2802, %v2928
        %v2943 = vmul.f32 %v2803, %v2924
        %v2944 = vmul.f32 %v2804, %v2928
        %v2945 = vmul.f32 %v2805, %v2924
        %v2946 = vmul.f32 %v2806, %v2928
        %v2947 = vmul.f32 %v2807, %v2924
        %v2948 = vmul.f32 %v2808, %v2928
        %v2949 = vmul.f32 %v2809, %v2924
        %v2950 = vmul.f32 %v2810, %v2928
        %v2951 = vmul.f32 %v2811, %v2924
        %v2952 = vmul.f32 %v2812, %v2928
        %v2953 = vmul.f32 %v2813, %v2924
        %v2954 = vmul.f32 %v2814, %v2928
        %v2955 = vmul.f32 %v2815, %v2924
        %v2956 = vmul.f32 %v2816, %v2928
        %v2957 = vmul.f32 %v2817, %v2924
        %v2958 = vmul.f32 %v2818, %v2928
        %v2959 = vmul.f32 %v2819, %v2924
        %v2960 = vmul.f32 %v2820, %v2928
        %v2961 = vmul.f32 %v2821, %v2924
        %v2962 = vmul.f32 %v2822, %v2928
        %v2963 = vmul.f32 %v2823, %v2924
        %v2964 = vmul.f32 %v2824, %v2928
        %v2965 = vmul.f32 %v2825, %v2924
        %v2966 = vmul.f32 %v2826, %v2928
        %v2967 = vmul.f32 %v2827, %v2924
        %v2968 = vmul.f32 %v2828, %v2928
        %v2969 = vmul.f32 %v2829, %v2924
        %v2970 = vmul.f32 %v2830, %v2928
        %v2971 = vmul.f32 %v2831, %v2924
        %v2972 = vmul.f32 %v2832, %v2928
        %v2973 = vmul.f32 %v2833, %v2924
        %v2974 = vmul.f32 %v2834, %v2928
        %v2975 = vmul.f32 %v2835, %v2924
        %v2976 = vmul.f32 %v2836, %v2928
        %v2977 = vmul.f32 %v2837, %v2924
        %v2978 = vmul.f32 %v2838, %v2928
        %v2979 = vmul.f32 %v2839, %v2924
        %v2980 = vmul.f32 %v2840, %v2928
        %v2981 = vmul.f32 %v2841, %v2924
        %v2982 = vmul.f32 %v2842, %v2928
        %v2983 = vmul.f32 %v2843, %v2924
        %v2984 = vmul.f32 %v2844, %v2928
        %v2985 = vmul.f32 %v2845, %v2924
        %v2986 = vmul.f32 %v2846, %v2928
        %v2987 = vmul.f32 %v2847, %v2924
        %v2988 = vmul.f32 %v2848, %v2928
        %v2989 = vmul.f32 %v2849, %v2924
        %v2990 = vmul.f32 %v2850, %v2928
        %v2991 = vmul.f32 %v2851, %v2924
        %v2992 = vmul.f32 %v2852, %v2928
        %v2993 = vlaneseq
        %v2994 = vshrl.u32 %v2993, 7
        %v2995 = vsub.s32 3, %v2994
        %v2996 = vrot.slane %v2303, %v2995
        %v2997 = vlaneseq
        %v2998 = vshrl.u32 %v2997, 7
        %v2999 = vsub.s32 3, %v2998
        %v3000 = vrot.slane %v2304, %v2999
        %v3001 = vmul.f32 %v2793, %v2996
        %v3002 = vmul.f32 %v2794, %v3000
        %v3003 = vmul.f32 %v2795, %v2996
        %v3004 = vmul.f32 %v2796, %v3000
        %v3005 = vmul.f32 %v2797, %v2996
        %v3006 = vmul.f32 %v2798, %v3000
        %v3007 = vmul.f32 %v2799, %v2996
        %v3008 = vmul.f32 %v2800, %v3000
        %v3009 = vmul.f32 %v2801, %v2996
        %v3010 = vmul.f32 %v2802, %v3000
        %v3011 = vmul.f32 %v2803, %v2996
        %v3012 = vmul.f32 %v2804, %v3000
        %v3013 = vmul.f32 %v2805, %v2996
        %v3014 = vmul.f32 %v2806, %v3000
        %v3015 = vmul.f32 %v2807, %v2996
        %v3016 = vmul.f32 %v2808, %v3000
        %v3017 = vmul.f32 %v2809, %v2996
        %v3018 = vmul.f32 %v2810, %v3000
        %v3019 = vmul.f32 %v2811, %v2996
        %v3020 = vmul.f32 %v2812, %v3000
        %v3021 = vmul.f32 %v2813, %v2996
        %v3022 = vmul.f32 %v2814, %v3000
        %v3023 = vmul.f32 %v2815, %v2996
        %v3024 = vmul.f32 %v2816, %v3000
        %v3025 = vmul.f32 %v2817, %v2996
        %v3026 = vmul.f32 %v2818, %v3000
        %v3027 = vmul.f32 %v2819, %v2996
        %v3028 = vmul.f32 %v2820, %v3000
        %v3029 = vmul.f32 %v2821, %v2996
        %v3030 = vmul.f32 %v2822, %v3000
        %v3031 = vmul.f32 %v2823, %v2996
        %v3032 = vmul.f32 %v2824, %v3000
        %v3033 = vmul.f32 %v2825, %v2996
        %v3034 = vmul.f32 %v2826, %v3000
        %v3035 = vmul.f32 %v2827, %v2996
        %v3036 = vmul.f32 %v2828, %v3000
        %v3037 = vmul.f32 %v2829, %v2996
        %v3038 = vmul.f32 %v2830, %v3000
        %v3039 = vmul.f32 %v2831, %v2996
        %v3040 = vmul.f32 %v2832, %v3000
        %v3041 = vmul.f32 %v2833, %v2996
        %v3042 = vmul.f32 %v2834, %v3000
        %v3043 = vmul.f32 %v2835, %v2996
        %v3044 = vmul.f32 %v2836, %v3000
        %v3045 = vmul.f32 %v2837, %v2996
        %v3046 = vmul.f32 %v2838, %v3000
        %v3047 = vmul.f32 %v2839, %v2996
        %v3048 = vmul.f32 %v2840, %v3000
        %v3049 = vmul.f32 %v2841, %v2996
        %v3050 = vmul.f32 %v2842, %v3000
        %v3051 = vmul.f32 %v2843, %v2996
        %v3052 = vmul.f32 %v2844, %v3000
        %v3053 = vmul.f32 %v2845, %v2996
        %v3054 = vmul.f32 %v2846, %v3000
        %v3055 = vmul.f32 %v2847, %v2996
        %v3056 = vmul.f32 %v2848, %v3000
        %v3057 = vmul.f32 %v2849, %v2996
        %v3058 = vmul.f32 %v2850, %v3000
        %v3059 = vmul.f32 %v2851, %v2996
        %v3060 = vmul.f32 %v2852, %v3000
        %v3061 = vmul.f32 %v2853, %v2996
        %v3062 = vmul.f32 %v2854, %v3000
        %v3063 = vmul.f32 %v2855, %v2996
        %v3064 = vmul.f32 %v2856, %v3000
        %v3065 = vadd.f32 %v2929, %v3001
        %v3066 = vadd.f32 %v2930, %v3002
        %v3067 = vadd.f32 %v2931, %v3003
        %v3068 = vadd.f32 %v2932, %v3004
        %v3069 = vadd.f32 %v2933, %v3005
        %v3070 = vadd.f32 %v2934, %v3006
        %v3071 = vadd.f32 %v2935, %v3007
        %v3072 = vadd.f32 %v2936, %v3008
        %v3073 = vadd.f32 %v2937, %v3009
        %v3074 = vadd.f32 %v2938, %v3010
        %v3075 = vadd.f32 %v2939, %v3011
        %v3076 = vadd.f32 %v2940, %v3012
        %v3077 = vadd.f32 %v2941, %v3013
        %v3078 = vadd.f32 %v2942, %v3014
        %v3079 = vadd.f32 %v2943, %v3015
        %v3080 = vadd.f32 %v2944, %v3016
        %v3081 = vadd.f32 %v2945, %v3017
        %v3082 = vadd.f32 %v2946, %v3018
        %v3083 = vadd.f32 %v2947, %v3019
        %v3084 = vadd.f32 %v2948, %v3020
        %v3085 = vadd.f32 %v2949, %v3021
        %v3086 = vadd.f32 %v2950, %v3022
        %v3087 = vadd.f32 %v2951, %v3023
        %v3088 = vadd.f32 %v2952, %v3024
        %v3089 = vadd.f32 %v2953, %v3025
        %v3090 = vadd.f32 %v2954, %v3026
        %v3091 = vadd.f32 %v2955, %v3027
        %v3092 = vadd.f32 %v2956, %v3028
        %v3093 = vadd.f32 %v2957, %v3029
        %v3094 = vadd.f32 %v2958, %v3030
        %v3095 = vadd.f32 %v2959, %v3031
        %v3096 = vadd.f32 %v2960, %v3032
        %v3097 = vadd.f32 %v2961, %v3033
        %v3098 = vadd.f32 %v2962, %v3034
        %v3099 = vadd.f32 %v2963, %v3035
        %v3100 = vadd.f32 %v2964, %v3036
        %v3101 = vadd.f32 %v2965, %v3037
        %v3102 = vadd.f32 %v2966, %v3038
        %v3103 = vadd.f32 %v2967, %v3039
        %v3104 = vadd.f32 %v2968, %v3040
        %v3105 = vadd.f32 %v2969, %v3041
        %v3106 = vadd.f32 %v2970, %v3042
        %v3107 = vadd.f32 %v2971, %v3043
        %v3108 = vadd.f32 %v2972, %v3044
        %v3109 = vadd.f32 %v2973, %v3045
        %v3110 = vadd.f32 %v2974, %v3046
        %v3111 = vadd.f32 %v2975, %v3047
        %v3112 = vadd.f32 %v2976, %v3048
        %v3113 = vadd.f32 %v2977, %v3049
        %v3114 = vadd.f32 %v2978, %v3050
        %v3115 = vadd.f32 %v2979, %v3051
        %v3116 = vadd.f32 %v2980, %v3052
        %v3117 = vadd.f32 %v2981, %v3053
        %v3118 = vadd.f32 %v2982, %v3054
        %v3119 = vadd.f32 %v2983, %v3055
        %v3120 = vadd.f32 %v2984, %v3056
        %v3121 = vadd.f32 %v2985, %v3057
        %v3122 = vadd.f32 %v2986, %v3058
        %v3123 = vadd.f32 %v2987, %v3059
        %v3124 = vadd.f32 %v2988, %v3060
        %v3125 = vadd.f32 %v2989, %v3061
        %v3126 = vadd.f32 %v2990, %v3062
        %v3127 = vadd.f32 %v2991, %v3063
        %v3128 = vadd.f32 %v2992, %v3064
        %v3129 = vlaneseq
        %v3130 = vshrl.u32 %v3129, 7
        %v3131 = vsub.s32 6, %v3130
        %v3132 = vrot.slane %v2303, %v3131
        %v3133 = vlaneseq
        %v3134 = vshrl.u32 %v3133, 7
        %v3135 = vsub.s32 6, %v3134
        %v3136 = vrot.slane %v2304, %v3135
        %v3137 = vmul.f32 %v2857, %v3132
        %v3138 = vmul.f32 %v2858, %v3136
        %v3139 = vmul.f32 %v2859, %v3132
        %v3140 = vmul.f32 %v2860, %v3136
        %v3141 = vmul.f32 %v2861, %v3132
        %v3142 = vmul.f32 %v2862, %v3136
        %v3143 = vmul.f32 %v2863, %v3132
        %v3144 = vmul.f32 %v2864, %v3136
        %v3145 = vmul.f32 %v2865, %v3132
        %v3146 = vmul.f32 %v2866, %v3136
        %v3147 = vmul.f32 %v2867, %v3132
        %v3148 = vmul.f32 %v2868, %v3136
        %v3149 = vmul.f32 %v2869, %v3132
        %v3150 = vmul.f32 %v2870, %v3136
        %v3151 = vmul.f32 %v2871, %v3132
        %v3152 = vmul.f32 %v2872, %v3136
        %v3153 = vmul.f32 %v2873, %v3132
        %v3154 = vmul.f32 %v2874, %v3136
        %v3155 = vmul.f32 %v2875, %v3132
        %v3156 = vmul.f32 %v2876, %v3136
        %v3157 = vmul.f32 %v2877, %v3132
        %v3158 = vmul.f32 %v2878, %v3136
        %v3159 = vmul.f32 %v2879, %v3132
        %v3160 = vmul.f32 %v2880, %v3136
        %v3161 = vmul.f32 %v2881, %v3132
        %v3162 = vmul.f32 %v2882, %v3136
        %v3163 = vmul.f32 %v2883, %v3132
        %v3164 = vmul.f32 %v2884, %v3136
        %v3165 = vmul.f32 %v2885, %v3132
        %v3166 = vmul.f32 %v2886, %v3136
        %v3167 = vmul.f32 %v2887, %v3132
        %v3168 = vmul.f32 %v2888, %v3136
        %v3169 = vmul.f32 %v2889, %v3132
        %v3170 = vmul.f32 %v2890, %v3136
        %v3171 = vmul.f32 %v2891, %v3132
        %v3172 = vmul.f32 %v2892, %v3136
        %v3173 = vmul.f32 %v2893, %v3132
        %v3174 = vmul.f32 %v2894, %v3136
        %v3175 = vmul.f32 %v2895, %v3132
        %v3176 = vmul.f32 %v2896, %v3136
        %v3177 = vmul.f32 %v2897, %v3132
        %v3178 = vmul.f32 %v2898, %v3136
        %v3179 = vmul.f32 %v2899, %v3132
        %v3180 = vmul.f32 %v2900, %v3136
        %v3181 = vmul.f32 %v2901, %v3132
        %v3182 = vmul.f32 %v2902, %v3136
        %v3183 = vmul.f32 %v2903, %v3132
        %v3184 = vmul.f32 %v2904, %v3136
        %v3185 = vmul.f32 %v2905, %v3132
        %v3186 = vmul.f32 %v2906, %v3136
        %v3187 = vmul.f32 %v2907, %v3132
        %v3188 = vmul.f32 %v2908, %v3136
        %v3189 = vmul.f32 %v2909, %v3132
        %v3190 = vmul.f32 %v2910, %v3136
        %v3191 = vmul.f32 %v2911, %v3132
        %v3192 = vmul.f32 %v2912, %v3136
        %v3193 = vmul.f32 %v2913, %v3132
        %v3194 = vmul.f32 %v2914, %v3136
        %v3195 = vmul.f32 %v2915, %v3132
        %v3196 = vmul.f32 %v2916, %v3136
        %v3197 = vmul.f32 %v2917, %v3132
        %v3198 = vmul.f32 %v2918, %v3136
        %v3199 = vmul.f32 %v2919, %v3132
        %v3200 = vmul.f32 %v2920, %v3136
        %v3201 = vadd.f32 %v3065, %v3137
        %v3202 = vadd.f32 %v3066, %v3138
        %v3203 = vadd.f32 %v3067, %v3139
        %v3204 = vadd.f32 %v3068, %v3140
        %v3205 = vadd.f32 %v3069, %v3141
        %v3206 = vadd.f32 %v3070, %v3142
        %v3207 = vadd.f32 %v3071, %v3143
        %v3208 = vadd.f32 %v3072, %v3144
        %v3209 = vadd.f32 %v3073, %v3145
        %v3210 = vadd.f32 %v3074, %v3146
        %v3211 = vadd.f32 %v3075, %v3147
        %v3212 = vadd.f32 %v3076, %v3148
        %v3213 = vadd.f32 %v3077, %v3149
        %v3214 = vadd.f32 %v3078, %v3150
        %v3215 = vadd.f32 %v3079, %v3151
        %v3216 = vadd.f32 %v3080, %v3152
        %v3217 = vadd.f32 %v3081, %v3153
        %v3218 = vadd.f32 %v3082, %v3154
        %v3219 = vadd.f32 %v3083, %v3155
        %v3220 = vadd.f32 %v3084, %v3156
        %v3221 = vadd.f32 %v3085, %v3157
        %v3222 = vadd.f32 %v3086, %v3158
        %v3223 = vadd.f32 %v3087, %v3159
        %v3224 = vadd.f32 %v3088, %v3160
        %v3225 = vadd.f32 %v3089, %v3161
        %v3226 = vadd.f32 %v3090, %v3162
        %v3227 = vadd.f32 %v3091, %v3163
        %v3228 = vadd.f32 %v3092, %v3164
        %v3229 = vadd.f32 %v3093, %v3165
        %v3230 = vadd.f32 %v3094, %v3166
        %v3231 = vadd.f32 %v3095, %v3167
        %v3232 = vadd.f32 %v3096, %v3168
        %v3233 = vadd.f32 %v3097, %v3169
        %v3234 = vadd.f32 %v3098, %v3170
        %v3235 = vadd.f32 %v3099, %v3171
        %v3236 = vadd.f32 %v3100, %v3172
        %v3237 = vadd.f32 %v3101, %v3173
        %v3238 = vadd.f32 %v3102, %v3174
        %v3239 = vadd.f32 %v3103, %v3175
        %v3240 = vadd.f32 %v3104, %v3176
        %v3241 = vadd.f32 %v3105, %v3177
        %v3242 = vadd.f32 %v3106, %v3178
        %v3243 = vadd.f32 %v3107, %v3179
        %v3244 = vadd.f32 %v3108, %v3180
        %v3245 = vadd.f32 %v3109, %v3181
        %v3246 = vadd.f32 %v3110, %v3182
        %v3247 = vadd.f32 %v3111, %v3183
        %v3248 = vadd.f32 %v3112, %v3184
        %v3249 = vadd.f32 %v3113, %v3185
        %v3250 = vadd.f32 %v3114, %v3186
        %v3251 = vadd.f32 %v3115, %v3187
        %v3252 = vadd.f32 %v3116, %v3188
        %v3253 = vadd.f32 %v3117, %v3189
        %v3254 = vadd.f32 %v3118, %v3190
        %v3255 = vadd.f32 %v3119, %v3191
        %v3256 = vadd.f32 %v3120, %v3192
        %v3257 = vadd.f32 %v3121, %v3193
        %v3258 = vadd.f32 %v3122, %v3194
        %v3259 = vadd.f32 %v3123, %v3195
        %v3260 = vadd.f32 %v3124, %v3196
        %v3261 = vadd.f32 %v3125, %v3197
        %v3262 = vadd.f32 %v3126, %v3198
        %v3263 = vadd.f32 %v3127, %v3199
        %v3264 = vadd.f32 %v3128, %v3200
        %v3265 = vlaneseq
        %v3266 = vshrl.u32 %v3265, 7
        %v3267 = vsub.s32 1, %v3266
        %v3268 = vrot.slane %v2303, %v3267
        %v3269 = vlaneseq
        %v3270 = vshrl.u32 %v3269, 7
        %v3271 = vsub.s32 1, %v3270
        %v3272 = vrot.slane %v2304, %v3271
        %v3273 = vmul.f32 %v2789, %v3268
        %v3274 = vmul.f32 %v2790, %v3272
        %v3275 = vmul.f32 %v2791, %v3268
        %v3276 = vmul.f32 %v2792, %v3272
        %v3277 = vmul.f32 %v2793, %v3268
        %v3278 = vmul.f32 %v2794, %v3272
        %v3279 = vmul.f32 %v2795, %v3268
        %v3280 = vmul.f32 %v2796, %v3272
        %v3281 = vmul.f32 %v2797, %v3268
        %v3282 = vmul.f32 %v2798, %v3272
        %v3283 = vmul.f32 %v2799, %v3268
        %v3284 = vmul.f32 %v2800, %v3272
        %v3285 = vmul.f32 %v2801, %v3268
        %v3286 = vmul.f32 %v2802, %v3272
        %v3287 = vmul.f32 %v2803, %v3268
        %v3288 = vmul.f32 %v2804, %v3272
        %v3289 = vmul.f32 %v2805, %v3268
        %v3290 = vmul.f32 %v2806, %v3272
        %v3291 = vmul.f32 %v2807, %v3268
        %v3292 = vmul.f32 %v2808, %v3272
        %v3293 = vmul.f32 %v2809, %v3268
        %v3294 = vmul.f32 %v2810, %v3272
        %v3295 = vmul.f32 %v2811, %v3268
        %v3296 = vmul.f32 %v2812, %v3272
        %v3297 = vmul.f32 %v2813, %v3268
        %v3298 = vmul.f32 %v2814, %v3272
        %v3299 = vmul.f32 %v2815, %v3268
        %v3300 = vmul.f32 %v2816, %v3272
        %v3301 = vmul.f32 %v2817, %v3268
        %v3302 = vmul.f32 %v2818, %v3272
        %v3303 = vmul.f32 %v2819, %v3268
        %v3304 = vmul.f32 %v2820, %v3272
        %v3305 = vmul.f32 %v2821, %v3268
        %v3306 = vmul.f32 %v2822, %v3272
        %v3307 = vmul.f32 %v2823, %v3268
        %v3308 = vmul.f32 %v2824, %v3272
        %v3309 = vmul.f32 %v2825, %v3268
        %v3310 = vmul.f32 %v2826, %v3272
        %v3311 = vmul.f32 %v2827, %v3268
        %v3312 = vmul.f32 %v2828, %v3272
        %v3313 = vmul.f32 %v2829, %v3268
        %v3314 = vmul.f32 %v2830, %v3272
        %v3315 = vmul.f32 %v2831, %v3268
        %v3316 = vmul.f32 %v2832, %v3272
        %v3317 = vmul.f32 %v2833, %v3268
        %v3318 = vmul.f32 %v2834, %v3272
        %v3319 = vmul.f32 %v2835, %v3268
        %v3320 = vmul.f32 %v2836, %v3272
        %v3321 = vmul.f32 %v2837, %v3268
        %v3322 = vmul.f32 %v2838, %v3272
        %v3323 = vmul.f32 %v2839, %v3268
        %v3324 = vmul.f32 %v2840, %v3272
        %v3325 = vmul.f32 %v2841, %v3268
        %v3326 = vmul.f32 %v2842, %v3272
        %v3327 = vmul.f32 %v2843, %v3268
        %v3328 = vmul.f32 %v2844, %v3272
        %v3329 = vmul.f32 %v2845, %v3268
        %v3330 = vmul.f32 %v2846, %v3272
        %v3331 = vmul.f32 %v2847, %v3268
        %v3332 = vmul.f32 %v2848, %v3272
        %v3333 = vmul.f32 %v2849, %v3268
        %v3334 = vmul.f32 %v2850, %v3272
        %v3335 = vmul.f32 %v2851, %v3268
        %v3336 = vmul.f32 %v2852, %v3272
        %v3337 = vlaneseq
        %v3338 = vshrl.u32 %v3337, 7
        %v3339 = vsub.s32 4, %v3338
        %v3340 = vrot.slane %v2303, %v3339
        %v3341 = vlaneseq
        %v3342 = vshrl.u32 %v3341, 7
        %v3343 = vsub.s32 4, %v3342
        %v3344 = vrot.slane %v2304, %v3343
        %v3345 = vmul.f32 %v2793, %v3340
        %v3346 = vmul.f32 %v2794, %v3344
        %v3347 = vmul.f32 %v2795, %v3340
        %v3348 = vmul.f32 %v2796, %v3344
        %v3349 = vmul.f32 %v2797, %v3340
        %v3350 = vmul.f32 %v2798, %v3344
        %v3351 = vmul.f32 %v2799, %v3340
        %v3352 = vmul.f32 %v2800, %v3344
        %v3353 = vmul.f32 %v2801, %v3340
        %v3354 = vmul.f32 %v2802, %v3344
        %v3355 = vmul.f32 %v2803, %v3340
        %v3356 = vmul.f32 %v2804, %v3344
        %v3357 = vmul.f32 %v2805, %v3340
        %v3358 = vmul.f32 %v2806, %v3344
        %v3359 = vmul.f32 %v2807, %v3340
        %v3360 = vmul.f32 %v2808, %v3344
        %v3361 = vmul.f32 %v2809, %v3340
        %v3362 = vmul.f32 %v2810, %v3344
        %v3363 = vmul.f32 %v2811, %v3340
        %v3364 = vmul.f32 %v2812, %v3344
        %v3365 = vmul.f32 %v2813, %v3340
        %v3366 = vmul.f32 %v2814, %v3344
        %v3367 = vmul.f32 %v2815, %v3340
        %v3368 = vmul.f32 %v2816, %v3344
        %v3369 = vmul.f32 %v2817, %v3340
        %v3370 = vmul.f32 %v2818, %v3344
        %v3371 = vmul.f32 %v2819, %v3340
        %v3372 = vmul.f32 %v2820, %v3344
        %v3373 = vmul.f32 %v2821, %v3340
        %v3374 = vmul.f32 %v2822, %v3344
        %v3375 = vmul.f32 %v2823, %v3340
        %v3376 = vmul.f32 %v2824, %v3344
        %v3377 = vmul.f32 %v2825, %v3340
        %v3378 = vmul.f32 %v2826, %v3344
        %v3379 = vmul.f32 %v2827, %v3340
        %v3380 = vmul.f32 %v2828, %v3344
        %v3381 = vmul.f32 %v2829, %v3340
        %v3382 = vmul.f32 %v2830, %v3344
        %v3383 = vmul.f32 %v2831, %v3340
        %v3384 = vmul.f32 %v2832, %v3344
        %v3385 = vmul.f32 %v2833, %v3340
        %v3386 = vmul.f32 %v2834, %v3344
        %v3387 = vmul.f32 %v2835, %v3340
        %v3388 = vmul.f32 %v2836, %v3344
        %v3389 = vmul.f32 %v2837, %v3340
        %v3390 = vmul.f32 %v2838, %v3344
        %v3391 = vmul.f32 %v2839, %v3340
        %v3392 = vmul.f32 %v2840, %v3344
        %v3393 = vmul.f32 %v2841, %v3340
        %v3394 = vmul.f32 %v2842, %v3344
        %v3395 = vmul.f32 %v2843, %v3340
        %v3396 = vmul.f32 %v2844, %v3344
        %v3397 = vmul.f32 %v2845, %v3340
        %v3398 = vmul.f32 %v2846, %v3344
        %v3399 = vmul.f32 %v2847, %v3340
        %v3400 = vmul.f32 %v2848, %v3344
        %v3401 = vmul.f32 %v2849, %v3340
        %v3402 = vmul.f32 %v2850, %v3344
        %v3403 = vmul.f32 %v2851, %v3340
        %v3404 = vmul.f32 %v2852, %v3344
        %v3405 = vmul.f32 %v2853, %v3340
        %v3406 = vmul.f32 %v2854, %v3344
        %v3407 = vmul.f32 %v2855, %v3340
        %v3408 = vmul.f32 %v2856, %v3344
        %v3409 = vadd.f32 %v3273, %v3345
        %v3410 = vadd.f32 %v3274, %v3346
        %v3411 = vadd.f32 %v3275, %v3347
        %v3412 = vadd.f32 %v3276, %v3348
        %v3413 = vadd.f32 %v3277, %v3349
        %v3414 = vadd.f32 %v3278, %v3350
        %v3415 = vadd.f32 %v3279, %v3351
        %v3416 = vadd.f32 %v3280, %v3352
        %v3417 = vadd.f32 %v3281, %v3353
        %v3418 = vadd.f32 %v3282, %v3354
        %v3419 = vadd.f32 %v3283, %v3355
        %v3420 = vadd.f32 %v3284, %v3356
        %v3421 = vadd.f32 %v3285, %v3357
        %v3422 = vadd.f32 %v3286, %v3358
        %v3423 = vadd.f32 %v3287, %v3359
        %v3424 = vadd.f32 %v3288, %v3360
        %v3425 = vadd.f32 %v3289, %v3361
        %v3426 = vadd.f32 %v3290, %v3362
        %v3427 = vadd.f32 %v3291, %v3363
        %v3428 = vadd.f32 %v3292, %v3364
        %v3429 = vadd.f32 %v3293, %v3365
        %v3430 = vadd.f32 %v3294, %v3366
        %v3431 = vadd.f32 %v3295, %v3367
        %v3432 = vadd.f32 %v3296, %v3368
        %v3433 = vadd.f32 %v3297, %v3369
        %v3434 = vadd.f32 %v3298, %v3370
        %v3435 = vadd.f32 %v3299, %v3371
        %v3436 = vadd.f32 %v3300, %v3372
        %v3437 = vadd.f32 %v3301, %v3373
        %v3438 = vadd.f32 %v3302, %v3374
        %v3439 = vadd.f32 %v3303, %v3375
        %v3440 = vadd.f32 %v3304, %v3376
        %v3441 = vadd.f32 %v3305, %v3377
        %v3442 = vadd.f32 %v3306, %v3378
        %v3443 = vadd.f32 %v3307, %v3379
        %v3444 = vadd.f32 %v3308, %v3380
        %v3445 = vadd.f32 %v3309, %v3381
        %v3446 = vadd.f32 %v3310, %v3382
        %v3447 = vadd.f32 %v3311, %v3383
        %v3448 = vadd.f32 %v3312, %v3384
        %v3449 = vadd.f32 %v3313, %v3385
        %v3450 = vadd.f32 %v3314, %v3386
        %v3451 = vadd.f32 %v3315, %v3387
        %v3452 = vadd.f32 %v3316, %v3388
        %v3453 = vadd.f32 %v3317, %v3389
        %v3454 = vadd.f32 %v3318, %v3390
        %v3455 = vadd.f32 %v3319, %v3391
        %v3456 = vadd.f32 %v3320, %v3392
        %v3457 = vadd.f32 %v3321, %v3393
        %v3458 = vadd.f32 %v3322, %v3394
        %v3459 = vadd.f32 %v3323, %v3395
        %v3460 = vadd.f32 %v3324, %v3396
        %v3461 = vadd.f32 %v3325, %v3397
        %v3462 = vadd.f32 %v3326, %v3398
        %v3463 = vadd.f32 %v3327, %v3399
        %v3464 = vadd.f32 %v3328, %v3400
        %v3465 = vadd.f32 %v3329, %v3401
        %v3466 = vadd.f32 %v3330, %v3402
        %v3467 = vadd.f32 %v3331, %v3403
        %v3468 = vadd.f32 %v3332, %v3404
        %v3469 = vadd.f32 %v3333, %v3405
        %v3470 = vadd.f32 %v3334, %v3406
        %v3471 = vadd.f32 %v3335, %v3407
        %v3472 = vadd.f32 %v3336, %v3408
        %v3473 = vlaneseq
        %v3474 = vshrl.u32 %v3473, 7
        %v3475 = vsub.s32 7, %v3474
        %v3476 = vrot.slane %v2303, %v3475
        %v3477 = vlaneseq
        %v3478 = vshrl.u32 %v3477, 7
        %v3479 = vsub.s32 7, %v3478
        %v3480 = vrot.slane %v2304, %v3479
        %v3481 = vmul.f32 %v2857, %v3476
        %v3482 = vmul.f32 %v2858, %v3480
        %v3483 = vmul.f32 %v2859, %v3476
        %v3484 = vmul.f32 %v2860, %v3480
        %v3485 = vmul.f32 %v2861, %v3476
        %v3486 = vmul.f32 %v2862, %v3480
        %v3487 = vmul.f32 %v2863, %v3476
        %v3488 = vmul.f32 %v2864, %v3480
        %v3489 = vmul.f32 %v2865, %v3476
        %v3490 = vmul.f32 %v2866, %v3480
        %v3491 = vmul.f32 %v2867, %v3476
        %v3492 = vmul.f32 %v2868, %v3480
        %v3493 = vmul.f32 %v2869, %v3476
        %v3494 = vmul.f32 %v2870, %v3480
        %v3495 = vmul.f32 %v2871, %v3476
        %v3496 = vmul.f32 %v2872, %v3480
        %v3497 = vmul.f32 %v2873, %v3476
        %v3498 = vmul.f32 %v2874, %v3480
        %v3499 = vmul.f32 %v2875, %v3476
        %v3500 = vmul.f32 %v2876, %v3480
        %v3501 = vmul.f32 %v2877, %v3476
        %v3502 = vmul.f32 %v2878, %v3480
        %v3503 = vmul.f32 %v2879, %v3476
        %v3504 = vmul.f32 %v2880, %v3480
        %v3505 = vmul.f32 %v2881, %v3476
        %v3506 = vmul.f32 %v2882, %v3480
        %v3507 = vmul.f32 %v2883, %v3476
        %v3508 = vmul.f32 %v2884, %v3480
        %v3509 = vmul.f32 %v2885, %v3476
        %v3510 = vmul.f32 %v2886, %v3480
        %v3511 = vmul.f32 %v2887, %v3476
        %v3512 = vmul.f32 %v2888, %v3480
        %v3513 = vmul.f32 %v2889, %v3476
        %v3514 = vmul.f32 %v2890, %v3480
        %v3515 = vmul.f32 %v2891, %v3476
        %v3516 = vmul.f32 %v2892, %v3480
        %v3517 = vmul.f32 %v2893, %v3476
        %v3518 = vmul.f32 %v2894, %v3480
        %v3519 = vmul.f32 %v2895, %v3476
        %v3520 = vmul.f32 %v2896, %v3480
        %v3521 = vmul.f32 %v2897, %v3476
        %v3522 = vmul.f32 %v2898, %v3480
        %v3523 = vmul.f32 %v2899, %v3476
        %v3524 = vmul.f32 %v2900, %v3480
        %v3525 = vmul.f32 %v2901, %v3476
        %v3526 = vmul.f32 %v2902, %v3480
        %v3527 = vmul.f32 %v2903, %v3476
        %v3528 = vmul.f32 %v2904, %v3480
        %v3529 = vmul.f32 %v2905, %v3476
        %v3530 = vmul.f32 %v2906, %v3480
        %v3531 = vmul.f32 %v2907, %v3476
        %v3532 = vmul.f32 %v2908, %v3480
        %v3533 = vmul.f32 %v2909, %v3476
        %v3534 = vmul.f32 %v2910, %v3480
        %v3535 = vmul.f32 %v2911, %v3476
        %v3536 = vmul.f32 %v2912, %v3480
        %v3537 = vmul.f32 %v2913, %v3476
        %v3538 = vmul.f32 %v2914, %v3480
        %v3539 = vmul.f32 %v2915, %v3476
        %v3540 = vmul.f32 %v2916, %v3480
        %v3541 = vmul.f32 %v2917, %v3476
        %v3542 = vmul.f32 %v2918, %v3480
        %v3543 = vmul.f32 %v2919, %v3476
        %v3544 = vmul.f32 %v2920, %v3480
        %v3545 = vadd.f32 %v3409, %v3481
        %v3546 = vadd.f32 %v3410, %v3482
        %v3547 = vadd.f32 %v3411, %v3483
        %v3548 = vadd.f32 %v3412, %v3484
        %v3549 = vadd.f32 %v3413, %v3485
        %v3550 = vadd.f32 %v3414, %v3486
        %v3551 = vadd.f32 %v3415, %v3487
        %v3552 = vadd.f32 %v3416, %v3488
        %v3553 = vadd.f32 %v3417, %v3489
        %v3554 = vadd.f32 %v3418, %v3490
        %v3555 = vadd.f32 %v3419, %v3491
        %v3556 = vadd.f32 %v3420, %v3492
        %v3557 = vadd.f32 %v3421, %v3493
        %v3558 = vadd.f32 %v3422, %v3494
        %v3559 = vadd.f32 %v3423, %v3495
        %v3560 = vadd.f32 %v3424, %v3496
        %v3561 = vadd.f32 %v3425, %v3497
        %v3562 = vadd.f32 %v3426, %v3498
        %v3563 = vadd.f32 %v3427, %v3499
        %v3564 = vadd.f32 %v3428, %v3500
        %v3565 = vadd.f32 %v3429, %v3501
        %v3566 = vadd.f32 %v3430, %v3502
        %v3567 = vadd.f32 %v3431, %v3503
        %v3568 = vadd.f32 %v3432, %v3504
        %v3569 = vadd.f32 %v3433, %v3505
        %v3570 = vadd.f32 %v3434, %v3506
        %v3571 = vadd.f32 %v3435, %v3507
        %v3572 = vadd.f32 %v3436, %v3508
        %v3573 = vadd.f32 %v3437, %v3509
        %v3574 = vadd.f32 %v3438, %v3510
        %v3575 = vadd.f32 %v3439, %v3511
        %v3576 = vadd.f32 %v3440, %v3512
        %v3577 = vadd.f32 %v3441, %v3513
        %v3578 = vadd.f32 %v3442, %v3514
        %v3579 = vadd.f32 %v3443, %v3515
        %v3580 = vadd.f32 %v3444, %v3516
        %v3581 = vadd.f32 %v3445, %v3517
        %v3582 = vadd.f32 %v3446, %v3518
        %v3583 = vadd.f32 %v3447, %v3519
        %v3584 = vadd.f32 %v3448, %v3520
        %v3585 = vadd.f32 %v3449, %v3521
        %v3586 = vadd.f32 %v3450, %v3522
        %v3587 = vadd.f32 %v3451, %v3523
        %v3588 = vadd.f32 %v3452, %v3524
        %v3589 = vadd.f32 %v3453, %v3525
        %v3590 = vadd.f32 %v3454, %v3526
        %v3591 = vadd.f32 %v3455, %v3527
        %v3592 = vadd.f32 %v3456, %v3528
        %v3593 = vadd.f32 %v3457, %v3529
        %v3594 = vadd.f32 %v3458, %v3530
        %v3595 = vadd.f32 %v3459, %v3531
        %v3596 = vadd.f32 %v3460, %v3532
        %v3597 = vadd.f32 %v3461, %v3533
        %v3598 = vadd.f32 %v3462, %v3534
        %v3599 = vadd.f32 %v3463, %v3535
        %v3600 = vadd.f32 %v3464, %v3536
        %v3601 = vadd.f32 %v3465, %v3537
        %v3602 = vadd.f32 %v3466, %v3538
        %v3603 = vadd.f32 %v3467, %v3539
        %v3604 = vadd.f32 %v3468, %v3540
        %v3605 = vadd.f32 %v3469, %v3541
        %v3606 = vadd.f32 %v3470, %v3542
        %v3607 = vadd.f32 %v3471, %v3543
        %v3608 = vadd.f32 %v3472, %v3544
        %v3609 = vlaneseq
        %v3610 = vshrl.u32 %v3609, 7
        %v3611 = vsub.s32 2, %v3610
        %v3612 = vrot.slane %v2303, %v3611
        %v3613 = vlaneseq
        %v3614 = vshrl.u32 %v3613, 7
        %v3615 = vsub.s32 2, %v3614
        %v3616 = vrot.slane %v2304, %v3615
        %v3617 = vmul.f32 %v2789, %v3612
        %v3618 = vmul.f32 %v2790, %v3616
        %v3619 = vmul.f32 %v2791, %v3612
        %v3620 = vmul.f32 %v2792, %v3616
        %v3621 = vmul.f32 %v2793, %v3612
        %v3622 = vmul.f32 %v2794, %v3616
        %v3623 = vmul.f32 %v2795, %v3612
        %v3624 = vmul.f32 %v2796, %v3616
        %v3625 = vmul.f32 %v2797, %v3612
        %v3626 = vmul.f32 %v2798, %v3616
        %v3627 = vmul.f32 %v2799, %v3612
        %v3628 = vmul.f32 %v2800, %v3616
        %v3629 = vmul.f32 %v2801, %v3612
        %v3630 = vmul.f32 %v2802, %v3616
        %v3631 = vmul.f32 %v2803, %v3612
        %v3632 = vmul.f32 %v2804, %v3616
        %v3633 = vmul.f32 %v2805, %v3612
        %v3634 = vmul.f32 %v2806, %v3616
        %v3635 = vmul.f32 %v2807, %v3612
        %v3636 = vmul.f32 %v2808, %v3616
        %v3637 = vmul.f32 %v2809, %v3612
        %v3638 = vmul.f32 %v2810, %v3616
        %v3639 = vmul.f32 %v2811, %v3612
        %v3640 = vmul.f32 %v2812, %v3616
        %v3641 = vmul.f32 %v2813, %v3612
        %v3642 = vmul.f32 %v2814, %v3616
        %v3643 = vmul.f32 %v2815, %v3612
        %v3644 = vmul.f32 %v2816, %v3616
        %v3645 = vmul.f32 %v2817, %v3612
        %v3646 = vmul.f32 %v2818, %v3616
        %v3647 = vmul.f32 %v2819, %v3612
        %v3648 = vmul.f32 %v2820, %v3616
        %v3649 = vmul.f32 %v2821, %v3612
        %v3650 = vmul.f32 %v2822, %v3616
        %v3651 = vmul.f32 %v2823, %v3612
        %v3652 = vmul.f32 %v2824, %v3616
        %v3653 = vmul.f32 %v2825, %v3612
        %v3654 = vmul.f32 %v2826, %v3616
        %v3655 = vmul.f32 %v2827, %v3612
        %v3656 = vmul.f32 %v2828, %v3616
        %v3657 = vmul.f32 %v2829, %v3612
        %v3658 = vmul.f32 %v2830, %v3616
        %v3659 = vmul.f32 %v2831, %v3612
        %v3660 = vmul.f32 %v2832, %v3616
        %v3661 = vmul.f32 %v2833, %v3612
        %v3662 = vmul.f32 %v2834, %v3616
        %v3663 = vmul.f32 %v2835, %v3612
        %v3664 = vmul.f32 %v2836, %v3616
        %v3665 = vmul.f32 %v2837, %v3612
        %v3666 = vmul.f32 %v2838, %v3616
        %v3667 = vmul.f32 %v2839, %v3612
        %v3668 = vmul.f32 %v2840, %v3616
        %v3669 = vmul.f32 %v2841, %v3612
        %v3670 = vmul.f32 %v2842, %v3616
        %v3671 = vmul.f32 %v2843, %v3612
        %v3672 = vmul.f32 %v2844, %v3616
        %v3673 = vmul.f32 %v2845, %v3612
        %v3674 = vmul.f32 %v2846, %v3616
        %v3675 = vmul.f32 %v2847, %v3612
        %v3676 = vmul.f32 %v2848, %v3616
        %v3677 = vmul.f32 %v2849, %v3612
        %v3678 = vmul.f32 %v2850, %v3616
        %v3679 = vmul.f32 %v2851, %v3612
        %v3680 = vmul.f32 %v2852, %v3616
        %v3681 = vlaneseq
        %v3682 = vshrl.u32 %v3681, 7
        %v3683 = vsub.s32 5, %v3682
        %v3684 = vrot.slane %v2303, %v3683
        %v3685 = vlaneseq
        %v3686 = vshrl.u32 %v3685, 7
        %v3687 = vsub.s32 5, %v3686
        %v3688 = vrot.slane %v2304, %v3687
        %v3689 = vmul.f32 %v2793, %v3684
        %v3690 = vmul.f32 %v2794, %v3688
        %v3691 = vmul.f32 %v2795, %v3684
        %v3692 = vmul.f32 %v2796, %v3688
        %v3693 = vmul.f32 %v2797, %v3684
        %v3694 = vmul.f32 %v2798, %v3688
        %v3695 = vmul.f32 %v2799, %v3684
        %v3696 = vmul.f32 %v2800, %v3688
        %v3697 = vmul.f32 %v2801, %v3684
        %v3698 = vmul.f32 %v2802, %v3688
        %v3699 = vmul.f32 %v2803, %v3684
        %v3700 = vmul.f32 %v2804, %v3688
        %v3701 = vmul.f32 %v2805, %v3684
        %v3702 = vmul.f32 %v2806, %v3688
        %v3703 = vmul.f32 %v2807, %v3684
        %v3704 = vmul.f32 %v2808, %v3688
        %v3705 = vmul.f32 %v2809, %v3684
        %v3706 = vmul.f32 %v2810, %v3688
        %v3707 = vmul.f32 %v2811, %v3684
        %v3708 = vmul.f32 %v2812, %v3688
        %v3709 = vmul.f32 %v2813, %v3684
        %v3710 = vmul.f32 %v2814, %v3688
        %v3711 = vmul.f32 %v2815, %v3684
        %v3712 = vmul.f32 %v2816, %v3688
        %v3713 = vmul.f32 %v2817, %v3684
        %v3714 = vmul.f32 %v2818, %v3688
        %v3715 = vmul.f32 %v2819, %v3684
        %v3716 = vmul.f32 %v2820, %v3688
        %v3717 = vmul.f32 %v2821, %v3684
        %v3718 = vmul.f32 %v2822, %v3688
        %v3719 = vmul.f32 %v2823, %v3684
        %v3720 = vmul.f32 %v2824, %v3688
        %v3721 = vmul.f32 %v2825, %v3684
        %v3722 = vmul.f32 %v2826, %v3688
        %v3723 = vmul.f32 %v2827, %v3684
        %v3724 = vmul.f32 %v2828, %v3688
        %v3725 = vmul.f32 %v2829, %v3684
        %v3726 = vmul.f32 %v2830, %v3688
        %v3727 = vmul.f32 %v2831, %v3684
        %v3728 = vmul.f32 %v2832, %v3688
        %v3729 = vmul.f32 %v2833, %v3684
        %v3730 = vmul.f32 %v2834, %v3688
        %v3731 = vmul.f32 %v2835, %v3684
        %v3732 = vmul.f32 %v2836, %v3688
        %v3733 = vmul.f32 %v2837, %v3684
        %v3734 = vmul.f32 %v2838, %v3688
        %v3735 = vmul.f32 %v2839, %v3684
        %v3736 = vmul.f32 %v2840, %v3688
        %v3737 = vmul.f32 %v2841, %v3684
        %v3738 = vmul.f32 %v2842, %v3688
        %v3739 = vmul.f32 %v2843, %v3684
        %v3740 = vmul.f32 %v2844, %v3688
        %v3741 = vmul.f32 %v2845, %v3684
        %v3742 = vmul.f32 %v2846, %v3688
        %v3743 = vmul.f32 %v2847, %v3684
        %v3744 = vmul.f32 %v2848, %v3688
        %v3745 = vmul.f32 %v2849, %v3684
        %v3746 = vmul.f32 %v2850, %v3688
        %v3747 = vmul.f32 %v2851, %v3684
        %v3748 = vmul.f32 %v2852, %v3688
        %v3749 = vmul.f32 %v2853, %v3684
        %v3750 = vmul.f32 %v2854, %v3688
        %v3751 = vmul.f32 %v2855, %v3684
        %v3752 = vmul.f32 %v2856, %v3688
        %v3753 = vadd.f32 %v3617, %v3689
        %v3754 = vadd.f32 %v3618, %v3690
        %v3755 = vadd.f32 %v3619, %v3691
        %v3756 = vadd.f32 %v3620, %v3692
        %v3757 = vadd.f32 %v3621, %v3693
        %v3758 = vadd.f32 %v3622, %v3694
        %v3759 = vadd.f32 %v3623, %v3695
        %v3760 = vadd.f32 %v3624, %v3696
        %v3761 = vadd.f32 %v3625, %v3697
        %v3762 = vadd.f32 %v3626, %v3698
        %v3763 = vadd.f32 %v3627, %v3699
        %v3764 = vadd.f32 %v3628, %v3700
        %v3765 = vadd.f32 %v3629, %v3701
        %v3766 = vadd.f32 %v3630, %v3702
        %v3767 = vadd.f32 %v3631, %v3703
        %v3768 = vadd.f32 %v3632, %v3704
        %v3769 = vadd.f32 %v3633, %v3705
        %v3770 = vadd.f32 %v3634, %v3706
        %v3771 = vadd.f32 %v3635, %v3707
        %v3772 = vadd.f32 %v3636, %v3708
        %v3773 = vadd.f32 %v3637, %v3709
        %v3774 = vadd.f32 %v3638, %v3710
        %v3775 = vadd.f32 %v3639, %v3711
        %v3776 = vadd.f32 %v3640, %v3712
        %v3777 = vadd.f32 %v3641, %v3713
        %v3778 = vadd.f32 %v3642, %v3714
        %v3779 = vadd.f32 %v3643, %v3715
        %v3780 = vadd.f32 %v3644, %v3716
        %v3781 = vadd.f32 %v3645, %v3717
        %v3782 = vadd.f32 %v3646, %v3718
        %v3783 = vadd.f32 %v3647, %v3719
        %v3784 = vadd.f32 %v3648, %v3720
        %v3785 = vadd.f32 %v3649, %v3721
        %v3786 = vadd.f32 %v3650, %v3722
        %v3787 = vadd.f32 %v3651, %v3723
        %v3788 = vadd.f32 %v3652, %v3724
        %v3789 = vadd.f32 %v3653, %v3725
        %v3790 = vadd.f32 %v3654, %v3726
        %v3791 = vadd.f32 %v3655, %v3727
        %v3792 = vadd.f32 %v3656, %v3728
        %v3793 = vadd.f32 %v3657, %v3729
        %v3794 = vadd.f32 %v3658, %v3730
        %v3795 = vadd.f32 %v3659, %v3731
        %v3796 = vadd.f32 %v3660, %v3732
        %v3797 = vadd.f32 %v3661, %v3733
        %v3798 = vadd.f32 %v3662, %v3734
        %v3799 = vadd.f32 %v3663, %v3735
        %v3800 = vadd.f32 %v3664, %v3736
        %v3801 = vadd.f32 %v3665, %v3737
        %v3802 = vadd.f32 %v3666, %v3738
        %v3803 = vadd.f32 %v3667, %v3739
        %v3804 = vadd.f32 %v3668, %v3740
        %v3805 = vadd.f32 %v3669, %v3741
        %v3806 = vadd.f32 %v3670, %v3742
        %v3807 = vadd.f32 %v3671, %v3743
        %v3808 = vadd.f32 %v3672, %v3744
        %v3809 = vadd.f32 %v3673, %v3745
        %v3810 = vadd.f32 %v3674, %v3746
        %v3811 = vadd.f32 %v3675, %v3747
        %v3812 = vadd.f32 %v3676, %v3748
        %v3813 = vadd.f32 %v3677, %v3749
        %v3814 = vadd.f32 %v3678, %v3750
        %v3815 = vadd.f32 %v3679, %v3751
        %v3816 = vadd.f32 %v3680, %v3752
        %v3817 = vlaneseq
        %v3818 = vshrl.u32 %v3817, 7
        %v3819 = vsub.s32 0, %v3818
        %v3820 = vrot.slane %v2305, %v3819
        %v3821 = vlaneseq
        %v3822 = vshrl.u32 %v3821, 7
        %v3823 = vsub.s32 0, %v3822
        %v3824 = vrot.slane %v2306, %v3823
        %v3825 = vmul.f32 %v2857, %v3820
        %v3826 = vmul.f32 %v2858, %v3824
        %v3827 = vmul.f32 %v2859, %v3820
        %v3828 = vmul.f32 %v2860, %v3824
        %v3829 = vmul.f32 %v2861, %v3820
        %v3830 = vmul.f32 %v2862, %v3824
        %v3831 = vmul.f32 %v2863, %v3820
        %v3832 = vmul.f32 %v2864, %v3824
        %v3833 = vmul.f32 %v2865, %v3820
        %v3834 = vmul.f32 %v2866, %v3824
        %v3835 = vmul.f32 %v2867, %v3820
        %v3836 = vmul.f32 %v2868, %v3824
        %v3837 = vmul.f32 %v2869, %v3820
        %v3838 = vmul.f32 %v2870, %v3824
        %v3839 = vmul.f32 %v2871, %v3820
        %v3840 = vmul.f32 %v2872, %v3824
        %v3841 = vmul.f32 %v2873, %v3820
        %v3842 = vmul.f32 %v2874, %v3824
        %v3843 = vmul.f32 %v2875, %v3820
        %v3844 = vmul.f32 %v2876, %v3824
        %v3845 = vmul.f32 %v2877, %v3820
        %v3846 = vmul.f32 %v2878, %v3824
        %v3847 = vmul.f32 %v2879, %v3820
        %v3848 = vmul.f32 %v2880, %v3824
        %v3849 = vmul.f32 %v2881, %v3820
        %v3850 = vmul.f32 %v2882, %v3824
        %v3851 = vmul.f32 %v2883, %v3820
        %v3852 = vmul.f32 %v2884, %v3824
        %v3853 = vmul.f32 %v2885, %v3820
        %v3854 = vmul.f32 %v2886, %v3824
        %v3855 = vmul.f32 %v2887, %v3820
        %v3856 = vmul.f32 %v2888, %v3824
        %v3857 = vmul.f32 %v2889, %v3820
        %v3858 = vmul.f32 %v2890, %v3824
        %v3859 = vmul.f32 %v2891, %v3820
        %v3860 = vmul.f32 %v2892, %v3824
        %v3861 = vmul.f32 %v2893, %v3820
        %v3862 = vmul.f32 %v2894, %v3824
        %v3863 = vmul.f32 %v2895, %v3820
        %v3864 = vmul.f32 %v2896, %v3824
        %v3865 = vmul.f32 %v2897, %v3820
        %v3866 = vmul.f32 %v2898, %v3824
        %v3867 = vmul.f32 %v2899, %v3820
        %v3868 = vmul.f32 %v2900, %v3824
        %v3869 = vmul.f32 %v2901, %v3820
        %v3870 = vmul.f32 %v2902, %v3824
        %v3871 = vmul.f32 %v2903, %v3820
        %v3872 = vmul.f32 %v2904, %v3824
        %v3873 = vmul.f32 %v2905, %v3820
        %v3874 = vmul.f32 %v2906, %v3824
        %v3875 = vmul.f32 %v2907, %v3820
        %v3876 = vmul.f32 %v2908, %v3824
        %v3877 = vmul.f32 %v2909, %v3820
        %v3878 = vmul.f32 %v2910, %v3824
        %v3879 = vmul.f32 %v2911, %v3820
        %v3880 = vmul.f32 %v2912, %v3824
        %v3881 = vmul.f32 %v2913, %v3820
        %v3882 = vmul.f32 %v2914, %v3824
        %v3883 = vmul.f32 %v2915, %v3820
        %v3884 = vmul.f32 %v2916, %v3824
        %v3885 = vmul.f32 %v2917, %v3820
        %v3886 = vmul.f32 %v2918, %v3824
        %v3887 = vmul.f32 %v2919, %v3820
        %v3888 = vmul.f32 %v2920, %v3824
        %v3889 = vadd.f32 %v3753, %v3825
        %v3890 = vadd.f32 %v3754, %v3826
        %v3891 = vadd.f32 %v3755, %v3827
        %v3892 = vadd.f32 %v3756, %v3828
        %v3893 = vadd.f32 %v3757, %v3829
        %v3894 = vadd.f32 %v3758, %v3830
        %v3895 = vadd.f32 %v3759, %v3831
        %v3896 = vadd.f32 %v3760, %v3832
        %v3897 = vadd.f32 %v3761, %v3833
        %v3898 = vadd.f32 %v3762, %v3834
        %v3899 = vadd.f32 %v3763, %v3835
        %v3900 = vadd.f32 %v3764, %v3836
        %v3901 = vadd.f32 %v3765, %v3837
        %v3902 = vadd.f32 %v3766, %v3838
        %v3903 = vadd.f32 %v3767, %v3839
        %v3904 = vadd.f32 %v3768, %v3840
        %v3905 = vadd.f32 %v3769, %v3841
        %v3906 = vadd.f32 %v3770, %v3842
        %v3907 = vadd.f32 %v3771, %v3843
        %v3908 = vadd.f32 %v3772, %v3844
        %v3909 = vadd.f32 %v3773, %v3845
        %v3910 = vadd.f32 %v3774, %v3846
        %v3911 = vadd.f32 %v3775, %v3847
        %v3912 = vadd.f32 %v3776, %v3848
        %v3913 = vadd.f32 %v3777, %v3849
        %v3914 = vadd.f32 %v3778, %v3850
        %v3915 = vadd.f32 %v3779, %v3851
        %v3916 = vadd.f32 %v3780, %v3852
        %v3917 = vadd.f32 %v3781, %v3853
        %v3918 = vadd.f32 %v3782, %v3854
        %v3919 = vadd.f32 %v3783, %v3855
        %v3920 = vadd.f32 %v3784, %v3856
        %v3921 = vadd.f32 %v3785, %v3857
        %v3922 = vadd.f32 %v3786, %v3858
        %v3923 = vadd.f32 %v3787, %v3859
        %v3924 = vadd.f32 %v3788, %v3860
        %v3925 = vadd.f32 %v3789, %v3861
        %v3926 = vadd.f32 %v3790, %v3862
        %v3927 = vadd.f32 %v3791, %v3863
        %v3928 = vadd.f32 %v3792, %v3864
        %v3929 = vadd.f32 %v3793, %v3865
        %v3930 = vadd.f32 %v3794, %v3866
        %v3931 = vadd.f32 %v3795, %v3867
        %v3932 = vadd.f32 %v3796, %v3868
        %v3933 = vadd.f32 %v3797, %v3869
        %v3934 = vadd.f32 %v3798, %v3870
        %v3935 = vadd.f32 %v3799, %v3871
        %v3936 = vadd.f32 %v3800, %v3872
        %v3937 = vadd.f32 %v3801, %v3873
        %v3938 = vadd.f32 %v3802, %v3874
        %v3939 = vadd.f32 %v3803, %v3875
        %v3940 = vadd.f32 %v3804, %v3876
        %v3941 = vadd.f32 %v3805, %v3877
        %v3942 = vadd.f32 %v3806, %v3878
        %v3943 = vadd.f32 %v3807, %v3879
        %v3944 = vadd.f32 %v3808, %v3880
        %v3945 = vadd.f32 %v3809, %v3881
        %v3946 = vadd.f32 %v3810, %v3882
        %v3947 = vadd.f32 %v3811, %v3883
        %v3948 = vadd.f32 %v3812, %v3884
        %v3949 = vadd.f32 %v3813, %v3885
        %v3950 = vadd.f32 %v3814, %v3886
        %v3951 = vadd.f32 %v3815, %v3887
        %v3952 = vadd.f32 %v3816, %v3888
        %v3954 = vlaneseq
        %v3955 = vshrl.u32 %v3954, 7
        %v3956 = vsub.s32 0, %v3955
        %v3957 = vrot.slane %v2307, %v3956
        %v3958 = vlaneseq
        %v3959 = vshrl.u32 %v3958, 7
        %v3960 = vsub.s32 1, %v3959
        %v3961 = vrot.slane %v2307, %v3960
        %v3964 = vadd.f32 %v3545, %v3957
        %v3965 = vadd.f32 %v3546, %v3961
        %v3966 = vadd.f32 %v3547, %v3957
        %v3967 = vadd.f32 %v3548, %v3961
        %v3968 = vadd.f32 %v3549, %v3957
        %v3969 = vadd.f32 %v3550, %v3961
        %v3970 = vadd.f32 %v3551, %v3957
        %v3971 = vadd.f32 %v3552, %v3961
        %v3972 = vadd.f32 %v3553, %v3957
        %v3973 = vadd.f32 %v3554, %v3961
        %v3974 = vadd.f32 %v3555, %v3957
        %v3975 = vadd.f32 %v3556, %v3961
        %v3976 = vadd.f32 %v3557, %v3957
        %v3977 = vadd.f32 %v3558, %v3961
        %v3978 = vadd.f32 %v3559, %v3957
        %v3979 = vadd.f32 %v3560, %v3961
        %v3980 = vadd.f32 %v3561, %v3957
        %v3981 = vadd.f32 %v3562, %v3961
        %v3982 = vadd.f32 %v3563, %v3957
        %v3983 = vadd.f32 %v3564, %v3961
        %v3984 = vadd.f32 %v3565, %v3957
        %v3985 = vadd.f32 %v3566, %v3961
        %v3986 = vadd.f32 %v3567, %v3957
        %v3987 = vadd.f32 %v3568, %v3961
        %v3988 = vadd.f32 %v3569, %v3957
        %v3989 = vadd.f32 %v3570, %v3961
        %v3990 = vadd.f32 %v3571, %v3957
        %v3991 = vadd.f32 %v3572, %v3961
        %v3992 = vadd.f32 %v3573, %v3957
        %v3993 = vadd.f32 %v3574, %v3961
        %v3994 = vadd.f32 %v3575, %v3957
        %v3995 = vadd.f32 %v3576, %v3961
        %v3996 = vadd.f32 %v3577, %v3957
        %v3997 = vadd.f32 %v3578, %v3961
        %v3998 = vadd.f32 %v3579, %v3957
        %v3999 = vadd.f32 %v3580, %v3961
        %v4000 = vadd.f32 %v3581, %v3957
        %v4001 = vadd.f32 %v3582, %v3961
        %v4002 = vadd.f32 %v3583, %v3957
        %v4003 = vadd.f32 %v3584, %v3961
        %v4004 = vadd.f32 %v3585, %v3957
        %v4005 = vadd.f32 %v3586, %v3961
        %v4006 = vadd.f32 %v3587, %v3957
        %v4007 = vadd.f32 %v3588, %v3961
        %v4008 = vadd.f32 %v3589, %v3957
        %v4009 = vadd.f32 %v3590, %v3961
        %v4010 = vadd.f32 %v3591, %v3957
        %v4011 = vadd.f32 %v3592, %v3961
        %v4012 = vadd.f32 %v3593, %v3957
        %v4013 = vadd.f32 %v3594, %v3961
        %v4014 = vadd.f32 %v3595, %v3957
        %v4015 = vadd.f32 %v3596, %v3961
        %v4016 = vadd.f32 %v3597, %v3957
        %v4017 = vadd.f32 %v3598, %v3961
        %v4018 = vadd.f32 %v3599, %v3957
        %v4019 = vadd.f32 %v3600, %v3961
        %v4020 = vadd.f32 %v3601, %v3957
        %v4021 = vadd.f32 %v3602, %v3961
        %v4022 = vadd.f32 %v3603, %v3957
        %v4023 = vadd.f32 %v3604, %v3961
        %v4024 = vadd.f32 %v3605, %v3957
        %v4025 = vadd.f32 %v3606, %v3961
        %v4026 = vadd.f32 %v3607, %v3957
        %v4027 = vadd.f32 %v3608, %v3961
        %v4028 = vrot.slane %v3201, 7
        %v4029 = vrot.slane %v3202, 7
        %v4030 = vrot.slane %v3203, 7
        %v4031 = vrot.slane %v3204, 7
        %v4032 = vrot.slane %v3205, 7
        %v4033 = vrot.slane %v3206, 7
        %v4034 = vrot.slane %v3207, 7
        %v4035 = vrot.slane %v3208, 7
        %v4036 = vrot.slane %v3209, 7
        %v4037 = vrot.slane %v3210, 7
        %v4038 = vrot.slane %v3211, 7
        %v4039 = vrot.slane %v3212, 7
        %v4040 = vrot.slane %v3213, 7
        %v4041 = vrot.slane %v3214, 7
        %v4042 = vrot.slane %v3215, 7
        %v4043 = vrot.slane %v3216, 7
        %v4044 = vrot.slane %v3217, 7
        %v4045 = vrot.slane %v3218, 7
        %v4046 = vrot.slane %v3219, 7
        %v4047 = vrot.slane %v3220, 7
        %v4048 = vrot.slane %v3221, 7
        %v4049 = vrot.slane %v3222, 7
        %v4050 = vrot.slane %v3223, 7
        %v4051 = vrot.slane %v3224, 7
        %v4052 = vrot.slane %v3225, 7
        %v4053 = vrot.slane %v3226, 7
        %v4054 = vrot.slane %v3227, 7
        %v4055 = vrot.slane %v3228, 7
        %v4056 = vrot.slane %v3229, 7
        %v4057 = vrot.slane %v3230, 7
        %v4058 = vrot.slane %v3231, 7
        %v4059 = vrot.slane %v3232, 7
        %v4060 = vrot.slane %v3233, 7
        %v4061 = vrot.slane %v3234, 7
        %v4062 = vrot.slane %v3235, 7
        %v4063 = vrot.slane %v3236, 7
        %v4064 = vrot.slane %v3237, 7
        %v4065 = vrot.slane %v3238, 7
        %v4066 = vrot.slane %v3239, 7
        %v4067 = vrot.slane %v3240, 7
        %v4068 = vrot.slane %v3241, 7
        %v4069 = vrot.slane %v3242, 7
        %v4070 = vrot.slane %v3243, 7
        %v4071 = vrot.slane %v3244, 7
        %v4072 = vrot.slane %v3245, 7
        %v4073 = vrot.slane %v3246, 7
        %v4074 = vrot.slane %v3247, 7
        %v4075 = vrot.slane %v3248, 7
        %v4076 = vrot.slane %v3249, 7
        %v4077 = vrot.slane %v3250, 7
        %v4078 = vrot.slane %v3251, 7
        %v4079 = vrot.slane %v3252, 7
        %v4080 = vrot.slane %v3253, 7
        %v4081 = vrot.slane %v3254, 7
        %v4082 = vrot.slane %v3255, 7
        %v4083 = vrot.slane %v3256, 7
        %v4084 = vrot.slane %v3257, 7
        %v4085 = vrot.slane %v3258, 7
        %v4086 = vrot.slane %v3259, 7
        %v4087 = vrot.slane %v3260, 7
        %v4088 = vrot.slane %v3261, 7
        %v4089 = vrot.slane %v3262, 7
        %v4090 = vrot.slane %v3263, 7
        %v4091 = vrot.slane %v3264, 7
        %vm4092 = vcmp.lt.s32.totalorder %v2309, 1
        %v4093 = vsel %vm4092, %v4088, %v4090
        %v4094 = vsel %vm4092, %v4089, %v4091
        %v4095 = vsel %vm4092, %v4086, %v4088
        %v4096 = vsel %vm4092, %v4087, %v4089
        %v4097 = vsel %vm4092, %v4084, %v4086
        %v4098 = vsel %vm4092, %v4085, %v4087
        %v4099 = vsel %vm4092, %v4082, %v4084
        %v4100 = vsel %vm4092, %v4083, %v4085
        %v4101 = vsel %vm4092, %v4080, %v4082
        %v4102 = vsel %vm4092, %v4081, %v4083
        %v4103 = vsel %vm4092, %v4078, %v4080
        %v4104 = vsel %vm4092, %v4079, %v4081
        %v4105 = vsel %vm4092, %v4076, %v4078
        %v4106 = vsel %vm4092, %v4077, %v4079
        %v4107 = vsel %vm4092, %v4074, %v4076
        %v4108 = vsel %vm4092, %v4075, %v4077
        %v4109 = vsel %vm4092, %v4072, %v4074
        %v4110 = vsel %vm4092, %v4073, %v4075
        %v4111 = vsel %vm4092, %v4070, %v4072
        %v4112 = vsel %vm4092, %v4071, %v4073
        %v4113 = vsel %vm4092, %v4068, %v4070
        %v4114 = vsel %vm4092, %v4069, %v4071
        %v4115 = vsel %vm4092, %v4066, %v4068
        %v4116 = vsel %vm4092, %v4067, %v4069
        %v4117 = vsel %vm4092, %v4064, %v4066
        %v4118 = vsel %vm4092, %v4065, %v4067
        %v4119 = vsel %vm4092, %v4062, %v4064
        %v4120 = vsel %vm4092, %v4063, %v4065
        %v4121 = vsel %vm4092, %v4060, %v4062
        %v4122 = vsel %vm4092, %v4061, %v4063
        %v4123 = vsel %vm4092, %v4058, %v4060
        %v4124 = vsel %vm4092, %v4059, %v4061
        %v4125 = vsel %vm4092, %v4056, %v4058
        %v4126 = vsel %vm4092, %v4057, %v4059
        %v4127 = vsel %vm4092, %v4054, %v4056
        %v4128 = vsel %vm4092, %v4055, %v4057
        %v4129 = vsel %vm4092, %v4052, %v4054
        %v4130 = vsel %vm4092, %v4053, %v4055
        %v4131 = vsel %vm4092, %v4050, %v4052
        %v4132 = vsel %vm4092, %v4051, %v4053
        %v4133 = vsel %vm4092, %v4048, %v4050
        %v4134 = vsel %vm4092, %v4049, %v4051
        %v4135 = vsel %vm4092, %v4046, %v4048
        %v4136 = vsel %vm4092, %v4047, %v4049
        %v4137 = vsel %vm4092, %v4044, %v4046
        %v4138 = vsel %vm4092, %v4045, %v4047
        %v4139 = vsel %vm4092, %v4042, %v4044
        %v4140 = vsel %vm4092, %v4043, %v4045
        %v4141 = vsel %vm4092, %v4040, %v4042
        %v4142 = vsel %vm4092, %v4041, %v4043
        %v4143 = vsel %vm4092, %v4038, %v4040
        %v4144 = vsel %vm4092, %v4039, %v4041
        %v4145 = vsel %vm4092, %v4036, %v4038
        %v4146 = vsel %vm4092, %v4037, %v4039
        %v4147 = vsel %vm4092, %v4034, %v4036
        %v4148 = vsel %vm4092, %v4035, %v4037
        %v4149 = vsel %vm4092, %v4032, %v4034
        %v4150 = vsel %vm4092, %v4033, %v4035
        %v4151 = vsel %vm4092, %v4030, %v4032
        %v4152 = vsel %vm4092, %v4031, %v4033
        %v4153 = vsel %vm4092, %v4028, %v4030
        %v4154 = vsel %vm4092, %v4029, %v4031
        %v4155 = vsel %vm4092, %v4090, %v4028
        %v4156 = vsel %vm4092, %v4091, %v4029
        %v4157 = vsel %vm2725, 1, 0
        %v4158 = vsel %vm2726, 1, 0
        %v4159 = vsel %vm2727, 1, 0
        %v4160 = vsel %vm2728, 1, 0
        %v4161 = vsel %vm2729, 1, 0
        %v4162 = vsel %vm2730, 1, 0
        %v4163 = vsel %vm2731, 1, 0
        %v4164 = vsel %vm2732, 1, 0
        %v4165 = vsel %vm2733, 1, 0
        %v4166 = vsel %vm2734, 1, 0
        %v4167 = vsel %vm2735, 1, 0
        %v4168 = vsel %vm2736, 1, 0
        %v4169 = vsel %vm2737, 1, 0
        %v4170 = vsel %vm2738, 1, 0
        %v4171 = vsel %vm2739, 1, 0
        %v4172 = vsel %vm2740, 1, 0
        %v4173 = vsel %vm2741, 1, 0
        %v4174 = vsel %vm2742, 1, 0
        %v4175 = vsel %vm2743, 1, 0
        %v4176 = vsel %vm2744, 1, 0
        %v4177 = vsel %vm2745, 1, 0
        %v4178 = vsel %vm2746, 1, 0
        %v4179 = vsel %vm2747, 1, 0
        %v4180 = vsel %vm2748, 1, 0
        %v4181 = vsel %vm2749, 1, 0
        %v4182 = vsel %vm2750, 1, 0
        %v4183 = vsel %vm2751, 1, 0
        %v4184 = vsel %vm2752, 1, 0
        %v4185 = vsel %vm2753, 1, 0
        %v4186 = vsel %vm2754, 1, 0
        %v4187 = vsel %vm2755, 1, 0
        %v4188 = vsel %vm2756, 1, 0
        %vm4189 = vcmp.eq.s32.totalorder %v4157, 1
        %vm4190 = vcmp.eq.s32.totalorder %v4158, 1
        %vm4191 = vcmp.eq.s32.totalorder %v4159, 1
        %vm4192 = vcmp.eq.s32.totalorder %v4160, 1
        %vm4193 = vcmp.eq.s32.totalorder %v4161, 1
        %vm4194 = vcmp.eq.s32.totalorder %v4162, 1
        %vm4195 = vcmp.eq.s32.totalorder %v4163, 1
        %vm4196 = vcmp.eq.s32.totalorder %v4164, 1
        %vm4197 = vcmp.eq.s32.totalorder %v4165, 1
        %vm4198 = vcmp.eq.s32.totalorder %v4166, 1
        %vm4199 = vcmp.eq.s32.totalorder %v4167, 1
        %vm4200 = vcmp.eq.s32.totalorder %v4168, 1
        %vm4201 = vcmp.eq.s32.totalorder %v4169, 1
        %vm4202 = vcmp.eq.s32.totalorder %v4170, 1
        %vm4203 = vcmp.eq.s32.totalorder %v4171, 1
        %vm4204 = vcmp.eq.s32.totalorder %v4172, 1
        %vm4205 = vcmp.eq.s32.totalorder %v4173, 1
        %vm4206 = vcmp.eq.s32.totalorder %v4174, 1
        %vm4207 = vcmp.eq.s32.totalorder %v4175, 1
        %vm4208 = vcmp.eq.s32.totalorder %v4176, 1
        %vm4209 = vcmp.eq.s32.totalorder %v4177, 1
        %vm4210 = vcmp.eq.s32.totalorder %v4178, 1
        %vm4211 = vcmp.eq.s32.totalorder %v4179, 1
        %vm4212 = vcmp.eq.s32.totalorder %v4180, 1
        %vm4213 = vcmp.eq.s32.totalorder %v4181, 1
        %vm4214 = vcmp.eq.s32.totalorder %v4182, 1
        %vm4215 = vcmp.eq.s32.totalorder %v4183, 1
        %vm4216 = vcmp.eq.s32.totalorder %v4184, 1
        %vm4217 = vcmp.eq.s32.totalorder %v4185, 1
        %vm4218 = vcmp.eq.s32.totalorder %v4186, 1
        %vm4219 = vcmp.eq.s32.totalorder %v4187, 1
        %vm4220 = vcmp.eq.s32.totalorder %v4188, 1
        %v4221 = vsel %vm4189, 0.0, %v4155
        %v4222 = vsel %vm4189, 0.0, %v4156
        %v4223 = vsel %vm4190, 0.0, %v4153
        %v4224 = vsel %vm4190, 0.0, %v4154
        %v4225 = vsel %vm4191, 0.0, %v4151
        %v4226 = vsel %vm4191, 0.0, %v4152
        %v4227 = vsel %vm4192, 0.0, %v4149
        %v4228 = vsel %vm4192, 0.0, %v4150
        %v4229 = vsel %vm4193, 0.0, %v4147
        %v4230 = vsel %vm4193, 0.0, %v4148
        %v4231 = vsel %vm4194, 0.0, %v4145
        %v4232 = vsel %vm4194, 0.0, %v4146
        %v4233 = vsel %vm4195, 0.0, %v4143
        %v4234 = vsel %vm4195, 0.0, %v4144
        %v4235 = vsel %vm4196, 0.0, %v4141
        %v4236 = vsel %vm4196, 0.0, %v4142
        %v4237 = vsel %vm4197, 0.0, %v4139
        %v4238 = vsel %vm4197, 0.0, %v4140
        %v4239 = vsel %vm4198, 0.0, %v4137
        %v4240 = vsel %vm4198, 0.0, %v4138
        %v4241 = vsel %vm4199, 0.0, %v4135
        %v4242 = vsel %vm4199, 0.0, %v4136
        %v4243 = vsel %vm4200, 0.0, %v4133
        %v4244 = vsel %vm4200, 0.0, %v4134
        %v4245 = vsel %vm4201, 0.0, %v4131
        %v4246 = vsel %vm4201, 0.0, %v4132
        %v4247 = vsel %vm4202, 0.0, %v4129
        %v4248 = vsel %vm4202, 0.0, %v4130
        %v4249 = vsel %vm4203, 0.0, %v4127
        %v4250 = vsel %vm4203, 0.0, %v4128
        %v4251 = vsel %vm4204, 0.0, %v4125
        %v4252 = vsel %vm4204, 0.0, %v4126
        %v4253 = vsel %vm4205, 0.0, %v4123
        %v4254 = vsel %vm4205, 0.0, %v4124
        %v4255 = vsel %vm4206, 0.0, %v4121
        %v4256 = vsel %vm4206, 0.0, %v4122
        %v4257 = vsel %vm4207, 0.0, %v4119
        %v4258 = vsel %vm4207, 0.0, %v4120
        %v4259 = vsel %vm4208, 0.0, %v4117
        %v4260 = vsel %vm4208, 0.0, %v4118
        %v4261 = vsel %vm4209, 0.0, %v4115
        %v4262 = vsel %vm4209, 0.0, %v4116
        %v4263 = vsel %vm4210, 0.0, %v4113
        %v4264 = vsel %vm4210, 0.0, %v4114
        %v4265 = vsel %vm4211, 0.0, %v4111
        %v4266 = vsel %vm4211, 0.0, %v4112
        %v4267 = vsel %vm4212, 0.0, %v4109
        %v4268 = vsel %vm4212, 0.0, %v4110
        %v4269 = vsel %vm4213, 0.0, %v4107
        %v4270 = vsel %vm4213, 0.0, %v4108
        %v4271 = vsel %vm4214, 0.0, %v4105
        %v4272 = vsel %vm4214, 0.0, %v4106
        %v4273 = vsel %vm4215, 0.0, %v4103
        %v4274 = vsel %vm4215, 0.0, %v4104
        %v4275 = vsel %vm4216, 0.0, %v4101
        %v4276 = vsel %vm4216, 0.0, %v4102
        %v4277 = vsel %vm4217, 0.0, %v4099
        %v4278 = vsel %vm4217, 0.0, %v4100
        %v4279 = vsel %vm4218, 0.0, %v4097
        %v4280 = vsel %vm4218, 0.0, %v4098
        %v4281 = vsel %vm4219, 0.0, %v4095
        %v4282 = vsel %vm4219, 0.0, %v4096
        %v4283 = vsel %vm4220, 0.0, %v4093
        %v4284 = vsel %vm4220, 0.0, %v4094
        %v4285 = vadd.f32 %v3964, %v4221
        %v4286 = vadd.f32 %v3965, %v4222
        %v4287 = vadd.f32 %v3966, %v4223
        %v4288 = vadd.f32 %v3967, %v4224
        %v4289 = vadd.f32 %v3968, %v4225
        %v4290 = vadd.f32 %v3969, %v4226
        %v4291 = vadd.f32 %v3970, %v4227
        %v4292 = vadd.f32 %v3971, %v4228
        %v4293 = vadd.f32 %v3972, %v4229
        %v4294 = vadd.f32 %v3973, %v4230
        %v4295 = vadd.f32 %v3974, %v4231
        %v4296 = vadd.f32 %v3975, %v4232
        %v4297 = vadd.f32 %v3976, %v4233
        %v4298 = vadd.f32 %v3977, %v4234
        %v4299 = vadd.f32 %v3978, %v4235
        %v4300 = vadd.f32 %v3979, %v4236
        %v4301 = vadd.f32 %v3980, %v4237
        %v4302 = vadd.f32 %v3981, %v4238
        %v4303 = vadd.f32 %v3982, %v4239
        %v4304 = vadd.f32 %v3983, %v4240
        %v4305 = vadd.f32 %v3984, %v4241
        %v4306 = vadd.f32 %v3985, %v4242
        %v4307 = vadd.f32 %v3986, %v4243
        %v4308 = vadd.f32 %v3987, %v4244
        %v4309 = vadd.f32 %v3988, %v4245
        %v4310 = vadd.f32 %v3989, %v4246
        %v4311 = vadd.f32 %v3990, %v4247
        %v4312 = vadd.f32 %v3991, %v4248
        %v4313 = vadd.f32 %v3992, %v4249
        %v4314 = vadd.f32 %v3993, %v4250
        %v4315 = vadd.f32 %v3994, %v4251
        %v4316 = vadd.f32 %v3995, %v4252
        %v4317 = vadd.f32 %v3996, %v4253
        %v4318 = vadd.f32 %v3997, %v4254
        %v4319 = vadd.f32 %v3998, %v4255
        %v4320 = vadd.f32 %v3999, %v4256
        %v4321 = vadd.f32 %v4000, %v4257
        %v4322 = vadd.f32 %v4001, %v4258
        %v4323 = vadd.f32 %v4002, %v4259
        %v4324 = vadd.f32 %v4003, %v4260
        %v4325 = vadd.f32 %v4004, %v4261
        %v4326 = vadd.f32 %v4005, %v4262
        %v4327 = vadd.f32 %v4006, %v4263
        %v4328 = vadd.f32 %v4007, %v4264
        %v4329 = vadd.f32 %v4008, %v4265
        %v4330 = vadd.f32 %v4009, %v4266
        %v4331 = vadd.f32 %v4010, %v4267
        %v4332 = vadd.f32 %v4011, %v4268
        %v4333 = vadd.f32 %v4012, %v4269
        %v4334 = vadd.f32 %v4013, %v4270
        %v4335 = vadd.f32 %v4014, %v4271
        %v4336 = vadd.f32 %v4015, %v4272
        %v4337 = vadd.f32 %v4016, %v4273
        %v4338 = vadd.f32 %v4017, %v4274
        %v4339 = vadd.f32 %v4018, %v4275
        %v4340 = vadd.f32 %v4019, %v4276
        %v4341 = vadd.f32 %v4020, %v4277
        %v4342 = vadd.f32 %v4021, %v4278
        %v4343 = vadd.f32 %v4022, %v4279
        %v4344 = vadd.f32 %v4023, %v4280
        %v4345 = vadd.f32 %v4024, %v4281
        %v4346 = vadd.f32 %v4025, %v4282
        %v4347 = vadd.f32 %v4026, %v4283
        %v4348 = vadd.f32 %v4027, %v4284
        %v4349 = vrot.slane %v3889, 1
        %v4350 = vrot.slane %v3890, 1
        %v4351 = vrot.slane %v3891, 1
        %v4352 = vrot.slane %v3892, 1
        %v4353 = vrot.slane %v3893, 1
        %v4354 = vrot.slane %v3894, 1
        %v4355 = vrot.slane %v3895, 1
        %v4356 = vrot.slane %v3896, 1
        %v4357 = vrot.slane %v3897, 1
        %v4358 = vrot.slane %v3898, 1
        %v4359 = vrot.slane %v3899, 1
        %v4360 = vrot.slane %v3900, 1
        %v4361 = vrot.slane %v3901, 1
        %v4362 = vrot.slane %v3902, 1
        %v4363 = vrot.slane %v3903, 1
        %v4364 = vrot.slane %v3904, 1
        %v4365 = vrot.slane %v3905, 1
        %v4366 = vrot.slane %v3906, 1
        %v4367 = vrot.slane %v3907, 1
        %v4368 = vrot.slane %v3908, 1
        %v4369 = vrot.slane %v3909, 1
        %v4370 = vrot.slane %v3910, 1
        %v4371 = vrot.slane %v3911, 1
        %v4372 = vrot.slane %v3912, 1
        %v4373 = vrot.slane %v3913, 1
        %v4374 = vrot.slane %v3914, 1
        %v4375 = vrot.slane %v3915, 1
        %v4376 = vrot.slane %v3916, 1
        %v4377 = vrot.slane %v3917, 1
        %v4378 = vrot.slane %v3918, 1
        %v4379 = vrot.slane %v3919, 1
        %v4380 = vrot.slane %v3920, 1
        %v4381 = vrot.slane %v3921, 1
        %v4382 = vrot.slane %v3922, 1
        %v4383 = vrot.slane %v3923, 1
        %v4384 = vrot.slane %v3924, 1
        %v4385 = vrot.slane %v3925, 1
        %v4386 = vrot.slane %v3926, 1
        %v4387 = vrot.slane %v3927, 1
        %v4388 = vrot.slane %v3928, 1
        %v4389 = vrot.slane %v3929, 1
        %v4390 = vrot.slane %v3930, 1
        %v4391 = vrot.slane %v3931, 1
        %v4392 = vrot.slane %v3932, 1
        %v4393 = vrot.slane %v3933, 1
        %v4394 = vrot.slane %v3934, 1
        %v4395 = vrot.slane %v3935, 1
        %v4396 = vrot.slane %v3936, 1
        %v4397 = vrot.slane %v3937, 1
        %v4398 = vrot.slane %v3938, 1
        %v4399 = vrot.slane %v3939, 1
        %v4400 = vrot.slane %v3940, 1
        %v4401 = vrot.slane %v3941, 1
        %v4402 = vrot.slane %v3942, 1
        %v4403 = vrot.slane %v3943, 1
        %v4404 = vrot.slane %v3944, 1
        %v4405 = vrot.slane %v3945, 1
        %v4406 = vrot.slane %v3946, 1
        %v4407 = vrot.slane %v3947, 1
        %v4408 = vrot.slane %v3948, 1
        %v4409 = vrot.slane %v3949, 1
        %v4410 = vrot.slane %v3950, 1
        %v4411 = vrot.slane %v3951, 1
        %v4412 = vrot.slane %v3952, 1
        %vm4413 = vcmp.lt.s32.totalorder %v2309, 7
        %v4414 = vsel %vm4413, %v4409, %v4411
        %v4415 = vsel %vm4413, %v4410, %v4412
        %v4416 = vsel %vm4413, %v4407, %v4409
        %v4417 = vsel %vm4413, %v4408, %v4410
        %v4418 = vsel %vm4413, %v4405, %v4407
        %v4419 = vsel %vm4413, %v4406, %v4408
        %v4420 = vsel %vm4413, %v4403, %v4405
        %v4421 = vsel %vm4413, %v4404, %v4406
        %v4422 = vsel %vm4413, %v4401, %v4403
        %v4423 = vsel %vm4413, %v4402, %v4404
        %v4424 = vsel %vm4413, %v4399, %v4401
        %v4425 = vsel %vm4413, %v4400, %v4402
        %v4426 = vsel %vm4413, %v4397, %v4399
        %v4427 = vsel %vm4413, %v4398, %v4400
        %v4428 = vsel %vm4413, %v4395, %v4397
        %v4429 = vsel %vm4413, %v4396, %v4398
        %v4430 = vsel %vm4413, %v4393, %v4395
        %v4431 = vsel %vm4413, %v4394, %v4396
        %v4432 = vsel %vm4413, %v4391, %v4393
        %v4433 = vsel %vm4413, %v4392, %v4394
        %v4434 = vsel %vm4413, %v4389, %v4391
        %v4435 = vsel %vm4413, %v4390, %v4392
        %v4436 = vsel %vm4413, %v4387, %v4389
        %v4437 = vsel %vm4413, %v4388, %v4390
        %v4438 = vsel %vm4413, %v4385, %v4387
        %v4439 = vsel %vm4413, %v4386, %v4388
        %v4440 = vsel %vm4413, %v4383, %v4385
        %v4441 = vsel %vm4413, %v4384, %v4386
        %v4442 = vsel %vm4413, %v4381, %v4383
        %v4443 = vsel %vm4413, %v4382, %v4384
        %v4444 = vsel %vm4413, %v4379, %v4381
        %v4445 = vsel %vm4413, %v4380, %v4382
        %v4446 = vsel %vm4413, %v4377, %v4379
        %v4447 = vsel %vm4413, %v4378, %v4380
        %v4448 = vsel %vm4413, %v4375, %v4377
        %v4449 = vsel %vm4413, %v4376, %v4378
        %v4450 = vsel %vm4413, %v4373, %v4375
        %v4451 = vsel %vm4413, %v4374, %v4376
        %v4452 = vsel %vm4413, %v4371, %v4373
        %v4453 = vsel %vm4413, %v4372, %v4374
        %v4454 = vsel %vm4413, %v4369, %v4371
        %v4455 = vsel %vm4413, %v4370, %v4372
        %v4456 = vsel %vm4413, %v4367, %v4369
        %v4457 = vsel %vm4413, %v4368, %v4370
        %v4458 = vsel %vm4413, %v4365, %v4367
        %v4459 = vsel %vm4413, %v4366, %v4368
        %v4460 = vsel %vm4413, %v4363, %v4365
        %v4461 = vsel %vm4413, %v4364, %v4366
        %v4462 = vsel %vm4413, %v4361, %v4363
        %v4463 = vsel %vm4413, %v4362, %v4364
        %v4464 = vsel %vm4413, %v4359, %v4361
        %v4465 = vsel %vm4413, %v4360, %v4362
        %v4466 = vsel %vm4413, %v4357, %v4359
        %v4467 = vsel %vm4413, %v4358, %v4360
        %v4468 = vsel %vm4413, %v4355, %v4357
        %v4469 = vsel %vm4413, %v4356, %v4358
        %v4470 = vsel %vm4413, %v4353, %v4355
        %v4471 = vsel %vm4413, %v4354, %v4356
        %v4472 = vsel %vm4413, %v4351, %v4353
        %v4473 = vsel %vm4413, %v4352, %v4354
        %v4474 = vsel %vm4413, %v4349, %v4351
        %v4475 = vsel %vm4413, %v4350, %v4352
        %v4476 = vsel %vm4413, %v4411, %v4349
        %v4477 = vsel %vm4413, %v4412, %v4350
        %v4478 = vsel %vm2757, 1, 0
        %v4479 = vsel %vm2758, 1, 0
        %v4480 = vsel %vm2759, 1, 0
        %v4481 = vsel %vm2760, 1, 0
        %v4482 = vsel %vm2761, 1, 0
        %v4483 = vsel %vm2762, 1, 0
        %v4484 = vsel %vm2763, 1, 0
        %v4485 = vsel %vm2764, 1, 0
        %v4486 = vsel %vm2765, 1, 0
        %v4487 = vsel %vm2766, 1, 0
        %v4488 = vsel %vm2767, 1, 0
        %v4489 = vsel %vm2768, 1, 0
        %v4490 = vsel %vm2769, 1, 0
        %v4491 = vsel %vm2770, 1, 0
        %v4492 = vsel %vm2771, 1, 0
        %v4493 = vsel %vm2772, 1, 0
        %v4494 = vsel %vm2773, 1, 0
        %v4495 = vsel %vm2774, 1, 0
        %v4496 = vsel %vm2775, 1, 0
        %v4497 = vsel %vm2776, 1, 0
        %v4498 = vsel %vm2777, 1, 0
        %v4499 = vsel %vm2778, 1, 0
        %v4500 = vsel %vm2779, 1, 0
        %v4501 = vsel %vm2780, 1, 0
        %v4502 = vsel %vm2781, 1, 0
        %v4503 = vsel %vm2782, 1, 0
        %v4504 = vsel %vm2783, 1, 0
        %v4505 = vsel %vm2784, 1, 0
        %v4506 = vsel %vm2785, 1, 0
        %v4507 = vsel %vm2786, 1, 0
        %v4508 = vsel %vm2787, 1, 0
        %v4509 = vsel %vm2788, 1, 0
        %vm4510 = vcmp.eq.s32.totalorder %v4478, 1
        %vm4511 = vcmp.eq.s32.totalorder %v4479, 1
        %vm4512 = vcmp.eq.s32.totalorder %v4480, 1
        %vm4513 = vcmp.eq.s32.totalorder %v4481, 1
        %vm4514 = vcmp.eq.s32.totalorder %v4482, 1
        %vm4515 = vcmp.eq.s32.totalorder %v4483, 1
        %vm4516 = vcmp.eq.s32.totalorder %v4484, 1
        %vm4517 = vcmp.eq.s32.totalorder %v4485, 1
        %vm4518 = vcmp.eq.s32.totalorder %v4486, 1
        %vm4519 = vcmp.eq.s32.totalorder %v4487, 1
        %vm4520 = vcmp.eq.s32.totalorder %v4488, 1
        %vm4521 = vcmp.eq.s32.totalorder %v4489, 1
        %vm4522 = vcmp.eq.s32.totalorder %v4490, 1
        %vm4523 = vcmp.eq.s32.totalorder %v4491, 1
        %vm4524 = vcmp.eq.s32.totalorder %v4492, 1
        %vm4525 = vcmp.eq.s32.totalorder %v4493, 1
        %vm4526 = vcmp.eq.s32.totalorder %v4494, 1
        %vm4527 = vcmp.eq.s32.totalorder %v4495, 1
        %vm4528 = vcmp.eq.s32.totalorder %v4496, 1
        %vm4529 = vcmp.eq.s32.totalorder %v4497, 1
        %vm4530 = vcmp.eq.s32.totalorder %v4498, 1
        %vm4531 = vcmp.eq.s32.totalorder %v4499, 1
        %vm4532 = vcmp.eq.s32.totalorder %v4500, 1
        %vm4533 = vcmp.eq.s32.totalorder %v4501, 1
        %vm4534 = vcmp.eq.s32.totalorder %v4502, 1
        %vm4535 = vcmp.eq.s32.totalorder %v4503, 1
        %vm4536 = vcmp.eq.s32.totalorder %v4504, 1
        %vm4537 = vcmp.eq.s32.totalorder %v4505, 1
        %vm4538 = vcmp.eq.s32.totalorder %v4506, 1
        %vm4539 = vcmp.eq.s32.totalorder %v4507, 1
        %vm4540 = vcmp.eq.s32.totalorder %v4508, 1
        %vm4541 = vcmp.eq.s32.totalorder %v4509, 1
        %v4542 = vsel %vm4510, 0.0, %v4474
        %v4543 = vsel %vm4510, 0.0, %v4475
        %v4544 = vsel %vm4511, 0.0, %v4472
        %v4545 = vsel %vm4511, 0.0, %v4473
        %v4546 = vsel %vm4512, 0.0, %v4470
        %v4547 = vsel %vm4512, 0.0, %v4471
        %v4548 = vsel %vm4513, 0.0, %v4468
        %v4549 = vsel %vm4513, 0.0, %v4469
        %v4550 = vsel %vm4514, 0.0, %v4466
        %v4551 = vsel %vm4514, 0.0, %v4467
        %v4552 = vsel %vm4515, 0.0, %v4464
        %v4553 = vsel %vm4515, 0.0, %v4465
        %v4554 = vsel %vm4516, 0.0, %v4462
        %v4555 = vsel %vm4516, 0.0, %v4463
        %v4556 = vsel %vm4517, 0.0, %v4460
        %v4557 = vsel %vm4517, 0.0, %v4461
        %v4558 = vsel %vm4518, 0.0, %v4458
        %v4559 = vsel %vm4518, 0.0, %v4459
        %v4560 = vsel %vm4519, 0.0, %v4456
        %v4561 = vsel %vm4519, 0.0, %v4457
        %v4562 = vsel %vm4520, 0.0, %v4454
        %v4563 = vsel %vm4520, 0.0, %v4455
        %v4564 = vsel %vm4521, 0.0, %v4452
        %v4565 = vsel %vm4521, 0.0, %v4453
        %v4566 = vsel %vm4522, 0.0, %v4450
        %v4567 = vsel %vm4522, 0.0, %v4451
        %v4568 = vsel %vm4523, 0.0, %v4448
        %v4569 = vsel %vm4523, 0.0, %v4449
        %v4570 = vsel %vm4524, 0.0, %v4446
        %v4571 = vsel %vm4524, 0.0, %v4447
        %v4572 = vsel %vm4525, 0.0, %v4444
        %v4573 = vsel %vm4525, 0.0, %v4445
        %v4574 = vsel %vm4526, 0.0, %v4442
        %v4575 = vsel %vm4526, 0.0, %v4443
        %v4576 = vsel %vm4527, 0.0, %v4440
        %v4577 = vsel %vm4527, 0.0, %v4441
        %v4578 = vsel %vm4528, 0.0, %v4438
        %v4579 = vsel %vm4528, 0.0, %v4439
        %v4580 = vsel %vm4529, 0.0, %v4436
        %v4581 = vsel %vm4529, 0.0, %v4437
        %v4582 = vsel %vm4530, 0.0, %v4434
        %v4583 = vsel %vm4530, 0.0, %v4435
        %v4584 = vsel %vm4531, 0.0, %v4432
        %v4585 = vsel %vm4531, 0.0, %v4433
        %v4586 = vsel %vm4532, 0.0, %v4430
        %v4587 = vsel %vm4532, 0.0, %v4431
        %v4588 = vsel %vm4533, 0.0, %v4428
        %v4589 = vsel %vm4533, 0.0, %v4429
        %v4590 = vsel %vm4534, 0.0, %v4426
        %v4591 = vsel %vm4534, 0.0, %v4427
        %v4592 = vsel %vm4535, 0.0, %v4424
        %v4593 = vsel %vm4535, 0.0, %v4425
        %v4594 = vsel %vm4536, 0.0, %v4422
        %v4595 = vsel %vm4536, 0.0, %v4423
        %v4596 = vsel %vm4537, 0.0, %v4420
        %v4597 = vsel %vm4537, 0.0, %v4421
        %v4598 = vsel %vm4538, 0.0, %v4418
        %v4599 = vsel %vm4538, 0.0, %v4419
        %v4600 = vsel %vm4539, 0.0, %v4416
        %v4601 = vsel %vm4539, 0.0, %v4417
        %v4602 = vsel %vm4540, 0.0, %v4414
        %v4603 = vsel %vm4540, 0.0, %v4415
        %v4604 = vsel %vm4541, 0.0, %v4476
        %v4605 = vsel %vm4541, 0.0, %v4477
        %v4606 = vadd.f32 %v4285, %v4542
        %v4607 = vadd.f32 %v4286, %v4543
        %v4608 = vadd.f32 %v4287, %v4544
        %v4609 = vadd.f32 %v4288, %v4545
        %v4610 = vadd.f32 %v4289, %v4546
        %v4611 = vadd.f32 %v4290, %v4547
        %v4612 = vadd.f32 %v4291, %v4548
        %v4613 = vadd.f32 %v4292, %v4549
        %v4614 = vadd.f32 %v4293, %v4550
        %v4615 = vadd.f32 %v4294, %v4551
        %v4616 = vadd.f32 %v4295, %v4552
        %v4617 = vadd.f32 %v4296, %v4553
        %v4618 = vadd.f32 %v4297, %v4554
        %v4619 = vadd.f32 %v4298, %v4555
        %v4620 = vadd.f32 %v4299, %v4556
        %v4621 = vadd.f32 %v4300, %v4557
        %v4622 = vadd.f32 %v4301, %v4558
        %v4623 = vadd.f32 %v4302, %v4559
        %v4624 = vadd.f32 %v4303, %v4560
        %v4625 = vadd.f32 %v4304, %v4561
        %v4626 = vadd.f32 %v4305, %v4562
        %v4627 = vadd.f32 %v4306, %v4563
        %v4628 = vadd.f32 %v4307, %v4564
        %v4629 = vadd.f32 %v4308, %v4565
        %v4630 = vadd.f32 %v4309, %v4566
        %v4631 = vadd.f32 %v4310, %v4567
        %v4632 = vadd.f32 %v4311, %v4568
        %v4633 = vadd.f32 %v4312, %v4569
        %v4634 = vadd.f32 %v4313, %v4570
        %v4635 = vadd.f32 %v4314, %v4571
        %v4636 = vadd.f32 %v4315, %v4572
        %v4637 = vadd.f32 %v4316, %v4573
        %v4638 = vadd.f32 %v4317, %v4574
        %v4639 = vadd.f32 %v4318, %v4575
        %v4640 = vadd.f32 %v4319, %v4576
        %v4641 = vadd.f32 %v4320, %v4577
        %v4642 = vadd.f32 %v4321, %v4578
        %v4643 = vadd.f32 %v4322, %v4579
        %v4644 = vadd.f32 %v4323, %v4580
        %v4645 = vadd.f32 %v4324, %v4581
        %v4646 = vadd.f32 %v4325, %v4582
        %v4647 = vadd.f32 %v4326, %v4583
        %v4648 = vadd.f32 %v4327, %v4584
        %v4649 = vadd.f32 %v4328, %v4585
        %v4650 = vadd.f32 %v4329, %v4586
        %v4651 = vadd.f32 %v4330, %v4587
        %v4652 = vadd.f32 %v4331, %v4588
        %v4653 = vadd.f32 %v4332, %v4589
        %v4654 = vadd.f32 %v4333, %v4590
        %v4655 = vadd.f32 %v4334, %v4591
        %v4656 = vadd.f32 %v4335, %v4592
        %v4657 = vadd.f32 %v4336, %v4593
        %v4658 = vadd.f32 %v4337, %v4594
        %v4659 = vadd.f32 %v4338, %v4595
        %v4660 = vadd.f32 %v4339, %v4596
        %v4661 = vadd.f32 %v4340, %v4597
        %v4662 = vadd.f32 %v4341, %v4598
        %v4663 = vadd.f32 %v4342, %v4599
        %v4664 = vadd.f32 %v4343, %v4600
        %v4665 = vadd.f32 %v4344, %v4601
        %v4666 = vadd.f32 %v4345, %v4602
        %v4667 = vadd.f32 %v4346, %v4603
        %v4668 = vadd.f32 %v4347, %v4604
        %v4669 = vadd.f32 %v4348, %v4605
        %v4670 = vand.u32 2147483647, %v4606
        %v4671 = vand.u32 2147483647, %v4607
        %v4672 = vand.u32 2147483647, %v4608
        %v4673 = vand.u32 2147483647, %v4609
        %v4674 = vand.u32 2147483647, %v4610
        %v4675 = vand.u32 2147483647, %v4611
        %v4676 = vand.u32 2147483647, %v4612
        %v4677 = vand.u32 2147483647, %v4613
        %v4678 = vand.u32 2147483647, %v4614
        %v4679 = vand.u32 2147483647, %v4615
        %v4680 = vand.u32 2147483647, %v4616
        %v4681 = vand.u32 2147483647, %v4617
        %v4682 = vand.u32 2147483647, %v4618
        %v4683 = vand.u32 2147483647, %v4619
        %v4684 = vand.u32 2147483647, %v4620
        %v4685 = vand.u32 2147483647, %v4621
        %v4686 = vand.u32 2147483647, %v4622
        %v4687 = vand.u32 2147483647, %v4623
        %v4688 = vand.u32 2147483647, %v4624
        %v4689 = vand.u32 2147483647, %v4625
        %v4690 = vand.u32 2147483647, %v4626
        %v4691 = vand.u32 2147483647, %v4627
        %v4692 = vand.u32 2147483647, %v4628
        %v4693 = vand.u32 2147483647, %v4629
        %v4694 = vand.u32 2147483647, %v4630
        %v4695 = vand.u32 2147483647, %v4631
        %v4696 = vand.u32 2147483647, %v4632
        %v4697 = vand.u32 2147483647, %v4633
        %v4698 = vand.u32 2147483647, %v4634
        %v4699 = vand.u32 2147483647, %v4635
        %v4700 = vand.u32 2147483647, %v4636
        %v4701 = vand.u32 2147483647, %v4637
        %v4702 = vand.u32 2147483647, %v4638
        %v4703 = vand.u32 2147483647, %v4639
        %v4704 = vand.u32 2147483647, %v4640
        %v4705 = vand.u32 2147483647, %v4641
        %v4706 = vand.u32 2147483647, %v4642
        %v4707 = vand.u32 2147483647, %v4643
        %v4708 = vand.u32 2147483647, %v4644
        %v4709 = vand.u32 2147483647, %v4645
        %v4710 = vand.u32 2147483647, %v4646
        %v4711 = vand.u32 2147483647, %v4647
        %v4712 = vand.u32 2147483647, %v4648
        %v4713 = vand.u32 2147483647, %v4649
        %v4714 = vand.u32 2147483647, %v4650
        %v4715 = vand.u32 2147483647, %v4651
        %v4716 = vand.u32 2147483647, %v4652
        %v4717 = vand.u32 2147483647, %v4653
        %v4718 = vand.u32 2147483647, %v4654
        %v4719 = vand.u32 2147483647, %v4655
        %v4720 = vand.u32 2147483647, %v4656
        %v4721 = vand.u32 2147483647, %v4657
        %v4722 = vand.u32 2147483647, %v4658
        %v4723 = vand.u32 2147483647, %v4659
        %v4724 = vand.u32 2147483647, %v4660
        %v4725 = vand.u32 2147483647, %v4661
        %v4726 = vand.u32 2147483647, %v4662
        %v4727 = vand.u32 2147483647, %v4663
        %v4728 = vand.u32 2147483647, %v4664
        %v4729 = vand.u32 2147483647, %v4665
        %v4730 = vand.u32 2147483647, %v4666
        %v4731 = vand.u32 2147483647, %v4667
        %v4732 = vand.u32 2147483647, %v4668
        %v4733 = vand.u32 2147483647, %v4669
        %v4734 = vmul.f32 %v4670, 0.70710677
        %v4735 = vmul.f32 %v4671, 0.70710677
        %v4736 = vmul.f32 %v4672, 0.70710677
        %v4737 = vmul.f32 %v4673, 0.70710677
        %v4738 = vmul.f32 %v4674, 0.70710677
        %v4739 = vmul.f32 %v4675, 0.70710677
        %v4740 = vmul.f32 %v4676, 0.70710677
        %v4741 = vmul.f32 %v4677, 0.70710677
        %v4742 = vmul.f32 %v4678, 0.70710677
        %v4743 = vmul.f32 %v4679, 0.70710677
        %v4744 = vmul.f32 %v4680, 0.70710677
        %v4745 = vmul.f32 %v4681, 0.70710677
        %v4746 = vmul.f32 %v4682, 0.70710677
        %v4747 = vmul.f32 %v4683, 0.70710677
        %v4748 = vmul.f32 %v4684, 0.70710677
        %v4749 = vmul.f32 %v4685, 0.70710677
        %v4750 = vmul.f32 %v4686, 0.70710677
        %v4751 = vmul.f32 %v4687, 0.70710677
        %v4752 = vmul.f32 %v4688, 0.70710677
        %v4753 = vmul.f32 %v4689, 0.70710677
        %v4754 = vmul.f32 %v4690, 0.70710677
        %v4755 = vmul.f32 %v4691, 0.70710677
        %v4756 = vmul.f32 %v4692, 0.70710677
        %v4757 = vmul.f32 %v4693, 0.70710677
        %v4758 = vmul.f32 %v4694, 0.70710677
        %v4759 = vmul.f32 %v4695, 0.70710677
        %v4760 = vmul.f32 %v4696, 0.70710677
        %v4761 = vmul.f32 %v4697, 0.70710677
        %v4762 = vmul.f32 %v4698, 0.70710677
        %v4763 = vmul.f32 %v4699, 0.70710677
        %v4764 = vmul.f32 %v4700, 0.70710677
        %v4765 = vmul.f32 %v4701, 0.70710677
        %v4766 = vmul.f32 %v4702, 0.70710677
        %v4767 = vmul.f32 %v4703, 0.70710677
        %v4768 = vmul.f32 %v4704, 0.70710677
        %v4769 = vmul.f32 %v4705, 0.70710677
        %v4770 = vmul.f32 %v4706, 0.70710677
        %v4771 = vmul.f32 %v4707, 0.70710677
        %v4772 = vmul.f32 %v4708, 0.70710677
        %v4773 = vmul.f32 %v4709, 0.70710677
        %v4774 = vmul.f32 %v4710, 0.70710677
        %v4775 = vmul.f32 %v4711, 0.70710677
        %v4776 = vmul.f32 %v4712, 0.70710677
        %v4777 = vmul.f32 %v4713, 0.70710677
        %v4778 = vmul.f32 %v4714, 0.70710677
        %v4779 = vmul.f32 %v4715, 0.70710677
        %v4780 = vmul.f32 %v4716, 0.70710677
        %v4781 = vmul.f32 %v4717, 0.70710677
        %v4782 = vmul.f32 %v4718, 0.70710677
        %v4783 = vmul.f32 %v4719, 0.70710677
        %v4784 = vmul.f32 %v4720, 0.70710677
        %v4785 = vmul.f32 %v4721, 0.70710677
        %v4786 = vmul.f32 %v4722, 0.70710677
        %v4787 = vmul.f32 %v4723, 0.70710677
        %v4788 = vmul.f32 %v4724, 0.70710677
        %v4789 = vmul.f32 %v4725, 0.70710677
        %v4790 = vmul.f32 %v4726, 0.70710677
        %v4791 = vmul.f32 %v4727, 0.70710677
        %v4792 = vmul.f32 %v4728, 0.70710677
        %v4793 = vmul.f32 %v4729, 0.70710677
        %v4794 = vmul.f32 %v4730, 0.70710677
        %v4795 = vmul.f32 %v4731, 0.70710677
        %v4796 = vmul.f32 %v4732, 0.70710677
        %v4797 = vmul.f32 %v4733, 0.70710677
        %v4798 = vmul.f32 %v4734, 0.3275911
        %v4799 = vmul.f32 %v4735, 0.3275911
        %v4800 = vmul.f32 %v4736, 0.3275911
        %v4801 = vmul.f32 %v4737, 0.3275911
        %v4802 = vmul.f32 %v4738, 0.3275911
        %v4803 = vmul.f32 %v4739, 0.3275911
        %v4804 = vmul.f32 %v4740, 0.3275911
        %v4805 = vmul.f32 %v4741, 0.3275911
        %v4806 = vmul.f32 %v4742, 0.3275911
        %v4807 = vmul.f32 %v4743, 0.3275911
        %v4808 = vmul.f32 %v4744, 0.3275911
        %v4809 = vmul.f32 %v4745, 0.3275911
        %v4810 = vmul.f32 %v4746, 0.3275911
        %v4811 = vmul.f32 %v4747, 0.3275911
        %v4812 = vmul.f32 %v4748, 0.3275911
        %v4813 = vmul.f32 %v4749, 0.3275911
        %v4814 = vmul.f32 %v4750, 0.3275911
        %v4815 = vmul.f32 %v4751, 0.3275911
        %v4816 = vmul.f32 %v4752, 0.3275911
        %v4817 = vmul.f32 %v4753, 0.3275911
        %v4818 = vmul.f32 %v4754, 0.3275911
        %v4819 = vmul.f32 %v4755, 0.3275911
        %v4820 = vmul.f32 %v4756, 0.3275911
        %v4821 = vmul.f32 %v4757, 0.3275911
        %v4822 = vmul.f32 %v4758, 0.3275911
        %v4823 = vmul.f32 %v4759, 0.3275911
        %v4824 = vmul.f32 %v4760, 0.3275911
        %v4825 = vmul.f32 %v4761, 0.3275911
        %v4826 = vmul.f32 %v4762, 0.3275911
        %v4827 = vmul.f32 %v4763, 0.3275911
        %v4828 = vmul.f32 %v4764, 0.3275911
        %v4829 = vmul.f32 %v4765, 0.3275911
        %v4830 = vmul.f32 %v4766, 0.3275911
        %v4831 = vmul.f32 %v4767, 0.3275911
        %v4832 = vmul.f32 %v4768, 0.3275911
        %v4833 = vmul.f32 %v4769, 0.3275911
        %v4834 = vmul.f32 %v4770, 0.3275911
        %v4835 = vmul.f32 %v4771, 0.3275911
        %v4836 = vmul.f32 %v4772, 0.3275911
        %v4837 = vmul.f32 %v4773, 0.3275911
        %v4838 = vmul.f32 %v4774, 0.3275911
        %v4839 = vmul.f32 %v4775, 0.3275911
        %v4840 = vmul.f32 %v4776, 0.3275911
        %v4841 = vmul.f32 %v4777, 0.3275911
        %v4842 = vmul.f32 %v4778, 0.3275911
        %v4843 = vmul.f32 %v4779, 0.3275911
        %v4844 = vmul.f32 %v4780, 0.3275911
        %v4845 = vmul.f32 %v4781, 0.3275911
        %v4846 = vmul.f32 %v4782, 0.3275911
        %v4847 = vmul.f32 %v4783, 0.3275911
        %v4848 = vmul.f32 %v4784, 0.3275911
        %v4849 = vmul.f32 %v4785, 0.3275911
        %v4850 = vmul.f32 %v4786, 0.3275911
        %v4851 = vmul.f32 %v4787, 0.3275911
        %v4852 = vmul.f32 %v4788, 0.3275911
        %v4853 = vmul.f32 %v4789, 0.3275911
        %v4854 = vmul.f32 %v4790, 0.3275911
        %v4855 = vmul.f32 %v4791, 0.3275911
        %v4856 = vmul.f32 %v4792, 0.3275911
        %v4857 = vmul.f32 %v4793, 0.3275911
        %v4858 = vmul.f32 %v4794, 0.3275911
        %v4859 = vmul.f32 %v4795, 0.3275911
        %v4860 = vmul.f32 %v4796, 0.3275911
        %v4861 = vmul.f32 %v4797, 0.3275911
        %v4862 = vadd.f32 %v4798, 1.0
        %v4863 = vadd.f32 %v4799, 1.0
        %v4864 = vadd.f32 %v4800, 1.0
        %v4865 = vadd.f32 %v4801, 1.0
        %v4866 = vadd.f32 %v4802, 1.0
        %v4867 = vadd.f32 %v4803, 1.0
        %v4868 = vadd.f32 %v4804, 1.0
        %v4869 = vadd.f32 %v4805, 1.0
        %v4870 = vadd.f32 %v4806, 1.0
        %v4871 = vadd.f32 %v4807, 1.0
        %v4872 = vadd.f32 %v4808, 1.0
        %v4873 = vadd.f32 %v4809, 1.0
        %v4874 = vadd.f32 %v4810, 1.0
        %v4875 = vadd.f32 %v4811, 1.0
        %v4876 = vadd.f32 %v4812, 1.0
        %v4877 = vadd.f32 %v4813, 1.0
        %v4878 = vadd.f32 %v4814, 1.0
        %v4879 = vadd.f32 %v4815, 1.0
        %v4880 = vadd.f32 %v4816, 1.0
        %v4881 = vadd.f32 %v4817, 1.0
        %v4882 = vadd.f32 %v4818, 1.0
        %v4883 = vadd.f32 %v4819, 1.0
        %v4884 = vadd.f32 %v4820, 1.0
        %v4885 = vadd.f32 %v4821, 1.0
        %v4886 = vadd.f32 %v4822, 1.0
        %v4887 = vadd.f32 %v4823, 1.0
        %v4888 = vadd.f32 %v4824, 1.0
        %v4889 = vadd.f32 %v4825, 1.0
        %v4890 = vadd.f32 %v4826, 1.0
        %v4891 = vadd.f32 %v4827, 1.0
        %v4892 = vadd.f32 %v4828, 1.0
        %v4893 = vadd.f32 %v4829, 1.0
        %v4894 = vadd.f32 %v4830, 1.0
        %v4895 = vadd.f32 %v4831, 1.0
        %v4896 = vadd.f32 %v4832, 1.0
        %v4897 = vadd.f32 %v4833, 1.0
        %v4898 = vadd.f32 %v4834, 1.0
        %v4899 = vadd.f32 %v4835, 1.0
        %v4900 = vadd.f32 %v4836, 1.0
        %v4901 = vadd.f32 %v4837, 1.0
        %v4902 = vadd.f32 %v4838, 1.0
        %v4903 = vadd.f32 %v4839, 1.0
        %v4904 = vadd.f32 %v4840, 1.0
        %v4905 = vadd.f32 %v4841, 1.0
        %v4906 = vadd.f32 %v4842, 1.0
        %v4907 = vadd.f32 %v4843, 1.0
        %v4908 = vadd.f32 %v4844, 1.0
        %v4909 = vadd.f32 %v4845, 1.0
        %v4910 = vadd.f32 %v4846, 1.0
        %v4911 = vadd.f32 %v4847, 1.0
        %v4912 = vadd.f32 %v4848, 1.0
        %v4913 = vadd.f32 %v4849, 1.0
        %v4914 = vadd.f32 %v4850, 1.0
        %v4915 = vadd.f32 %v4851, 1.0
        %v4916 = vadd.f32 %v4852, 1.0
        %v4917 = vadd.f32 %v4853, 1.0
        %v4918 = vadd.f32 %v4854, 1.0
        %v4919 = vadd.f32 %v4855, 1.0
        %v4920 = vadd.f32 %v4856, 1.0
        %v4921 = vadd.f32 %v4857, 1.0
        %v4922 = vadd.f32 %v4858, 1.0
        %v4923 = vadd.f32 %v4859, 1.0
        %v4924 = vadd.f32 %v4860, 1.0
        %v4925 = vadd.f32 %v4861, 1.0
        %v4926 = vrcp.pop %v4862
        %v4927 = vmul.f32 1.0, %v4926
        %v4928 = vrcp.pop %v4863
        %v4929 = vmul.f32 1.0, %v4928
        %v4930 = vrcp.pop %v4864
        %v4931 = vmul.f32 1.0, %v4930
        %v4932 = vrcp.pop %v4865
        %v4933 = vmul.f32 1.0, %v4932
        %v4934 = vrcp.pop %v4866
        %v4935 = vmul.f32 1.0, %v4934
        %v4936 = vrcp.pop %v4867
        %v4937 = vmul.f32 1.0, %v4936
        %v4938 = vrcp.pop %v4868
        %v4939 = vmul.f32 1.0, %v4938
        %v4940 = vrcp.pop %v4869
        %v4941 = vmul.f32 1.0, %v4940
        %v4942 = vrcp.pop %v4870
        %v4943 = vmul.f32 1.0, %v4942
        %v4944 = vrcp.pop %v4871
        %v4945 = vmul.f32 1.0, %v4944
        %v4946 = vrcp.pop %v4872
        %v4947 = vmul.f32 1.0, %v4946
        %v4948 = vrcp.pop %v4873
        %v4949 = vmul.f32 1.0, %v4948
        %v4950 = vrcp.pop %v4874
        %v4951 = vmul.f32 1.0, %v4950
        %v4952 = vrcp.pop %v4875
        %v4953 = vmul.f32 1.0, %v4952
        %v4954 = vrcp.pop %v4876
        %v4955 = vmul.f32 1.0, %v4954
        %v4956 = vrcp.pop %v4877
        %v4957 = vmul.f32 1.0, %v4956
        %v4958 = vrcp.pop %v4878
        %v4959 = vmul.f32 1.0, %v4958
        %v4960 = vrcp.pop %v4879
        %v4961 = vmul.f32 1.0, %v4960
        %v4962 = vrcp.pop %v4880
        %v4963 = vmul.f32 1.0, %v4962
        %v4964 = vrcp.pop %v4881
        %v4965 = vmul.f32 1.0, %v4964
        %v4966 = vrcp.pop %v4882
        %v4967 = vmul.f32 1.0, %v4966
        %v4968 = vrcp.pop %v4883
        %v4969 = vmul.f32 1.0, %v4968
        %v4970 = vrcp.pop %v4884
        %v4971 = vmul.f32 1.0, %v4970
        %v4972 = vrcp.pop %v4885
        %v4973 = vmul.f32 1.0, %v4972
        %v4974 = vrcp.pop %v4886
        %v4975 = vmul.f32 1.0, %v4974
        %v4976 = vrcp.pop %v4887
        %v4977 = vmul.f32 1.0, %v4976
        %v4978 = vrcp.pop %v4888
        %v4979 = vmul.f32 1.0, %v4978
        %v4980 = vrcp.pop %v4889
        %v4981 = vmul.f32 1.0, %v4980
        %v4982 = vrcp.pop %v4890
        %v4983 = vmul.f32 1.0, %v4982
        %v4984 = vrcp.pop %v4891
        %v4985 = vmul.f32 1.0, %v4984
        %v4986 = vrcp.pop %v4892
        %v4987 = vmul.f32 1.0, %v4986
        %v4988 = vrcp.pop %v4893
        %v4989 = vmul.f32 1.0, %v4988
        %v4990 = vrcp.pop %v4894
        %v4991 = vmul.f32 1.0, %v4990
        %v4992 = vrcp.pop %v4895
        %v4993 = vmul.f32 1.0, %v4992
        %v4994 = vrcp.pop %v4896
        %v4995 = vmul.f32 1.0, %v4994
        %v4996 = vrcp.pop %v4897
        %v4997 = vmul.f32 1.0, %v4996
        %v4998 = vrcp.pop %v4898
        %v4999 = vmul.f32 1.0, %v4998
        %v5000 = vrcp.pop %v4899
        %v5001 = vmul.f32 1.0, %v5000
        %v5002 = vrcp.pop %v4900
        %v5003 = vmul.f32 1.0, %v5002
        %v5004 = vrcp.pop %v4901
        %v5005 = vmul.f32 1.0, %v5004
        %v5006 = vrcp.pop %v4902
        %v5007 = vmul.f32 1.0, %v5006
        %v5008 = vrcp.pop %v4903
        %v5009 = vmul.f32 1.0, %v5008
        %v5010 = vrcp.pop %v4904
        %v5011 = vmul.f32 1.0, %v5010
        %v5012 = vrcp.pop %v4905
        %v5013 = vmul.f32 1.0, %v5012
        %v5014 = vrcp.pop %v4906
        %v5015 = vmul.f32 1.0, %v5014
        %v5016 = vrcp.pop %v4907
        %v5017 = vmul.f32 1.0, %v5016
        %v5018 = vrcp.pop %v4908
        %v5019 = vmul.f32 1.0, %v5018
        %v5020 = vrcp.pop %v4909
        %v5021 = vmul.f32 1.0, %v5020
        %v5022 = vrcp.pop %v4910
        %v5023 = vmul.f32 1.0, %v5022
        %v5024 = vrcp.pop %v4911
        %v5025 = vmul.f32 1.0, %v5024
        %v5026 = vrcp.pop %v4912
        %v5027 = vmul.f32 1.0, %v5026
        %v5028 = vrcp.pop %v4913
        %v5029 = vmul.f32 1.0, %v5028
        %v5030 = vrcp.pop %v4914
        %v5031 = vmul.f32 1.0, %v5030
        %v5032 = vrcp.pop %v4915
        %v5033 = vmul.f32 1.0, %v5032
        %v5034 = vrcp.pop %v4916
        %v5035 = vmul.f32 1.0, %v5034
        %v5036 = vrcp.pop %v4917
        %v5037 = vmul.f32 1.0, %v5036
        %v5038 = vrcp.pop %v4918
        %v5039 = vmul.f32 1.0, %v5038
        %v5040 = vrcp.pop %v4919
        %v5041 = vmul.f32 1.0, %v5040
        %v5042 = vrcp.pop %v4920
        %v5043 = vmul.f32 1.0, %v5042
        %v5044 = vrcp.pop %v4921
        %v5045 = vmul.f32 1.0, %v5044
        %v5046 = vrcp.pop %v4922
        %v5047 = vmul.f32 1.0, %v5046
        %v5048 = vrcp.pop %v4923
        %v5049 = vmul.f32 1.0, %v5048
        %v5050 = vrcp.pop %v4924
        %v5051 = vmul.f32 1.0, %v5050
        %v5052 = vrcp.pop %v4925
        %v5053 = vmul.f32 1.0, %v5052
        %v5054 = vmul.f32 %v4927, 0.5307027
        %v5055 = vmul.f32 %v4929, 0.5307027
        %v5056 = vmul.f32 %v4931, 0.5307027
        %v5057 = vmul.f32 %v4933, 0.5307027
        %v5058 = vmul.f32 %v4935, 0.5307027
        %v5059 = vmul.f32 %v4937, 0.5307027
        %v5060 = vmul.f32 %v4939, 0.5307027
        %v5061 = vmul.f32 %v4941, 0.5307027
        %v5062 = vmul.f32 %v4943, 0.5307027
        %v5063 = vmul.f32 %v4945, 0.5307027
        %v5064 = vmul.f32 %v4947, 0.5307027
        %v5065 = vmul.f32 %v4949, 0.5307027
        %v5066 = vmul.f32 %v4951, 0.5307027
        %v5067 = vmul.f32 %v4953, 0.5307027
        %v5068 = vmul.f32 %v4955, 0.5307027
        %v5069 = vmul.f32 %v4957, 0.5307027
        %v5070 = vmul.f32 %v4959, 0.5307027
        %v5071 = vmul.f32 %v4961, 0.5307027
        %v5072 = vmul.f32 %v4963, 0.5307027
        %v5073 = vmul.f32 %v4965, 0.5307027
        %v5074 = vmul.f32 %v4967, 0.5307027
        %v5075 = vmul.f32 %v4969, 0.5307027
        %v5076 = vmul.f32 %v4971, 0.5307027
        %v5077 = vmul.f32 %v4973, 0.5307027
        %v5078 = vmul.f32 %v4975, 0.5307027
        %v5079 = vmul.f32 %v4977, 0.5307027
        %v5080 = vmul.f32 %v4979, 0.5307027
        %v5081 = vmul.f32 %v4981, 0.5307027
        %v5082 = vmul.f32 %v4983, 0.5307027
        %v5083 = vmul.f32 %v4985, 0.5307027
        %v5084 = vmul.f32 %v4987, 0.5307027
        %v5085 = vmul.f32 %v4989, 0.5307027
        %v5086 = vmul.f32 %v4991, 0.5307027
        %v5087 = vmul.f32 %v4993, 0.5307027
        %v5088 = vmul.f32 %v4995, 0.5307027
        %v5089 = vmul.f32 %v4997, 0.5307027
        %v5090 = vmul.f32 %v4999, 0.5307027
        %v5091 = vmul.f32 %v5001, 0.5307027
        %v5092 = vmul.f32 %v5003, 0.5307027
        %v5093 = vmul.f32 %v5005, 0.5307027
        %v5094 = vmul.f32 %v5007, 0.5307027
        %v5095 = vmul.f32 %v5009, 0.5307027
        %v5096 = vmul.f32 %v5011, 0.5307027
        %v5097 = vmul.f32 %v5013, 0.5307027
        %v5098 = vmul.f32 %v5015, 0.5307027
        %v5099 = vmul.f32 %v5017, 0.5307027
        %v5100 = vmul.f32 %v5019, 0.5307027
        %v5101 = vmul.f32 %v5021, 0.5307027
        %v5102 = vmul.f32 %v5023, 0.5307027
        %v5103 = vmul.f32 %v5025, 0.5307027
        %v5104 = vmul.f32 %v5027, 0.5307027
        %v5105 = vmul.f32 %v5029, 0.5307027
        %v5106 = vmul.f32 %v5031, 0.5307027
        %v5107 = vmul.f32 %v5033, 0.5307027
        %v5108 = vmul.f32 %v5035, 0.5307027
        %v5109 = vmul.f32 %v5037, 0.5307027
        %v5110 = vmul.f32 %v5039, 0.5307027
        %v5111 = vmul.f32 %v5041, 0.5307027
        %v5112 = vmul.f32 %v5043, 0.5307027
        %v5113 = vmul.f32 %v5045, 0.5307027
        %v5114 = vmul.f32 %v5047, 0.5307027
        %v5115 = vmul.f32 %v5049, 0.5307027
        %v5116 = vmul.f32 %v5051, 0.5307027
        %v5117 = vmul.f32 %v5053, 0.5307027
        %v5118 = vadd.f32 %v5054, -0.72657603
        %v5119 = vadd.f32 %v5055, -0.72657603
        %v5120 = vadd.f32 %v5056, -0.72657603
        %v5121 = vadd.f32 %v5057, -0.72657603
        %v5122 = vadd.f32 %v5058, -0.72657603
        %v5123 = vadd.f32 %v5059, -0.72657603
        %v5124 = vadd.f32 %v5060, -0.72657603
        %v5125 = vadd.f32 %v5061, -0.72657603
        %v5126 = vadd.f32 %v5062, -0.72657603
        %v5127 = vadd.f32 %v5063, -0.72657603
        %v5128 = vadd.f32 %v5064, -0.72657603
        %v5129 = vadd.f32 %v5065, -0.72657603
        %v5130 = vadd.f32 %v5066, -0.72657603
        %v5131 = vadd.f32 %v5067, -0.72657603
        %v5132 = vadd.f32 %v5068, -0.72657603
        %v5133 = vadd.f32 %v5069, -0.72657603
        %v5134 = vadd.f32 %v5070, -0.72657603
        %v5135 = vadd.f32 %v5071, -0.72657603
        %v5136 = vadd.f32 %v5072, -0.72657603
        %v5137 = vadd.f32 %v5073, -0.72657603
        %v5138 = vadd.f32 %v5074, -0.72657603
        %v5139 = vadd.f32 %v5075, -0.72657603
        %v5140 = vadd.f32 %v5076, -0.72657603
        %v5141 = vadd.f32 %v5077, -0.72657603
        %v5142 = vadd.f32 %v5078, -0.72657603
        %v5143 = vadd.f32 %v5079, -0.72657603
        %v5144 = vadd.f32 %v5080, -0.72657603
        %v5145 = vadd.f32 %v5081, -0.72657603
        %v5146 = vadd.f32 %v5082, -0.72657603
        %v5147 = vadd.f32 %v5083, -0.72657603
        %v5148 = vadd.f32 %v5084, -0.72657603
        %v5149 = vadd.f32 %v5085, -0.72657603
        %v5150 = vadd.f32 %v5086, -0.72657603
        %v5151 = vadd.f32 %v5087, -0.72657603
        %v5152 = vadd.f32 %v5088, -0.72657603
        %v5153 = vadd.f32 %v5089, -0.72657603
        %v5154 = vadd.f32 %v5090, -0.72657603
        %v5155 = vadd.f32 %v5091, -0.72657603
        %v5156 = vadd.f32 %v5092, -0.72657603
        %v5157 = vadd.f32 %v5093, -0.72657603
        %v5158 = vadd.f32 %v5094, -0.72657603
        %v5159 = vadd.f32 %v5095, -0.72657603
        %v5160 = vadd.f32 %v5096, -0.72657603
        %v5161 = vadd.f32 %v5097, -0.72657603
        %v5162 = vadd.f32 %v5098, -0.72657603
        %v5163 = vadd.f32 %v5099, -0.72657603
        %v5164 = vadd.f32 %v5100, -0.72657603
        %v5165 = vadd.f32 %v5101, -0.72657603
        %v5166 = vadd.f32 %v5102, -0.72657603
        %v5167 = vadd.f32 %v5103, -0.72657603
        %v5168 = vadd.f32 %v5104, -0.72657603
        %v5169 = vadd.f32 %v5105, -0.72657603
        %v5170 = vadd.f32 %v5106, -0.72657603
        %v5171 = vadd.f32 %v5107, -0.72657603
        %v5172 = vadd.f32 %v5108, -0.72657603
        %v5173 = vadd.f32 %v5109, -0.72657603
        %v5174 = vadd.f32 %v5110, -0.72657603
        %v5175 = vadd.f32 %v5111, -0.72657603
        %v5176 = vadd.f32 %v5112, -0.72657603
        %v5177 = vadd.f32 %v5113, -0.72657603
        %v5178 = vadd.f32 %v5114, -0.72657603
        %v5179 = vadd.f32 %v5115, -0.72657603
        %v5180 = vadd.f32 %v5116, -0.72657603
        %v5181 = vadd.f32 %v5117, -0.72657603
        %v5182 = vmul.f32 %v5118, %v4927
        %v5183 = vmul.f32 %v5119, %v4929
        %v5184 = vmul.f32 %v5120, %v4931
        %v5185 = vmul.f32 %v5121, %v4933
        %v5186 = vmul.f32 %v5122, %v4935
        %v5187 = vmul.f32 %v5123, %v4937
        %v5188 = vmul.f32 %v5124, %v4939
        %v5189 = vmul.f32 %v5125, %v4941
        %v5190 = vmul.f32 %v5126, %v4943
        %v5191 = vmul.f32 %v5127, %v4945
        %v5192 = vmul.f32 %v5128, %v4947
        %v5193 = vmul.f32 %v5129, %v4949
        %v5194 = vmul.f32 %v5130, %v4951
        %v5195 = vmul.f32 %v5131, %v4953
        %v5196 = vmul.f32 %v5132, %v4955
        %v5197 = vmul.f32 %v5133, %v4957
        %v5198 = vmul.f32 %v5134, %v4959
        %v5199 = vmul.f32 %v5135, %v4961
        %v5200 = vmul.f32 %v5136, %v4963
        %v5201 = vmul.f32 %v5137, %v4965
        %v5202 = vmul.f32 %v5138, %v4967
        %v5203 = vmul.f32 %v5139, %v4969
        %v5204 = vmul.f32 %v5140, %v4971
        %v5205 = vmul.f32 %v5141, %v4973
        %v5206 = vmul.f32 %v5142, %v4975
        %v5207 = vmul.f32 %v5143, %v4977
        %v5208 = vmul.f32 %v5144, %v4979
        %v5209 = vmul.f32 %v5145, %v4981
        %v5210 = vmul.f32 %v5146, %v4983
        %v5211 = vmul.f32 %v5147, %v4985
        %v5212 = vmul.f32 %v5148, %v4987
        %v5213 = vmul.f32 %v5149, %v4989
        %v5214 = vmul.f32 %v5150, %v4991
        %v5215 = vmul.f32 %v5151, %v4993
        %v5216 = vmul.f32 %v5152, %v4995
        %v5217 = vmul.f32 %v5153, %v4997
        %v5218 = vmul.f32 %v5154, %v4999
        %v5219 = vmul.f32 %v5155, %v5001
        %v5220 = vmul.f32 %v5156, %v5003
        %v5221 = vmul.f32 %v5157, %v5005
        %v5222 = vmul.f32 %v5158, %v5007
        %v5223 = vmul.f32 %v5159, %v5009
        %v5224 = vmul.f32 %v5160, %v5011
        %v5225 = vmul.f32 %v5161, %v5013
        %v5226 = vmul.f32 %v5162, %v5015
        %v5227 = vmul.f32 %v5163, %v5017
        %v5228 = vmul.f32 %v5164, %v5019
        %v5229 = vmul.f32 %v5165, %v5021
        %v5230 = vmul.f32 %v5166, %v5023
        %v5231 = vmul.f32 %v5167, %v5025
        %v5232 = vmul.f32 %v5168, %v5027
        %v5233 = vmul.f32 %v5169, %v5029
        %v5234 = vmul.f32 %v5170, %v5031
        %v5235 = vmul.f32 %v5171, %v5033
        %v5236 = vmul.f32 %v5172, %v5035
        %v5237 = vmul.f32 %v5173, %v5037
        %v5238 = vmul.f32 %v5174, %v5039
        %v5239 = vmul.f32 %v5175, %v5041
        %v5240 = vmul.f32 %v5176, %v5043
        %v5241 = vmul.f32 %v5177, %v5045
        %v5242 = vmul.f32 %v5178, %v5047
        %v5243 = vmul.f32 %v5179, %v5049
        %v5244 = vmul.f32 %v5180, %v5051
        %v5245 = vmul.f32 %v5181, %v5053
        %v5246 = vadd.f32 %v5182, 0.7107069
        %v5247 = vadd.f32 %v5183, 0.7107069
        %v5248 = vadd.f32 %v5184, 0.7107069
        %v5249 = vadd.f32 %v5185, 0.7107069
        %v5250 = vadd.f32 %v5186, 0.7107069
        %v5251 = vadd.f32 %v5187, 0.7107069
        %v5252 = vadd.f32 %v5188, 0.7107069
        %v5253 = vadd.f32 %v5189, 0.7107069
        %v5254 = vadd.f32 %v5190, 0.7107069
        %v5255 = vadd.f32 %v5191, 0.7107069
        %v5256 = vadd.f32 %v5192, 0.7107069
        %v5257 = vadd.f32 %v5193, 0.7107069
        %v5258 = vadd.f32 %v5194, 0.7107069
        %v5259 = vadd.f32 %v5195, 0.7107069
        %v5260 = vadd.f32 %v5196, 0.7107069
        %v5261 = vadd.f32 %v5197, 0.7107069
        %v5262 = vadd.f32 %v5198, 0.7107069
        %v5263 = vadd.f32 %v5199, 0.7107069
        %v5264 = vadd.f32 %v5200, 0.7107069
        %v5265 = vadd.f32 %v5201, 0.7107069
        %v5266 = vadd.f32 %v5202, 0.7107069
        %v5267 = vadd.f32 %v5203, 0.7107069
        %v5268 = vadd.f32 %v5204, 0.7107069
        %v5269 = vadd.f32 %v5205, 0.7107069
        %v5270 = vadd.f32 %v5206, 0.7107069
        %v5271 = vadd.f32 %v5207, 0.7107069
        %v5272 = vadd.f32 %v5208, 0.7107069
        %v5273 = vadd.f32 %v5209, 0.7107069
        %v5274 = vadd.f32 %v5210, 0.7107069
        %v5275 = vadd.f32 %v5211, 0.7107069
        %v5276 = vadd.f32 %v5212, 0.7107069
        %v5277 = vadd.f32 %v5213, 0.7107069
        %v5278 = vadd.f32 %v5214, 0.7107069
        %v5279 = vadd.f32 %v5215, 0.7107069
        %v5280 = vadd.f32 %v5216, 0.7107069
        %v5281 = vadd.f32 %v5217, 0.7107069
        %v5282 = vadd.f32 %v5218, 0.7107069
        %v5283 = vadd.f32 %v5219, 0.7107069
        %v5284 = vadd.f32 %v5220, 0.7107069
        %v5285 = vadd.f32 %v5221, 0.7107069
        %v5286 = vadd.f32 %v5222, 0.7107069
        %v5287 = vadd.f32 %v5223, 0.7107069
        %v5288 = vadd.f32 %v5224, 0.7107069
        %v5289 = vadd.f32 %v5225, 0.7107069
        %v5290 = vadd.f32 %v5226, 0.7107069
        %v5291 = vadd.f32 %v5227, 0.7107069
        %v5292 = vadd.f32 %v5228, 0.7107069
        %v5293 = vadd.f32 %v5229, 0.7107069
        %v5294 = vadd.f32 %v5230, 0.7107069
        %v5295 = vadd.f32 %v5231, 0.7107069
        %v5296 = vadd.f32 %v5232, 0.7107069
        %v5297 = vadd.f32 %v5233, 0.7107069
        %v5298 = vadd.f32 %v5234, 0.7107069
        %v5299 = vadd.f32 %v5235, 0.7107069
        %v5300 = vadd.f32 %v5236, 0.7107069
        %v5301 = vadd.f32 %v5237, 0.7107069
        %v5302 = vadd.f32 %v5238, 0.7107069
        %v5303 = vadd.f32 %v5239, 0.7107069
        %v5304 = vadd.f32 %v5240, 0.7107069
        %v5305 = vadd.f32 %v5241, 0.7107069
        %v5306 = vadd.f32 %v5242, 0.7107069
        %v5307 = vadd.f32 %v5243, 0.7107069
        %v5308 = vadd.f32 %v5244, 0.7107069
        %v5309 = vadd.f32 %v5245, 0.7107069
        %v5310 = vmul.f32 %v5246, %v4927
        %v5311 = vmul.f32 %v5247, %v4929
        %v5312 = vmul.f32 %v5248, %v4931
        %v5313 = vmul.f32 %v5249, %v4933
        %v5314 = vmul.f32 %v5250, %v4935
        %v5315 = vmul.f32 %v5251, %v4937
        %v5316 = vmul.f32 %v5252, %v4939
        %v5317 = vmul.f32 %v5253, %v4941
        %v5318 = vmul.f32 %v5254, %v4943
        %v5319 = vmul.f32 %v5255, %v4945
        %v5320 = vmul.f32 %v5256, %v4947
        %v5321 = vmul.f32 %v5257, %v4949
        %v5322 = vmul.f32 %v5258, %v4951
        %v5323 = vmul.f32 %v5259, %v4953
        %v5324 = vmul.f32 %v5260, %v4955
        %v5325 = vmul.f32 %v5261, %v4957
        %v5326 = vmul.f32 %v5262, %v4959
        %v5327 = vmul.f32 %v5263, %v4961
        %v5328 = vmul.f32 %v5264, %v4963
        %v5329 = vmul.f32 %v5265, %v4965
        %v5330 = vmul.f32 %v5266, %v4967
        %v5331 = vmul.f32 %v5267, %v4969
        %v5332 = vmul.f32 %v5268, %v4971
        %v5333 = vmul.f32 %v5269, %v4973
        %v5334 = vmul.f32 %v5270, %v4975
        %v5335 = vmul.f32 %v5271, %v4977
        %v5336 = vmul.f32 %v5272, %v4979
        %v5337 = vmul.f32 %v5273, %v4981
        %v5338 = vmul.f32 %v5274, %v4983
        %v5339 = vmul.f32 %v5275, %v4985
        %v5340 = vmul.f32 %v5276, %v4987
        %v5341 = vmul.f32 %v5277, %v4989
        %v5342 = vmul.f32 %v5278, %v4991
        %v5343 = vmul.f32 %v5279, %v4993
        %v5344 = vmul.f32 %v5280, %v4995
        %v5345 = vmul.f32 %v5281, %v4997
        %v5346 = vmul.f32 %v5282, %v4999
        %v5347 = vmul.f32 %v5283, %v5001
        %v5348 = vmul.f32 %v5284, %v5003
        %v5349 = vmul.f32 %v5285, %v5005
        %v5350 = vmul.f32 %v5286, %v5007
        %v5351 = vmul.f32 %v5287, %v5009
        %v5352 = vmul.f32 %v5288, %v5011
        %v5353 = vmul.f32 %v5289, %v5013
        %v5354 = vmul.f32 %v5290, %v5015
        %v5355 = vmul.f32 %v5291, %v5017
        %v5356 = vmul.f32 %v5292, %v5019
        %v5357 = vmul.f32 %v5293, %v5021
        %v5358 = vmul.f32 %v5294, %v5023
        %v5359 = vmul.f32 %v5295, %v5025
        %v5360 = vmul.f32 %v5296, %v5027
        %v5361 = vmul.f32 %v5297, %v5029
        %v5362 = vmul.f32 %v5298, %v5031
        %v5363 = vmul.f32 %v5299, %v5033
        %v5364 = vmul.f32 %v5300, %v5035
        %v5365 = vmul.f32 %v5301, %v5037
        %v5366 = vmul.f32 %v5302, %v5039
        %v5367 = vmul.f32 %v5303, %v5041
        %v5368 = vmul.f32 %v5304, %v5043
        %v5369 = vmul.f32 %v5305, %v5045
        %v5370 = vmul.f32 %v5306, %v5047
        %v5371 = vmul.f32 %v5307, %v5049
        %v5372 = vmul.f32 %v5308, %v5051
        %v5373 = vmul.f32 %v5309, %v5053
        %v5374 = vadd.f32 %v5310, -0.14224836
        %v5375 = vadd.f32 %v5311, -0.14224836
        %v5376 = vadd.f32 %v5312, -0.14224836
        %v5377 = vadd.f32 %v5313, -0.14224836
        %v5378 = vadd.f32 %v5314, -0.14224836
        %v5379 = vadd.f32 %v5315, -0.14224836
        %v5380 = vadd.f32 %v5316, -0.14224836
        %v5381 = vadd.f32 %v5317, -0.14224836
        %v5382 = vadd.f32 %v5318, -0.14224836
        %v5383 = vadd.f32 %v5319, -0.14224836
        %v5384 = vadd.f32 %v5320, -0.14224836
        %v5385 = vadd.f32 %v5321, -0.14224836
        %v5386 = vadd.f32 %v5322, -0.14224836
        %v5387 = vadd.f32 %v5323, -0.14224836
        %v5388 = vadd.f32 %v5324, -0.14224836
        %v5389 = vadd.f32 %v5325, -0.14224836
        %v5390 = vadd.f32 %v5326, -0.14224836
        %v5391 = vadd.f32 %v5327, -0.14224836
        %v5392 = vadd.f32 %v5328, -0.14224836
        %v5393 = vadd.f32 %v5329, -0.14224836
        %v5394 = vadd.f32 %v5330, -0.14224836
        %v5395 = vadd.f32 %v5331, -0.14224836
        %v5396 = vadd.f32 %v5332, -0.14224836
        %v5397 = vadd.f32 %v5333, -0.14224836
        %v5398 = vadd.f32 %v5334, -0.14224836
        %v5399 = vadd.f32 %v5335, -0.14224836
        %v5400 = vadd.f32 %v5336, -0.14224836
        %v5401 = vadd.f32 %v5337, -0.14224836
        %v5402 = vadd.f32 %v5338, -0.14224836
        %v5403 = vadd.f32 %v5339, -0.14224836
        %v5404 = vadd.f32 %v5340, -0.14224836
        %v5405 = vadd.f32 %v5341, -0.14224836
        %v5406 = vadd.f32 %v5342, -0.14224836
        %v5407 = vadd.f32 %v5343, -0.14224836
        %v5408 = vadd.f32 %v5344, -0.14224836
        %v5409 = vadd.f32 %v5345, -0.14224836
        %v5410 = vadd.f32 %v5346, -0.14224836
        %v5411 = vadd.f32 %v5347, -0.14224836
        %v5412 = vadd.f32 %v5348, -0.14224836
        %v5413 = vadd.f32 %v5349, -0.14224836
        %v5414 = vadd.f32 %v5350, -0.14224836
        %v5415 = vadd.f32 %v5351, -0.14224836
        %v5416 = vadd.f32 %v5352, -0.14224836
        %v5417 = vadd.f32 %v5353, -0.14224836
        %v5418 = vadd.f32 %v5354, -0.14224836
        %v5419 = vadd.f32 %v5355, -0.14224836
        %v5420 = vadd.f32 %v5356, -0.14224836
        %v5421 = vadd.f32 %v5357, -0.14224836
        %v5422 = vadd.f32 %v5358, -0.14224836
        %v5423 = vadd.f32 %v5359, -0.14224836
        %v5424 = vadd.f32 %v5360, -0.14224836
        %v5425 = vadd.f32 %v5361, -0.14224836
        %v5426 = vadd.f32 %v5362, -0.14224836
        %v5427 = vadd.f32 %v5363, -0.14224836
        %v5428 = vadd.f32 %v5364, -0.14224836
        %v5429 = vadd.f32 %v5365, -0.14224836
        %v5430 = vadd.f32 %v5366, -0.14224836
        %v5431 = vadd.f32 %v5367, -0.14224836
        %v5432 = vadd.f32 %v5368, -0.14224836
        %v5433 = vadd.f32 %v5369, -0.14224836
        %v5434 = vadd.f32 %v5370, -0.14224836
        %v5435 = vadd.f32 %v5371, -0.14224836
        %v5436 = vadd.f32 %v5372, -0.14224836
        %v5437 = vadd.f32 %v5373, -0.14224836
        %v5438 = vmul.f32 %v5374, %v4927
        %v5439 = vmul.f32 %v5375, %v4929
        %v5440 = vmul.f32 %v5376, %v4931
        %v5441 = vmul.f32 %v5377, %v4933
        %v5442 = vmul.f32 %v5378, %v4935
        %v5443 = vmul.f32 %v5379, %v4937
        %v5444 = vmul.f32 %v5380, %v4939
        %v5445 = vmul.f32 %v5381, %v4941
        %v5446 = vmul.f32 %v5382, %v4943
        %v5447 = vmul.f32 %v5383, %v4945
        %v5448 = vmul.f32 %v5384, %v4947
        %v5449 = vmul.f32 %v5385, %v4949
        %v5450 = vmul.f32 %v5386, %v4951
        %v5451 = vmul.f32 %v5387, %v4953
        %v5452 = vmul.f32 %v5388, %v4955
        %v5453 = vmul.f32 %v5389, %v4957
        %v5454 = vmul.f32 %v5390, %v4959
        %v5455 = vmul.f32 %v5391, %v4961
        %v5456 = vmul.f32 %v5392, %v4963
        %v5457 = vmul.f32 %v5393, %v4965
        %v5458 = vmul.f32 %v5394, %v4967
        %v5459 = vmul.f32 %v5395, %v4969
        %v5460 = vmul.f32 %v5396, %v4971
        %v5461 = vmul.f32 %v5397, %v4973
        %v5462 = vmul.f32 %v5398, %v4975
        %v5463 = vmul.f32 %v5399, %v4977
        %v5464 = vmul.f32 %v5400, %v4979
        %v5465 = vmul.f32 %v5401, %v4981
        %v5466 = vmul.f32 %v5402, %v4983
        %v5467 = vmul.f32 %v5403, %v4985
        %v5468 = vmul.f32 %v5404, %v4987
        %v5469 = vmul.f32 %v5405, %v4989
        %v5470 = vmul.f32 %v5406, %v4991
        %v5471 = vmul.f32 %v5407, %v4993
        %v5472 = vmul.f32 %v5408, %v4995
        %v5473 = vmul.f32 %v5409, %v4997
        %v5474 = vmul.f32 %v5410, %v4999
        %v5475 = vmul.f32 %v5411, %v5001
        %v5476 = vmul.f32 %v5412, %v5003
        %v5477 = vmul.f32 %v5413, %v5005
        %v5478 = vmul.f32 %v5414, %v5007
        %v5479 = vmul.f32 %v5415, %v5009
        %v5480 = vmul.f32 %v5416, %v5011
        %v5481 = vmul.f32 %v5417, %v5013
        %v5482 = vmul.f32 %v5418, %v5015
        %v5483 = vmul.f32 %v5419, %v5017
        %v5484 = vmul.f32 %v5420, %v5019
        %v5485 = vmul.f32 %v5421, %v5021
        %v5486 = vmul.f32 %v5422, %v5023
        %v5487 = vmul.f32 %v5423, %v5025
        %v5488 = vmul.f32 %v5424, %v5027
        %v5489 = vmul.f32 %v5425, %v5029
        %v5490 = vmul.f32 %v5426, %v5031
        %v5491 = vmul.f32 %v5427, %v5033
        %v5492 = vmul.f32 %v5428, %v5035
        %v5493 = vmul.f32 %v5429, %v5037
        %v5494 = vmul.f32 %v5430, %v5039
        %v5495 = vmul.f32 %v5431, %v5041
        %v5496 = vmul.f32 %v5432, %v5043
        %v5497 = vmul.f32 %v5433, %v5045
        %v5498 = vmul.f32 %v5434, %v5047
        %v5499 = vmul.f32 %v5435, %v5049
        %v5500 = vmul.f32 %v5436, %v5051
        %v5501 = vmul.f32 %v5437, %v5053
        %v5502 = vadd.f32 %v5438, 0.1274148
        %v5503 = vadd.f32 %v5439, 0.1274148
        %v5504 = vadd.f32 %v5440, 0.1274148
        %v5505 = vadd.f32 %v5441, 0.1274148
        %v5506 = vadd.f32 %v5442, 0.1274148
        %v5507 = vadd.f32 %v5443, 0.1274148
        %v5508 = vadd.f32 %v5444, 0.1274148
        %v5509 = vadd.f32 %v5445, 0.1274148
        %v5510 = vadd.f32 %v5446, 0.1274148
        %v5511 = vadd.f32 %v5447, 0.1274148
        %v5512 = vadd.f32 %v5448, 0.1274148
        %v5513 = vadd.f32 %v5449, 0.1274148
        %v5514 = vadd.f32 %v5450, 0.1274148
        %v5515 = vadd.f32 %v5451, 0.1274148
        %v5516 = vadd.f32 %v5452, 0.1274148
        %v5517 = vadd.f32 %v5453, 0.1274148
        %v5518 = vadd.f32 %v5454, 0.1274148
        %v5519 = vadd.f32 %v5455, 0.1274148
        %v5520 = vadd.f32 %v5456, 0.1274148
        %v5521 = vadd.f32 %v5457, 0.1274148
        %v5522 = vadd.f32 %v5458, 0.1274148
        %v5523 = vadd.f32 %v5459, 0.1274148
        %v5524 = vadd.f32 %v5460, 0.1274148
        %v5525 = vadd.f32 %v5461, 0.1274148
        %v5526 = vadd.f32 %v5462, 0.1274148
        %v5527 = vadd.f32 %v5463, 0.1274148
        %v5528 = vadd.f32 %v5464, 0.1274148
        %v5529 = vadd.f32 %v5465, 0.1274148
        %v5530 = vadd.f32 %v5466, 0.1274148
        %v5531 = vadd.f32 %v5467, 0.1274148
        %v5532 = vadd.f32 %v5468, 0.1274148
        %v5533 = vadd.f32 %v5469, 0.1274148
        %v5534 = vadd.f32 %v5470, 0.1274148
        %v5535 = vadd.f32 %v5471, 0.1274148
        %v5536 = vadd.f32 %v5472, 0.1274148
        %v5537 = vadd.f32 %v5473, 0.1274148
        %v5538 = vadd.f32 %v5474, 0.1274148
        %v5539 = vadd.f32 %v5475, 0.1274148
        %v5540 = vadd.f32 %v5476, 0.1274148
        %v5541 = vadd.f32 %v5477, 0.1274148
        %v5542 = vadd.f32 %v5478, 0.1274148
        %v5543 = vadd.f32 %v5479, 0.1274148
        %v5544 = vadd.f32 %v5480, 0.1274148
        %v5545 = vadd.f32 %v5481, 0.1274148
        %v5546 = vadd.f32 %v5482, 0.1274148
        %v5547 = vadd.f32 %v5483, 0.1274148
        %v5548 = vadd.f32 %v5484, 0.1274148
        %v5549 = vadd.f32 %v5485, 0.1274148
        %v5550 = vadd.f32 %v5486, 0.1274148
        %v5551 = vadd.f32 %v5487, 0.1274148
        %v5552 = vadd.f32 %v5488, 0.1274148
        %v5553 = vadd.f32 %v5489, 0.1274148
        %v5554 = vadd.f32 %v5490, 0.1274148
        %v5555 = vadd.f32 %v5491, 0.1274148
        %v5556 = vadd.f32 %v5492, 0.1274148
        %v5557 = vadd.f32 %v5493, 0.1274148
        %v5558 = vadd.f32 %v5494, 0.1274148
        %v5559 = vadd.f32 %v5495, 0.1274148
        %v5560 = vadd.f32 %v5496, 0.1274148
        %v5561 = vadd.f32 %v5497, 0.1274148
        %v5562 = vadd.f32 %v5498, 0.1274148
        %v5563 = vadd.f32 %v5499, 0.1274148
        %v5564 = vadd.f32 %v5500, 0.1274148
        %v5565 = vadd.f32 %v5501, 0.1274148
        %v5566 = vmul.f32 %v5502, %v4927
        %v5567 = vmul.f32 %v5503, %v4929
        %v5568 = vmul.f32 %v5504, %v4931
        %v5569 = vmul.f32 %v5505, %v4933
        %v5570 = vmul.f32 %v5506, %v4935
        %v5571 = vmul.f32 %v5507, %v4937
        %v5572 = vmul.f32 %v5508, %v4939
        %v5573 = vmul.f32 %v5509, %v4941
        %v5574 = vmul.f32 %v5510, %v4943
        %v5575 = vmul.f32 %v5511, %v4945
        %v5576 = vmul.f32 %v5512, %v4947
        %v5577 = vmul.f32 %v5513, %v4949
        %v5578 = vmul.f32 %v5514, %v4951
        %v5579 = vmul.f32 %v5515, %v4953
        %v5580 = vmul.f32 %v5516, %v4955
        %v5581 = vmul.f32 %v5517, %v4957
        %v5582 = vmul.f32 %v5518, %v4959
        %v5583 = vmul.f32 %v5519, %v4961
        %v5584 = vmul.f32 %v5520, %v4963
        %v5585 = vmul.f32 %v5521, %v4965
        %v5586 = vmul.f32 %v5522, %v4967
        %v5587 = vmul.f32 %v5523, %v4969
        %v5588 = vmul.f32 %v5524, %v4971
        %v5589 = vmul.f32 %v5525, %v4973
        %v5590 = vmul.f32 %v5526, %v4975
        %v5591 = vmul.f32 %v5527, %v4977
        %v5592 = vmul.f32 %v5528, %v4979
        %v5593 = vmul.f32 %v5529, %v4981
        %v5594 = vmul.f32 %v5530, %v4983
        %v5595 = vmul.f32 %v5531, %v4985
        %v5596 = vmul.f32 %v5532, %v4987
        %v5597 = vmul.f32 %v5533, %v4989
        %v5598 = vmul.f32 %v5534, %v4991
        %v5599 = vmul.f32 %v5535, %v4993
        %v5600 = vmul.f32 %v5536, %v4995
        %v5601 = vmul.f32 %v5537, %v4997
        %v5602 = vmul.f32 %v5538, %v4999
        %v5603 = vmul.f32 %v5539, %v5001
        %v5604 = vmul.f32 %v5540, %v5003
        %v5605 = vmul.f32 %v5541, %v5005
        %v5606 = vmul.f32 %v5542, %v5007
        %v5607 = vmul.f32 %v5543, %v5009
        %v5608 = vmul.f32 %v5544, %v5011
        %v5609 = vmul.f32 %v5545, %v5013
        %v5610 = vmul.f32 %v5546, %v5015
        %v5611 = vmul.f32 %v5547, %v5017
        %v5612 = vmul.f32 %v5548, %v5019
        %v5613 = vmul.f32 %v5549, %v5021
        %v5614 = vmul.f32 %v5550, %v5023
        %v5615 = vmul.f32 %v5551, %v5025
        %v5616 = vmul.f32 %v5552, %v5027
        %v5617 = vmul.f32 %v5553, %v5029
        %v5618 = vmul.f32 %v5554, %v5031
        %v5619 = vmul.f32 %v5555, %v5033
        %v5620 = vmul.f32 %v5556, %v5035
        %v5621 = vmul.f32 %v5557, %v5037
        %v5622 = vmul.f32 %v5558, %v5039
        %v5623 = vmul.f32 %v5559, %v5041
        %v5624 = vmul.f32 %v5560, %v5043
        %v5625 = vmul.f32 %v5561, %v5045
        %v5626 = vmul.f32 %v5562, %v5047
        %v5627 = vmul.f32 %v5563, %v5049
        %v5628 = vmul.f32 %v5564, %v5051
        %v5629 = vmul.f32 %v5565, %v5053
        %v5630 = vsub.f32 0.0, %v4734
        %v5631 = vsub.f32 0.0, %v4735
        %v5632 = vsub.f32 0.0, %v4736
        %v5633 = vsub.f32 0.0, %v4737
        %v5634 = vsub.f32 0.0, %v4738
        %v5635 = vsub.f32 0.0, %v4739
        %v5636 = vsub.f32 0.0, %v4740
        %v5637 = vsub.f32 0.0, %v4741
        %v5638 = vsub.f32 0.0, %v4742
        %v5639 = vsub.f32 0.0, %v4743
        %v5640 = vsub.f32 0.0, %v4744
        %v5641 = vsub.f32 0.0, %v4745
        %v5642 = vsub.f32 0.0, %v4746
        %v5643 = vsub.f32 0.0, %v4747
        %v5644 = vsub.f32 0.0, %v4748
        %v5645 = vsub.f32 0.0, %v4749
        %v5646 = vsub.f32 0.0, %v4750
        %v5647 = vsub.f32 0.0, %v4751
        %v5648 = vsub.f32 0.0, %v4752
        %v5649 = vsub.f32 0.0, %v4753
        %v5650 = vsub.f32 0.0, %v4754
        %v5651 = vsub.f32 0.0, %v4755
        %v5652 = vsub.f32 0.0, %v4756
        %v5653 = vsub.f32 0.0, %v4757
        %v5654 = vsub.f32 0.0, %v4758
        %v5655 = vsub.f32 0.0, %v4759
        %v5656 = vsub.f32 0.0, %v4760
        %v5657 = vsub.f32 0.0, %v4761
        %v5658 = vsub.f32 0.0, %v4762
        %v5659 = vsub.f32 0.0, %v4763
        %v5660 = vsub.f32 0.0, %v4764
        %v5661 = vsub.f32 0.0, %v4765
        %v5662 = vsub.f32 0.0, %v4766
        %v5663 = vsub.f32 0.0, %v4767
        %v5664 = vsub.f32 0.0, %v4768
        %v5665 = vsub.f32 0.0, %v4769
        %v5666 = vsub.f32 0.0, %v4770
        %v5667 = vsub.f32 0.0, %v4771
        %v5668 = vsub.f32 0.0, %v4772
        %v5669 = vsub.f32 0.0, %v4773
        %v5670 = vsub.f32 0.0, %v4774
        %v5671 = vsub.f32 0.0, %v4775
        %v5672 = vsub.f32 0.0, %v4776
        %v5673 = vsub.f32 0.0, %v4777
        %v5674 = vsub.f32 0.0, %v4778
        %v5675 = vsub.f32 0.0, %v4779
        %v5676 = vsub.f32 0.0, %v4780
        %v5677 = vsub.f32 0.0, %v4781
        %v5678 = vsub.f32 0.0, %v4782
        %v5679 = vsub.f32 0.0, %v4783
        %v5680 = vsub.f32 0.0, %v4784
        %v5681 = vsub.f32 0.0, %v4785
        %v5682 = vsub.f32 0.0, %v4786
        %v5683 = vsub.f32 0.0, %v4787
        %v5684 = vsub.f32 0.0, %v4788
        %v5685 = vsub.f32 0.0, %v4789
        %v5686 = vsub.f32 0.0, %v4790
        %v5687 = vsub.f32 0.0, %v4791
        %v5688 = vsub.f32 0.0, %v4792
        %v5689 = vsub.f32 0.0, %v4793
        %v5690 = vsub.f32 0.0, %v4794
        %v5691 = vsub.f32 0.0, %v4795
        %v5692 = vsub.f32 0.0, %v4796
        %v5693 = vsub.f32 0.0, %v4797
        %v5694 = vmul.f32 %v5630, %v4734
        %v5695 = vmul.f32 %v5631, %v4735
        %v5696 = vmul.f32 %v5632, %v4736
        %v5697 = vmul.f32 %v5633, %v4737
        %v5698 = vmul.f32 %v5634, %v4738
        %v5699 = vmul.f32 %v5635, %v4739
        %v5700 = vmul.f32 %v5636, %v4740
        %v5701 = vmul.f32 %v5637, %v4741
        %v5702 = vmul.f32 %v5638, %v4742
        %v5703 = vmul.f32 %v5639, %v4743
        %v5704 = vmul.f32 %v5640, %v4744
        %v5705 = vmul.f32 %v5641, %v4745
        %v5706 = vmul.f32 %v5642, %v4746
        %v5707 = vmul.f32 %v5643, %v4747
        %v5708 = vmul.f32 %v5644, %v4748
        %v5709 = vmul.f32 %v5645, %v4749
        %v5710 = vmul.f32 %v5646, %v4750
        %v5711 = vmul.f32 %v5647, %v4751
        %v5712 = vmul.f32 %v5648, %v4752
        %v5713 = vmul.f32 %v5649, %v4753
        %v5714 = vmul.f32 %v5650, %v4754
        %v5715 = vmul.f32 %v5651, %v4755
        %v5716 = vmul.f32 %v5652, %v4756
        %v5717 = vmul.f32 %v5653, %v4757
        %v5718 = vmul.f32 %v5654, %v4758
        %v5719 = vmul.f32 %v5655, %v4759
        %v5720 = vmul.f32 %v5656, %v4760
        %v5721 = vmul.f32 %v5657, %v4761
        %v5722 = vmul.f32 %v5658, %v4762
        %v5723 = vmul.f32 %v5659, %v4763
        %v5724 = vmul.f32 %v5660, %v4764
        %v5725 = vmul.f32 %v5661, %v4765
        %v5726 = vmul.f32 %v5662, %v4766
        %v5727 = vmul.f32 %v5663, %v4767
        %v5728 = vmul.f32 %v5664, %v4768
        %v5729 = vmul.f32 %v5665, %v4769
        %v5730 = vmul.f32 %v5666, %v4770
        %v5731 = vmul.f32 %v5667, %v4771
        %v5732 = vmul.f32 %v5668, %v4772
        %v5733 = vmul.f32 %v5669, %v4773
        %v5734 = vmul.f32 %v5670, %v4774
        %v5735 = vmul.f32 %v5671, %v4775
        %v5736 = vmul.f32 %v5672, %v4776
        %v5737 = vmul.f32 %v5673, %v4777
        %v5738 = vmul.f32 %v5674, %v4778
        %v5739 = vmul.f32 %v5675, %v4779
        %v5740 = vmul.f32 %v5676, %v4780
        %v5741 = vmul.f32 %v5677, %v4781
        %v5742 = vmul.f32 %v5678, %v4782
        %v5743 = vmul.f32 %v5679, %v4783
        %v5744 = vmul.f32 %v5680, %v4784
        %v5745 = vmul.f32 %v5681, %v4785
        %v5746 = vmul.f32 %v5682, %v4786
        %v5747 = vmul.f32 %v5683, %v4787
        %v5748 = vmul.f32 %v5684, %v4788
        %v5749 = vmul.f32 %v5685, %v4789
        %v5750 = vmul.f32 %v5686, %v4790
        %v5751 = vmul.f32 %v5687, %v4791
        %v5752 = vmul.f32 %v5688, %v4792
        %v5753 = vmul.f32 %v5689, %v4793
        %v5754 = vmul.f32 %v5690, %v4794
        %v5755 = vmul.f32 %v5691, %v4795
        %v5756 = vmul.f32 %v5692, %v4796
        %v5757 = vmul.f32 %v5693, %v4797
        %v5758 = vmul.f32 %v5694, 1.442695
        %v5759 = vpow.pop %v5758
        %v5760 = vmul.f32 %v5695, 1.442695
        %v5761 = vpow.pop %v5760
        %v5762 = vmul.f32 %v5696, 1.442695
        %v5763 = vpow.pop %v5762
        %v5764 = vmul.f32 %v5697, 1.442695
        %v5765 = vpow.pop %v5764
        %v5766 = vmul.f32 %v5698, 1.442695
        %v5767 = vpow.pop %v5766
        %v5768 = vmul.f32 %v5699, 1.442695
        %v5769 = vpow.pop %v5768
        %v5770 = vmul.f32 %v5700, 1.442695
        %v5771 = vpow.pop %v5770
        %v5772 = vmul.f32 %v5701, 1.442695
        %v5773 = vpow.pop %v5772
        %v5774 = vmul.f32 %v5702, 1.442695
        %v5775 = vpow.pop %v5774
        %v5776 = vmul.f32 %v5703, 1.442695
        %v5777 = vpow.pop %v5776
        %v5778 = vmul.f32 %v5704, 1.442695
        %v5779 = vpow.pop %v5778
        %v5780 = vmul.f32 %v5705, 1.442695
        %v5781 = vpow.pop %v5780
        %v5782 = vmul.f32 %v5706, 1.442695
        %v5783 = vpow.pop %v5782
        %v5784 = vmul.f32 %v5707, 1.442695
        %v5785 = vpow.pop %v5784
        %v5786 = vmul.f32 %v5708, 1.442695
        %v5787 = vpow.pop %v5786
        %v5788 = vmul.f32 %v5709, 1.442695
        %v5789 = vpow.pop %v5788
        %v5790 = vmul.f32 %v5710, 1.442695
        %v5791 = vpow.pop %v5790
        %v5792 = vmul.f32 %v5711, 1.442695
        %v5793 = vpow.pop %v5792
        %v5794 = vmul.f32 %v5712, 1.442695
        %v5795 = vpow.pop %v5794
        %v5796 = vmul.f32 %v5713, 1.442695
        %v5797 = vpow.pop %v5796
        %v5798 = vmul.f32 %v5714, 1.442695
        %v5799 = vpow.pop %v5798
        %v5800 = vmul.f32 %v5715, 1.442695
        %v5801 = vpow.pop %v5800
        %v5802 = vmul.f32 %v5716, 1.442695
        %v5803 = vpow.pop %v5802
        %v5804 = vmul.f32 %v5717, 1.442695
        %v5805 = vpow.pop %v5804
        %v5806 = vmul.f32 %v5718, 1.442695
        %v5807 = vpow.pop %v5806
        %v5808 = vmul.f32 %v5719, 1.442695
        %v5809 = vpow.pop %v5808
        %v5810 = vmul.f32 %v5720, 1.442695
        %v5811 = vpow.pop %v5810
        %v5812 = vmul.f32 %v5721, 1.442695
        %v5813 = vpow.pop %v5812
        %v5814 = vmul.f32 %v5722, 1.442695
        %v5815 = vpow.pop %v5814
        %v5816 = vmul.f32 %v5723, 1.442695
        %v5817 = vpow.pop %v5816
        %v5818 = vmul.f32 %v5724, 1.442695
        %v5819 = vpow.pop %v5818
        %v5820 = vmul.f32 %v5725, 1.442695
        %v5821 = vpow.pop %v5820
        %v5822 = vmul.f32 %v5726, 1.442695
        %v5823 = vpow.pop %v5822
        %v5824 = vmul.f32 %v5727, 1.442695
        %v5825 = vpow.pop %v5824
        %v5826 = vmul.f32 %v5728, 1.442695
        %v5827 = vpow.pop %v5826
        %v5828 = vmul.f32 %v5729, 1.442695
        %v5829 = vpow.pop %v5828
        %v5830 = vmul.f32 %v5730, 1.442695
        %v5831 = vpow.pop %v5830
        %v5832 = vmul.f32 %v5731, 1.442695
        %v5833 = vpow.pop %v5832
        %v5834 = vmul.f32 %v5732, 1.442695
        %v5835 = vpow.pop %v5834
        %v5836 = vmul.f32 %v5733, 1.442695
        %v5837 = vpow.pop %v5836
        %v5838 = vmul.f32 %v5734, 1.442695
        %v5839 = vpow.pop %v5838
        %v5840 = vmul.f32 %v5735, 1.442695
        %v5841 = vpow.pop %v5840
        %v5842 = vmul.f32 %v5736, 1.442695
        %v5843 = vpow.pop %v5842
        %v5844 = vmul.f32 %v5737, 1.442695
        %v5845 = vpow.pop %v5844
        %v5846 = vmul.f32 %v5738, 1.442695
        %v5847 = vpow.pop %v5846
        %v5848 = vmul.f32 %v5739, 1.442695
        %v5849 = vpow.pop %v5848
        %v5850 = vmul.f32 %v5740, 1.442695
        %v5851 = vpow.pop %v5850
        %v5852 = vmul.f32 %v5741, 1.442695
        %v5853 = vpow.pop %v5852
        %v5854 = vmul.f32 %v5742, 1.442695
        %v5855 = vpow.pop %v5854
        %v5856 = vmul.f32 %v5743, 1.442695
        %v5857 = vpow.pop %v5856
        %v5858 = vmul.f32 %v5744, 1.442695
        %v5859 = vpow.pop %v5858
        %v5860 = vmul.f32 %v5745, 1.442695
        %v5861 = vpow.pop %v5860
        %v5862 = vmul.f32 %v5746, 1.442695
        %v5863 = vpow.pop %v5862
        %v5864 = vmul.f32 %v5747, 1.442695
        %v5865 = vpow.pop %v5864
        %v5866 = vmul.f32 %v5748, 1.442695
        %v5867 = vpow.pop %v5866
        %v5868 = vmul.f32 %v5749, 1.442695
        %v5869 = vpow.pop %v5868
        %v5870 = vmul.f32 %v5750, 1.442695
        %v5871 = vpow.pop %v5870
        %v5872 = vmul.f32 %v5751, 1.442695
        %v5873 = vpow.pop %v5872
        %v5874 = vmul.f32 %v5752, 1.442695
        %v5875 = vpow.pop %v5874
        %v5876 = vmul.f32 %v5753, 1.442695
        %v5877 = vpow.pop %v5876
        %v5878 = vmul.f32 %v5754, 1.442695
        %v5879 = vpow.pop %v5878
        %v5880 = vmul.f32 %v5755, 1.442695
        %v5881 = vpow.pop %v5880
        %v5882 = vmul.f32 %v5756, 1.442695
        %v5883 = vpow.pop %v5882
        %v5884 = vmul.f32 %v5757, 1.442695
        %v5885 = vpow.pop %v5884
        %v5886 = vmul.f32 %v5566, %v5759
        %v5887 = vmul.f32 %v5567, %v5761
        %v5888 = vmul.f32 %v5568, %v5763
        %v5889 = vmul.f32 %v5569, %v5765
        %v5890 = vmul.f32 %v5570, %v5767
        %v5891 = vmul.f32 %v5571, %v5769
        %v5892 = vmul.f32 %v5572, %v5771
        %v5893 = vmul.f32 %v5573, %v5773
        %v5894 = vmul.f32 %v5574, %v5775
        %v5895 = vmul.f32 %v5575, %v5777
        %v5896 = vmul.f32 %v5576, %v5779
        %v5897 = vmul.f32 %v5577, %v5781
        %v5898 = vmul.f32 %v5578, %v5783
        %v5899 = vmul.f32 %v5579, %v5785
        %v5900 = vmul.f32 %v5580, %v5787
        %v5901 = vmul.f32 %v5581, %v5789
        %v5902 = vmul.f32 %v5582, %v5791
        %v5903 = vmul.f32 %v5583, %v5793
        %v5904 = vmul.f32 %v5584, %v5795
        %v5905 = vmul.f32 %v5585, %v5797
        %v5906 = vmul.f32 %v5586, %v5799
        %v5907 = vmul.f32 %v5587, %v5801
        %v5908 = vmul.f32 %v5588, %v5803
        %v5909 = vmul.f32 %v5589, %v5805
        %v5910 = vmul.f32 %v5590, %v5807
        %v5911 = vmul.f32 %v5591, %v5809
        %v5912 = vmul.f32 %v5592, %v5811
        %v5913 = vmul.f32 %v5593, %v5813
        %v5914 = vmul.f32 %v5594, %v5815
        %v5915 = vmul.f32 %v5595, %v5817
        %v5916 = vmul.f32 %v5596, %v5819
        %v5917 = vmul.f32 %v5597, %v5821
        %v5918 = vmul.f32 %v5598, %v5823
        %v5919 = vmul.f32 %v5599, %v5825
        %v5920 = vmul.f32 %v5600, %v5827
        %v5921 = vmul.f32 %v5601, %v5829
        %v5922 = vmul.f32 %v5602, %v5831
        %v5923 = vmul.f32 %v5603, %v5833
        %v5924 = vmul.f32 %v5604, %v5835
        %v5925 = vmul.f32 %v5605, %v5837
        %v5926 = vmul.f32 %v5606, %v5839
        %v5927 = vmul.f32 %v5607, %v5841
        %v5928 = vmul.f32 %v5608, %v5843
        %v5929 = vmul.f32 %v5609, %v5845
        %v5930 = vmul.f32 %v5610, %v5847
        %v5931 = vmul.f32 %v5611, %v5849
        %v5932 = vmul.f32 %v5612, %v5851
        %v5933 = vmul.f32 %v5613, %v5853
        %v5934 = vmul.f32 %v5614, %v5855
        %v5935 = vmul.f32 %v5615, %v5857
        %v5936 = vmul.f32 %v5616, %v5859
        %v5937 = vmul.f32 %v5617, %v5861
        %v5938 = vmul.f32 %v5618, %v5863
        %v5939 = vmul.f32 %v5619, %v5865
        %v5940 = vmul.f32 %v5620, %v5867
        %v5941 = vmul.f32 %v5621, %v5869
        %v5942 = vmul.f32 %v5622, %v5871
        %v5943 = vmul.f32 %v5623, %v5873
        %v5944 = vmul.f32 %v5624, %v5875
        %v5945 = vmul.f32 %v5625, %v5877
        %v5946 = vmul.f32 %v5626, %v5879
        %v5947 = vmul.f32 %v5627, %v5881
        %v5948 = vmul.f32 %v5628, %v5883
        %v5949 = vmul.f32 %v5629, %v5885
        %vm5950 = vcmp.ge.f32.partialorder %v4606, 0.0
        %vm5951 = vcmp.ge.f32.partialorder %v4607, 0.0
        %vm5952 = vcmp.ge.f32.partialorder %v4608, 0.0
        %vm5953 = vcmp.ge.f32.partialorder %v4609, 0.0
        %vm5954 = vcmp.ge.f32.partialorder %v4610, 0.0
        %vm5955 = vcmp.ge.f32.partialorder %v4611, 0.0
        %vm5956 = vcmp.ge.f32.partialorder %v4612, 0.0
        %vm5957 = vcmp.ge.f32.partialorder %v4613, 0.0
        %vm5958 = vcmp.ge.f32.partialorder %v4614, 0.0
        %vm5959 = vcmp.ge.f32.partialorder %v4615, 0.0
        %vm5960 = vcmp.ge.f32.partialorder %v4616, 0.0
        %vm5961 = vcmp.ge.f32.partialorder %v4617, 0.0
        %vm5962 = vcmp.ge.f32.partialorder %v4618, 0.0
        %vm5963 = vcmp.ge.f32.partialorder %v4619, 0.0
        %vm5964 = vcmp.ge.f32.partialorder %v4620, 0.0
        %vm5965 = vcmp.ge.f32.partialorder %v4621, 0.0
        %vm5966 = vcmp.ge.f32.partialorder %v4622, 0.0
        %vm5967 = vcmp.ge.f32.partialorder %v4623, 0.0
        %vm5968 = vcmp.ge.f32.partialorder %v4624, 0.0
        %vm5969 = vcmp.ge.f32.partialorder %v4625, 0.0
        %vm5970 = vcmp.ge.f32.partialorder %v4626, 0.0
        %vm5971 = vcmp.ge.f32.partialorder %v4627, 0.0
        %vm5972 = vcmp.ge.f32.partialorder %v4628, 0.0
        %vm5973 = vcmp.ge.f32.partialorder %v4629, 0.0
        %vm5974 = vcmp.ge.f32.partialorder %v4630, 0.0
        %vm5975 = vcmp.ge.f32.partialorder %v4631, 0.0
        %vm5976 = vcmp.ge.f32.partialorder %v4632, 0.0
        %vm5977 = vcmp.ge.f32.partialorder %v4633, 0.0
        %vm5978 = vcmp.ge.f32.partialorder %v4634, 0.0
        %vm5979 = vcmp.ge.f32.partialorder %v4635, 0.0
        %vm5980 = vcmp.ge.f32.partialorder %v4636, 0.0
        %vm5981 = vcmp.ge.f32.partialorder %v4637, 0.0
        %vm5982 = vcmp.ge.f32.partialorder %v4638, 0.0
        %vm5983 = vcmp.ge.f32.partialorder %v4639, 0.0
        %vm5984 = vcmp.ge.f32.partialorder %v4640, 0.0
        %vm5985 = vcmp.ge.f32.partialorder %v4641, 0.0
        %vm5986 = vcmp.ge.f32.partialorder %v4642, 0.0
        %vm5987 = vcmp.ge.f32.partialorder %v4643, 0.0
        %vm5988 = vcmp.ge.f32.partialorder %v4644, 0.0
        %vm5989 = vcmp.ge.f32.partialorder %v4645, 0.0
        %vm5990 = vcmp.ge.f32.partialorder %v4646, 0.0
        %vm5991 = vcmp.ge.f32.partialorder %v4647, 0.0
        %vm5992 = vcmp.ge.f32.partialorder %v4648, 0.0
        %vm5993 = vcmp.ge.f32.partialorder %v4649, 0.0
        %vm5994 = vcmp.ge.f32.partialorder %v4650, 0.0
        %vm5995 = vcmp.ge.f32.partialorder %v4651, 0.0
        %vm5996 = vcmp.ge.f32.partialorder %v4652, 0.0
        %vm5997 = vcmp.ge.f32.partialorder %v4653, 0.0
        %vm5998 = vcmp.ge.f32.partialorder %v4654, 0.0
        %vm5999 = vcmp.ge.f32.partialorder %v4655, 0.0
        %vm6000 = vcmp.ge.f32.partialorder %v4656, 0.0
        %vm6001 = vcmp.ge.f32.partialorder %v4657, 0.0
        %vm6002 = vcmp.ge.f32.partialorder %v4658, 0.0
        %vm6003 = vcmp.ge.f32.partialorder %v4659, 0.0
        %vm6004 = vcmp.ge.f32.partialorder %v4660, 0.0
        %vm6005 = vcmp.ge.f32.partialorder %v4661, 0.0
        %vm6006 = vcmp.ge.f32.partialorder %v4662, 0.0
        %vm6007 = vcmp.ge.f32.partialorder %v4663, 0.0
        %vm6008 = vcmp.ge.f32.partialorder %v4664, 0.0
        %vm6009 = vcmp.ge.f32.partialorder %v4665, 0.0
        %vm6010 = vcmp.ge.f32.partialorder %v4666, 0.0
        %vm6011 = vcmp.ge.f32.partialorder %v4667, 0.0
        %vm6012 = vcmp.ge.f32.partialorder %v4668, 0.0
        %vm6013 = vcmp.ge.f32.partialorder %v4669, 0.0
        %v6014 = vsub.f32 1.0, %v5886
        %v6015 = vsub.f32 1.0, %v5887
        %v6016 = vsub.f32 1.0, %v5888
        %v6017 = vsub.f32 1.0, %v5889
        %v6018 = vsub.f32 1.0, %v5890
        %v6019 = vsub.f32 1.0, %v5891
        %v6020 = vsub.f32 1.0, %v5892
        %v6021 = vsub.f32 1.0, %v5893
        %v6022 = vsub.f32 1.0, %v5894
        %v6023 = vsub.f32 1.0, %v5895
        %v6024 = vsub.f32 1.0, %v5896
        %v6025 = vsub.f32 1.0, %v5897
        %v6026 = vsub.f32 1.0, %v5898
        %v6027 = vsub.f32 1.0, %v5899
        %v6028 = vsub.f32 1.0, %v5900
        %v6029 = vsub.f32 1.0, %v5901
        %v6030 = vsub.f32 1.0, %v5902
        %v6031 = vsub.f32 1.0, %v5903
        %v6032 = vsub.f32 1.0, %v5904
        %v6033 = vsub.f32 1.0, %v5905
        %v6034 = vsub.f32 1.0, %v5906
        %v6035 = vsub.f32 1.0, %v5907
        %v6036 = vsub.f32 1.0, %v5908
        %v6037 = vsub.f32 1.0, %v5909
        %v6038 = vsub.f32 1.0, %v5910
        %v6039 = vsub.f32 1.0, %v5911
        %v6040 = vsub.f32 1.0, %v5912
        %v6041 = vsub.f32 1.0, %v5913
        %v6042 = vsub.f32 1.0, %v5914
        %v6043 = vsub.f32 1.0, %v5915
        %v6044 = vsub.f32 1.0, %v5916
        %v6045 = vsub.f32 1.0, %v5917
        %v6046 = vsub.f32 1.0, %v5918
        %v6047 = vsub.f32 1.0, %v5919
        %v6048 = vsub.f32 1.0, %v5920
        %v6049 = vsub.f32 1.0, %v5921
        %v6050 = vsub.f32 1.0, %v5922
        %v6051 = vsub.f32 1.0, %v5923
        %v6052 = vsub.f32 1.0, %v5924
        %v6053 = vsub.f32 1.0, %v5925
        %v6054 = vsub.f32 1.0, %v5926
        %v6055 = vsub.f32 1.0, %v5927
        %v6056 = vsub.f32 1.0, %v5928
        %v6057 = vsub.f32 1.0, %v5929
        %v6058 = vsub.f32 1.0, %v5930
        %v6059 = vsub.f32 1.0, %v5931
        %v6060 = vsub.f32 1.0, %v5932
        %v6061 = vsub.f32 1.0, %v5933
        %v6062 = vsub.f32 1.0, %v5934
        %v6063 = vsub.f32 1.0, %v5935
        %v6064 = vsub.f32 1.0, %v5936
        %v6065 = vsub.f32 1.0, %v5937
        %v6066 = vsub.f32 1.0, %v5938
        %v6067 = vsub.f32 1.0, %v5939
        %v6068 = vsub.f32 1.0, %v5940
        %v6069 = vsub.f32 1.0, %v5941
        %v6070 = vsub.f32 1.0, %v5942
        %v6071 = vsub.f32 1.0, %v5943
        %v6072 = vsub.f32 1.0, %v5944
        %v6073 = vsub.f32 1.0, %v5945
        %v6074 = vsub.f32 1.0, %v5946
        %v6075 = vsub.f32 1.0, %v5947
        %v6076 = vsub.f32 1.0, %v5948
        %v6077 = vsub.f32 1.0, %v5949
        %v6078 = vsel %vm5950, %v6014, %v5886
        %v6079 = vsel %vm5951, %v6015, %v5887
        %v6080 = vsel %vm5952, %v6016, %v5888
        %v6081 = vsel %vm5953, %v6017, %v5889
        %v6082 = vsel %vm5954, %v6018, %v5890
        %v6083 = vsel %vm5955, %v6019, %v5891
        %v6084 = vsel %vm5956, %v6020, %v5892
        %v6085 = vsel %vm5957, %v6021, %v5893
        %v6086 = vsel %vm5958, %v6022, %v5894
        %v6087 = vsel %vm5959, %v6023, %v5895
        %v6088 = vsel %vm5960, %v6024, %v5896
        %v6089 = vsel %vm5961, %v6025, %v5897
        %v6090 = vsel %vm5962, %v6026, %v5898
        %v6091 = vsel %vm5963, %v6027, %v5899
        %v6092 = vsel %vm5964, %v6028, %v5900
        %v6093 = vsel %vm5965, %v6029, %v5901
        %v6094 = vsel %vm5966, %v6030, %v5902
        %v6095 = vsel %vm5967, %v6031, %v5903
        %v6096 = vsel %vm5968, %v6032, %v5904
        %v6097 = vsel %vm5969, %v6033, %v5905
        %v6098 = vsel %vm5970, %v6034, %v5906
        %v6099 = vsel %vm5971, %v6035, %v5907
        %v6100 = vsel %vm5972, %v6036, %v5908
        %v6101 = vsel %vm5973, %v6037, %v5909
        %v6102 = vsel %vm5974, %v6038, %v5910
        %v6103 = vsel %vm5975, %v6039, %v5911
        %v6104 = vsel %vm5976, %v6040, %v5912
        %v6105 = vsel %vm5977, %v6041, %v5913
        %v6106 = vsel %vm5978, %v6042, %v5914
        %v6107 = vsel %vm5979, %v6043, %v5915
        %v6108 = vsel %vm5980, %v6044, %v5916
        %v6109 = vsel %vm5981, %v6045, %v5917
        %v6110 = vsel %vm5982, %v6046, %v5918
        %v6111 = vsel %vm5983, %v6047, %v5919
        %v6112 = vsel %vm5984, %v6048, %v5920
        %v6113 = vsel %vm5985, %v6049, %v5921
        %v6114 = vsel %vm5986, %v6050, %v5922
        %v6115 = vsel %vm5987, %v6051, %v5923
        %v6116 = vsel %vm5988, %v6052, %v5924
        %v6117 = vsel %vm5989, %v6053, %v5925
        %v6118 = vsel %vm5990, %v6054, %v5926
        %v6119 = vsel %vm5991, %v6055, %v5927
        %v6120 = vsel %vm5992, %v6056, %v5928
        %v6121 = vsel %vm5993, %v6057, %v5929
        %v6122 = vsel %vm5994, %v6058, %v5930
        %v6123 = vsel %vm5995, %v6059, %v5931
        %v6124 = vsel %vm5996, %v6060, %v5932
        %v6125 = vsel %vm5997, %v6061, %v5933
        %v6126 = vsel %vm5998, %v6062, %v5934
        %v6127 = vsel %vm5999, %v6063, %v5935
        %v6128 = vsel %vm6000, %v6064, %v5936
        %v6129 = vsel %vm6001, %v6065, %v5937
        %v6130 = vsel %vm6002, %v6066, %v5938
        %v6131 = vsel %vm6003, %v6067, %v5939
        %v6132 = vsel %vm6004, %v6068, %v5940
        %v6133 = vsel %vm6005, %v6069, %v5941
        %v6134 = vsel %vm6006, %v6070, %v5942
        %v6135 = vsel %vm6007, %v6071, %v5943
        %v6136 = vsel %vm6008, %v6072, %v5944
        %v6137 = vsel %vm6009, %v6073, %v5945
        %v6138 = vsel %vm6010, %v6074, %v5946
        %v6139 = vsel %vm6011, %v6075, %v5947
        %v6140 = vsel %vm6012, %v6076, %v5948
        %v6141 = vsel %vm6013, %v6077, %v5949
        %v6142 = vmul.f32 %v4606, %v6078
        %v6143 = vmul.f32 %v4607, %v6079
        %v6144 = vmul.f32 %v4608, %v6080
        %v6145 = vmul.f32 %v4609, %v6081
        %v6146 = vmul.f32 %v4610, %v6082
        %v6147 = vmul.f32 %v4611, %v6083
        %v6148 = vmul.f32 %v4612, %v6084
        %v6149 = vmul.f32 %v4613, %v6085
        %v6150 = vmul.f32 %v4614, %v6086
        %v6151 = vmul.f32 %v4615, %v6087
        %v6152 = vmul.f32 %v4616, %v6088
        %v6153 = vmul.f32 %v4617, %v6089
        %v6154 = vmul.f32 %v4618, %v6090
        %v6155 = vmul.f32 %v4619, %v6091
        %v6156 = vmul.f32 %v4620, %v6092
        %v6157 = vmul.f32 %v4621, %v6093
        %v6158 = vmul.f32 %v4622, %v6094
        %v6159 = vmul.f32 %v4623, %v6095
        %v6160 = vmul.f32 %v4624, %v6096
        %v6161 = vmul.f32 %v4625, %v6097
        %v6162 = vmul.f32 %v4626, %v6098
        %v6163 = vmul.f32 %v4627, %v6099
        %v6164 = vmul.f32 %v4628, %v6100
        %v6165 = vmul.f32 %v4629, %v6101
        %v6166 = vmul.f32 %v4630, %v6102
        %v6167 = vmul.f32 %v4631, %v6103
        %v6168 = vmul.f32 %v4632, %v6104
        %v6169 = vmul.f32 %v4633, %v6105
        %v6170 = vmul.f32 %v4634, %v6106
        %v6171 = vmul.f32 %v4635, %v6107
        %v6172 = vmul.f32 %v4636, %v6108
        %v6173 = vmul.f32 %v4637, %v6109
        %v6174 = vmul.f32 %v4638, %v6110
        %v6175 = vmul.f32 %v4639, %v6111
        %v6176 = vmul.f32 %v4640, %v6112
        %v6177 = vmul.f32 %v4641, %v6113
        %v6178 = vmul.f32 %v4642, %v6114
        %v6179 = vmul.f32 %v4643, %v6115
        %v6180 = vmul.f32 %v4644, %v6116
        %v6181 = vmul.f32 %v4645, %v6117
        %v6182 = vmul.f32 %v4646, %v6118
        %v6183 = vmul.f32 %v4647, %v6119
        %v6184 = vmul.f32 %v4648, %v6120
        %v6185 = vmul.f32 %v4649, %v6121
        %v6186 = vmul.f32 %v4650, %v6122
        %v6187 = vmul.f32 %v4651, %v6123
        %v6188 = vmul.f32 %v4652, %v6124
        %v6189 = vmul.f32 %v4653, %v6125
        %v6190 = vmul.f32 %v4654, %v6126
        %v6191 = vmul.f32 %v4655, %v6127
        %v6192 = vmul.f32 %v4656, %v6128
        %v6193 = vmul.f32 %v4657, %v6129
        %v6194 = vmul.f32 %v4658, %v6130
        %v6195 = vmul.f32 %v4659, %v6131
        %v6196 = vmul.f32 %v4660, %v6132
        %v6197 = vmul.f32 %v4661, %v6133
        %v6198 = vmul.f32 %v4662, %v6134
        %v6199 = vmul.f32 %v4663, %v6135
        %v6200 = vmul.f32 %v4664, %v6136
        %v6201 = vmul.f32 %v4665, %v6137
        %v6202 = vmul.f32 %v4666, %v6138
        %v6203 = vmul.f32 %v4667, %v6139
        %v6204 = vmul.f32 %v4668, %v6140
        %v6205 = vmul.f32 %v4669, %v6141
        %v6206 = vpack.c.bf16 %v6144, %v6142
        %v6207 = vpack.c.bf16 %v6145, %v6143
        %v6208 = vpack.c.bf16 %v6148, %v6146
        %v6209 = vpack.c.bf16 %v6149, %v6147
        %v6210 = vpack.c.bf16 %v6152, %v6150
        %v6211 = vpack.c.bf16 %v6153, %v6151
        %v6212 = vpack.c.bf16 %v6156, %v6154
        %v6213 = vpack.c.bf16 %v6157, %v6155
        %v6214 = vpack.c.bf16 %v6160, %v6158
        %v6215 = vpack.c.bf16 %v6161, %v6159
        %v6216 = vpack.c.bf16 %v6164, %v6162
        %v6217 = vpack.c.bf16 %v6165, %v6163
        %v6218 = vpack.c.bf16 %v6168, %v6166
        %v6219 = vpack.c.bf16 %v6169, %v6167
        %v6220 = vpack.c.bf16 %v6172, %v6170
        %v6221 = vpack.c.bf16 %v6173, %v6171
        %v6222 = vpack.c.bf16 %v6176, %v6174
        %v6223 = vpack.c.bf16 %v6177, %v6175
        %v6224 = vpack.c.bf16 %v6180, %v6178
        %v6225 = vpack.c.bf16 %v6181, %v6179
        %v6226 = vpack.c.bf16 %v6184, %v6182
        %v6227 = vpack.c.bf16 %v6185, %v6183
        %v6228 = vpack.c.bf16 %v6188, %v6186
        %v6229 = vpack.c.bf16 %v6189, %v6187
        %v6230 = vpack.c.bf16 %v6192, %v6190
        %v6231 = vpack.c.bf16 %v6193, %v6191
        %v6232 = vpack.c.bf16 %v6196, %v6194
        %v6233 = vpack.c.bf16 %v6197, %v6195
        %v6234 = vpack.c.bf16 %v6200, %v6198
        %v6235 = vpack.c.bf16 %v6201, %v6199
        %v6236 = vpack.c.bf16 %v6204, %v6202
        %v6237 = vpack.c.bf16 %v6205, %v6203
        %v6238 = vld [vmem:[#allocation6] sm:$0xff]
        %v6239 = vld [vmem:[#allocation6 + $0x8] sm:$0xff]
        %v6240 = vld [vmem:[#allocation6 + $0x10] sm:$0xff]
        %v6241 = vld [vmem:[#allocation6 + $0x18] sm:$0xff]
        %v6242 = vld [vmem:[#allocation6 + $0x20] sm:$0xff]
        %v6243 = vld [vmem:[#allocation6 + $0x28] sm:$0xff]
        %v6244 = vld [vmem:[#allocation6 + $0x30] sm:$0xff]
        %v6245 = vld [vmem:[#allocation6 + $0x38] sm:$0xff]
        %v6246 = vld [vmem:[#allocation6 + $0x40] sm:$0xff]
        %v6247 = vld [vmem:[#allocation6 + $0x48] sm:$0xff]
        %v6248 = vld [vmem:[#allocation6 + $0x50] sm:$0xff]
        %v6249 = vld [vmem:[#allocation6 + $0x58] sm:$0xff]
        %v6250 = vld [vmem:[#allocation6 + $0x60] sm:$0xff]
        %v6251 = vld [vmem:[#allocation6 + $0x68] sm:$0xff]
        %v6252 = vld [vmem:[#allocation6 + $0x70] sm:$0xff]
        %v6253 = vld [vmem:[#allocation6 + $0x78] sm:$0xff]
        %v6254 = vld [vmem:[#allocation6 + $0x80] sm:$0xff]
        %v6255 = vld [vmem:[#allocation6 + $0x88] sm:$0xff]
        %v6256 = vld [vmem:[#allocation6 + $0x90] sm:$0xff]
        %v6257 = vld [vmem:[#allocation6 + $0x98] sm:$0xff]
        %v6258 = vld [vmem:[#allocation6 + $0xa0] sm:$0xff]
        %v6259 = vld [vmem:[#allocation6 + $0xa8] sm:$0xff]
        %v6260 = vld [vmem:[#allocation6 + $0xb0] sm:$0xff]
        %v6261 = vld [vmem:[#allocation6 + $0xb8] sm:$0xff]
        %v6262 = vld [vmem:[#allocation6 + $0xc0] sm:$0xff]
        %v6263 = vld [vmem:[#allocation6 + $0xc8] sm:$0xff]
        %v6264 = vld [vmem:[#allocation6 + $0xd0] sm:$0xff]
        %v6265 = vld [vmem:[#allocation6 + $0xd8] sm:$0xff]
        %v6266 = vld [vmem:[#allocation6 + $0xe0] sm:$0xff]
        %v6267 = vld [vmem:[#allocation6 + $0xe8] sm:$0xff]
        %v6268 = vld [vmem:[#allocation6 + $0xf0] sm:$0xff]
        %v6269 = vld [vmem:[#allocation6 + $0xf8] sm:$0xff]
        %v6270 = vld [vmem:[%s6] sm:$0x3]
        %v6272 = vlaneseq
        %v6273 = vshrl.u32 %v6272, 7
        %v6274 = vsub.s32 0, %v6273
        %v6275 = vrot.slane %v6270, %v6274
        %v6276 = vlaneseq
        %v6277 = vshrl.u32 %v6276, 7
        %v6278 = vsub.s32 1, %v6277
        %v6279 = vrot.slane %v6270, %v6278
        %v6314 = vunpack.c.l.b16 %v6238
        %v6315 = vunpack.c.h.b16 %v6238
        %v6316 = vunpack.c.l.b16 %v6239
        %v6317 = vunpack.c.h.b16 %v6239
        %v6318 = vunpack.c.l.b16 %v6240
        %v6319 = vunpack.c.h.b16 %v6240
        %v6320 = vunpack.c.l.b16 %v6241
        %v6321 = vunpack.c.h.b16 %v6241
        %v6322 = vunpack.c.l.b16 %v6242
        %v6323 = vunpack.c.h.b16 %v6242
        %v6324 = vunpack.c.l.b16 %v6243
        %v6325 = vunpack.c.h.b16 %v6243
        %v6326 = vunpack.c.l.b16 %v6244
        %v6327 = vunpack.c.h.b16 %v6244
        %v6328 = vunpack.c.l.b16 %v6245
        %v6329 = vunpack.c.h.b16 %v6245
        %v6330 = vunpack.c.l.b16 %v6246
        %v6331 = vunpack.c.h.b16 %v6246
        %v6332 = vunpack.c.l.b16 %v6247
        %v6333 = vunpack.c.h.b16 %v6247
        %v6334 = vunpack.c.l.b16 %v6248
        %v6335 = vunpack.c.h.b16 %v6248
        %v6336 = vunpack.c.l.b16 %v6249
        %v6337 = vunpack.c.h.b16 %v6249
        %v6338 = vunpack.c.l.b16 %v6250
        %v6339 = vunpack.c.h.b16 %v6250
        %v6340 = vunpack.c.l.b16 %v6251
        %v6341 = vunpack.c.h.b16 %v6251
        %v6342 = vunpack.c.l.b16 %v6252
        %v6343 = vunpack.c.h.b16 %v6252
        %v6344 = vunpack.c.l.b16 %v6253
        %v6345 = vunpack.c.h.b16 %v6253
        %v6346 = vunpack.c.l.b16 %v6254
        %v6347 = vunpack.c.h.b16 %v6254
        %v6348 = vunpack.c.l.b16 %v6255
        %v6349 = vunpack.c.h.b16 %v6255
        %v6350 = vunpack.c.l.b16 %v6256
        %v6351 = vunpack.c.h.b16 %v6256
        %v6352 = vunpack.c.l.b16 %v6257
        %v6353 = vunpack.c.h.b16 %v6257
        %v6354 = vunpack.c.l.b16 %v6258
        %v6355 = vunpack.c.h.b16 %v6258
        %v6356 = vunpack.c.l.b16 %v6259
        %v6357 = vunpack.c.h.b16 %v6259
        %v6358 = vunpack.c.l.b16 %v6260
        %v6359 = vunpack.c.h.b16 %v6260
        %v6360 = vunpack.c.l.b16 %v6261
        %v6361 = vunpack.c.h.b16 %v6261
        %v6362 = vunpack.c.l.b16 %v6262
        %v6363 = vunpack.c.h.b16 %v6262
        %v6364 = vunpack.c.l.b16 %v6263
        %v6365 = vunpack.c.h.b16 %v6263
        %v6366 = vunpack.c.l.b16 %v6264
        %v6367 = vunpack.c.h.b16 %v6264
        %v6368 = vunpack.c.l.b16 %v6265
        %v6369 = vunpack.c.h.b16 %v6265
        %v6370 = vunpack.c.l.b16 %v6266
        %v6371 = vunpack.c.h.b16 %v6266
        %v6372 = vunpack.c.l.b16 %v6267
        %v6373 = vunpack.c.h.b16 %v6267
        %v6374 = vunpack.c.l.b16 %v6268
        %v6375 = vunpack.c.h.b16 %v6268
        %v6376 = vunpack.c.l.b16 %v6269
        %v6377 = vunpack.c.h.b16 %v6269
        %v6378 = vpack.c.b16 %v6316, %v6314
        %v6379 = vpack.c.b16 %v6317, %v6315
        %v6380 = vpack.c.b16 %v6320, %v6318
        %v6381 = vpack.c.b16 %v6321, %v6319
        %v6382 = vpack.c.b16 %v6324, %v6322
        %v6383 = vpack.c.b16 %v6325, %v6323
        %v6384 = vpack.c.b16 %v6328, %v6326
        %v6385 = vpack.c.b16 %v6329, %v6327
        %v6386 = vpack.c.b16 %v6332, %v6330
        %v6387 = vpack.c.b16 %v6333, %v6331
        %v6388 = vpack.c.b16 %v6336, %v6334
        %v6389 = vpack.c.b16 %v6337, %v6335
        %v6390 = vpack.c.b16 %v6340, %v6338
        %v6391 = vpack.c.b16 %v6341, %v6339
        %v6392 = vpack.c.b16 %v6344, %v6342
        %v6393 = vpack.c.b16 %v6345, %v6343
        %v6394 = vpack.c.b16 %v6348, %v6346
        %v6395 = vpack.c.b16 %v6349, %v6347
        %v6396 = vpack.c.b16 %v6352, %v6350
        %v6397 = vpack.c.b16 %v6353, %v6351
        %v6398 = vpack.c.b16 %v6356, %v6354
        %v6399 = vpack.c.b16 %v6357, %v6355
        %v6400 = vpack.c.b16 %v6360, %v6358
        %v6401 = vpack.c.b16 %v6361, %v6359
        %v6402 = vpack.c.b16 %v6364, %v6362
        %v6403 = vpack.c.b16 %v6365, %v6363
        %v6404 = vpack.c.b16 %v6368, %v6366
        %v6405 = vpack.c.b16 %v6369, %v6367
        %v6406 = vpack.c.b16 %v6372, %v6370
        %v6407 = vpack.c.b16 %v6373, %v6371
        %v6408 = vpack.c.b16 %v6376, %v6374
        %v6409 = vpack.c.b16 %v6377, %v6375
        %6442 = vmatprep.subr.bf16.mxu0 %v6393
        %6443 = vmatpush1.bf16.msra.mxu0 %v6392
        %6444 = vmatprep.subr.bf16.mxu0 %v6391
        %6445 = vmatpush1.bf16.msra.mxu0 %v6390
        %6446 = vmatprep.subr.bf16.mxu0 %v6389
        %6447 = vmatpush1.bf16.msra.mxu0 %v6388
        %6448 = vmatprep.subr.bf16.mxu0 %v6387
        %6449 = vmatpush1.bf16.msra.mxu0 %v6386
        %6450 = vmatprep.subr.bf16.mxu0 %v6385
        %6451 = vmatpush1.bf16.msra.mxu0 %v6384
        %6452 = vmatprep.subr.bf16.mxu0 %v6383
        %6453 = vmatpush1.bf16.msra.mxu0 %v6382
        %6454 = vmatprep.subr.bf16.mxu0 %v6381
        %6455 = vmatpush1.bf16.msra.mxu0 %v6380
        %6456 = vmatprep.subr.bf16.mxu0 %v6379
        %6457 = vmatpush1.bf16.msra.mxu0 %v6378
        %6458 = vmatprep.subr.bf16.mxu0 %v6409
        %6459 = vmatpush2.bf16.msra.mxu0 %v6408
        %6460 = vmatprep.subr.bf16.mxu0 %v6407
        %6461 = vmatpush2.bf16.msra.mxu0 %v6406
        %6462 = vmatprep.subr.bf16.mxu0 %v6405
        %6463 = vmatpush2.bf16.msra.mxu0 %v6404
        %6464 = vmatprep.subr.bf16.mxu0 %v6403
        %6465 = vmatpush2.bf16.msra.mxu0 %v6402
        %6466 = vmatprep.subr.bf16.mxu0 %v6401
        %6467 = vmatpush2.bf16.msra.mxu0 %v6400
        %6468 = vmatprep.subr.bf16.mxu0 %v6399
        %6469 = vmatpush2.bf16.msra.mxu0 %v6398
        %6470 = vmatprep.subr.bf16.mxu0 %v6397
        %6471 = vmatpush2.bf16.msra.mxu0 %v6396
        %6472 = vmatprep.subr.bf16.mxu0 %v6395
        %6473 = vmatpush2.bf16.msra.mxu0 %v6394
        %6474 = vmatprep.mubr.bf16.mxu0 %v6207
        %6475 = vmatmul.mubr.bf16.gmra.mxu0 %v6206
        %v6476 = vpop.f32.mrf.mxu0
        %v6477 = vadd.f32 %v6275, %v6476
        %v6478 = vpop.f32.mrf.mxu0
        %v6479 = vadd.f32 %v6279, %v6478
        %v6480 = vpop.f32.mrf.mxu0
        %v6481 = vadd.f32 %v6275, %v6480
        %v6482 = vpop.f32.mrf.mxu0
        %v6483 = vadd.f32 %v6279, %v6482
        %6484 = vmatprep.mubr.bf16.mxu0 %v6209
        %6485 = vmatmul.mubr.bf16.gmra.mxu0 %v6208
        %v6486 = vpop.f32.mrf.mxu0
        %v6487 = vadd.f32 %v6275, %v6486
        %v6488 = vpop.f32.mrf.mxu0
        %v6489 = vadd.f32 %v6279, %v6488
        %v6490 = vpop.f32.mrf.mxu0
        %v6491 = vadd.f32 %v6275, %v6490
        %v6492 = vpop.f32.mrf.mxu0
        %v6493 = vadd.f32 %v6279, %v6492
        %6494 = vmatprep.mubr.bf16.mxu0 %v6211
        %6495 = vmatmul.mubr.bf16.gmra.mxu0 %v6210
        %v6496 = vpop.f32.mrf.mxu0
        %v6497 = vadd.f32 %v6275, %v6496
        %v6498 = vpop.f32.mrf.mxu0
        %v6499 = vadd.f32 %v6279, %v6498
        %v6500 = vpop.f32.mrf.mxu0
        %v6501 = vadd.f32 %v6275, %v6500
        %v6502 = vpop.f32.mrf.mxu0
        %v6503 = vadd.f32 %v6279, %v6502
        %6504 = vmatprep.mubr.bf16.mxu0 %v6213
        %6505 = vmatmul.mubr.bf16.gmra.mxu0 %v6212
        %v6506 = vpop.f32.mrf.mxu0
        %v6507 = vadd.f32 %v6275, %v6506
        %v6508 = vpop.f32.mrf.mxu0
        %v6509 = vadd.f32 %v6279, %v6508
        %v6510 = vpop.f32.mrf.mxu0
        %v6511 = vadd.f32 %v6275, %v6510
        %v6512 = vpop.f32.mrf.mxu0
        %v6513 = vadd.f32 %v6279, %v6512
        %6514 = vmatprep.mubr.bf16.mxu0 %v6215
        %6515 = vmatmul.mubr.bf16.gmra.mxu0 %v6214
        %v6516 = vpop.f32.mrf.mxu0
        %v6517 = vadd.f32 %v6275, %v6516
        %v6518 = vpop.f32.mrf.mxu0
        %v6519 = vadd.f32 %v6279, %v6518
        %v6520 = vpop.f32.mrf.mxu0
        %v6521 = vadd.f32 %v6275, %v6520
        %v6522 = vpop.f32.mrf.mxu0
        %v6523 = vadd.f32 %v6279, %v6522
        %6524 = vmatprep.mubr.bf16.mxu0 %v6217
        %6525 = vmatmul.mubr.bf16.gmra.mxu0 %v6216
        %v6526 = vpop.f32.mrf.mxu0
        %v6527 = vadd.f32 %v6275, %v6526
        %v6528 = vpop.f32.mrf.mxu0
        %v6529 = vadd.f32 %v6279, %v6528
        %v6530 = vpop.f32.mrf.mxu0
        %v6531 = vadd.f32 %v6275, %v6530
        %v6532 = vpop.f32.mrf.mxu0
        %v6533 = vadd.f32 %v6279, %v6532
        %6534 = vmatprep.mubr.bf16.mxu0 %v6219
        %6535 = vmatmul.mubr.bf16.gmra.mxu0 %v6218
        %v6536 = vpop.f32.mrf.mxu0
        %v6537 = vadd.f32 %v6275, %v6536
        %v6538 = vpop.f32.mrf.mxu0
        %v6539 = vadd.f32 %v6279, %v6538
        %v6540 = vpop.f32.mrf.mxu0
        %v6541 = vadd.f32 %v6275, %v6540
        %v6542 = vpop.f32.mrf.mxu0
        %v6543 = vadd.f32 %v6279, %v6542
        %6544 = vmatprep.mubr.bf16.mxu0 %v6221
        %6545 = vmatmul.mubr.bf16.gmra.mxu0 %v6220
        %v6546 = vpop.f32.mrf.mxu0
        %v6547 = vadd.f32 %v6275, %v6546
        %v6548 = vpop.f32.mrf.mxu0
        %v6549 = vadd.f32 %v6279, %v6548
        %v6550 = vpop.f32.mrf.mxu0
        %v6551 = vadd.f32 %v6275, %v6550
        %v6552 = vpop.f32.mrf.mxu0
        %v6553 = vadd.f32 %v6279, %v6552
        %6554 = vmatprep.mubr.bf16.mxu0 %v6223
        %6555 = vmatmul.mubr.bf16.gmra.mxu0 %v6222
        %v6556 = vpop.f32.mrf.mxu0
        %v6557 = vadd.f32 %v6275, %v6556
        %v6558 = vpop.f32.mrf.mxu0
        %v6559 = vadd.f32 %v6279, %v6558
        %v6560 = vpop.f32.mrf.mxu0
        %v6561 = vadd.f32 %v6275, %v6560
        %v6562 = vpop.f32.mrf.mxu0
        %v6563 = vadd.f32 %v6279, %v6562
        %6564 = vmatprep.mubr.bf16.mxu0 %v6225
        %6565 = vmatmul.mubr.bf16.gmra.mxu0 %v6224
        %v6566 = vpop.f32.mrf.mxu0
        %v6567 = vadd.f32 %v6275, %v6566
        %v6568 = vpop.f32.mrf.mxu0
        %v6569 = vadd.f32 %v6279, %v6568
        %v6570 = vpop.f32.mrf.mxu0
        %v6571 = vadd.f32 %v6275, %v6570
        %v6572 = vpop.f32.mrf.mxu0
        %v6573 = vadd.f32 %v6279, %v6572
        %6574 = vmatprep.mubr.bf16.mxu0 %v6227
        %6575 = vmatmul.mubr.bf16.gmra.mxu0 %v6226
        %v6576 = vpop.f32.mrf.mxu0
        %v6577 = vadd.f32 %v6275, %v6576
        %v6578 = vpop.f32.mrf.mxu0
        %v6579 = vadd.f32 %v6279, %v6578
        %v6580 = vpop.f32.mrf.mxu0
        %v6581 = vadd.f32 %v6275, %v6580
        %v6582 = vpop.f32.mrf.mxu0
        %v6583 = vadd.f32 %v6279, %v6582
        %6584 = vmatprep.mubr.bf16.mxu0 %v6229
        %6585 = vmatmul.mubr.bf16.gmra.mxu0 %v6228
        %v6586 = vpop.f32.mrf.mxu0
        %v6587 = vadd.f32 %v6275, %v6586
        %v6588 = vpop.f32.mrf.mxu0
        %v6589 = vadd.f32 %v6279, %v6588
        %v6590 = vpop.f32.mrf.mxu0
        %v6591 = vadd.f32 %v6275, %v6590
        %v6592 = vpop.f32.mrf.mxu0
        %v6593 = vadd.f32 %v6279, %v6592
        %6594 = vmatprep.mubr.bf16.mxu0 %v6231
        %6595 = vmatmul.mubr.bf16.gmra.mxu0 %v6230
        %v6596 = vpop.f32.mrf.mxu0
        %v6597 = vadd.f32 %v6275, %v6596
        %v6598 = vpop.f32.mrf.mxu0
        %v6599 = vadd.f32 %v6279, %v6598
        %v6600 = vpop.f32.mrf.mxu0
        %v6601 = vadd.f32 %v6275, %v6600
        %v6602 = vpop.f32.mrf.mxu0
        %v6603 = vadd.f32 %v6279, %v6602
        %6604 = vmatprep.mubr.bf16.mxu0 %v6233
        %6605 = vmatmul.mubr.bf16.gmra.mxu0 %v6232
        %v6606 = vpop.f32.mrf.mxu0
        %v6607 = vadd.f32 %v6275, %v6606
        %v6608 = vpop.f32.mrf.mxu0
        %v6609 = vadd.f32 %v6279, %v6608
        %v6610 = vpop.f32.mrf.mxu0
        %v6611 = vadd.f32 %v6275, %v6610
        %v6612 = vpop.f32.mrf.mxu0
        %v6613 = vadd.f32 %v6279, %v6612
        %6614 = vmatprep.mubr.bf16.mxu0 %v6235
        %6615 = vmatmul.mubr.bf16.gmra.mxu0 %v6234
        %v6616 = vpop.f32.mrf.mxu0
        %v6617 = vadd.f32 %v6275, %v6616
        %v6618 = vpop.f32.mrf.mxu0
        %v6619 = vadd.f32 %v6279, %v6618
        %v6620 = vpop.f32.mrf.mxu0
        %v6621 = vadd.f32 %v6275, %v6620
        %v6622 = vpop.f32.mrf.mxu0
        %v6623 = vadd.f32 %v6279, %v6622
        %6624 = vmatprep.mubr.bf16.mxu0 %v6237
        %6625 = vmatmul.mubr.bf16.gmra.mxu0 %v6236
        %v6626 = vpop.f32.mrf.mxu0
        %v6627 = vadd.f32 %v6275, %v6626
        %v6628 = vpop.f32.mrf.mxu0
        %v6629 = vadd.f32 %v6279, %v6628
        %v6630 = vpop.f32.mrf.mxu0
        %v6631 = vadd.f32 %v6275, %v6630
        %v6632 = vpop.f32.mrf.mxu0
        %v6633 = vadd.f32 %v6279, %v6632
        %6634 = vdwg.mxu0
        %v6635 = vand.u32 2147483647, %v6477
        %v6636 = vand.u32 2147483647, %v6479
        %v6637 = vand.u32 2147483647, %v6481
        %v6638 = vand.u32 2147483647, %v6483
        %v6639 = vand.u32 2147483647, %v6487
        %v6640 = vand.u32 2147483647, %v6489
        %v6641 = vand.u32 2147483647, %v6491
        %v6642 = vand.u32 2147483647, %v6493
        %v6643 = vand.u32 2147483647, %v6497
        %v6644 = vand.u32 2147483647, %v6499
        %v6645 = vand.u32 2147483647, %v6501
        %v6646 = vand.u32 2147483647, %v6503
        %v6647 = vand.u32 2147483647, %v6507
        %v6648 = vand.u32 2147483647, %v6509
        %v6649 = vand.u32 2147483647, %v6511
        %v6650 = vand.u32 2147483647, %v6513
        %v6651 = vand.u32 2147483647, %v6517
        %v6652 = vand.u32 2147483647, %v6519
        %v6653 = vand.u32 2147483647, %v6521
        %v6654 = vand.u32 2147483647, %v6523
        %v6655 = vand.u32 2147483647, %v6527
        %v6656 = vand.u32 2147483647, %v6529
        %v6657 = vand.u32 2147483647, %v6531
        %v6658 = vand.u32 2147483647, %v6533
        %v6659 = vand.u32 2147483647, %v6537
        %v6660 = vand.u32 2147483647, %v6539
        %v6661 = vand.u32 2147483647, %v6541
        %v6662 = vand.u32 2147483647, %v6543
        %v6663 = vand.u32 2147483647, %v6547
        %v6664 = vand.u32 2147483647, %v6549
        %v6665 = vand.u32 2147483647, %v6551
        %v6666 = vand.u32 2147483647, %v6553
        %v6667 = vand.u32 2147483647, %v6557
        %v6668 = vand.u32 2147483647, %v6559
        %v6669 = vand.u32 2147483647, %v6561
        %v6670 = vand.u32 2147483647, %v6563
        %v6671 = vand.u32 2147483647, %v6567
        %v6672 = vand.u32 2147483647, %v6569
        %v6673 = vand.u32 2147483647, %v6571
        %v6674 = vand.u32 2147483647, %v6573
        %v6675 = vand.u32 2147483647, %v6577
        %v6676 = vand.u32 2147483647, %v6579
        %v6677 = vand.u32 2147483647, %v6581
        %v6678 = vand.u32 2147483647, %v6583
        %v6679 = vand.u32 2147483647, %v6587
        %v6680 = vand.u32 2147483647, %v6589
        %v6681 = vand.u32 2147483647, %v6591
        %v6682 = vand.u32 2147483647, %v6593
        %v6683 = vand.u32 2147483647, %v6597
        %v6684 = vand.u32 2147483647, %v6599
        %v6685 = vand.u32 2147483647, %v6601
        %v6686 = vand.u32 2147483647, %v6603
        %v6687 = vand.u32 2147483647, %v6607
        %v6688 = vand.u32 2147483647, %v6609
        %v6689 = vand.u32 2147483647, %v6611
        %v6690 = vand.u32 2147483647, %v6613
        %v6691 = vand.u32 2147483647, %v6617
        %v6692 = vand.u32 2147483647, %v6619
        %v6693 = vand.u32 2147483647, %v6621
        %v6694 = vand.u32 2147483647, %v6623
        %v6695 = vand.u32 2147483647, %v6627
        %v6696 = vand.u32 2147483647, %v6629
        %v6697 = vand.u32 2147483647, %v6631
        %v6698 = vand.u32 2147483647, %v6633
        %v6699 = vmul.f32 %v6635, 0.70710677
        %v6700 = vmul.f32 %v6636, 0.70710677
        %v6701 = vmul.f32 %v6637, 0.70710677
        %v6702 = vmul.f32 %v6638, 0.70710677
        %v6703 = vmul.f32 %v6639, 0.70710677
        %v6704 = vmul.f32 %v6640, 0.70710677
        %v6705 = vmul.f32 %v6641, 0.70710677
        %v6706 = vmul.f32 %v6642, 0.70710677
        %v6707 = vmul.f32 %v6643, 0.70710677
        %v6708 = vmul.f32 %v6644, 0.70710677
        %v6709 = vmul.f32 %v6645, 0.70710677
        %v6710 = vmul.f32 %v6646, 0.70710677
        %v6711 = vmul.f32 %v6647, 0.70710677
        %v6712 = vmul.f32 %v6648, 0.70710677
        %v6713 = vmul.f32 %v6649, 0.70710677
        %v6714 = vmul.f32 %v6650, 0.70710677
        %v6715 = vmul.f32 %v6651, 0.70710677
        %v6716 = vmul.f32 %v6652, 0.70710677
        %v6717 = vmul.f32 %v6653, 0.70710677
        %v6718 = vmul.f32 %v6654, 0.70710677
        %v6719 = vmul.f32 %v6655, 0.70710677
        %v6720 = vmul.f32 %v6656, 0.70710677
        %v6721 = vmul.f32 %v6657, 0.70710677
        %v6722 = vmul.f32 %v6658, 0.70710677
        %v6723 = vmul.f32 %v6659, 0.70710677
        %v6724 = vmul.f32 %v6660, 0.70710677
        %v6725 = vmul.f32 %v6661, 0.70710677
        %v6726 = vmul.f32 %v6662, 0.70710677
        %v6727 = vmul.f32 %v6663, 0.70710677
        %v6728 = vmul.f32 %v6664, 0.70710677
        %v6729 = vmul.f32 %v6665, 0.70710677
        %v6730 = vmul.f32 %v6666, 0.70710677
        %v6731 = vmul.f32 %v6667, 0.70710677
        %v6732 = vmul.f32 %v6668, 0.70710677
        %v6733 = vmul.f32 %v6669, 0.70710677
        %v6734 = vmul.f32 %v6670, 0.70710677
        %v6735 = vmul.f32 %v6671, 0.70710677
        %v6736 = vmul.f32 %v6672, 0.70710677
        %v6737 = vmul.f32 %v6673, 0.70710677
        %v6738 = vmul.f32 %v6674, 0.70710677
        %v6739 = vmul.f32 %v6675, 0.70710677
        %v6740 = vmul.f32 %v6676, 0.70710677
        %v6741 = vmul.f32 %v6677, 0.70710677
        %v6742 = vmul.f32 %v6678, 0.70710677
        %v6743 = vmul.f32 %v6679, 0.70710677
        %v6744 = vmul.f32 %v6680, 0.70710677
        %v6745 = vmul.f32 %v6681, 0.70710677
        %v6746 = vmul.f32 %v6682, 0.70710677
        %v6747 = vmul.f32 %v6683, 0.70710677
        %v6748 = vmul.f32 %v6684, 0.70710677
        %v6749 = vmul.f32 %v6685, 0.70710677
        %v6750 = vmul.f32 %v6686, 0.70710677
        %v6751 = vmul.f32 %v6687, 0.70710677
        %v6752 = vmul.f32 %v6688, 0.70710677
        %v6753 = vmul.f32 %v6689, 0.70710677
        %v6754 = vmul.f32 %v6690, 0.70710677
        %v6755 = vmul.f32 %v6691, 0.70710677
        %v6756 = vmul.f32 %v6692, 0.70710677
        %v6757 = vmul.f32 %v6693, 0.70710677
        %v6758 = vmul.f32 %v6694, 0.70710677
        %v6759 = vmul.f32 %v6695, 0.70710677
        %v6760 = vmul.f32 %v6696, 0.70710677
        %v6761 = vmul.f32 %v6697, 0.70710677
        %v6762 = vmul.f32 %v6698, 0.70710677
        %v6763 = vmul.f32 %v6699, 0.3275911
        %v6764 = vmul.f32 %v6700, 0.3275911
        %v6765 = vmul.f32 %v6701, 0.3275911
        %v6766 = vmul.f32 %v6702, 0.3275911
        %v6767 = vmul.f32 %v6703, 0.3275911
        %v6768 = vmul.f32 %v6704, 0.3275911
        %v6769 = vmul.f32 %v6705, 0.3275911
        %v6770 = vmul.f32 %v6706, 0.3275911
        %v6771 = vmul.f32 %v6707, 0.3275911
        %v6772 = vmul.f32 %v6708, 0.3275911
        %v6773 = vmul.f32 %v6709, 0.3275911
        %v6774 = vmul.f32 %v6710, 0.3275911
        %v6775 = vmul.f32 %v6711, 0.3275911
        %v6776 = vmul.f32 %v6712, 0.3275911
        %v6777 = vmul.f32 %v6713, 0.3275911
        %v6778 = vmul.f32 %v6714, 0.3275911
        %v6779 = vmul.f32 %v6715, 0.3275911
        %v6780 = vmul.f32 %v6716, 0.3275911
        %v6781 = vmul.f32 %v6717, 0.3275911
        %v6782 = vmul.f32 %v6718, 0.3275911
        %v6783 = vmul.f32 %v6719, 0.3275911
        %v6784 = vmul.f32 %v6720, 0.3275911
        %v6785 = vmul.f32 %v6721, 0.3275911
        %v6786 = vmul.f32 %v6722, 0.3275911
        %v6787 = vmul.f32 %v6723, 0.3275911
        %v6788 = vmul.f32 %v6724, 0.3275911
        %v6789 = vmul.f32 %v6725, 0.3275911
        %v6790 = vmul.f32 %v6726, 0.3275911
        %v6791 = vmul.f32 %v6727, 0.3275911
        %v6792 = vmul.f32 %v6728, 0.3275911
        %v6793 = vmul.f32 %v6729, 0.3275911
        %v6794 = vmul.f32 %v6730, 0.3275911
        %v6795 = vmul.f32 %v6731, 0.3275911
        %v6796 = vmul.f32 %v6732, 0.3275911
        %v6797 = vmul.f32 %v6733, 0.3275911
        %v6798 = vmul.f32 %v6734, 0.3275911
        %v6799 = vmul.f32 %v6735, 0.3275911
        %v6800 = vmul.f32 %v6736, 0.3275911
        %v6801 = vmul.f32 %v6737, 0.3275911
        %v6802 = vmul.f32 %v6738, 0.3275911
        %v6803 = vmul.f32 %v6739, 0.3275911
        %v6804 = vmul.f32 %v6740, 0.3275911
        %v6805 = vmul.f32 %v6741, 0.3275911
        %v6806 = vmul.f32 %v6742, 0.3275911
        %v6807 = vmul.f32 %v6743, 0.3275911
        %v6808 = vmul.f32 %v6744, 0.3275911
        %v6809 = vmul.f32 %v6745, 0.3275911
        %v6810 = vmul.f32 %v6746, 0.3275911
        %v6811 = vmul.f32 %v6747, 0.3275911
        %v6812 = vmul.f32 %v6748, 0.3275911
        %v6813 = vmul.f32 %v6749, 0.3275911
        %v6814 = vmul.f32 %v6750, 0.3275911
        %v6815 = vmul.f32 %v6751, 0.3275911
        %v6816 = vmul.f32 %v6752, 0.3275911
        %v6817 = vmul.f32 %v6753, 0.3275911
        %v6818 = vmul.f32 %v6754, 0.3275911
        %v6819 = vmul.f32 %v6755, 0.3275911
        %v6820 = vmul.f32 %v6756, 0.3275911
        %v6821 = vmul.f32 %v6757, 0.3275911
        %v6822 = vmul.f32 %v6758, 0.3275911
        %v6823 = vmul.f32 %v6759, 0.3275911
        %v6824 = vmul.f32 %v6760, 0.3275911
        %v6825 = vmul.f32 %v6761, 0.3275911
        %v6826 = vmul.f32 %v6762, 0.3275911
        %v6827 = vadd.f32 %v6763, 1.0
        %v6828 = vadd.f32 %v6764, 1.0
        %v6829 = vadd.f32 %v6765, 1.0
        %v6830 = vadd.f32 %v6766, 1.0
        %v6831 = vadd.f32 %v6767, 1.0
        %v6832 = vadd.f32 %v6768, 1.0
        %v6833 = vadd.f32 %v6769, 1.0
        %v6834 = vadd.f32 %v6770, 1.0
        %v6835 = vadd.f32 %v6771, 1.0
        %v6836 = vadd.f32 %v6772, 1.0
        %v6837 = vadd.f32 %v6773, 1.0
        %v6838 = vadd.f32 %v6774, 1.0
        %v6839 = vadd.f32 %v6775, 1.0
        %v6840 = vadd.f32 %v6776, 1.0
        %v6841 = vadd.f32 %v6777, 1.0
        %v6842 = vadd.f32 %v6778, 1.0
        %v6843 = vadd.f32 %v6779, 1.0
        %v6844 = vadd.f32 %v6780, 1.0
        %v6845 = vadd.f32 %v6781, 1.0
        %v6846 = vadd.f32 %v6782, 1.0
        %v6847 = vadd.f32 %v6783, 1.0
        %v6848 = vadd.f32 %v6784, 1.0
        %v6849 = vadd.f32 %v6785, 1.0
        %v6850 = vadd.f32 %v6786, 1.0
        %v6851 = vadd.f32 %v6787, 1.0
        %v6852 = vadd.f32 %v6788, 1.0
        %v6853 = vadd.f32 %v6789, 1.0
        %v6854 = vadd.f32 %v6790, 1.0
        %v6855 = vadd.f32 %v6791, 1.0
        %v6856 = vadd.f32 %v6792, 1.0
        %v6857 = vadd.f32 %v6793, 1.0
        %v6858 = vadd.f32 %v6794, 1.0
        %v6859 = vadd.f32 %v6795, 1.0
        %v6860 = vadd.f32 %v6796, 1.0
        %v6861 = vadd.f32 %v6797, 1.0
        %v6862 = vadd.f32 %v6798, 1.0
        %v6863 = vadd.f32 %v6799, 1.0
        %v6864 = vadd.f32 %v6800, 1.0
        %v6865 = vadd.f32 %v6801, 1.0
        %v6866 = vadd.f32 %v6802, 1.0
        %v6867 = vadd.f32 %v6803, 1.0
        %v6868 = vadd.f32 %v6804, 1.0
        %v6869 = vadd.f32 %v6805, 1.0
        %v6870 = vadd.f32 %v6806, 1.0
        %v6871 = vadd.f32 %v6807, 1.0
        %v6872 = vadd.f32 %v6808, 1.0
        %v6873 = vadd.f32 %v6809, 1.0
        %v6874 = vadd.f32 %v6810, 1.0
        %v6875 = vadd.f32 %v6811, 1.0
        %v6876 = vadd.f32 %v6812, 1.0
        %v6877 = vadd.f32 %v6813, 1.0
        %v6878 = vadd.f32 %v6814, 1.0
        %v6879 = vadd.f32 %v6815, 1.0
        %v6880 = vadd.f32 %v6816, 1.0
        %v6881 = vadd.f32 %v6817, 1.0
        %v6882 = vadd.f32 %v6818, 1.0
        %v6883 = vadd.f32 %v6819, 1.0
        %v6884 = vadd.f32 %v6820, 1.0
        %v6885 = vadd.f32 %v6821, 1.0
        %v6886 = vadd.f32 %v6822, 1.0
        %v6887 = vadd.f32 %v6823, 1.0
        %v6888 = vadd.f32 %v6824, 1.0
        %v6889 = vadd.f32 %v6825, 1.0
        %v6890 = vadd.f32 %v6826, 1.0
        %v6891 = vrcp.pop %v6827
        %v6892 = vmul.f32 1.0, %v6891
        %v6893 = vrcp.pop %v6828
        %v6894 = vmul.f32 1.0, %v6893
        %v6895 = vrcp.pop %v6829
        %v6896 = vmul.f32 1.0, %v6895
        %v6897 = vrcp.pop %v6830
        %v6898 = vmul.f32 1.0, %v6897
        %v6899 = vrcp.pop %v6831
        %v6900 = vmul.f32 1.0, %v6899
        %v6901 = vrcp.pop %v6832
        %v6902 = vmul.f32 1.0, %v6901
        %v6903 = vrcp.pop %v6833
        %v6904 = vmul.f32 1.0, %v6903
        %v6905 = vrcp.pop %v6834
        %v6906 = vmul.f32 1.0, %v6905
        %v6907 = vrcp.pop %v6835
        %v6908 = vmul.f32 1.0, %v6907
        %v6909 = vrcp.pop %v6836
        %v6910 = vmul.f32 1.0, %v6909
        %v6911 = vrcp.pop %v6837
        %v6912 = vmul.f32 1.0, %v6911
        %v6913 = vrcp.pop %v6838
        %v6914 = vmul.f32 1.0, %v6913
        %v6915 = vrcp.pop %v6839
        %v6916 = vmul.f32 1.0, %v6915
        %v6917 = vrcp.pop %v6840
        %v6918 = vmul.f32 1.0, %v6917
        %v6919 = vrcp.pop %v6841
        %v6920 = vmul.f32 1.0, %v6919
        %v6921 = vrcp.pop %v6842
        %v6922 = vmul.f32 1.0, %v6921
        %v6923 = vrcp.pop %v6843
        %v6924 = vmul.f32 1.0, %v6923
        %v6925 = vrcp.pop %v6844
        %v6926 = vmul.f32 1.0, %v6925
        %v6927 = vrcp.pop %v6845
        %v6928 = vmul.f32 1.0, %v6927
        %v6929 = vrcp.pop %v6846
        %v6930 = vmul.f32 1.0, %v6929
        %v6931 = vrcp.pop %v6847
        %v6932 = vmul.f32 1.0, %v6931
        %v6933 = vrcp.pop %v6848
        %v6934 = vmul.f32 1.0, %v6933
        %v6935 = vrcp.pop %v6849
        %v6936 = vmul.f32 1.0, %v6935
        %v6937 = vrcp.pop %v6850
        %v6938 = vmul.f32 1.0, %v6937
        %v6939 = vrcp.pop %v6851
        %v6940 = vmul.f32 1.0, %v6939
        %v6941 = vrcp.pop %v6852
        %v6942 = vmul.f32 1.0, %v6941
        %v6943 = vrcp.pop %v6853
        %v6944 = vmul.f32 1.0, %v6943
        %v6945 = vrcp.pop %v6854
        %v6946 = vmul.f32 1.0, %v6945
        %v6947 = vrcp.pop %v6855
        %v6948 = vmul.f32 1.0, %v6947
        %v6949 = vrcp.pop %v6856
        %v6950 = vmul.f32 1.0, %v6949
        %v6951 = vrcp.pop %v6857
        %v6952 = vmul.f32 1.0, %v6951
        %v6953 = vrcp.pop %v6858
        %v6954 = vmul.f32 1.0, %v6953
        %v6955 = vrcp.pop %v6859
        %v6956 = vmul.f32 1.0, %v6955
        %v6957 = vrcp.pop %v6860
        %v6958 = vmul.f32 1.0, %v6957
        %v6959 = vrcp.pop %v6861
        %v6960 = vmul.f32 1.0, %v6959
        %v6961 = vrcp.pop %v6862
        %v6962 = vmul.f32 1.0, %v6961
        %v6963 = vrcp.pop %v6863
        %v6964 = vmul.f32 1.0, %v6963
        %v6965 = vrcp.pop %v6864
        %v6966 = vmul.f32 1.0, %v6965
        %v6967 = vrcp.pop %v6865
        %v6968 = vmul.f32 1.0, %v6967
        %v6969 = vrcp.pop %v6866
        %v6970 = vmul.f32 1.0, %v6969
        %v6971 = vrcp.pop %v6867
        %v6972 = vmul.f32 1.0, %v6971
        %v6973 = vrcp.pop %v6868
        %v6974 = vmul.f32 1.0, %v6973
        %v6975 = vrcp.pop %v6869
        %v6976 = vmul.f32 1.0, %v6975
        %v6977 = vrcp.pop %v6870
        %v6978 = vmul.f32 1.0, %v6977
        %v6979 = vrcp.pop %v6871
        %v6980 = vmul.f32 1.0, %v6979
        %v6981 = vrcp.pop %v6872
        %v6982 = vmul.f32 1.0, %v6981
        %v6983 = vrcp.pop %v6873
        %v6984 = vmul.f32 1.0, %v6983
        %v6985 = vrcp.pop %v6874
        %v6986 = vmul.f32 1.0, %v6985
        %v6987 = vrcp.pop %v6875
        %v6988 = vmul.f32 1.0, %v6987
        %v6989 = vrcp.pop %v6876
        %v6990 = vmul.f32 1.0, %v6989
        %v6991 = vrcp.pop %v6877
        %v6992 = vmul.f32 1.0, %v6991
        %v6993 = vrcp.pop %v6878
        %v6994 = vmul.f32 1.0, %v6993
        %v6995 = vrcp.pop %v6879
        %v6996 = vmul.f32 1.0, %v6995
        %v6997 = vrcp.pop %v6880
        %v6998 = vmul.f32 1.0, %v6997
        %v6999 = vrcp.pop %v6881
        %v7000 = vmul.f32 1.0, %v6999
        %v7001 = vrcp.pop %v6882
        %v7002 = vmul.f32 1.0, %v7001
        %v7003 = vrcp.pop %v6883
        %v7004 = vmul.f32 1.0, %v7003
        %v7005 = vrcp.pop %v6884
        %v7006 = vmul.f32 1.0, %v7005
        %v7007 = vrcp.pop %v6885
        %v7008 = vmul.f32 1.0, %v7007
        %v7009 = vrcp.pop %v6886
        %v7010 = vmul.f32 1.0, %v7009
        %v7011 = vrcp.pop %v6887
        %v7012 = vmul.f32 1.0, %v7011
        %v7013 = vrcp.pop %v6888
        %v7014 = vmul.f32 1.0, %v7013
        %v7015 = vrcp.pop %v6889
        %v7016 = vmul.f32 1.0, %v7015
        %v7017 = vrcp.pop %v6890
        %v7018 = vmul.f32 1.0, %v7017
        %v7019 = vmul.f32 %v6892, 0.5307027
        %v7020 = vmul.f32 %v6894, 0.5307027
        %v7021 = vmul.f32 %v6896, 0.5307027
        %v7022 = vmul.f32 %v6898, 0.5307027
        %v7023 = vmul.f32 %v6900, 0.5307027
        %v7024 = vmul.f32 %v6902, 0.5307027
        %v7025 = vmul.f32 %v6904, 0.5307027
        %v7026 = vmul.f32 %v6906, 0.5307027
        %v7027 = vmul.f32 %v6908, 0.5307027
        %v7028 = vmul.f32 %v6910, 0.5307027
        %v7029 = vmul.f32 %v6912, 0.5307027
        %v7030 = vmul.f32 %v6914, 0.5307027
        %v7031 = vmul.f32 %v6916, 0.5307027
        %v7032 = vmul.f32 %v6918, 0.5307027
        %v7033 = vmul.f32 %v6920, 0.5307027
        %v7034 = vmul.f32 %v6922, 0.5307027
        %v7035 = vmul.f32 %v6924, 0.5307027
        %v7036 = vmul.f32 %v6926, 0.5307027
        %v7037 = vmul.f32 %v6928, 0.5307027
        %v7038 = vmul.f32 %v6930, 0.5307027
        %v7039 = vmul.f32 %v6932, 0.5307027
        %v7040 = vmul.f32 %v6934, 0.5307027
        %v7041 = vmul.f32 %v6936, 0.5307027
        %v7042 = vmul.f32 %v6938, 0.5307027
        %v7043 = vmul.f32 %v6940, 0.5307027
        %v7044 = vmul.f32 %v6942, 0.5307027
        %v7045 = vmul.f32 %v6944, 0.5307027
        %v7046 = vmul.f32 %v6946, 0.5307027
        %v7047 = vmul.f32 %v6948, 0.5307027
        %v7048 = vmul.f32 %v6950, 0.5307027
        %v7049 = vmul.f32 %v6952, 0.5307027
        %v7050 = vmul.f32 %v6954, 0.5307027
        %v7051 = vmul.f32 %v6956, 0.5307027
        %v7052 = vmul.f32 %v6958, 0.5307027
        %v7053 = vmul.f32 %v6960, 0.5307027
        %v7054 = vmul.f32 %v6962, 0.5307027
        %v7055 = vmul.f32 %v6964, 0.5307027
        %v7056 = vmul.f32 %v6966, 0.5307027
        %v7057 = vmul.f32 %v6968, 0.5307027
        %v7058 = vmul.f32 %v6970, 0.5307027
        %v7059 = vmul.f32 %v6972, 0.5307027
        %v7060 = vmul.f32 %v6974, 0.5307027
        %v7061 = vmul.f32 %v6976, 0.5307027
        %v7062 = vmul.f32 %v6978, 0.5307027
        %v7063 = vmul.f32 %v6980, 0.5307027
        %v7064 = vmul.f32 %v6982, 0.5307027
        %v7065 = vmul.f32 %v6984, 0.5307027
        %v7066 = vmul.f32 %v6986, 0.5307027
        %v7067 = vmul.f32 %v6988, 0.5307027
        %v7068 = vmul.f32 %v6990, 0.5307027
        %v7069 = vmul.f32 %v6992, 0.5307027
        %v7070 = vmul.f32 %v6994, 0.5307027
        %v7071 = vmul.f32 %v6996, 0.5307027
        %v7072 = vmul.f32 %v6998, 0.5307027
        %v7073 = vmul.f32 %v7000, 0.5307027
        %v7074 = vmul.f32 %v7002, 0.5307027
        %v7075 = vmul.f32 %v7004, 0.5307027
        %v7076 = vmul.f32 %v7006, 0.5307027
        %v7077 = vmul.f32 %v7008, 0.5307027
        %v7078 = vmul.f32 %v7010, 0.5307027
        %v7079 = vmul.f32 %v7012, 0.5307027
        %v7080 = vmul.f32 %v7014, 0.5307027
        %v7081 = vmul.f32 %v7016, 0.5307027
        %v7082 = vmul.f32 %v7018, 0.5307027
        %v7083 = vadd.f32 %v7019, -0.72657603
        %v7084 = vadd.f32 %v7020, -0.72657603
        %v7085 = vadd.f32 %v7021, -0.72657603
        %v7086 = vadd.f32 %v7022, -0.72657603
        %v7087 = vadd.f32 %v7023, -0.72657603
        %v7088 = vadd.f32 %v7024, -0.72657603
        %v7089 = vadd.f32 %v7025, -0.72657603
        %v7090 = vadd.f32 %v7026, -0.72657603
        %v7091 = vadd.f32 %v7027, -0.72657603
        %v7092 = vadd.f32 %v7028, -0.72657603
        %v7093 = vadd.f32 %v7029, -0.72657603
        %v7094 = vadd.f32 %v7030, -0.72657603
        %v7095 = vadd.f32 %v7031, -0.72657603
        %v7096 = vadd.f32 %v7032, -0.72657603
        %v7097 = vadd.f32 %v7033, -0.72657603
        %v7098 = vadd.f32 %v7034, -0.72657603
        %v7099 = vadd.f32 %v7035, -0.72657603
        %v7100 = vadd.f32 %v7036, -0.72657603
        %v7101 = vadd.f32 %v7037, -0.72657603
        %v7102 = vadd.f32 %v7038, -0.72657603
        %v7103 = vadd.f32 %v7039, -0.72657603
        %v7104 = vadd.f32 %v7040, -0.72657603
        %v7105 = vadd.f32 %v7041, -0.72657603
        %v7106 = vadd.f32 %v7042, -0.72657603
        %v7107 = vadd.f32 %v7043, -0.72657603
        %v7108 = vadd.f32 %v7044, -0.72657603
        %v7109 = vadd.f32 %v7045, -0.72657603
        %v7110 = vadd.f32 %v7046, -0.72657603
        %v7111 = vadd.f32 %v7047, -0.72657603
        %v7112 = vadd.f32 %v7048, -0.72657603
        %v7113 = vadd.f32 %v7049, -0.72657603
        %v7114 = vadd.f32 %v7050, -0.72657603
        %v7115 = vadd.f32 %v7051, -0.72657603
        %v7116 = vadd.f32 %v7052, -0.72657603
        %v7117 = vadd.f32 %v7053, -0.72657603
        %v7118 = vadd.f32 %v7054, -0.72657603
        %v7119 = vadd.f32 %v7055, -0.72657603
        %v7120 = vadd.f32 %v7056, -0.72657603
        %v7121 = vadd.f32 %v7057, -0.72657603
        %v7122 = vadd.f32 %v7058, -0.72657603
        %v7123 = vadd.f32 %v7059, -0.72657603
        %v7124 = vadd.f32 %v7060, -0.72657603
        %v7125 = vadd.f32 %v7061, -0.72657603
        %v7126 = vadd.f32 %v7062, -0.72657603
        %v7127 = vadd.f32 %v7063, -0.72657603
        %v7128 = vadd.f32 %v7064, -0.72657603
        %v7129 = vadd.f32 %v7065, -0.72657603
        %v7130 = vadd.f32 %v7066, -0.72657603
        %v7131 = vadd.f32 %v7067, -0.72657603
        %v7132 = vadd.f32 %v7068, -0.72657603
        %v7133 = vadd.f32 %v7069, -0.72657603
        %v7134 = vadd.f32 %v7070, -0.72657603
        %v7135 = vadd.f32 %v7071, -0.72657603
        %v7136 = vadd.f32 %v7072, -0.72657603
        %v7137 = vadd.f32 %v7073, -0.72657603
        %v7138 = vadd.f32 %v7074, -0.72657603
        %v7139 = vadd.f32 %v7075, -0.72657603
        %v7140 = vadd.f32 %v7076, -0.72657603
        %v7141 = vadd.f32 %v7077, -0.72657603
        %v7142 = vadd.f32 %v7078, -0.72657603
        %v7143 = vadd.f32 %v7079, -0.72657603
        %v7144 = vadd.f32 %v7080, -0.72657603
        %v7145 = vadd.f32 %v7081, -0.72657603
        %v7146 = vadd.f32 %v7082, -0.72657603
        %v7147 = vmul.f32 %v7083, %v6892
        %v7148 = vmul.f32 %v7084, %v6894
        %v7149 = vmul.f32 %v7085, %v6896
        %v7150 = vmul.f32 %v7086, %v6898
        %v7151 = vmul.f32 %v7087, %v6900
        %v7152 = vmul.f32 %v7088, %v6902
        %v7153 = vmul.f32 %v7089, %v6904
        %v7154 = vmul.f32 %v7090, %v6906
        %v7155 = vmul.f32 %v7091, %v6908
        %v7156 = vmul.f32 %v7092, %v6910
        %v7157 = vmul.f32 %v7093, %v6912
        %v7158 = vmul.f32 %v7094, %v6914
        %v7159 = vmul.f32 %v7095, %v6916
        %v7160 = vmul.f32 %v7096, %v6918
        %v7161 = vmul.f32 %v7097, %v6920
        %v7162 = vmul.f32 %v7098, %v6922
        %v7163 = vmul.f32 %v7099, %v6924
        %v7164 = vmul.f32 %v7100, %v6926
        %v7165 = vmul.f32 %v7101, %v6928
        %v7166 = vmul.f32 %v7102, %v6930
        %v7167 = vmul.f32 %v7103, %v6932
        %v7168 = vmul.f32 %v7104, %v6934
        %v7169 = vmul.f32 %v7105, %v6936
        %v7170 = vmul.f32 %v7106, %v6938
        %v7171 = vmul.f32 %v7107, %v6940
        %v7172 = vmul.f32 %v7108, %v6942
        %v7173 = vmul.f32 %v7109, %v6944
        %v7174 = vmul.f32 %v7110, %v6946
        %v7175 = vmul.f32 %v7111, %v6948
        %v7176 = vmul.f32 %v7112, %v6950
        %v7177 = vmul.f32 %v7113, %v6952
        %v7178 = vmul.f32 %v7114, %v6954
        %v7179 = vmul.f32 %v7115, %v6956
        %v7180 = vmul.f32 %v7116, %v6958
        %v7181 = vmul.f32 %v7117, %v6960
        %v7182 = vmul.f32 %v7118, %v6962
        %v7183 = vmul.f32 %v7119, %v6964
        %v7184 = vmul.f32 %v7120, %v6966
        %v7185 = vmul.f32 %v7121, %v6968
        %v7186 = vmul.f32 %v7122, %v6970
        %v7187 = vmul.f32 %v7123, %v6972
        %v7188 = vmul.f32 %v7124, %v6974
        %v7189 = vmul.f32 %v7125, %v6976
        %v7190 = vmul.f32 %v7126, %v6978
        %v7191 = vmul.f32 %v7127, %v6980
        %v7192 = vmul.f32 %v7128, %v6982
        %v7193 = vmul.f32 %v7129, %v6984
        %v7194 = vmul.f32 %v7130, %v6986
        %v7195 = vmul.f32 %v7131, %v6988
        %v7196 = vmul.f32 %v7132, %v6990
        %v7197 = vmul.f32 %v7133, %v6992
        %v7198 = vmul.f32 %v7134, %v6994
        %v7199 = vmul.f32 %v7135, %v6996
        %v7200 = vmul.f32 %v7136, %v6998
        %v7201 = vmul.f32 %v7137, %v7000
        %v7202 = vmul.f32 %v7138, %v7002
        %v7203 = vmul.f32 %v7139, %v7004
        %v7204 = vmul.f32 %v7140, %v7006
        %v7205 = vmul.f32 %v7141, %v7008
        %v7206 = vmul.f32 %v7142, %v7010
        %v7207 = vmul.f32 %v7143, %v7012
        %v7208 = vmul.f32 %v7144, %v7014
        %v7209 = vmul.f32 %v7145, %v7016
        %v7210 = vmul.f32 %v7146, %v7018
        %v7211 = vadd.f32 %v7147, 0.7107069
        %v7212 = vadd.f32 %v7148, 0.7107069
        %v7213 = vadd.f32 %v7149, 0.7107069
        %v7214 = vadd.f32 %v7150, 0.7107069
        %v7215 = vadd.f32 %v7151, 0.7107069
        %v7216 = vadd.f32 %v7152, 0.7107069
        %v7217 = vadd.f32 %v7153, 0.7107069
        %v7218 = vadd.f32 %v7154, 0.7107069
        %v7219 = vadd.f32 %v7155, 0.7107069
        %v7220 = vadd.f32 %v7156, 0.7107069
        %v7221 = vadd.f32 %v7157, 0.7107069
        %v7222 = vadd.f32 %v7158, 0.7107069
        %v7223 = vadd.f32 %v7159, 0.7107069
        %v7224 = vadd.f32 %v7160, 0.7107069
        %v7225 = vadd.f32 %v7161, 0.7107069
        %v7226 = vadd.f32 %v7162, 0.7107069
        %v7227 = vadd.f32 %v7163, 0.7107069
        %v7228 = vadd.f32 %v7164, 0.7107069
        %v7229 = vadd.f32 %v7165, 0.7107069
        %v7230 = vadd.f32 %v7166, 0.7107069
        %v7231 = vadd.f32 %v7167, 0.7107069
        %v7232 = vadd.f32 %v7168, 0.7107069
        %v7233 = vadd.f32 %v7169, 0.7107069
        %v7234 = vadd.f32 %v7170, 0.7107069
        %v7235 = vadd.f32 %v7171, 0.7107069
        %v7236 = vadd.f32 %v7172, 0.7107069
        %v7237 = vadd.f32 %v7173, 0.7107069
        %v7238 = vadd.f32 %v7174, 0.7107069
        %v7239 = vadd.f32 %v7175, 0.7107069
        %v7240 = vadd.f32 %v7176, 0.7107069
        %v7241 = vadd.f32 %v7177, 0.7107069
        %v7242 = vadd.f32 %v7178, 0.7107069
        %v7243 = vadd.f32 %v7179, 0.7107069
        %v7244 = vadd.f32 %v7180, 0.7107069
        %v7245 = vadd.f32 %v7181, 0.7107069
        %v7246 = vadd.f32 %v7182, 0.7107069
        %v7247 = vadd.f32 %v7183, 0.7107069
        %v7248 = vadd.f32 %v7184, 0.7107069
        %v7249 = vadd.f32 %v7185, 0.7107069
        %v7250 = vadd.f32 %v7186, 0.7107069
        %v7251 = vadd.f32 %v7187, 0.7107069
        %v7252 = vadd.f32 %v7188, 0.7107069
        %v7253 = vadd.f32 %v7189, 0.7107069
        %v7254 = vadd.f32 %v7190, 0.7107069
        %v7255 = vadd.f32 %v7191, 0.7107069
        %v7256 = vadd.f32 %v7192, 0.7107069
        %v7257 = vadd.f32 %v7193, 0.7107069
        %v7258 = vadd.f32 %v7194, 0.7107069
        %v7259 = vadd.f32 %v7195, 0.7107069
        %v7260 = vadd.f32 %v7196, 0.7107069
        %v7261 = vadd.f32 %v7197, 0.7107069
        %v7262 = vadd.f32 %v7198, 0.7107069
        %v7263 = vadd.f32 %v7199, 0.7107069
        %v7264 = vadd.f32 %v7200, 0.7107069
        %v7265 = vadd.f32 %v7201, 0.7107069
        %v7266 = vadd.f32 %v7202, 0.7107069
        %v7267 = vadd.f32 %v7203, 0.7107069
        %v7268 = vadd.f32 %v7204, 0.7107069
        %v7269 = vadd.f32 %v7205, 0.7107069
        %v7270 = vadd.f32 %v7206, 0.7107069
        %v7271 = vadd.f32 %v7207, 0.7107069
        %v7272 = vadd.f32 %v7208, 0.7107069
        %v7273 = vadd.f32 %v7209, 0.7107069
        %v7274 = vadd.f32 %v7210, 0.7107069
        %v7275 = vmul.f32 %v7211, %v6892
        %v7276 = vmul.f32 %v7212, %v6894
        %v7277 = vmul.f32 %v7213, %v6896
        %v7278 = vmul.f32 %v7214, %v6898
        %v7279 = vmul.f32 %v7215, %v6900
        %v7280 = vmul.f32 %v7216, %v6902
        %v7281 = vmul.f32 %v7217, %v6904
        %v7282 = vmul.f32 %v7218, %v6906
        %v7283 = vmul.f32 %v7219, %v6908
        %v7284 = vmul.f32 %v7220, %v6910
        %v7285 = vmul.f32 %v7221, %v6912
        %v7286 = vmul.f32 %v7222, %v6914
        %v7287 = vmul.f32 %v7223, %v6916
        %v7288 = vmul.f32 %v7224, %v6918
        %v7289 = vmul.f32 %v7225, %v6920
        %v7290 = vmul.f32 %v7226, %v6922
        %v7291 = vmul.f32 %v7227, %v6924
        %v7292 = vmul.f32 %v7228, %v6926
        %v7293 = vmul.f32 %v7229, %v6928
        %v7294 = vmul.f32 %v7230, %v6930
        %v7295 = vmul.f32 %v7231, %v6932
        %v7296 = vmul.f32 %v7232, %v6934
        %v7297 = vmul.f32 %v7233, %v6936
        %v7298 = vmul.f32 %v7234, %v6938
        %v7299 = vmul.f32 %v7235, %v6940
        %v7300 = vmul.f32 %v7236, %v6942
        %v7301 = vmul.f32 %v7237, %v6944
        %v7302 = vmul.f32 %v7238, %v6946
        %v7303 = vmul.f32 %v7239, %v6948
        %v7304 = vmul.f32 %v7240, %v6950
        %v7305 = vmul.f32 %v7241, %v6952
        %v7306 = vmul.f32 %v7242, %v6954
        %v7307 = vmul.f32 %v7243, %v6956
        %v7308 = vmul.f32 %v7244, %v6958
        %v7309 = vmul.f32 %v7245, %v6960
        %v7310 = vmul.f32 %v7246, %v6962
        %v7311 = vmul.f32 %v7247, %v6964
        %v7312 = vmul.f32 %v7248, %v6966
        %v7313 = vmul.f32 %v7249, %v6968
        %v7314 = vmul.f32 %v7250, %v6970
        %v7315 = vmul.f32 %v7251, %v6972
        %v7316 = vmul.f32 %v7252, %v6974
        %v7317 = vmul.f32 %v7253, %v6976
        %v7318 = vmul.f32 %v7254, %v6978
        %v7319 = vmul.f32 %v7255, %v6980
        %v7320 = vmul.f32 %v7256, %v6982
        %v7321 = vmul.f32 %v7257, %v6984
        %v7322 = vmul.f32 %v7258, %v6986
        %v7323 = vmul.f32 %v7259, %v6988
        %v7324 = vmul.f32 %v7260, %v6990
        %v7325 = vmul.f32 %v7261, %v6992
        %v7326 = vmul.f32 %v7262, %v6994
        %v7327 = vmul.f32 %v7263, %v6996
        %v7328 = vmul.f32 %v7264, %v6998
        %v7329 = vmul.f32 %v7265, %v7000
        %v7330 = vmul.f32 %v7266, %v7002
        %v7331 = vmul.f32 %v7267, %v7004
        %v7332 = vmul.f32 %v7268, %v7006
        %v7333 = vmul.f32 %v7269, %v7008
        %v7334 = vmul.f32 %v7270, %v7010
        %v7335 = vmul.f32 %v7271, %v7012
        %v7336 = vmul.f32 %v7272, %v7014
        %v7337 = vmul.f32 %v7273, %v7016
        %v7338 = vmul.f32 %v7274, %v7018
        %v7339 = vadd.f32 %v7275, -0.14224836
        %v7340 = vadd.f32 %v7276, -0.14224836
        %v7341 = vadd.f32 %v7277, -0.14224836
        %v7342 = vadd.f32 %v7278, -0.14224836
        %v7343 = vadd.f32 %v7279, -0.14224836
        %v7344 = vadd.f32 %v7280, -0.14224836
        %v7345 = vadd.f32 %v7281, -0.14224836
        %v7346 = vadd.f32 %v7282, -0.14224836
        %v7347 = vadd.f32 %v7283, -0.14224836
        %v7348 = vadd.f32 %v7284, -0.14224836
        %v7349 = vadd.f32 %v7285, -0.14224836
        %v7350 = vadd.f32 %v7286, -0.14224836
        %v7351 = vadd.f32 %v7287, -0.14224836
        %v7352 = vadd.f32 %v7288, -0.14224836
        %v7353 = vadd.f32 %v7289, -0.14224836
        %v7354 = vadd.f32 %v7290, -0.14224836
        %v7355 = vadd.f32 %v7291, -0.14224836
        %v7356 = vadd.f32 %v7292, -0.14224836
        %v7357 = vadd.f32 %v7293, -0.14224836
        %v7358 = vadd.f32 %v7294, -0.14224836
        %v7359 = vadd.f32 %v7295, -0.14224836
        %v7360 = vadd.f32 %v7296, -0.14224836
        %v7361 = vadd.f32 %v7297, -0.14224836
        %v7362 = vadd.f32 %v7298, -0.14224836
        %v7363 = vadd.f32 %v7299, -0.14224836
        %v7364 = vadd.f32 %v7300, -0.14224836
        %v7365 = vadd.f32 %v7301, -0.14224836
        %v7366 = vadd.f32 %v7302, -0.14224836
        %v7367 = vadd.f32 %v7303, -0.14224836
        %v7368 = vadd.f32 %v7304, -0.14224836
        %v7369 = vadd.f32 %v7305, -0.14224836
        %v7370 = vadd.f32 %v7306, -0.14224836
        %v7371 = vadd.f32 %v7307, -0.14224836
        %v7372 = vadd.f32 %v7308, -0.14224836
        %v7373 = vadd.f32 %v7309, -0.14224836
        %v7374 = vadd.f32 %v7310, -0.14224836
        %v7375 = vadd.f32 %v7311, -0.14224836
        %v7376 = vadd.f32 %v7312, -0.14224836
        %v7377 = vadd.f32 %v7313, -0.14224836
        %v7378 = vadd.f32 %v7314, -0.14224836
        %v7379 = vadd.f32 %v7315, -0.14224836
        %v7380 = vadd.f32 %v7316, -0.14224836
        %v7381 = vadd.f32 %v7317, -0.14224836
        %v7382 = vadd.f32 %v7318, -0.14224836
        %v7383 = vadd.f32 %v7319, -0.14224836
        %v7384 = vadd.f32 %v7320, -0.14224836
        %v7385 = vadd.f32 %v7321, -0.14224836
        %v7386 = vadd.f32 %v7322, -0.14224836
        %v7387 = vadd.f32 %v7323, -0.14224836
        %v7388 = vadd.f32 %v7324, -0.14224836
        %v7389 = vadd.f32 %v7325, -0.14224836
        %v7390 = vadd.f32 %v7326, -0.14224836
        %v7391 = vadd.f32 %v7327, -0.14224836
        %v7392 = vadd.f32 %v7328, -0.14224836
        %v7393 = vadd.f32 %v7329, -0.14224836
        %v7394 = vadd.f32 %v7330, -0.14224836
        %v7395 = vadd.f32 %v7331, -0.14224836
        %v7396 = vadd.f32 %v7332, -0.14224836
        %v7397 = vadd.f32 %v7333, -0.14224836
        %v7398 = vadd.f32 %v7334, -0.14224836
        %v7399 = vadd.f32 %v7335, -0.14224836
        %v7400 = vadd.f32 %v7336, -0.14224836
        %v7401 = vadd.f32 %v7337, -0.14224836
        %v7402 = vadd.f32 %v7338, -0.14224836
        %v7403 = vmul.f32 %v7339, %v6892
        %v7404 = vmul.f32 %v7340, %v6894
        %v7405 = vmul.f32 %v7341, %v6896
        %v7406 = vmul.f32 %v7342, %v6898
        %v7407 = vmul.f32 %v7343, %v6900
        %v7408 = vmul.f32 %v7344, %v6902
        %v7409 = vmul.f32 %v7345, %v6904
        %v7410 = vmul.f32 %v7346, %v6906
        %v7411 = vmul.f32 %v7347, %v6908
        %v7412 = vmul.f32 %v7348, %v6910
        %v7413 = vmul.f32 %v7349, %v6912
        %v7414 = vmul.f32 %v7350, %v6914
        %v7415 = vmul.f32 %v7351, %v6916
        %v7416 = vmul.f32 %v7352, %v6918
        %v7417 = vmul.f32 %v7353, %v6920
        %v7418 = vmul.f32 %v7354, %v6922
        %v7419 = vmul.f32 %v7355, %v6924
        %v7420 = vmul.f32 %v7356, %v6926
        %v7421 = vmul.f32 %v7357, %v6928
        %v7422 = vmul.f32 %v7358, %v6930
        %v7423 = vmul.f32 %v7359, %v6932
        %v7424 = vmul.f32 %v7360, %v6934
        %v7425 = vmul.f32 %v7361, %v6936
        %v7426 = vmul.f32 %v7362, %v6938
        %v7427 = vmul.f32 %v7363, %v6940
        %v7428 = vmul.f32 %v7364, %v6942
        %v7429 = vmul.f32 %v7365, %v6944
        %v7430 = vmul.f32 %v7366, %v6946
        %v7431 = vmul.f32 %v7367, %v6948
        %v7432 = vmul.f32 %v7368, %v6950
        %v7433 = vmul.f32 %v7369, %v6952
        %v7434 = vmul.f32 %v7370, %v6954
        %v7435 = vmul.f32 %v7371, %v6956
        %v7436 = vmul.f32 %v7372, %v6958
        %v7437 = vmul.f32 %v7373, %v6960
        %v7438 = vmul.f32 %v7374, %v6962
        %v7439 = vmul.f32 %v7375, %v6964
        %v7440 = vmul.f32 %v7376, %v6966
        %v7441 = vmul.f32 %v7377, %v6968
        %v7442 = vmul.f32 %v7378, %v6970
        %v7443 = vmul.f32 %v7379, %v6972
        %v7444 = vmul.f32 %v7380, %v6974
        %v7445 = vmul.f32 %v7381, %v6976
        %v7446 = vmul.f32 %v7382, %v6978
        %v7447 = vmul.f32 %v7383, %v6980
        %v7448 = vmul.f32 %v7384, %v6982
        %v7449 = vmul.f32 %v7385, %v6984
        %v7450 = vmul.f32 %v7386, %v6986
        %v7451 = vmul.f32 %v7387, %v6988
        %v7452 = vmul.f32 %v7388, %v6990
        %v7453 = vmul.f32 %v7389, %v6992
        %v7454 = vmul.f32 %v7390, %v6994
        %v7455 = vmul.f32 %v7391, %v6996
        %v7456 = vmul.f32 %v7392, %v6998
        %v7457 = vmul.f32 %v7393, %v7000
        %v7458 = vmul.f32 %v7394, %v7002
        %v7459 = vmul.f32 %v7395, %v7004
        %v7460 = vmul.f32 %v7396, %v7006
        %v7461 = vmul.f32 %v7397, %v7008
        %v7462 = vmul.f32 %v7398, %v7010
        %v7463 = vmul.f32 %v7399, %v7012
        %v7464 = vmul.f32 %v7400, %v7014
        %v7465 = vmul.f32 %v7401, %v7016
        %v7466 = vmul.f32 %v7402, %v7018
        %v7467 = vadd.f32 %v7403, 0.1274148
        %v7468 = vadd.f32 %v7404, 0.1274148
        %v7469 = vadd.f32 %v7405, 0.1274148
        %v7470 = vadd.f32 %v7406, 0.1274148
        %v7471 = vadd.f32 %v7407, 0.1274148
        %v7472 = vadd.f32 %v7408, 0.1274148
        %v7473 = vadd.f32 %v7409, 0.1274148
        %v7474 = vadd.f32 %v7410, 0.1274148
        %v7475 = vadd.f32 %v7411, 0.1274148
        %v7476 = vadd.f32 %v7412, 0.1274148
        %v7477 = vadd.f32 %v7413, 0.1274148
        %v7478 = vadd.f32 %v7414, 0.1274148
        %v7479 = vadd.f32 %v7415, 0.1274148
        %v7480 = vadd.f32 %v7416, 0.1274148
        %v7481 = vadd.f32 %v7417, 0.1274148
        %v7482 = vadd.f32 %v7418, 0.1274148
        %v7483 = vadd.f32 %v7419, 0.1274148
        %v7484 = vadd.f32 %v7420, 0.1274148
        %v7485 = vadd.f32 %v7421, 0.1274148
        %v7486 = vadd.f32 %v7422, 0.1274148
        %v7487 = vadd.f32 %v7423, 0.1274148
        %v7488 = vadd.f32 %v7424, 0.1274148
        %v7489 = vadd.f32 %v7425, 0.1274148
        %v7490 = vadd.f32 %v7426, 0.1274148
        %v7491 = vadd.f32 %v7427, 0.1274148
        %v7492 = vadd.f32 %v7428, 0.1274148
        %v7493 = vadd.f32 %v7429, 0.1274148
        %v7494 = vadd.f32 %v7430, 0.1274148
        %v7495 = vadd.f32 %v7431, 0.1274148
        %v7496 = vadd.f32 %v7432, 0.1274148
        %v7497 = vadd.f32 %v7433, 0.1274148
        %v7498 = vadd.f32 %v7434, 0.1274148
        %v7499 = vadd.f32 %v7435, 0.1274148
        %v7500 = vadd.f32 %v7436, 0.1274148
        %v7501 = vadd.f32 %v7437, 0.1274148
        %v7502 = vadd.f32 %v7438, 0.1274148
        %v7503 = vadd.f32 %v7439, 0.1274148
        %v7504 = vadd.f32 %v7440, 0.1274148
        %v7505 = vadd.f32 %v7441, 0.1274148
        %v7506 = vadd.f32 %v7442, 0.1274148
        %v7507 = vadd.f32 %v7443, 0.1274148
        %v7508 = vadd.f32 %v7444, 0.1274148
        %v7509 = vadd.f32 %v7445, 0.1274148
        %v7510 = vadd.f32 %v7446, 0.1274148
        %v7511 = vadd.f32 %v7447, 0.1274148
        %v7512 = vadd.f32 %v7448, 0.1274148
        %v7513 = vadd.f32 %v7449, 0.1274148
        %v7514 = vadd.f32 %v7450, 0.1274148
        %v7515 = vadd.f32 %v7451, 0.1274148
        %v7516 = vadd.f32 %v7452, 0.1274148
        %v7517 = vadd.f32 %v7453, 0.1274148
        %v7518 = vadd.f32 %v7454, 0.1274148
        %v7519 = vadd.f32 %v7455, 0.1274148
        %v7520 = vadd.f32 %v7456, 0.1274148
        %v7521 = vadd.f32 %v7457, 0.1274148
        %v7522 = vadd.f32 %v7458, 0.1274148
        %v7523 = vadd.f32 %v7459, 0.1274148
        %v7524 = vadd.f32 %v7460, 0.1274148
        %v7525 = vadd.f32 %v7461, 0.1274148
        %v7526 = vadd.f32 %v7462, 0.1274148
        %v7527 = vadd.f32 %v7463, 0.1274148
        %v7528 = vadd.f32 %v7464, 0.1274148
        %v7529 = vadd.f32 %v7465, 0.1274148
        %v7530 = vadd.f32 %v7466, 0.1274148
        %v7531 = vmul.f32 %v7467, %v6892
        %v7532 = vmul.f32 %v7468, %v6894
        %v7533 = vmul.f32 %v7469, %v6896
        %v7534 = vmul.f32 %v7470, %v6898
        %v7535 = vmul.f32 %v7471, %v6900
        %v7536 = vmul.f32 %v7472, %v6902
        %v7537 = vmul.f32 %v7473, %v6904
        %v7538 = vmul.f32 %v7474, %v6906
        %v7539 = vmul.f32 %v7475, %v6908
        %v7540 = vmul.f32 %v7476, %v6910
        %v7541 = vmul.f32 %v7477, %v6912
        %v7542 = vmul.f32 %v7478, %v6914
        %v7543 = vmul.f32 %v7479, %v6916
        %v7544 = vmul.f32 %v7480, %v6918
        %v7545 = vmul.f32 %v7481, %v6920
        %v7546 = vmul.f32 %v7482, %v6922
        %v7547 = vmul.f32 %v7483, %v6924
        %v7548 = vmul.f32 %v7484, %v6926
        %v7549 = vmul.f32 %v7485, %v6928
        %v7550 = vmul.f32 %v7486, %v6930
        %v7551 = vmul.f32 %v7487, %v6932
        %v7552 = vmul.f32 %v7488, %v6934
        %v7553 = vmul.f32 %v7489, %v6936
        %v7554 = vmul.f32 %v7490, %v6938
        %v7555 = vmul.f32 %v7491, %v6940
        %v7556 = vmul.f32 %v7492, %v6942
        %v7557 = vmul.f32 %v7493, %v6944
        %v7558 = vmul.f32 %v7494, %v6946
        %v7559 = vmul.f32 %v7495, %v6948
        %v7560 = vmul.f32 %v7496, %v6950
        %v7561 = vmul.f32 %v7497, %v6952
        %v7562 = vmul.f32 %v7498, %v6954
        %v7563 = vmul.f32 %v7499, %v6956
        %v7564 = vmul.f32 %v7500, %v6958
        %v7565 = vmul.f32 %v7501, %v6960
        %v7566 = vmul.f32 %v7502, %v6962
        %v7567 = vmul.f32 %v7503, %v6964
        %v7568 = vmul.f32 %v7504, %v6966
        %v7569 = vmul.f32 %v7505, %v6968
        %v7570 = vmul.f32 %v7506, %v6970
        %v7571 = vmul.f32 %v7507, %v6972
        %v7572 = vmul.f32 %v7508, %v6974
        %v7573 = vmul.f32 %v7509, %v6976
        %v7574 = vmul.f32 %v7510, %v6978
        %v7575 = vmul.f32 %v7511, %v6980
        %v7576 = vmul.f32 %v7512, %v6982
        %v7577 = vmul.f32 %v7513, %v6984
        %v7578 = vmul.f32 %v7514, %v6986
        %v7579 = vmul.f32 %v7515, %v6988
        %v7580 = vmul.f32 %v7516, %v6990
        %v7581 = vmul.f32 %v7517, %v6992
        %v7582 = vmul.f32 %v7518, %v6994
        %v7583 = vmul.f32 %v7519, %v6996
        %v7584 = vmul.f32 %v7520, %v6998
        %v7585 = vmul.f32 %v7521, %v7000
        %v7586 = vmul.f32 %v7522, %v7002
        %v7587 = vmul.f32 %v7523, %v7004
        %v7588 = vmul.f32 %v7524, %v7006
        %v7589 = vmul.f32 %v7525, %v7008
        %v7590 = vmul.f32 %v7526, %v7010
        %v7591 = vmul.f32 %v7527, %v7012
        %v7592 = vmul.f32 %v7528, %v7014
        %v7593 = vmul.f32 %v7529, %v7016
        %v7594 = vmul.f32 %v7530, %v7018
        %v7595 = vsub.f32 0.0, %v6699
        %v7596 = vsub.f32 0.0, %v6700
        %v7597 = vsub.f32 0.0, %v6701
        %v7598 = vsub.f32 0.0, %v6702
        %v7599 = vsub.f32 0.0, %v6703
        %v7600 = vsub.f32 0.0, %v6704
        %v7601 = vsub.f32 0.0, %v6705
        %v7602 = vsub.f32 0.0, %v6706
        %v7603 = vsub.f32 0.0, %v6707
        %v7604 = vsub.f32 0.0, %v6708
        %v7605 = vsub.f32 0.0, %v6709
        %v7606 = vsub.f32 0.0, %v6710
        %v7607 = vsub.f32 0.0, %v6711
        %v7608 = vsub.f32 0.0, %v6712
        %v7609 = vsub.f32 0.0, %v6713
        %v7610 = vsub.f32 0.0, %v6714
        %v7611 = vsub.f32 0.0, %v6715
        %v7612 = vsub.f32 0.0, %v6716
        %v7613 = vsub.f32 0.0, %v6717
        %v7614 = vsub.f32 0.0, %v6718
        %v7615 = vsub.f32 0.0, %v6719
        %v7616 = vsub.f32 0.0, %v6720
        %v7617 = vsub.f32 0.0, %v6721
        %v7618 = vsub.f32 0.0, %v6722
        %v7619 = vsub.f32 0.0, %v6723
        %v7620 = vsub.f32 0.0, %v6724
        %v7621 = vsub.f32 0.0, %v6725
        %v7622 = vsub.f32 0.0, %v6726
        %v7623 = vsub.f32 0.0, %v6727
        %v7624 = vsub.f32 0.0, %v6728
        %v7625 = vsub.f32 0.0, %v6729
        %v7626 = vsub.f32 0.0, %v6730
        %v7627 = vsub.f32 0.0, %v6731
        %v7628 = vsub.f32 0.0, %v6732
        %v7629 = vsub.f32 0.0, %v6733
        %v7630 = vsub.f32 0.0, %v6734
        %v7631 = vsub.f32 0.0, %v6735
        %v7632 = vsub.f32 0.0, %v6736
        %v7633 = vsub.f32 0.0, %v6737
        %v7634 = vsub.f32 0.0, %v6738
        %v7635 = vsub.f32 0.0, %v6739
        %v7636 = vsub.f32 0.0, %v6740
        %v7637 = vsub.f32 0.0, %v6741
        %v7638 = vsub.f32 0.0, %v6742
        %v7639 = vsub.f32 0.0, %v6743
        %v7640 = vsub.f32 0.0, %v6744
        %v7641 = vsub.f32 0.0, %v6745
        %v7642 = vsub.f32 0.0, %v6746
        %v7643 = vsub.f32 0.0, %v6747
        %v7644 = vsub.f32 0.0, %v6748
        %v7645 = vsub.f32 0.0, %v6749
        %v7646 = vsub.f32 0.0, %v6750
        %v7647 = vsub.f32 0.0, %v6751
        %v7648 = vsub.f32 0.0, %v6752
        %v7649 = vsub.f32 0.0, %v6753
        %v7650 = vsub.f32 0.0, %v6754
        %v7651 = vsub.f32 0.0, %v6755
        %v7652 = vsub.f32 0.0, %v6756
        %v7653 = vsub.f32 0.0, %v6757
        %v7654 = vsub.f32 0.0, %v6758
        %v7655 = vsub.f32 0.0, %v6759
        %v7656 = vsub.f32 0.0, %v6760
        %v7657 = vsub.f32 0.0, %v6761
        %v7658 = vsub.f32 0.0, %v6762
        %v7659 = vmul.f32 %v7595, %v6699
        %v7660 = vmul.f32 %v7596, %v6700
        %v7661 = vmul.f32 %v7597, %v6701
        %v7662 = vmul.f32 %v7598, %v6702
        %v7663 = vmul.f32 %v7599, %v6703
        %v7664 = vmul.f32 %v7600, %v6704
        %v7665 = vmul.f32 %v7601, %v6705
        %v7666 = vmul.f32 %v7602, %v6706
        %v7667 = vmul.f32 %v7603, %v6707
        %v7668 = vmul.f32 %v7604, %v6708
        %v7669 = vmul.f32 %v7605, %v6709
        %v7670 = vmul.f32 %v7606, %v6710
        %v7671 = vmul.f32 %v7607, %v6711
        %v7672 = vmul.f32 %v7608, %v6712
        %v7673 = vmul.f32 %v7609, %v6713
        %v7674 = vmul.f32 %v7610, %v6714
        %v7675 = vmul.f32 %v7611, %v6715
        %v7676 = vmul.f32 %v7612, %v6716
        %v7677 = vmul.f32 %v7613, %v6717
        %v7678 = vmul.f32 %v7614, %v6718
        %v7679 = vmul.f32 %v7615, %v6719
        %v7680 = vmul.f32 %v7616, %v6720
        %v7681 = vmul.f32 %v7617, %v6721
        %v7682 = vmul.f32 %v7618, %v6722
        %v7683 = vmul.f32 %v7619, %v6723
        %v7684 = vmul.f32 %v7620, %v6724
        %v7685 = vmul.f32 %v7621, %v6725
        %v7686 = vmul.f32 %v7622, %v6726
        %v7687 = vmul.f32 %v7623, %v6727
        %v7688 = vmul.f32 %v7624, %v6728
        %v7689 = vmul.f32 %v7625, %v6729
        %v7690 = vmul.f32 %v7626, %v6730
        %v7691 = vmul.f32 %v7627, %v6731
        %v7692 = vmul.f32 %v7628, %v6732
        %v7693 = vmul.f32 %v7629, %v6733
        %v7694 = vmul.f32 %v7630, %v6734
        %v7695 = vmul.f32 %v7631, %v6735
        %v7696 = vmul.f32 %v7632, %v6736
        %v7697 = vmul.f32 %v7633, %v6737
        %v7698 = vmul.f32 %v7634, %v6738
        %v7699 = vmul.f32 %v7635, %v6739
        %v7700 = vmul.f32 %v7636, %v6740
        %v7701 = vmul.f32 %v7637, %v6741
        %v7702 = vmul.f32 %v7638, %v6742
        %v7703 = vmul.f32 %v7639, %v6743
        %v7704 = vmul.f32 %v7640, %v6744
        %v7705 = vmul.f32 %v7641, %v6745
        %v7706 = vmul.f32 %v7642, %v6746
        %v7707 = vmul.f32 %v7643, %v6747
        %v7708 = vmul.f32 %v7644, %v6748
        %v7709 = vmul.f32 %v7645, %v6749
        %v7710 = vmul.f32 %v7646, %v6750
        %v7711 = vmul.f32 %v7647, %v6751
        %v7712 = vmul.f32 %v7648, %v6752
        %v7713 = vmul.f32 %v7649, %v6753
        %v7714 = vmul.f32 %v7650, %v6754
        %v7715 = vmul.f32 %v7651, %v6755
        %v7716 = vmul.f32 %v7652, %v6756
        %v7717 = vmul.f32 %v7653, %v6757
        %v7718 = vmul.f32 %v7654, %v6758
        %v7719 = vmul.f32 %v7655, %v6759
        %v7720 = vmul.f32 %v7656, %v6760
        %v7721 = vmul.f32 %v7657, %v6761
        %v7722 = vmul.f32 %v7658, %v6762
        %v7723 = vmul.f32 %v7659, 1.442695
        %v7724 = vpow.pop %v7723
        %v7725 = vmul.f32 %v7660, 1.442695
        %v7726 = vpow.pop %v7725
        %v7727 = vmul.f32 %v7661, 1.442695
        %v7728 = vpow.pop %v7727
        %v7729 = vmul.f32 %v7662, 1.442695
        %v7730 = vpow.pop %v7729
        %v7731 = vmul.f32 %v7663, 1.442695
        %v7732 = vpow.pop %v7731
        %v7733 = vmul.f32 %v7664, 1.442695
        %v7734 = vpow.pop %v7733
        %v7735 = vmul.f32 %v7665, 1.442695
        %v7736 = vpow.pop %v7735
        %v7737 = vmul.f32 %v7666, 1.442695
        %v7738 = vpow.pop %v7737
        %v7739 = vmul.f32 %v7667, 1.442695
        %v7740 = vpow.pop %v7739
        %v7741 = vmul.f32 %v7668, 1.442695
        %v7742 = vpow.pop %v7741
        %v7743 = vmul.f32 %v7669, 1.442695
        %v7744 = vpow.pop %v7743
        %v7745 = vmul.f32 %v7670, 1.442695
        %v7746 = vpow.pop %v7745
        %v7747 = vmul.f32 %v7671, 1.442695
        %v7748 = vpow.pop %v7747
        %v7749 = vmul.f32 %v7672, 1.442695
        %v7750 = vpow.pop %v7749
        %v7751 = vmul.f32 %v7673, 1.442695
        %v7752 = vpow.pop %v7751
        %v7753 = vmul.f32 %v7674, 1.442695
        %v7754 = vpow.pop %v7753
        %v7755 = vmul.f32 %v7675, 1.442695
        %v7756 = vpow.pop %v7755
        %v7757 = vmul.f32 %v7676, 1.442695
        %v7758 = vpow.pop %v7757
        %v7759 = vmul.f32 %v7677, 1.442695
        %v7760 = vpow.pop %v7759
        %v7761 = vmul.f32 %v7678, 1.442695
        %v7762 = vpow.pop %v7761
        %v7763 = vmul.f32 %v7679, 1.442695
        %v7764 = vpow.pop %v7763
        %v7765 = vmul.f32 %v7680, 1.442695
        %v7766 = vpow.pop %v7765
        %v7767 = vmul.f32 %v7681, 1.442695
        %v7768 = vpow.pop %v7767
        %v7769 = vmul.f32 %v7682, 1.442695
        %v7770 = vpow.pop %v7769
        %v7771 = vmul.f32 %v7683, 1.442695
        %v7772 = vpow.pop %v7771
        %v7773 = vmul.f32 %v7684, 1.442695
        %v7774 = vpow.pop %v7773
        %v7775 = vmul.f32 %v7685, 1.442695
        %v7776 = vpow.pop %v7775
        %v7777 = vmul.f32 %v7686, 1.442695
        %v7778 = vpow.pop %v7777
        %v7779 = vmul.f32 %v7687, 1.442695
        %v7780 = vpow.pop %v7779
        %v7781 = vmul.f32 %v7688, 1.442695
        %v7782 = vpow.pop %v7781
        %v7783 = vmul.f32 %v7689, 1.442695
        %v7784 = vpow.pop %v7783
        %v7785 = vmul.f32 %v7690, 1.442695
        %v7786 = vpow.pop %v7785
        %v7787 = vmul.f32 %v7691, 1.442695
        %v7788 = vpow.pop %v7787
        %v7789 = vmul.f32 %v7692, 1.442695
        %v7790 = vpow.pop %v7789
        %v7791 = vmul.f32 %v7693, 1.442695
        %v7792 = vpow.pop %v7791
        %v7793 = vmul.f32 %v7694, 1.442695
        %v7794 = vpow.pop %v7793
        %v7795 = vmul.f32 %v7695, 1.442695
        %v7796 = vpow.pop %v7795
        %v7797 = vmul.f32 %v7696, 1.442695
        %v7798 = vpow.pop %v7797
        %v7799 = vmul.f32 %v7697, 1.442695
        %v7800 = vpow.pop %v7799
        %v7801 = vmul.f32 %v7698, 1.442695
        %v7802 = vpow.pop %v7801
        %v7803 = vmul.f32 %v7699, 1.442695
        %v7804 = vpow.pop %v7803
        %v7805 = vmul.f32 %v7700, 1.442695
        %v7806 = vpow.pop %v7805
        %v7807 = vmul.f32 %v7701, 1.442695
        %v7808 = vpow.pop %v7807
        %v7809 = vmul.f32 %v7702, 1.442695
        %v7810 = vpow.pop %v7809
        %v7811 = vmul.f32 %v7703, 1.442695
        %v7812 = vpow.pop %v7811
        %v7813 = vmul.f32 %v7704, 1.442695
        %v7814 = vpow.pop %v7813
        %v7815 = vmul.f32 %v7705, 1.442695
        %v7816 = vpow.pop %v7815
        %v7817 = vmul.f32 %v7706, 1.442695
        %v7818 = vpow.pop %v7817
        %v7819 = vmul.f32 %v7707, 1.442695
        %v7820 = vpow.pop %v7819
        %v7821 = vmul.f32 %v7708, 1.442695
        %v7822 = vpow.pop %v7821
        %v7823 = vmul.f32 %v7709, 1.442695
        %v7824 = vpow.pop %v7823
        %v7825 = vmul.f32 %v7710, 1.442695
        %v7826 = vpow.pop %v7825
        %v7827 = vmul.f32 %v7711, 1.442695
        %v7828 = vpow.pop %v7827
        %v7829 = vmul.f32 %v7712, 1.442695
        %v7830 = vpow.pop %v7829
        %v7831 = vmul.f32 %v7713, 1.442695
        %v7832 = vpow.pop %v7831
        %v7833 = vmul.f32 %v7714, 1.442695
        %v7834 = vpow.pop %v7833
        %v7835 = vmul.f32 %v7715, 1.442695
        %v7836 = vpow.pop %v7835
        %v7837 = vmul.f32 %v7716, 1.442695
        %v7838 = vpow.pop %v7837
        %v7839 = vmul.f32 %v7717, 1.442695
        %v7840 = vpow.pop %v7839
        %v7841 = vmul.f32 %v7718, 1.442695
        %v7842 = vpow.pop %v7841
        %v7843 = vmul.f32 %v7719, 1.442695
        %v7844 = vpow.pop %v7843
        %v7845 = vmul.f32 %v7720, 1.442695
        %v7846 = vpow.pop %v7845
        %v7847 = vmul.f32 %v7721, 1.442695
        %v7848 = vpow.pop %v7847
        %v7849 = vmul.f32 %v7722, 1.442695
        %v7850 = vpow.pop %v7849
        %v7851 = vmul.f32 %v7531, %v7724
        %v7852 = vmul.f32 %v7532, %v7726
        %v7853 = vmul.f32 %v7533, %v7728
        %v7854 = vmul.f32 %v7534, %v7730
        %v7855 = vmul.f32 %v7535, %v7732
        %v7856 = vmul.f32 %v7536, %v7734
        %v7857 = vmul.f32 %v7537, %v7736
        %v7858 = vmul.f32 %v7538, %v7738
        %v7859 = vmul.f32 %v7539, %v7740
        %v7860 = vmul.f32 %v7540, %v7742
        %v7861 = vmul.f32 %v7541, %v7744
        %v7862 = vmul.f32 %v7542, %v7746
        %v7863 = vmul.f32 %v7543, %v7748
        %v7864 = vmul.f32 %v7544, %v7750
        %v7865 = vmul.f32 %v7545, %v7752
        %v7866 = vmul.f32 %v7546, %v7754
        %v7867 = vmul.f32 %v7547, %v7756
        %v7868 = vmul.f32 %v7548, %v7758
        %v7869 = vmul.f32 %v7549, %v7760
        %v7870 = vmul.f32 %v7550, %v7762
        %v7871 = vmul.f32 %v7551, %v7764
        %v7872 = vmul.f32 %v7552, %v7766
        %v7873 = vmul.f32 %v7553, %v7768
        %v7874 = vmul.f32 %v7554, %v7770
        %v7875 = vmul.f32 %v7555, %v7772
        %v7876 = vmul.f32 %v7556, %v7774
        %v7877 = vmul.f32 %v7557, %v7776
        %v7878 = vmul.f32 %v7558, %v7778
        %v7879 = vmul.f32 %v7559, %v7780
        %v7880 = vmul.f32 %v7560, %v7782
        %v7881 = vmul.f32 %v7561, %v7784
        %v7882 = vmul.f32 %v7562, %v7786
        %v7883 = vmul.f32 %v7563, %v7788
        %v7884 = vmul.f32 %v7564, %v7790
        %v7885 = vmul.f32 %v7565, %v7792
        %v7886 = vmul.f32 %v7566, %v7794
        %v7887 = vmul.f32 %v7567, %v7796
        %v7888 = vmul.f32 %v7568, %v7798
        %v7889 = vmul.f32 %v7569, %v7800
        %v7890 = vmul.f32 %v7570, %v7802
        %v7891 = vmul.f32 %v7571, %v7804
        %v7892 = vmul.f32 %v7572, %v7806
        %v7893 = vmul.f32 %v7573, %v7808
        %v7894 = vmul.f32 %v7574, %v7810
        %v7895 = vmul.f32 %v7575, %v7812
        %v7896 = vmul.f32 %v7576, %v7814
        %v7897 = vmul.f32 %v7577, %v7816
        %v7898 = vmul.f32 %v7578, %v7818
        %v7899 = vmul.f32 %v7579, %v7820
        %v7900 = vmul.f32 %v7580, %v7822
        %v7901 = vmul.f32 %v7581, %v7824
        %v7902 = vmul.f32 %v7582, %v7826
        %v7903 = vmul.f32 %v7583, %v7828
        %v7904 = vmul.f32 %v7584, %v7830
        %v7905 = vmul.f32 %v7585, %v7832
        %v7906 = vmul.f32 %v7586, %v7834
        %v7907 = vmul.f32 %v7587, %v7836
        %v7908 = vmul.f32 %v7588, %v7838
        %v7909 = vmul.f32 %v7589, %v7840
        %v7910 = vmul.f32 %v7590, %v7842
        %v7911 = vmul.f32 %v7591, %v7844
        %v7912 = vmul.f32 %v7592, %v7846
        %v7913 = vmul.f32 %v7593, %v7848
        %v7914 = vmul.f32 %v7594, %v7850
        %vm7915 = vcmp.ge.f32.partialorder %v6477, 0.0
        %vm7916 = vcmp.ge.f32.partialorder %v6479, 0.0
        %vm7917 = vcmp.ge.f32.partialorder %v6481, 0.0
        %vm7918 = vcmp.ge.f32.partialorder %v6483, 0.0
        %vm7919 = vcmp.ge.f32.partialorder %v6487, 0.0
        %vm7920 = vcmp.ge.f32.partialorder %v6489, 0.0
        %vm7921 = vcmp.ge.f32.partialorder %v6491, 0.0
        %vm7922 = vcmp.ge.f32.partialorder %v6493, 0.0
        %vm7923 = vcmp.ge.f32.partialorder %v6497, 0.0
        %vm7924 = vcmp.ge.f32.partialorder %v6499, 0.0
        %vm7925 = vcmp.ge.f32.partialorder %v6501, 0.0
        %vm7926 = vcmp.ge.f32.partialorder %v6503, 0.0
        %vm7927 = vcmp.ge.f32.partialorder %v6507, 0.0
        %vm7928 = vcmp.ge.f32.partialorder %v6509, 0.0
        %vm7929 = vcmp.ge.f32.partialorder %v6511, 0.0
        %vm7930 = vcmp.ge.f32.partialorder %v6513, 0.0
        %vm7931 = vcmp.ge.f32.partialorder %v6517, 0.0
        %vm7932 = vcmp.ge.f32.partialorder %v6519, 0.0
        %vm7933 = vcmp.ge.f32.partialorder %v6521, 0.0
        %vm7934 = vcmp.ge.f32.partialorder %v6523, 0.0
        %vm7935 = vcmp.ge.f32.partialorder %v6527, 0.0
        %vm7936 = vcmp.ge.f32.partialorder %v6529, 0.0
        %vm7937 = vcmp.ge.f32.partialorder %v6531, 0.0
        %vm7938 = vcmp.ge.f32.partialorder %v6533, 0.0
        %vm7939 = vcmp.ge.f32.partialorder %v6537, 0.0
        %vm7940 = vcmp.ge.f32.partialorder %v6539, 0.0
        %vm7941 = vcmp.ge.f32.partialorder %v6541, 0.0
        %vm7942 = vcmp.ge.f32.partialorder %v6543, 0.0
        %vm7943 = vcmp.ge.f32.partialorder %v6547, 0.0
        %vm7944 = vcmp.ge.f32.partialorder %v6549, 0.0
        %vm7945 = vcmp.ge.f32.partialorder %v6551, 0.0
        %vm7946 = vcmp.ge.f32.partialorder %v6553, 0.0
        %vm7947 = vcmp.ge.f32.partialorder %v6557, 0.0
        %vm7948 = vcmp.ge.f32.partialorder %v6559, 0.0
        %vm7949 = vcmp.ge.f32.partialorder %v6561, 0.0
        %vm7950 = vcmp.ge.f32.partialorder %v6563, 0.0
        %vm7951 = vcmp.ge.f32.partialorder %v6567, 0.0
        %vm7952 = vcmp.ge.f32.partialorder %v6569, 0.0
        %vm7953 = vcmp.ge.f32.partialorder %v6571, 0.0
        %vm7954 = vcmp.ge.f32.partialorder %v6573, 0.0
        %vm7955 = vcmp.ge.f32.partialorder %v6577, 0.0
        %vm7956 = vcmp.ge.f32.partialorder %v6579, 0.0
        %vm7957 = vcmp.ge.f32.partialorder %v6581, 0.0
        %vm7958 = vcmp.ge.f32.partialorder %v6583, 0.0
        %vm7959 = vcmp.ge.f32.partialorder %v6587, 0.0
        %vm7960 = vcmp.ge.f32.partialorder %v6589, 0.0
        %vm7961 = vcmp.ge.f32.partialorder %v6591, 0.0
        %vm7962 = vcmp.ge.f32.partialorder %v6593, 0.0
        %vm7963 = vcmp.ge.f32.partialorder %v6597, 0.0
        %vm7964 = vcmp.ge.f32.partialorder %v6599, 0.0
        %vm7965 = vcmp.ge.f32.partialorder %v6601, 0.0
        %vm7966 = vcmp.ge.f32.partialorder %v6603, 0.0
        %vm7967 = vcmp.ge.f32.partialorder %v6607, 0.0
        %vm7968 = vcmp.ge.f32.partialorder %v6609, 0.0
        %vm7969 = vcmp.ge.f32.partialorder %v6611, 0.0
        %vm7970 = vcmp.ge.f32.partialorder %v6613, 0.0
        %vm7971 = vcmp.ge.f32.partialorder %v6617, 0.0
        %vm7972 = vcmp.ge.f32.partialorder %v6619, 0.0
        %vm7973 = vcmp.ge.f32.partialorder %v6621, 0.0
        %vm7974 = vcmp.ge.f32.partialorder %v6623, 0.0
        %vm7975 = vcmp.ge.f32.partialorder %v6627, 0.0
        %vm7976 = vcmp.ge.f32.partialorder %v6629, 0.0
        %vm7977 = vcmp.ge.f32.partialorder %v6631, 0.0
        %vm7978 = vcmp.ge.f32.partialorder %v6633, 0.0
        %v7979 = vsub.f32 1.0, %v7851
        %v7980 = vsub.f32 1.0, %v7852
        %v7981 = vsub.f32 1.0, %v7853
        %v7982 = vsub.f32 1.0, %v7854
        %v7983 = vsub.f32 1.0, %v7855
        %v7984 = vsub.f32 1.0, %v7856
        %v7985 = vsub.f32 1.0, %v7857
        %v7986 = vsub.f32 1.0, %v7858
        %v7987 = vsub.f32 1.0, %v7859
        %v7988 = vsub.f32 1.0, %v7860
        %v7989 = vsub.f32 1.0, %v7861
        %v7990 = vsub.f32 1.0, %v7862
        %v7991 = vsub.f32 1.0, %v7863
        %v7992 = vsub.f32 1.0, %v7864
        %v7993 = vsub.f32 1.0, %v7865
        %v7994 = vsub.f32 1.0, %v7866
        %v7995 = vsub.f32 1.0, %v7867
        %v7996 = vsub.f32 1.0, %v7868
        %v7997 = vsub.f32 1.0, %v7869
        %v7998 = vsub.f32 1.0, %v7870
        %v7999 = vsub.f32 1.0, %v7871
        %v8000 = vsub.f32 1.0, %v7872
        %v8001 = vsub.f32 1.0, %v7873
        %v8002 = vsub.f32 1.0, %v7874
        %v8003 = vsub.f32 1.0, %v7875
        %v8004 = vsub.f32 1.0, %v7876
        %v8005 = vsub.f32 1.0, %v7877
        %v8006 = vsub.f32 1.0, %v7878
        %v8007 = vsub.f32 1.0, %v7879
        %v8008 = vsub.f32 1.0, %v7880
        %v8009 = vsub.f32 1.0, %v7881
        %v8010 = vsub.f32 1.0, %v7882
        %v8011 = vsub.f32 1.0, %v7883
        %v8012 = vsub.f32 1.0, %v7884
        %v8013 = vsub.f32 1.0, %v7885
        %v8014 = vsub.f32 1.0, %v7886
        %v8015 = vsub.f32 1.0, %v7887
        %v8016 = vsub.f32 1.0, %v7888
        %v8017 = vsub.f32 1.0, %v7889
        %v8018 = vsub.f32 1.0, %v7890
        %v8019 = vsub.f32 1.0, %v7891
        %v8020 = vsub.f32 1.0, %v7892
        %v8021 = vsub.f32 1.0, %v7893
        %v8022 = vsub.f32 1.0, %v7894
        %v8023 = vsub.f32 1.0, %v7895
        %v8024 = vsub.f32 1.0, %v7896
        %v8025 = vsub.f32 1.0, %v7897
        %v8026 = vsub.f32 1.0, %v7898
        %v8027 = vsub.f32 1.0, %v7899
        %v8028 = vsub.f32 1.0, %v7900
        %v8029 = vsub.f32 1.0, %v7901
        %v8030 = vsub.f32 1.0, %v7902
        %v8031 = vsub.f32 1.0, %v7903
        %v8032 = vsub.f32 1.0, %v7904
        %v8033 = vsub.f32 1.0, %v7905
        %v8034 = vsub.f32 1.0, %v7906
        %v8035 = vsub.f32 1.0, %v7907
        %v8036 = vsub.f32 1.0, %v7908
        %v8037 = vsub.f32 1.0, %v7909
        %v8038 = vsub.f32 1.0, %v7910
        %v8039 = vsub.f32 1.0, %v7911
        %v8040 = vsub.f32 1.0, %v7912
        %v8041 = vsub.f32 1.0, %v7913
        %v8042 = vsub.f32 1.0, %v7914
        %v8043 = vsel %vm7915, %v7979, %v7851
        %v8044 = vsel %vm7916, %v7980, %v7852
        %v8045 = vsel %vm7917, %v7981, %v7853
        %v8046 = vsel %vm7918, %v7982, %v7854
        %v8047 = vsel %vm7919, %v7983, %v7855
        %v8048 = vsel %vm7920, %v7984, %v7856
        %v8049 = vsel %vm7921, %v7985, %v7857
        %v8050 = vsel %vm7922, %v7986, %v7858
        %v8051 = vsel %vm7923, %v7987, %v7859
        %v8052 = vsel %vm7924, %v7988, %v7860
        %v8053 = vsel %vm7925, %v7989, %v7861
        %v8054 = vsel %vm7926, %v7990, %v7862
        %v8055 = vsel %vm7927, %v7991, %v7863
        %v8056 = vsel %vm7928, %v7992, %v7864
        %v8057 = vsel %vm7929, %v7993, %v7865
        %v8058 = vsel %vm7930, %v7994, %v7866
        %v8059 = vsel %vm7931, %v7995, %v7867
        %v8060 = vsel %vm7932, %v7996, %v7868
        %v8061 = vsel %vm7933, %v7997, %v7869
        %v8062 = vsel %vm7934, %v7998, %v7870
        %v8063 = vsel %vm7935, %v7999, %v7871
        %v8064 = vsel %vm7936, %v8000, %v7872
        %v8065 = vsel %vm7937, %v8001, %v7873
        %v8066 = vsel %vm7938, %v8002, %v7874
        %v8067 = vsel %vm7939, %v8003, %v7875
        %v8068 = vsel %vm7940, %v8004, %v7876
        %v8069 = vsel %vm7941, %v8005, %v7877
        %v8070 = vsel %vm7942, %v8006, %v7878
        %v8071 = vsel %vm7943, %v8007, %v7879
        %v8072 = vsel %vm7944, %v8008, %v7880
        %v8073 = vsel %vm7945, %v8009, %v7881
        %v8074 = vsel %vm7946, %v8010, %v7882
        %v8075 = vsel %vm7947, %v8011, %v7883
        %v8076 = vsel %vm7948, %v8012, %v7884
        %v8077 = vsel %vm7949, %v8013, %v7885
        %v8078 = vsel %vm7950, %v8014, %v7886
        %v8079 = vsel %vm7951, %v8015, %v7887
        %v8080 = vsel %vm7952, %v8016, %v7888
        %v8081 = vsel %vm7953, %v8017, %v7889
        %v8082 = vsel %vm7954, %v8018, %v7890
        %v8083 = vsel %vm7955, %v8019, %v7891
        %v8084 = vsel %vm7956, %v8020, %v7892
        %v8085 = vsel %vm7957, %v8021, %v7893
        %v8086 = vsel %vm7958, %v8022, %v7894
        %v8087 = vsel %vm7959, %v8023, %v7895
        %v8088 = vsel %vm7960, %v8024, %v7896
        %v8089 = vsel %vm7961, %v8025, %v7897
        %v8090 = vsel %vm7962, %v8026, %v7898
        %v8091 = vsel %vm7963, %v8027, %v7899
        %v8092 = vsel %vm7964, %v8028, %v7900
        %v8093 = vsel %vm7965, %v8029, %v7901
        %v8094 = vsel %vm7966, %v8030, %v7902
        %v8095 = vsel %vm7967, %v8031, %v7903
        %v8096 = vsel %vm7968, %v8032, %v7904
        %v8097 = vsel %vm7969, %v8033, %v7905
        %v8098 = vsel %vm7970, %v8034, %v7906
        %v8099 = vsel %vm7971, %v8035, %v7907
        %v8100 = vsel %vm7972, %v8036, %v7908
        %v8101 = vsel %vm7973, %v8037, %v7909
        %v8102 = vsel %vm7974, %v8038, %v7910
        %v8103 = vsel %vm7975, %v8039, %v7911
        %v8104 = vsel %vm7976, %v8040, %v7912
        %v8105 = vsel %vm7977, %v8041, %v7913
        %v8106 = vsel %vm7978, %v8042, %v7914
        %v8107 = vmul.f32 %v6477, %v8043
        %v8108 = vmul.f32 %v6479, %v8044
        %v8109 = vmul.f32 %v6481, %v8045
        %v8110 = vmul.f32 %v6483, %v8046
        %v8111 = vmul.f32 %v6487, %v8047
        %v8112 = vmul.f32 %v6489, %v8048
        %v8113 = vmul.f32 %v6491, %v8049
        %v8114 = vmul.f32 %v6493, %v8050
        %v8115 = vmul.f32 %v6497, %v8051
        %v8116 = vmul.f32 %v6499, %v8052
        %v8117 = vmul.f32 %v6501, %v8053
        %v8118 = vmul.f32 %v6503, %v8054
        %v8119 = vmul.f32 %v6507, %v8055
        %v8120 = vmul.f32 %v6509, %v8056
        %v8121 = vmul.f32 %v6511, %v8057
        %v8122 = vmul.f32 %v6513, %v8058
        %v8123 = vmul.f32 %v6517, %v8059
        %v8124 = vmul.f32 %v6519, %v8060
        %v8125 = vmul.f32 %v6521, %v8061
        %v8126 = vmul.f32 %v6523, %v8062
        %v8127 = vmul.f32 %v6527, %v8063
        %v8128 = vmul.f32 %v6529, %v8064
        %v8129 = vmul.f32 %v6531, %v8065
        %v8130 = vmul.f32 %v6533, %v8066
        %v8131 = vmul.f32 %v6537, %v8067
        %v8132 = vmul.f32 %v6539, %v8068
        %v8133 = vmul.f32 %v6541, %v8069
        %v8134 = vmul.f32 %v6543, %v8070
        %v8135 = vmul.f32 %v6547, %v8071
        %v8136 = vmul.f32 %v6549, %v8072
        %v8137 = vmul.f32 %v6551, %v8073
        %v8138 = vmul.f32 %v6553, %v8074
        %v8139 = vmul.f32 %v6557, %v8075
        %v8140 = vmul.f32 %v6559, %v8076
        %v8141 = vmul.f32 %v6561, %v8077
        %v8142 = vmul.f32 %v6563, %v8078
        %v8143 = vmul.f32 %v6567, %v8079
        %v8144 = vmul.f32 %v6569, %v8080
        %v8145 = vmul.f32 %v6571, %v8081
        %v8146 = vmul.f32 %v6573, %v8082
        %v8147 = vmul.f32 %v6577, %v8083
        %v8148 = vmul.f32 %v6579, %v8084
        %v8149 = vmul.f32 %v6581, %v8085
        %v8150 = vmul.f32 %v6583, %v8086
        %v8151 = vmul.f32 %v6587, %v8087
        %v8152 = vmul.f32 %v6589, %v8088
        %v8153 = vmul.f32 %v6591, %v8089
        %v8154 = vmul.f32 %v6593, %v8090
        %v8155 = vmul.f32 %v6597, %v8091
        %v8156 = vmul.f32 %v6599, %v8092
        %v8157 = vmul.f32 %v6601, %v8093
        %v8158 = vmul.f32 %v6603, %v8094
        %v8159 = vmul.f32 %v6607, %v8095
        %v8160 = vmul.f32 %v6609, %v8096
        %v8161 = vmul.f32 %v6611, %v8097
        %v8162 = vmul.f32 %v6613, %v8098
        %v8163 = vmul.f32 %v6617, %v8099
        %v8164 = vmul.f32 %v6619, %v8100
        %v8165 = vmul.f32 %v6621, %v8101
        %v8166 = vmul.f32 %v6623, %v8102
        %v8167 = vmul.f32 %v6627, %v8103
        %v8168 = vmul.f32 %v6629, %v8104
        %v8169 = vmul.f32 %v6631, %v8105
        %v8170 = vmul.f32 %v6633, %v8106
        %v8171 = vpack.c.bf16 %v8109, %v8107
        %v8172 = vpack.c.bf16 %v8110, %v8108
        %v8173 = vpack.c.bf16 %v8113, %v8111
        %v8174 = vpack.c.bf16 %v8114, %v8112
        %v8175 = vpack.c.bf16 %v8117, %v8115
        %v8176 = vpack.c.bf16 %v8118, %v8116
        %v8177 = vpack.c.bf16 %v8121, %v8119
        %v8178 = vpack.c.bf16 %v8122, %v8120
        %v8179 = vpack.c.bf16 %v8125, %v8123
        %v8180 = vpack.c.bf16 %v8126, %v8124
        %v8181 = vpack.c.bf16 %v8129, %v8127
        %v8182 = vpack.c.bf16 %v8130, %v8128
        %v8183 = vpack.c.bf16 %v8133, %v8131
        %v8184 = vpack.c.bf16 %v8134, %v8132
        %v8185 = vpack.c.bf16 %v8137, %v8135
        %v8186 = vpack.c.bf16 %v8138, %v8136
        %v8187 = vpack.c.bf16 %v8141, %v8139
        %v8188 = vpack.c.bf16 %v8142, %v8140
        %v8189 = vpack.c.bf16 %v8145, %v8143
        %v8190 = vpack.c.bf16 %v8146, %v8144
        %v8191 = vpack.c.bf16 %v8149, %v8147
        %v8192 = vpack.c.bf16 %v8150, %v8148
        %v8193 = vpack.c.bf16 %v8153, %v8151
        %v8194 = vpack.c.bf16 %v8154, %v8152
        %v8195 = vpack.c.bf16 %v8157, %v8155
        %v8196 = vpack.c.bf16 %v8158, %v8156
        %v8197 = vpack.c.bf16 %v8161, %v8159
        %v8198 = vpack.c.bf16 %v8162, %v8160
        %v8199 = vpack.c.bf16 %v8165, %v8163
        %v8200 = vpack.c.bf16 %v8166, %v8164
        %v8201 = vpack.c.bf16 %v8169, %v8167
        %v8202 = vpack.c.bf16 %v8170, %v8168
        %v8203 = vld [vmem:[%s7] sm:$0xf]
        %v8204 = vld [vmem:[%s7 + $0x4] sm:$0xf]
        %v8205 = vld [vmem:[%s7 + $0x8] sm:$0xf]
        %v8206 = vld [vmem:[%s7 + $0xc] sm:$0xf]
        %v8207 = vld [vmem:[%s7 + $0x10] sm:$0xf]
        %v8208 = vld [vmem:[%s7 + $0x14] sm:$0xf]
        %v8209 = vld [vmem:[%s7 + $0x18] sm:$0xf]
        %v8210 = vld [vmem:[%s7 + $0x1c] sm:$0xf]
        %v8211 = vld [vmem:[%s7 + $0x20] sm:$0xf]
        %v8212 = vld [vmem:[%s7 + $0x24] sm:$0xf]
        %v8213 = vld [vmem:[%s7 + $0x28] sm:$0xf]
        %v8214 = vld [vmem:[%s7 + $0x2c] sm:$0xf]
        %v8215 = vld [vmem:[%s7 + $0x30] sm:$0xf]
        %v8216 = vld [vmem:[%s7 + $0x34] sm:$0xf]
        %v8217 = vld [vmem:[%s7 + $0x38] sm:$0xf]
        %v8218 = vld [vmem:[%s7 + $0x3c] sm:$0xf]
        %v8219 = vld [vmem:[%s7 + $0x40] sm:$0xf]
        %v8220 = vld [vmem:[%s7 + $0x44] sm:$0xf]
        %v8221 = vld [vmem:[%s7 + $0x48] sm:$0xf]
        %v8222 = vld [vmem:[%s7 + $0x4c] sm:$0xf]
        %v8223 = vld [vmem:[%s7 + $0x50] sm:$0xf]
        %v8224 = vld [vmem:[%s7 + $0x54] sm:$0xf]
        %v8225 = vld [vmem:[%s7 + $0x58] sm:$0xf]
        %v8226 = vld [vmem:[%s7 + $0x5c] sm:$0xf]
        %v8227 = vld [vmem:[%s7 + $0x60] sm:$0xf]
        %v8228 = vld [vmem:[%s7 + $0x64] sm:$0xf]
        %v8229 = vld [vmem:[%s7 + $0x68] sm:$0xf]
        %v8230 = vld [vmem:[%s7 + $0x6c] sm:$0xf]
        %v8231 = vld [vmem:[%s7 + $0x70] sm:$0xf]
        %v8232 = vld [vmem:[%s7 + $0x74] sm:$0xf]
        %v8233 = vld [vmem:[%s7 + $0x78] sm:$0xf]
        %v8234 = vld [vmem:[%s7 + $0x7c] sm:$0xf]
        %v8235 = vld [vmem:[%s8] sm:$0x1]
        %v8237 = vlaneseq
        %v8238 = vshrl.u32 %v8237, 7
        %v8239 = vsub.s32 0, %v8238
        %v8240 = vrot.slane %v8235, %v8239
        %v8274 = vunpack.c.l.b16 %v8203
        %v8275 = vunpack.c.l.b16 %v8204
        %v8276 = vunpack.c.l.b16 %v8205
        %v8277 = vunpack.c.l.b16 %v8206
        %v8278 = vunpack.c.l.b16 %v8207
        %v8279 = vunpack.c.l.b16 %v8208
        %v8280 = vunpack.c.l.b16 %v8209
        %v8281 = vunpack.c.l.b16 %v8210
        %v8282 = vunpack.c.l.b16 %v8211
        %v8283 = vunpack.c.l.b16 %v8212
        %v8284 = vunpack.c.l.b16 %v8213
        %v8285 = vunpack.c.l.b16 %v8214
        %v8286 = vunpack.c.l.b16 %v8215
        %v8287 = vunpack.c.l.b16 %v8216
        %v8288 = vunpack.c.l.b16 %v8217
        %v8289 = vunpack.c.l.b16 %v8218
        %v8290 = vunpack.c.l.b16 %v8219
        %v8291 = vunpack.c.l.b16 %v8220
        %v8292 = vunpack.c.l.b16 %v8221
        %v8293 = vunpack.c.l.b16 %v8222
        %v8294 = vunpack.c.l.b16 %v8223
        %v8295 = vunpack.c.l.b16 %v8224
        %v8296 = vunpack.c.l.b16 %v8225
        %v8297 = vunpack.c.l.b16 %v8226
        %v8298 = vunpack.c.l.b16 %v8227
        %v8299 = vunpack.c.l.b16 %v8228
        %v8300 = vunpack.c.l.b16 %v8229
        %v8301 = vunpack.c.l.b16 %v8230
        %v8302 = vunpack.c.l.b16 %v8231
        %v8303 = vunpack.c.l.b16 %v8232
        %v8304 = vunpack.c.l.b16 %v8233
        %v8305 = vunpack.c.l.b16 %v8234
        %v8306 = vpack.c.b16 %v8275, %v8274
        %v8307 = vpack.c.b16 %v8277, %v8276
        %v8308 = vpack.c.b16 %v8279, %v8278
        %v8309 = vpack.c.b16 %v8281, %v8280
        %v8310 = vpack.c.b16 %v8283, %v8282
        %v8311 = vpack.c.b16 %v8285, %v8284
        %v8312 = vpack.c.b16 %v8287, %v8286
        %v8313 = vpack.c.b16 %v8289, %v8288
        %v8314 = vpack.c.b16 %v8291, %v8290
        %v8315 = vpack.c.b16 %v8293, %v8292
        %v8316 = vpack.c.b16 %v8295, %v8294
        %v8317 = vpack.c.b16 %v8297, %v8296
        %v8318 = vpack.c.b16 %v8299, %v8298
        %v8319 = vpack.c.b16 %v8301, %v8300
        %v8320 = vpack.c.b16 %v8303, %v8302
        %v8321 = vpack.c.b16 %v8305, %v8304
        %8338 = vmatprep.subr.bf16.mxu0 0
        %8339 = vmatpush1.bf16.msra.mxu0 %v8313
        %8340 = vmatprep.subr.bf16.mxu0 0
        %8341 = vmatpush1.bf16.msra.mxu0 %v8312
        %8342 = vmatprep.subr.bf16.mxu0 0
        %8343 = vmatpush1.bf16.msra.mxu0 %v8311
        %8344 = vmatprep.subr.bf16.mxu0 0
        %8345 = vmatpush1.bf16.msra.mxu0 %v8310
        %8346 = vmatprep.subr.bf16.mxu0 0
        %8347 = vmatpush1.bf16.msra.mxu0 %v8309
        %8348 = vmatprep.subr.bf16.mxu0 0
        %8349 = vmatpush1.bf16.msra.mxu0 %v8308
        %8350 = vmatprep.subr.bf16.mxu0 0
        %8351 = vmatpush1.bf16.msra.mxu0 %v8307
        %8352 = vmatprep.subr.bf16.mxu0 0
        %8353 = vmatpush1.bf16.msra.mxu0 %v8306
        %8354 = vmatprep.subr.bf16.mxu0 0
        %8355 = vmatpush2.bf16.msra.mxu0 %v8321
        %8356 = vmatprep.subr.bf16.mxu0 0
        %8357 = vmatpush2.bf16.msra.mxu0 %v8320
        %8358 = vmatprep.subr.bf16.mxu0 0
        %8359 = vmatpush2.bf16.msra.mxu0 %v8319
        %8360 = vmatprep.subr.bf16.mxu0 0
        %8361 = vmatpush2.bf16.msra.mxu0 %v8318
        %8362 = vmatprep.subr.bf16.mxu0 0
        %8363 = vmatpush2.bf16.msra.mxu0 %v8317
        %8364 = vmatprep.subr.bf16.mxu0 0
        %8365 = vmatpush2.bf16.msra.mxu0 %v8316
        %8366 = vmatprep.subr.bf16.mxu0 0
        %8367 = vmatpush2.bf16.msra.mxu0 %v8315
        %8368 = vmatprep.subr.bf16.mxu0 0
        %8369 = vmatpush2.bf16.msra.mxu0 %v8314
        %8370 = vmatprep.mubr.bf16.mxu0 %v8172
        %8371 = vmatmul.mubr.bf16.gmra.mxu0 %v8171
        %v8372 = vpop.f32.mrf.mxu0
        %v8373 = vadd.f32 %v8240, %v8372
        %v8374 = vpop.f32.mrf.mxu0
        %v8375 = vpop.f32.mrf.mxu0
        %v8376 = vadd.f32 %v8240, %v8375
        %v8377 = vpop.f32.mrf.mxu0
        %8378 = vmatprep.mubr.bf16.mxu0 %v8174
        %8379 = vmatmul.mubr.bf16.gmra.mxu0 %v8173
        %v8380 = vpop.f32.mrf.mxu0
        %v8381 = vadd.f32 %v8240, %v8380
        %v8382 = vpop.f32.mrf.mxu0
        %v8383 = vpop.f32.mrf.mxu0
        %v8384 = vadd.f32 %v8240, %v8383
        %v8385 = vpop.f32.mrf.mxu0
        %8386 = vmatprep.mubr.bf16.mxu0 %v8176
        %8387 = vmatmul.mubr.bf16.gmra.mxu0 %v8175
        %v8388 = vpop.f32.mrf.mxu0
        %v8389 = vadd.f32 %v8240, %v8388
        %v8390 = vpop.f32.mrf.mxu0
        %v8391 = vpop.f32.mrf.mxu0
        %v8392 = vadd.f32 %v8240, %v8391
        %v8393 = vpop.f32.mrf.mxu0
        %8394 = vmatprep.mubr.bf16.mxu0 %v8178
        %8395 = vmatmul.mubr.bf16.gmra.mxu0 %v8177
        %v8396 = vpop.f32.mrf.mxu0
        %v8397 = vadd.f32 %v8240, %v8396
        %v8398 = vpop.f32.mrf.mxu0
        %v8399 = vpop.f32.mrf.mxu0
        %v8400 = vadd.f32 %v8240, %v8399
        %v8401 = vpop.f32.mrf.mxu0
        %8402 = vmatprep.mubr.bf16.mxu0 %v8180
        %8403 = vmatmul.mubr.bf16.gmra.mxu0 %v8179
        %v8404 = vpop.f32.mrf.mxu0
        %v8405 = vadd.f32 %v8240, %v8404
        %v8406 = vpop.f32.mrf.mxu0
        %v8407 = vpop.f32.mrf.mxu0
        %v8408 = vadd.f32 %v8240, %v8407
        %v8409 = vpop.f32.mrf.mxu0
        %8410 = vmatprep.mubr.bf16.mxu0 %v8182
        %8411 = vmatmul.mubr.bf16.gmra.mxu0 %v8181
        %v8412 = vpop.f32.mrf.mxu0
        %v8413 = vadd.f32 %v8240, %v8412
        %v8414 = vpop.f32.mrf.mxu0
        %v8415 = vpop.f32.mrf.mxu0
        %v8416 = vadd.f32 %v8240, %v8415
        %v8417 = vpop.f32.mrf.mxu0
        %8418 = vmatprep.mubr.bf16.mxu0 %v8184
        %8419 = vmatmul.mubr.bf16.gmra.mxu0 %v8183
        %v8420 = vpop.f32.mrf.mxu0
        %v8421 = vadd.f32 %v8240, %v8420
        %v8422 = vpop.f32.mrf.mxu0
        %v8423 = vpop.f32.mrf.mxu0
        %v8424 = vadd.f32 %v8240, %v8423
        %v8425 = vpop.f32.mrf.mxu0
        %8426 = vmatprep.mubr.bf16.mxu0 %v8186
        %8427 = vmatmul.mubr.bf16.gmra.mxu0 %v8185
        %v8428 = vpop.f32.mrf.mxu0
        %v8429 = vadd.f32 %v8240, %v8428
        %v8430 = vpop.f32.mrf.mxu0
        %v8431 = vpop.f32.mrf.mxu0
        %v8432 = vadd.f32 %v8240, %v8431
        %v8433 = vpop.f32.mrf.mxu0
        %8434 = vmatprep.mubr.bf16.mxu0 %v8188
        %8435 = vmatmul.mubr.bf16.gmra.mxu0 %v8187
        %v8436 = vpop.f32.mrf.mxu0
        %v8437 = vadd.f32 %v8240, %v8436
        %v8438 = vpop.f32.mrf.mxu0
        %v8439 = vpop.f32.mrf.mxu0
        %v8440 = vadd.f32 %v8240, %v8439
        %v8441 = vpop.f32.mrf.mxu0
        %8442 = vmatprep.mubr.bf16.mxu0 %v8190
        %8443 = vmatmul.mubr.bf16.gmra.mxu0 %v8189
        %v8444 = vpop.f32.mrf.mxu0
        %v8445 = vadd.f32 %v8240, %v8444
        %v8446 = vpop.f32.mrf.mxu0
        %v8447 = vpop.f32.mrf.mxu0
        %v8448 = vadd.f32 %v8240, %v8447
        %v8449 = vpop.f32.mrf.mxu0
        %8450 = vmatprep.mubr.bf16.mxu0 %v8192
        %8451 = vmatmul.mubr.bf16.gmra.mxu0 %v8191
        %v8452 = vpop.f32.mrf.mxu0
        %v8453 = vadd.f32 %v8240, %v8452
        %v8454 = vpop.f32.mrf.mxu0
        %v8455 = vpop.f32.mrf.mxu0
        %v8456 = vadd.f32 %v8240, %v8455
        %v8457 = vpop.f32.mrf.mxu0
        %8458 = vmatprep.mubr.bf16.mxu0 %v8194
        %8459 = vmatmul.mubr.bf16.gmra.mxu0 %v8193
        %v8460 = vpop.f32.mrf.mxu0
        %v8461 = vadd.f32 %v8240, %v8460
        %v8462 = vpop.f32.mrf.mxu0
        %v8463 = vpop.f32.mrf.mxu0
        %v8464 = vadd.f32 %v8240, %v8463
        %v8465 = vpop.f32.mrf.mxu0
        %8466 = vmatprep.mubr.bf16.mxu0 %v8196
        %8467 = vmatmul.mubr.bf16.gmra.mxu0 %v8195
        %v8468 = vpop.f32.mrf.mxu0
        %v8469 = vadd.f32 %v8240, %v8468
        %v8470 = vpop.f32.mrf.mxu0
        %v8471 = vpop.f32.mrf.mxu0
        %v8472 = vadd.f32 %v8240, %v8471
        %v8473 = vpop.f32.mrf.mxu0
        %8474 = vmatprep.mubr.bf16.mxu0 %v8198
        %8475 = vmatmul.mubr.bf16.gmra.mxu0 %v8197
        %v8476 = vpop.f32.mrf.mxu0
        %v8477 = vadd.f32 %v8240, %v8476
        %v8478 = vpop.f32.mrf.mxu0
        %v8479 = vpop.f32.mrf.mxu0
        %v8480 = vadd.f32 %v8240, %v8479
        %v8481 = vpop.f32.mrf.mxu0
        %8482 = vmatprep.mubr.bf16.mxu0 %v8200
        %8483 = vmatmul.mubr.bf16.gmra.mxu0 %v8199
        %v8484 = vpop.f32.mrf.mxu0
        %v8485 = vadd.f32 %v8240, %v8484
        %v8486 = vpop.f32.mrf.mxu0
        %v8487 = vpop.f32.mrf.mxu0
        %v8488 = vadd.f32 %v8240, %v8487
        %v8489 = vpop.f32.mrf.mxu0
        %8490 = vmatprep.mubr.bf16.mxu0 %v8202
        %8491 = vmatmul.mubr.bf16.gmra.mxu0 %v8201
        %v8492 = vpop.f32.mrf.mxu0
        %v8493 = vadd.f32 %v8240, %v8492
        %v8494 = vpop.f32.mrf.mxu0
        %v8495 = vpop.f32.mrf.mxu0
        %v8496 = vadd.f32 %v8240, %v8495
        %v8497 = vpop.f32.mrf.mxu0
        %8498 = vdwg.mxu0
        %8499 = vst.msk [vmem:[%s365] sm:$0xff] %vm453, %v8373
        %8500 = vst.msk [vmem:[%s365 + $0x8] sm:$0xff] %vm453, %v8376
        %8501 = vst.msk [vmem:[%s365 + $0x10] sm:$0xff] %vm453, %v8381
        %8502 = vst.msk [vmem:[%s365 + $0x18] sm:$0xff] %vm453, %v8384
        %8503 = vst.msk [vmem:[%s365 + $0x20] sm:$0xff] %vm453, %v8389
        %8504 = vst.msk [vmem:[%s365 + $0x28] sm:$0xff] %vm453, %v8392
        %8505 = vst.msk [vmem:[%s365 + $0x30] sm:$0xff] %vm453, %v8397
        %8506 = vst.msk [vmem:[%s365 + $0x38] sm:$0xff] %vm453, %v8400
        %8507 = vst.msk [vmem:[%s365 + $0x40] sm:$0xff] %vm453, %v8405
        %8508 = vst.msk [vmem:[%s365 + $0x48] sm:$0xff] %vm453, %v8408
        %8509 = vst.msk [vmem:[%s365 + $0x50] sm:$0xff] %vm453, %v8413
        %8510 = vst.msk [vmem:[%s365 + $0x58] sm:$0xff] %vm453, %v8416
        %8511 = vst.msk [vmem:[%s365 + $0x60] sm:$0xff] %vm453, %v8421
        %8512 = vst.msk [vmem:[%s365 + $0x68] sm:$0xff] %vm453, %v8424
        %8513 = vst.msk [vmem:[%s365 + $0x70] sm:$0xff] %vm453, %v8429
        %8514 = vst.msk [vmem:[%s365 + $0x78] sm:$0xff] %vm453, %v8432
        %8515 = vst.msk [vmem:[%s365 + $0x80] sm:$0xff] %vm453, %v8437
        %8516 = vst.msk [vmem:[%s365 + $0x88] sm:$0xff] %vm453, %v8440
        %8517 = vst.msk [vmem:[%s365 + $0x90] sm:$0xff] %vm453, %v8445
        %8518 = vst.msk [vmem:[%s365 + $0x98] sm:$0xff] %vm453, %v8448
        %8519 = vst.msk [vmem:[%s365 + $0xa0] sm:$0xff] %vm453, %v8453
        %8520 = vst.msk [vmem:[%s365 + $0xa8] sm:$0xff] %vm453, %v8456
        %8521 = vst.msk [vmem:[%s365 + $0xb0] sm:$0xff] %vm453, %v8461
        %8522 = vst.msk [vmem:[%s365 + $0xb8] sm:$0xff] %vm453, %v8464
        %8523 = vst.msk [vmem:[%s365 + $0xc0] sm:$0xff] %vm453, %v8469
        %8524 = vst.msk [vmem:[%s365 + $0xc8] sm:$0xff] %vm453, %v8472
        %8525 = vst.msk [vmem:[%s365 + $0xd0] sm:$0xff] %vm453, %v8477
        %8526 = vst.msk [vmem:[%s365 + $0xd8] sm:$0xff] %vm453, %v8480
        %8527 = vst.msk [vmem:[%s365 + $0xe0] sm:$0xff] %vm453, %v8485
        %8528 = vst.msk [vmem:[%s365 + $0xe8] sm:$0xff] %vm453, %v8488
        %8529 = vst.msk [vmem:[%s365 + $0xf0] sm:$0xff] %vm453, %v8493
        %8530 = vst.msk [vmem:[%s365 + $0xf8] sm:$0xff] %vm453, %v8496
        %s8531 = sand.u32 %s229, 1
        %s8532 = scalar_lea.sflag [#allocation5], %s8531
        %s8533 = sand.u32 %s229, 1
        %s8534 = smul.addr %s8533, 256
        %s8535 = scalar_lea.vmem [#allocation8], %s8534
        // Predicated region
        $region65: #{mix_feed_forward.1} parent=55 // pred_check
          %p8536 = pneg %p239
        $region66: #{mix_feed_forward.1} parent=55 // pred_check_branch
          %8538 = sbr.rel (%p8536) target = $region68
        $region67: #{mix_feed_forward.1} parent=55 // pred_region
          %s8539 = smul.u32 32, %s27
          %s8541 = ssub.s32 4096, 4096
          %8542 = vsyncadd %s8532, %s8541
          %s8543 = smul.addr %s8539, 128
          %s8544 = scalar_lea.hbm %s9, %s8543
          %s8545 = sshll.u32 %s8535, 4
          %s8546 = int_to_ptr.vmem [resolvable:$true] %s8545
          %8551 = dma.vmem_to_hbm [thread:$0]  %s8546, 4096, %s8544, %s8532, 128, 128, 8
        $region68: #{mix_feed_forward.1} parent=55 // pred_fallthru
          _
      $region56: #{mix_feed_forward.1} parent=5 // pred_fallthru
        _
      %p8552 = scmp.le.s32.totalorder 2, %s22
      // Predicated region
      $region69: #{mix_feed_forward.1} parent=5 // pred_check
        %p8553 = pneg %p8552
      $region70: #{mix_feed_forward.1} parent=5 // pred_check_branch
        %8555 = sbr.rel (%p8553) target = $region72
      $region71: #{mix_feed_forward.1} parent=5 // pred_region
        %s8556 = ssub.s32 %s22, 2
        // Predicated region
        $region73: #{mix_feed_forward.1} parent=71 // pred_check
          %p8557 = pneg %p245
        $region74: #{mix_feed_forward.1} parent=71 // pred_check_branch
          %8559 = sbr.rel (%p8557) target = $region76
        $region75: #{mix_feed_forward.1} parent=71 // pred_region
          %s8560 = sand.u32 %s230, 1
          %s8561 = scalar_lea.sflag [#allocation5], %s8560
          %s8562 = sand.u32 %s230, 1
          %s8563 = smul.addr %s8562, 256
          %s8564 = scalar_lea.vmem [#allocation8], %s8563
          %8565 = dma.done %s8561, 4096
        $region76: #{mix_feed_forward.1} parent=71 // pred_fallthru
          _
      $region72: #{mix_feed_forward.1} parent=5 // pred_fallthru
        _
    $region6: #{mix_feed_forward.1} parent=1 // loop_footer
      %s26 = sadd.s32 1, %s22
    $region7: #{mix_feed_forward.1} parent=1 // loop_footer_branch
      %21 = sbr.rel target = $region3
    $region8: #{mix_feed_forward.1} parent=1 // loop_exit
      _
    %8566 = vsyncpa [#allocation4], 1
    %s8567 = scalar_lea.sflag [#allocation4], 1
    %8568 = vsyncpa %s8567, 1
    %8569 = vsyncpa [#allocation7], 1
    %8570 = vsyncpa [#allocation5], 1
    %s8571 = scalar_lea.sflag [#allocation5], 1
    %8572 = vsyncpa %s8571, 1

</llo_original>
